<compile_context>
chip_gen: v7x
topology: tpu7x:2x2x1
jax: 0.10.0
libtpu: 0.0.40
codegen_flags: <defaults>
</compile_context>

<pallas_src>
import functools

import jax
import jax.numpy as jnp
from jax.experimental import pallas as pl
from jax.experimental.pallas import tpu as pltpu


# ----------------------------------------------------------------------------
# Fused kernel: full RefinenetBlock forward for B images per grid step.
# ----------------------------------------------------------------------------
def _refinenet_block_kernel(x_ref, w_ref, b_ref, o_ref, lhs_ref, ppad_ref,
                            *, B, H, WC, C):
    """x_ref   : (B*H, WC)        f32   B images stacked as row slabs
       w_ref   : (9, 3*WC, WC)    bf16  K-folded block-banded conv matrices
       b_ref   : (3, WC)          f32   W-tiled biases of the three biased convs
       o_ref   : (B*H, WC)        f32
       lhs_ref : (B*H, 3*WC)      bf16  lane-concatenated conv LHS (VMEM)
       ppad_ref: (B*(H+4), WC)    f32   -inf-row-padded pool scratch (VMEM)
    """
    BH = B * H
    PH = H + 4

    # --- init ONLY the halo rows (never rewritten; interiors are overwritten
    #     by every conv / pool below) -----------------------------------------
    zrow = jnp.zeros((1, WC), jnp.bfloat16)
    ninf = jnp.full((2, WC), -jnp.inf, jnp.float32)
    for img in range(B):
        r0 = img * H
        lhs_ref[pl.ds(r0, 1), 0:WC] = zrow                    # ky=0 top halo
        lhs_ref[pl.ds(r0 + H - 1, 1), 2 * WC:3 * WC] = zrow   # ky=2 bottom halo
        p0 = img * PH
        ppad_ref[pl.ds(p0, 2), :] = ninf                      # pool top halo
        ppad_ref[pl.ds(p0 + H + 2, 2), :] = ninf              # pool bottom halo

    # --- lane-shift masks for the pool, hoisted and reused by all 3 pools ----
    lane = jax.lax.broadcasted_iota(jnp.int32, (BH, WC), 1)
    pool_shifts = []
    for dx in (-2, -1, 1, 2):
        s = dx * C
        mask = (lane >= -s) if s < 0 else (lane < WC - s)
        pool_shifts.append((s, mask))

    def conv3x3(v, w_idx, b_idx=None):
        # One (B*H, 3*WC) x (3*WC, WC) bf16 matmul per conv: cast once, write
        # the three ky-shifted row bands of the LHS, single MXU pass (K=3*WC).
        vb = v.astype(jnp.bfloat16)
        lhs_ref[:, WC:2 * WC] = vb                                    # ky = 1
        for img in range(B):
            r0 = img * H
            lhs_ref[pl.ds(r0 + 1, H - 1), 0:WC] = vb[r0:r0 + H - 1]          # ky=0
            lhs_ref[pl.ds(r0, H - 1), 2 * WC:3 * WC] = vb[r0 + 1:r0 + H]     # ky=2
        acc = jnp.dot(lhs_ref[...], w_ref[w_idx],
                      preferred_element_type=jnp.float32)
        if b_idx is not None:
            # NOTE: could ride the matmul as one extra K row; kept on the VPU
            # (only 3 biased convs, marginal).
            acc = acc + b_ref[pl.ds(b_idx, 1), :]
        return acc

    def maxpool5x5(v):
        # Separable 5x5 / stride-1 / pad-2 max pool:
        #   lane (W) pass: 4 taps of roll(XLU) + precomputed mask + max,
        #   row  (H) pass: 5 row-slice taps through the -inf padded scratch.
        m = v
        for s, mask in pool_shifts:
            rolled = pltpu.roll(v, (-s) % WC, 1)        # res[l] = v[l + s]
            m = jnp.maximum(m, jnp.where(mask, rolled, -jnp.inf))
        for img in range(B):
            ppad_ref[pl.ds(img * PH + 2, H), :] = m[img * H:(img + 1) * H]
        pieces = []
        for img in range(B):
            p0 = img * PH
            r = ppad_ref[pl.ds(p0, H), :]
            for ky in range(1, 5):
                r = jnp.maximum(r, ppad_ref[pl.ds(p0 + ky, H), :])
            pieces.append(r)
        return pieces[0] if B == 1 else jnp.concatenate(pieces, axis=0)

    def rcu(v, w_idx, b_idx):
        # ResidualConvUnit with PyTorch inplace-ReLU semantics:
        #   out = relu(v) + conv2(relu(conv1(relu(v))))
        r = jnp.maximum(v, 0.0)
        h = conv3x3(r, w_idx, b_idx)            # conv1 (with bias)
        h = jnp.maximum(h, 0.0)
        h = conv3x3(h, w_idx + 1)               # conv2 (no bias)
        return r + h

    out = rcu(x_ref[...], 0, 0)                 # rcu0[0]
    out = rcu(out, 2, 1)                        # rcu0[1]

    # ChainedResidualPool
    out = jnp.maximum(out, 0.0)
    branch = out
    for j in range(3):
        branch = conv3x3(maxpool5x5(branch), 4 + j)   # branch convs, no bias
        out = out + branch

    out = rcu(out, 7, 2)                        # final RCU ("conv")
    o_ref[...] = out


# ----------------------------------------------------------------------------
# Wrapper-side weight plumbing: 3x3 conv -> K-folded block-banded matrices.
# ----------------------------------------------------------------------------
def _band_matrices(w_oihw, W):
    """(Cout, Cin, 3, 3) torch conv weight -> (3, W*Cin, W*Cout) matrices M so
    that a stride-1 pad-1 3x3 conv on (H, W*C) slabs becomes
        y[h] = sum_ky  xpad_rows[h + ky] @ M[ky]
    with M[ky][wi*Cin+ci, wo*Cout+co] = w[co, ci, ky, wi-wo+1] inside the band.
    """
    w_hwio = jnp.transpose(w_oihw, (2, 3, 1, 0))            # (3, 3, Cin, Cout)
    Cin, Cout = int(w_hwio.shape[2]), int(w_hwio.shape[3])
    wi = jnp.arange(W)[:, None]
    wo = jnp.arange(W)[None, :]
    kx = wi - wo + 1                                        # (W, W)
    valid = (kx >= 0) & (kx <= 2)
    blk = w_hwio[:, jnp.clip(kx, 0, 2)]                     # (3, W, W, Ci, Co)
    blk = jnp.where(valid[None, :, :, None, None], blk, 0.0)
    return jnp.transpose(blk, (0, 1, 3, 2, 4)).reshape(3, W * Cin, W * Cout)


def _pack_params(params, W):
    order = [
        params["rcu0_0"]["w1"], params["rcu0_0"]["w2"],
        params["rcu0_1"]["w1"], params["rcu0_1"]["w2"],
        params["crp"][0], params["crp"][1], params["crp"][2],
        params["conv"]["w1"], params["conv"]["w2"],
    ]
    C = int(order[0].shape[1])
    WC = W * C
    # K-folded: (3, WC, WC) -> (3*WC, WC) per conv; ky blocks stacked along K.
    w_fold = jnp.stack(
        [_band_matrices(w, W).reshape(3 * WC, WC) for w in order], axis=0)
    w_fold = w_fold.astype(jnp.bfloat16)                    # (9, 3*WC, WC)
    biases = [params["rcu0_0"]["b1"], params["rcu0_1"]["b1"],
              params["conv"]["b1"]]
    b_tiled = jnp.stack([jnp.tile(b, W) for b in biases], axis=0)  # (3, WC)
    return w_fold, b_tiled.astype(jnp.float32)


def _pick_block_batch(n, h):
    """Largest images-per-grid-step that divides N, keeps grid >= 2 (so the
    'parallel' batch axis still shards across both v7x TensorCores) and keeps
    the matmul M = bt*H modest."""
    max_bt = max(1, min(n // 2, max(1, 1024 // h)))
    for bt in range(max_bt, 0, -1):
        if n % bt == 0:
            return bt
    return 1


def _build_forward(N, C, H, W, bt, single_buffer_weights):
    WC = W * C
    BH = bt * H
    grid_n = N // bt

    kernel = functools.partial(_refinenet_block_kernel, B=bt, H=H, WC=WC, C=C)

    w_spec_kwargs = {}
    if single_buffer_weights:
        # Constant index_map -> fetched once; single buffering halves the
        # largest VMEM resident (weights are quadratic in WC).
        w_spec_kwargs["pipeline_mode"] = pl.Buffered(buffer_count=1)
    w_spec = pl.BlockSpec((9, 3 * WC, WC), lambda n: (0, 0, 0), **w_spec_kwargs)

    # Lower the VMEM request to the actual footprint (+generous headroom)
    # instead of asking for all of v7x's 64 MiB.
    w_bytes = 9 * 3 * WC * WC * 2 * (1 if single_buffer_weights else 2)
    io_bytes = 2 * 2 * BH * WC * 4                 # x + out blocks, double buf
    scratch_bytes = BH * 3 * WC * 2 + bt * (H + 4) * WC * 4
    bias_bytes = 2 * 3 * WC * 4
    footprint = w_bytes + io_bytes + scratch_bytes + bias_bytes
    vmem_limit = int(min(2 * footprint + (8 << 20), 48 << 20))

    call = pl.pallas_call(
        kernel,
        out_shape=jax.ShapeDtypeStruct((N * H, WC), jnp.float32),
        grid_spec=pltpu.PrefetchScalarGridSpec(
            num_scalar_prefetch=0,
            grid=(grid_n,),
            in_specs=[
                pl.BlockSpec((BH, WC), lambda n: (n, 0)),
                w_spec,
                pl.BlockSpec((3, WC), lambda n: (0, 0)),
            ],
            out_specs=pl.BlockSpec((BH, WC), lambda n: (n, 0)),
            scratch_shapes=[
                pltpu.VMEM((BH, 3 * WC), jnp.bfloat16),       # conv LHS
                pltpu.VMEM((bt * (H + 4), WC), jnp.float32),  # pool halo buf
            ],
        ),
        compiler_params=pltpu.CompilerParams(
            dimension_semantics=("parallel",),
            vmem_limit_bytes=vmem_limit,
        ),
    )
    return jax.jit(call)


def refinenet_block(x_nchw, params):
    N, C, H, W = x_nchw.shape
    WC = W * C
    assert WC % 128 == 0, "lane-dense layout requires W*C to be a multiple of 128"
    bt = _pick_block_batch(N, H)

    # NCHW -> lane-dense (N*H, W*C) row slabs (layout plumbing outside kernel).
    x_rows = jnp.transpose(x_nchw, (0, 2, 3, 1)).reshape(N * H, WC)
    w_fold, b_tiled = _pack_params(params, W)

    try:
        fwd = _build_forward(N, C, H, W, bt, single_buffer_weights=True)
        out_rows = jax.block_until_ready(fwd(x_rows, w_fold, b_tiled))
    except Exception:
        # TODO(synk): pl.Buffered(1) single-buffered weights not supported on
        # this jax/libtpu build; fall back to default double-buffered weights.
        fwd = _build_forward(N, C, H, W, bt, single_buffer_weights=False)
        out_rows = fwd(x_rows, w_fold, b_tiled)

    return jnp.transpose(out_rows.reshape(N, H, W, C), (0, 3, 1, 2))


# ----------------------------------------------------------------------------
# Deterministic parameter init (PyTorch OIHW conv weights + bias vectors).
# ----------------------------------------------------------------------------
def init_params(key, c):
    ks = jax.random.split(key, 12)
    conv_w = lambda k: jax.random.normal(k, (c, c, 3, 3), jnp.float32) * 0.1
    bias = lambda k: jax.random.normal(k, (c,), jnp.float32) * 0.1
    rcu_p = lambda k1, k2, k3: dict(w1=conv_w(k1), b1=bias(k2), w2=conv_w(k3))
    return dict(
        rcu0_0=rcu_p(ks[0], ks[1], ks[2]),
        rcu0_1=rcu_p(ks[3], ks[4], ks[5]),
        crp=[conv_w(ks[6]), conv_w(ks[7]), conv_w(ks[8])],
        conv=rcu_p(ks[9], ks[10], ks[11]),
    )


# ----------------------------------------------------------------------------
# Pure-JAX reference (f32) for a correctness check.
# ----------------------------------------------------------------------------
def _conv3x3_ref(x_nhwc, w_oihw, b=None):
    w_hwio = jnp.transpose(w_oihw, (2, 3, 1, 0))
    y = jax.lax.conv_general_dilated(
        x_nhwc, w_hwio, (1, 1), ((1, 1), (1, 1)),
        dimension_numbers=("NHWC", "HWIO", "NHWC"))
    if b is not None:
        y = y + b.reshape(1, 1, 1, -1)
    return y


def _maxpool5_ref(x_nhwc):
    return jax.lax.reduce_window(
        x_nhwc, -jnp.inf, jax.lax.max, (1, 5, 5, 1), (1, 1, 1, 1),
        [(0, 0), (2, 2), (2, 2), (0, 0)])


def _rcu_ref(x, p):
    r = jnp.maximum(x, 0.0)
    h = _conv3x3_ref(r, p["w1"], p["b1"])
    h = _conv3x3_ref(jnp.maximum(h, 0.0), p["w2"])
    return r + h


def refinenet_block_ref(x_nchw, params):
    x = jnp.transpose(x_nchw, (0, 2, 3, 1))
    out = _rcu_ref(x, params["rcu0_0"])
    out = _rcu_ref(out, params["rcu0_1"])
    out = jnp.maximum(out, 0.0)
    branch = out
    for w in params["crp"]:
        branch = _conv3x3_ref(_maxpool5_ref(branch), w)
        out = out + branch
    out = _rcu_ref(out, params["conv"])
    return jnp.transpose(out, (0, 3, 1, 2))


# ----------------------------------------------------------------------------
if __name__ == "__main__":
    key = jax.random.PRNGKey(0)
    k_x, k_p = jax.random.split(key)

    # Single input feature (mrf is None): dim_of_features = ((8, 16),)
    # N=4 so that 2 images are batched per grid step while keeping grid=2.
    N, C, H, W = 4, 8, 16, 16          # W * C = 128 -> exactly one lane group
    x = jax.random.normal(k_x, (N, C, H, W), jnp.float32)
    params = init_params(k_p, C)

    out = refinenet_block(x, params)
    out = jax.block_until_ready(out)

    ref = refinenet_block_ref(x, params)
    assert out.shape == (N, C, H, W)
    rel_err = float(jnp.max(jnp.abs(out - ref)) / (jnp.max(jnp.abs(ref)) + 1e-6))
    assert rel_err < 3e-2, f"mismatch vs reference: rel_err={rel_err}"

    print("KERNEL_OK")
</pallas_src>

<mosaic_0001>
module attributes {stable_mosaic.version = 11 : i64} {
  func.func @_refinenet_block_kernel(%arg0: i32, %arg1: memref<32x128xf32, #tpu.memory_space<vmem>>, %arg2: memref<9x384x128xbf16, #tpu.memory_space<vmem>>, %arg3: memref<3x128xf32, #tpu.memory_space<vmem>>, %arg4: memref<32x128xf32, #tpu.memory_space<vmem>>, %arg5: memref<32x384xbf16, #tpu.memory_space<vmem>>, %arg6: memref<40x128xf32, #tpu.memory_space<vmem>>) attributes {dimension_semantics = [#tpu.dimension_semantics<parallel>], iteration_bounds = array<i64: 2>, scalar_prefetch = 0 : i64, scratch_operands = 2 : i64, tpu.core_type = #tpu.core_type<tc>, window_params = [{transform_indices = @transform_0, window_bounds = array<i64: 32, 128>}, {pipeline_mode = #tpu.pipeline_mode<synchronous>, transform_indices = @transform_1, window_bounds = array<i64: 9, 384, 128>}, {pipeline_mode = #tpu.pipeline_mode<synchronous>, transform_indices = @transform_2, window_bounds = array<i64: 3, 128>}, {transform_indices = @transform_3, window_bounds = array<i64: 32, 128>}]} {
    %cst = arith.constant 0.000000e+00 : bf16
    %0 = vector.broadcast %cst : bf16 to vector<1x128xbf16>
    %cst_0 = arith.constant 0xFF800000 : f32
    %1 = vector.broadcast %cst_0 : f32 to vector<2x128xf32>
    %c0 = arith.constant 0 : index
    %c0_1 = arith.constant 0 : index
    %2 = vector.load %arg5[%c0, %c0_1] : memref<32x384xbf16, #tpu.memory_space<vmem>>, vector<1x128xbf16>
    tpu.vector_store %arg5[%c0, %c0_1], %0 {strides = array<i32>} : memref<32x384xbf16, #tpu.memory_space<vmem>>, vector<1x128xbf16>,
    %c15 = arith.constant 15 : index
    %c256 = arith.constant 256 : index
    %3 = vector.load %arg5[%c15, %c256] : memref<32x384xbf16, #tpu.memory_space<vmem>>, vector<1x128xbf16>
    tpu.vector_store %arg5[%c15, %c256], %0 {strides = array<i32>} : memref<32x384xbf16, #tpu.memory_space<vmem>>, vector<1x128xbf16>,
    %c0_2 = arith.constant 0 : index
    %c0_3 = arith.constant 0 : index
    %4 = vector.load %arg6[%c0_2, %c0_3] : memref<40x128xf32, #tpu.memory_space<vmem>>, vector<2x128xf32>
    tpu.vector_store %arg6[%c0_2, %c0_3], %1 {strides = array<i32>} : memref<40x128xf32, #tpu.memory_space<vmem>>, vector<2x128xf32>,
    %c18 = arith.constant 18 : index
    %c0_4 = arith.constant 0 : index
    %5 = vector.load %arg6[%c18, %c0_4] : memref<40x128xf32, #tpu.memory_space<vmem>>, vector<2x128xf32>
    tpu.vector_store %arg6[%c18, %c0_4], %1 {strides = array<i32>} : memref<40x128xf32, #tpu.memory_space<vmem>>, vector<2x128xf32>,
    %c16 = arith.constant 16 : index
    %c0_5 = arith.constant 0 : index
    %6 = vector.load %arg5[%c16, %c0_5] : memref<32x384xbf16, #tpu.memory_space<vmem>>, vector<1x128xbf16>
    tpu.vector_store %arg5[%c16, %c0_5], %0 {strides = array<i32>} : memref<32x384xbf16, #tpu.memory_space<vmem>>, vector<1x128xbf16>,
    %c31 = arith.constant 31 : index
    %c256_6 = arith.constant 256 : index
    %7 = vector.load %arg5[%c31, %c256_6] : memref<32x384xbf16, #tpu.memory_space<vmem>>, vector<1x128xbf16>
    tpu.vector_store %arg5[%c31, %c256_6], %0 {strides = array<i32>} : memref<32x384xbf16, #tpu.memory_space<vmem>>, vector<1x128xbf16>,
    %c20 = arith.constant 20 : index
    %c0_7 = arith.constant 0 : index
    %8 = vector.load %arg6[%c20, %c0_7] : memref<40x128xf32, #tpu.memory_space<vmem>>, vector<2x128xf32>
    tpu.vector_store %arg6[%c20, %c0_7], %1 {strides = array<i32>} : memref<40x128xf32, #tpu.memory_space<vmem>>, vector<2x128xf32>,
    %c38 = arith.constant 38 : index
    %c0_8 = arith.constant 0 : index
    %9 = vector.load %arg6[%c38, %c0_8] : memref<40x128xf32, #tpu.memory_space<vmem>>, vector<2x128xf32>
    tpu.vector_store %arg6[%c38, %c0_8], %1 {strides = array<i32>} : memref<40x128xf32, #tpu.memory_space<vmem>>, vector<2x128xf32>,
    %10 = tpu.iota {dimensions = array<i32: 1>} : vector<32x128xi32>
    %c16_i32 = arith.constant 16 : i32
    %11 = vector.broadcast %c16_i32 : i32 to vector<32x128xi32>
    %12 = arith.cmpi sge, %10, %11 : vector<32x128xi32>
    %c8_i32 = arith.constant 8 : i32
    %13 = vector.broadcast %c8_i32 : i32 to vector<32x128xi32>
    %14 = arith.cmpi sge, %10, %13 : vector<32x128xi32>
    %c120_i32 = arith.constant 120 : i32
    %15 = vector.broadcast %c120_i32 : i32 to vector<32x128xi32>
    %16 = arith.cmpi slt, %10, %15 : vector<32x128xi32>
    %c112_i32 = arith.constant 112 : i32
    %17 = vector.broadcast %c112_i32 : i32 to vector<32x128xi32>
    %18 = arith.cmpi slt, %10, %17 : vector<32x128xi32>
    %c0_9 = arith.constant 0 : index
    %c0_10 = arith.constant 0 : index
    %19 = vector.load %arg1[%c0_9, %c0_10] : memref<32x128xf32, #tpu.memory_space<vmem>>, vector<32x128xf32>
    %cst_11 = arith.constant 0.000000e+00 : f32
    %20 = vector.broadcast %cst_11 : f32 to vector<32x128xf32>
    %21 = arith.maximumf %19, %20 : vector<32x128xf32>
    %22 = arith.truncf %21 : vector<32x128xf32> to vector<32x128xbf16>
    %c0_12 = arith.constant 0 : index
    %c128 = arith.constant 128 : index
    %23 = vector.load %arg5[%c0_12, %c128] : memref<32x384xbf16, #tpu.memory_space<vmem>>, vector<32x128xbf16>
    tpu.vector_store %arg5[%c0_12, %c128], %22 {strides = array<i32>} : memref<32x384xbf16, #tpu.memory_space<vmem>>, vector<32x128xbf16>,
    %24 = vector.extract_strided_slice %22 {offsets = [0, 0], sizes = [15, 128], strides = [1, 1]} : vector<32x128xbf16> to vector<15x128xbf16>
    %c1 = arith.constant 1 : index
    %c0_13 = arith.constant 0 : index
    %25 = vector.load %arg5[%c1, %c0_13] : memref<32x384xbf16, #tpu.memory_space<vmem>>, vector<15x128xbf16>
    tpu.vector_store %arg5[%c1, %c0_13], %24 {strides = array<i32>} : memref<32x384xbf16, #tpu.memory_space<vmem>>, vector<15x128xbf16>,
    %26 = vector.extract_strided_slice %22 {offsets = [1, 0], sizes = [15, 128], strides = [1, 1]} : vector<32x128xbf16> to vector<15x128xbf16>
    %c0_14 = arith.constant 0 : index
    %c256_15 = arith.constant 256 : index
    %27 = vector.load %arg5[%c0_14, %c256_15] : memref<32x384xbf16, #tpu.memory_space<vmem>>, vector<15x128xbf16>
    tpu.vector_store %arg5[%c0_14, %c256_15], %26 {strides = array<i32>} : memref<32x384xbf16, #tpu.memory_space<vmem>>, vector<15x128xbf16>,
    %28 = vector.extract_strided_slice %22 {offsets = [16, 0], sizes = [15, 128], strides = [1, 1]} : vector<32x128xbf16> to vector<15x128xbf16>
    %c17 = arith.constant 17 : index
    %c0_16 = arith.constant 0 : index
    %29 = vector.load %arg5[%c17, %c0_16] : memref<32x384xbf16, #tpu.memory_space<vmem>>, vector<15x128xbf16>
    tpu.vector_store %arg5[%c17, %c0_16], %28 {strides = array<i32>} : memref<32x384xbf16, #tpu.memory_space<vmem>>, vector<15x128xbf16>,
    %30 = vector.extract_strided_slice %22 {offsets = [17, 0], sizes = [15, 128], strides = [1, 1]} : vector<32x128xbf16> to vector<15x128xbf16>
    %c16_17 = arith.constant 16 : index
    %c256_18 = arith.constant 256 : index
    %31 = vector.load %arg5[%c16_17, %c256_18] : memref<32x384xbf16, #tpu.memory_space<vmem>>, vector<15x128xbf16>
    tpu.vector_store %arg5[%c16_17, %c256_18], %30 {strides = array<i32>} : memref<32x384xbf16, #tpu.memory_space<vmem>>, vector<15x128xbf16>,
    %c0_19 = arith.constant 0 : index
    %c0_20 = arith.constant 0 : index
    %32 = vector.load %arg5[%c0_19, %c0_20] : memref<32x384xbf16, #tpu.memory_space<vmem>>, vector<32x384xbf16>
    %c0_21 = arith.constant 0 : index
    %c0_22 = arith.constant 0 : index
    %c0_23 = arith.constant 0 : index
    %33 = vector.load %arg2[%c0_21, %c0_22, %c0_23] : memref<9x384x128xbf16, #tpu.memory_space<vmem>>, vector<1x384x128xbf16>
    %34 = vector.shape_cast %33 : vector<1x384x128xbf16> to vector<384x128xbf16>
    %cst_24 = arith.constant dense<0.000000e+00> : vector<32x128xf32>
    %35 = tpu.matmul %32, %34, %cst_24 {dimension_numbers = #tpu.dot_dimension_numbers<[1], [0], [0], [1], [0, 0, 1, 1], [], []>} : vector<32x384xbf16>, vector<384x128xbf16>, vector<32x128xf32> -> vector<32x128xf32>
    %c0_25 = arith.constant 0 : index
    %c0_26 = arith.constant 0 : index
    %36 = vector.load %arg3[%c0_25, %c0_26] : memref<3x128xf32, #tpu.memory_space<vmem>>, vector<1x128xf32>
    %37 = vector.broadcast %36 : vector<1x128xf32> to vector<32x128xf32>
    %38 = arith.addf %35, %37 : vector<32x128xf32>
    %cst_27 = arith.constant 0.000000e+00 : f32
    %39 = vector.broadcast %cst_27 : f32 to vector<32x128xf32>
    %40 = arith.maximumf %38, %39 : vector<32x128xf32>
    %41 = arith.truncf %40 : vector<32x128xf32> to vector<32x128xbf16>
    %c0_28 = arith.constant 0 : index
    %c128_29 = arith.constant 128 : index
    %42 = vector.load %arg5[%c0_28, %c128_29] : memref<32x384xbf16, #tpu.memory_space<vmem>>, vector<32x128xbf16>
    tpu.vector_store %arg5[%c0_28, %c128_29], %41 {strides = array<i32>} : memref<32x384xbf16, #tpu.memory_space<vmem>>, vector<32x128xbf16>,
    %43 = vector.extract_strided_slice %41 {offsets = [0, 0], sizes = [15, 128], strides = [1, 1]} : vector<32x128xbf16> to vector<15x128xbf16>
    %c1_30 = arith.constant 1 : index
    %c0_31 = arith.constant 0 : index
    %44 = vector.load %arg5[%c1_30, %c0_31] : memref<32x384xbf16, #tpu.memory_space<vmem>>, vector<15x128xbf16>
    tpu.vector_store %arg5[%c1_30, %c0_31], %43 {strides = array<i32>} : memref<32x384xbf16, #tpu.memory_space<vmem>>, vector<15x128xbf16>,
    %45 = vector.extract_strided_slice %41 {offsets = [1, 0], sizes = [15, 128], strides = [1, 1]} : vector<32x128xbf16> to vector<15x128xbf16>
    %c0_32 = arith.constant 0 : index
    %c256_33 = arith.constant 256 : index
    %46 = vector.load %arg5[%c0_32, %c256_33] : memref<32x384xbf16, #tpu.memory_space<vmem>>, vector<15x128xbf16>
    tpu.vector_store %arg5[%c0_32, %c256_33], %45 {strides = array<i32>} : memref<32x384xbf16, #tpu.memory_space<vmem>>, vector<15x128xbf16>,
    %47 = vector.extract_strided_slice %41 {offsets = [16, 0], sizes = [15, 128], strides = [1, 1]} : vector<32x128xbf16> to vector<15x128xbf16>
    %c17_34 = arith.constant 17 : index
    %c0_35 = arith.constant 0 : index
    %48 = vector.load %arg5[%c17_34, %c0_35] : memref<32x384xbf16, #tpu.memory_space<vmem>>, vector<15x128xbf16>
    tpu.vector_store %arg5[%c17_34, %c0_35], %47 {strides = array<i32>} : memref<32x384xbf16, #tpu.memory_space<vmem>>, vector<15x128xbf16>,
    %49 = vector.extract_strided_slice %41 {offsets = [17, 0], sizes = [15, 128], strides = [1, 1]} : vector<32x128xbf16> to vector<15x128xbf16>
    %c16_36 = arith.constant 16 : index
    %c256_37 = arith.constant 256 : index
    %50 = vector.load %arg5[%c16_36, %c256_37] : memref<32x384xbf16, #tpu.memory_space<vmem>>, vector<15x128xbf16>
    tpu.vector_store %arg5[%c16_36, %c256_37], %49 {strides = array<i32>} : memref<32x384xbf16, #tpu.memory_space<vmem>>, vector<15x128xbf16>,
    %c0_38 = arith.constant 0 : index
    %c0_39 = arith.constant 0 : index
    %51 = vector.load %arg5[%c0_38, %c0_39] : memref<32x384xbf16, #tpu.memory_space<vmem>>, vector<32x384xbf16>
    %c1_40 = arith.constant 1 : index
    %c0_41 = arith.constant 0 : index
    %c0_42 = arith.constant 0 : index
    %52 = vector.load %arg2[%c1_40, %c0_41, %c0_42] : memref<9x384x128xbf16, #tpu.memory_space<vmem>>, vector<1x384x128xbf16>
    %53 = vector.shape_cast %52 : vector<1x384x128xbf16> to vector<384x128xbf16>
    %cst_43 = arith.constant dense<0.000000e+00> : vector<32x128xf32>
    %54 = tpu.matmul %51, %53, %cst_43 {dimension_numbers = #tpu.dot_dimension_numbers<[1], [0], [0], [1], [0, 0, 1, 1], [], []>} : vector<32x384xbf16>, vector<384x128xbf16>, vector<32x128xf32> -> vector<32x128xf32>
    %55 = arith.addf %21, %54 : vector<32x128xf32>
    %cst_44 = arith.constant 0.000000e+00 : f32
    %56 = vector.broadcast %cst_44 : f32 to vector<32x128xf32>
    %57 = arith.maximumf %55, %56 : vector<32x128xf32>
    %58 = arith.truncf %57 : vector<32x128xf32> to vector<32x128xbf16>
    %c0_45 = arith.constant 0 : index
    %c128_46 = arith.constant 128 : index
    %59 = vector.load %arg5[%c0_45, %c128_46] : memref<32x384xbf16, #tpu.memory_space<vmem>>, vector<32x128xbf16>
    tpu.vector_store %arg5[%c0_45, %c128_46], %58 {strides = array<i32>} : memref<32x384xbf16, #tpu.memory_space<vmem>>, vector<32x128xbf16>,
    %60 = vector.extract_strided_slice %58 {offsets = [0, 0], sizes = [15, 128], strides = [1, 1]} : vector<32x128xbf16> to vector<15x128xbf16>
    %c1_47 = arith.constant 1 : index
    %c0_48 = arith.constant 0 : index
    %61 = vector.load %arg5[%c1_47, %c0_48] : memref<32x384xbf16, #tpu.memory_space<vmem>>, vector<15x128xbf16>
    tpu.vector_store %arg5[%c1_47, %c0_48], %60 {strides = array<i32>} : memref<32x384xbf16, #tpu.memory_space<vmem>>, vector<15x128xbf16>,
    %62 = vector.extract_strided_slice %58 {offsets = [1, 0], sizes = [15, 128], strides = [1, 1]} : vector<32x128xbf16> to vector<15x128xbf16>
    %c0_49 = arith.constant 0 : index
    %c256_50 = arith.constant 256 : index
    %63 = vector.load %arg5[%c0_49, %c256_50] : memref<32x384xbf16, #tpu.memory_space<vmem>>, vector<15x128xbf16>
    tpu.vector_store %arg5[%c0_49, %c256_50], %62 {strides = array<i32>} : memref<32x384xbf16, #tpu.memory_space<vmem>>, vector<15x128xbf16>,
    %64 = vector.extract_strided_slice %58 {offsets = [16, 0], sizes = [15, 128], strides = [1, 1]} : vector<32x128xbf16> to vector<15x128xbf16>
    %c17_51 = arith.constant 17 : index
    %c0_52 = arith.constant 0 : index
    %65 = vector.load %arg5[%c17_51, %c0_52] : memref<32x384xbf16, #tpu.memory_space<vmem>>, vector<15x128xbf16>
    tpu.vector_store %arg5[%c17_51, %c0_52], %64 {strides = array<i32>} : memref<32x384xbf16, #tpu.memory_space<vmem>>, vector<15x128xbf16>,
    %66 = vector.extract_strided_slice %58 {offsets = [17, 0], sizes = [15, 128], strides = [1, 1]} : vector<32x128xbf16> to vector<15x128xbf16>
    %c16_53 = arith.constant 16 : index
    %c256_54 = arith.constant 256 : index
    %67 = vector.load %arg5[%c16_53, %c256_54] : memref<32x384xbf16, #tpu.memory_space<vmem>>, vector<15x128xbf16>
    tpu.vector_store %arg5[%c16_53, %c256_54], %66 {strides = array<i32>} : memref<32x384xbf16, #tpu.memory_space<vmem>>, vector<15x128xbf16>,
    %c0_55 = arith.constant 0 : index
    %c0_56 = arith.constant 0 : index
    %68 = vector.load %arg5[%c0_55, %c0_56] : memref<32x384xbf16, #tpu.memory_space<vmem>>, vector<32x384xbf16>
    %c2 = arith.constant 2 : index
    %c0_57 = arith.constant 0 : index
    %c0_58 = arith.constant 0 : index
    %69 = vector.load %arg2[%c2, %c0_57, %c0_58] : memref<9x384x128xbf16, #tpu.memory_space<vmem>>, vector<1x384x128xbf16>
    %70 = vector.shape_cast %69 : vector<1x384x128xbf16> to vector<384x128xbf16>
    %cst_59 = arith.constant dense<0.000000e+00> : vector<32x128xf32>
    %71 = tpu.matmul %68, %70, %cst_59 {dimension_numbers = #tpu.dot_dimension_numbers<[1], [0], [0], [1], [0, 0, 1, 1], [], []>} : vector<32x384xbf16>, vector<384x128xbf16>, vector<32x128xf32> -> vector<32x128xf32>
    %c1_60 = arith.constant 1 : index
    %c0_61 = arith.constant 0 : index
    %72 = vector.load %arg3[%c1_60, %c0_61] : memref<3x128xf32, #tpu.memory_space<vmem>>, vector<1x128xf32>
    %73 = vector.broadcast %72 : vector<1x128xf32> to vector<32x128xf32>
    %74 = arith.addf %71, %73 : vector<32x128xf32>
    %cst_62 = arith.constant 0.000000e+00 : f32
    %75 = vector.broadcast %cst_62 : f32 to vector<32x128xf32>
    %76 = arith.maximumf %74, %75 : vector<32x128xf32>
    %77 = arith.truncf %76 : vector<32x128xf32> to vector<32x128xbf16>
    %c0_63 = arith.constant 0 : index
    %c128_64 = arith.constant 128 : index
    %78 = vector.load %arg5[%c0_63, %c128_64] : memref<32x384xbf16, #tpu.memory_space<vmem>>, vector<32x128xbf16>
    tpu.vector_store %arg5[%c0_63, %c128_64], %77 {strides = array<i32>} : memref<32x384xbf16, #tpu.memory_space<vmem>>, vector<32x128xbf16>,
    %79 = vector.extract_strided_slice %77 {offsets = [0, 0], sizes = [15, 128], strides = [1, 1]} : vector<32x128xbf16> to vector<15x128xbf16>
    %c1_65 = arith.constant 1 : index
    %c0_66 = arith.constant 0 : index
    %80 = vector.load %arg5[%c1_65, %c0_66] : memref<32x384xbf16, #tpu.memory_space<vmem>>, vector<15x128xbf16>
    tpu.vector_store %arg5[%c1_65, %c0_66], %79 {strides = array<i32>} : memref<32x384xbf16, #tpu.memory_space<vmem>>, vector<15x128xbf16>,
    %81 = vector.extract_strided_slice %77 {offsets = [1, 0], sizes = [15, 128], strides = [1, 1]} : vector<32x128xbf16> to vector<15x128xbf16>
    %c0_67 = arith.constant 0 : index
    %c256_68 = arith.constant 256 : index
    %82 = vector.load %arg5[%c0_67, %c256_68] : memref<32x384xbf16, #tpu.memory_space<vmem>>, vector<15x128xbf16>
    tpu.vector_store %arg5[%c0_67, %c256_68], %81 {strides = array<i32>} : memref<32x384xbf16, #tpu.memory_space<vmem>>, vector<15x128xbf16>,
    %83 = vector.extract_strided_slice %77 {offsets = [16, 0], sizes = [15, 128], strides = [1, 1]} : vector<32x128xbf16> to vector<15x128xbf16>
    %c17_69 = arith.constant 17 : index
    %c0_70 = arith.constant 0 : index
    %84 = vector.load %arg5[%c17_69, %c0_70] : memref<32x384xbf16, #tpu.memory_space<vmem>>, vector<15x128xbf16>
    tpu.vector_store %arg5[%c17_69, %c0_70], %83 {strides = array<i32>} : memref<32x384xbf16, #tpu.memory_space<vmem>>, vector<15x128xbf16>,
    %85 = vector.extract_strided_slice %77 {offsets = [17, 0], sizes = [15, 128], strides = [1, 1]} : vector<32x128xbf16> to vector<15x128xbf16>
    %c16_71 = arith.constant 16 : index
    %c256_72 = arith.constant 256 : index
    %86 = vector.load %arg5[%c16_71, %c256_72] : memref<32x384xbf16, #tpu.memory_space<vmem>>, vector<15x128xbf16>
    tpu.vector_store %arg5[%c16_71, %c256_72], %85 {strides = array<i32>} : memref<32x384xbf16, #tpu.memory_space<vmem>>, vector<15x128xbf16>,
    %c0_73 = arith.constant 0 : index
    %c0_74 = arith.constant 0 : index
    %87 = vector.load %arg5[%c0_73, %c0_74] : memref<32x384xbf16, #tpu.memory_space<vmem>>, vector<32x384xbf16>
    %c3 = arith.constant 3 : index
    %c0_75 = arith.constant 0 : index
    %c0_76 = arith.constant 0 : index
    %88 = vector.load %arg2[%c3, %c0_75, %c0_76] : memref<9x384x128xbf16, #tpu.memory_space<vmem>>, vector<1x384x128xbf16>
    %89 = vector.shape_cast %88 : vector<1x384x128xbf16> to vector<384x128xbf16>
    %cst_77 = arith.constant dense<0.000000e+00> : vector<32x128xf32>
    %90 = tpu.matmul %87, %89, %cst_77 {dimension_numbers = #tpu.dot_dimension_numbers<[1], [0], [0], [1], [0, 0, 1, 1], [], []>} : vector<32x384xbf16>, vector<384x128xbf16>, vector<32x128xf32> -> vector<32x128xf32>
    %91 = arith.addf %57, %90 : vector<32x128xf32>
    %cst_78 = arith.constant 0.000000e+00 : f32
    %92 = vector.broadcast %cst_78 : f32 to vector<32x128xf32>
    %93 = arith.maximumf %91, %92 : vector<32x128xf32>
    %c16_i32_79 = arith.constant 16 : i32
    %94 = tpu.dynamic_rotate %93 by %c16_i32_79 dim 1 : vector<32x128xf32>, i32 -> vector<32x128xf32>
    %cst_80 = arith.constant 0xFF800000 : f32
    %95 = vector.broadcast %cst_80 : f32 to vector<32x128xf32>
    %96 = arith.select %12, %94, %95 : vector<32x128xi1>, vector<32x128xf32>
    %97 = arith.maximumf %93, %96 : vector<32x128xf32>
    %c8_i32_81 = arith.constant 8 : i32
    %98 = tpu.dynamic_rotate %93 by %c8_i32_81 dim 1 : vector<32x128xf32>, i32 -> vector<32x128xf32>
    %cst_82 = arith.constant 0xFF800000 : f32
    %99 = vector.broadcast %cst_82 : f32 to vector<32x128xf32>
    %100 = arith.select %14, %98, %99 : vector<32x128xi1>, vector<32x128xf32>
    %101 = arith.maximumf %97, %100 : vector<32x128xf32>
    %c120_i32_83 = arith.constant 120 : i32
    %102 = tpu.dynamic_rotate %93 by %c120_i32_83 dim 1 : vector<32x128xf32>, i32 -> vector<32x128xf32>
    %cst_84 = arith.constant 0xFF800000 : f32
    %103 = vector.broadcast %cst_84 : f32 to vector<32x128xf32>
    %104 = arith.select %16, %102, %103 : vector<32x128xi1>, vector<32x128xf32>
    %105 = arith.maximumf %101, %104 : vector<32x128xf32>
    %c112_i32_85 = arith.constant 112 : i32
    %106 = tpu.dynamic_rotate %93 by %c112_i32_85 dim 1 : vector<32x128xf32>, i32 -> vector<32x128xf32>
    %cst_86 = arith.constant 0xFF800000 : f32
    %107 = vector.broadcast %cst_86 : f32 to vector<32x128xf32>
    %108 = arith.select %18, %106, %107 : vector<32x128xi1>, vector<32x128xf32>
    %109 = arith.maximumf %105, %108 : vector<32x128xf32>
    %110 = vector.extract_strided_slice %109 {offsets = [0, 0], sizes = [16, 128], strides = [1, 1]} : vector<32x128xf32> to vector<16x128xf32>
    %c2_87 = arith.constant 2 : index
    %c0_88 = arith.constant 0 : index
    %111 = vector.load %arg6[%c2_87, %c0_88] : memref<40x128xf32, #tpu.memory_space<vmem>>, vector<16x128xf32>
    tpu.vector_store %arg6[%c2_87, %c0_88], %110 {strides = array<i32>} : memref<40x128xf32, #tpu.memory_space<vmem>>, vector<16x128xf32>,
    %112 = vector.extract_strided_slice %109 {offsets = [16, 0], sizes = [16, 128], strides = [1, 1]} : vector<32x128xf32> to vector<16x128xf32>
    %c22 = arith.constant 22 : index
    %c0_89 = arith.constant 0 : index
    %113 = vector.load %arg6[%c22, %c0_89] : memref<40x128xf32, #tpu.memory_space<vmem>>, vector<16x128xf32>
    tpu.vector_store %arg6[%c22, %c0_89], %112 {strides = array<i32>} : memref<40x128xf32, #tpu.memory_space<vmem>>, vector<16x128xf32>,
    %c0_90 = arith.constant 0 : index
    %c0_91 = arith.constant 0 : index
    %114 = vector.load %arg6[%c0_90, %c0_91] : memref<40x128xf32, #tpu.memory_space<vmem>>, vector<16x128xf32>
    %c1_92 = arith.constant 1 : index
    %c0_93 = arith.constant 0 : index
    %115 = vector.load %arg6[%c1_92, %c0_93] : memref<40x128xf32, #tpu.memory_space<vmem>>, vector<16x128xf32>
    %116 = arith.maximumf %114, %115 : vector<16x128xf32>
    %c2_94 = arith.constant 2 : index
    %c0_95 = arith.constant 0 : index
    %117 = vector.load %arg6[%c2_94, %c0_95] : memref<40x128xf32, #tpu.memory_space<vmem>>, vector<16x128xf32>
    %118 = arith.maximumf %116, %117 : vector<16x128xf32>
    %c3_96 = arith.constant 3 : index
    %c0_97 = arith.constant 0 : index
    %119 = vector.load %arg6[%c3_96, %c0_97] : memref<40x128xf32, #tpu.memory_space<vmem>>, vector<16x128xf32>
    %120 = arith.maximumf %118, %119 : vector<16x128xf32>
    %c4 = arith.constant 4 : index
    %c0_98 = arith.constant 0 : index
    %121 = vector.load %arg6[%c4, %c0_98] : memref<40x128xf32, #tpu.memory_space<vmem>>, vector<16x128xf32>
    %122 = arith.maximumf %120, %121 : vector<16x128xf32>
    %c20_99 = arith.constant 20 : index
    %c0_100 = arith.constant 0 : index
    %123 = vector.load %arg6[%c20_99, %c0_100] : memref<40x128xf32, #tpu.memory_space<vmem>>, vector<16x128xf32>
    %c21 = arith.constant 21 : index
    %c0_101 = arith.constant 0 : index
    %124 = vector.load %arg6[%c21, %c0_101] : memref<40x128xf32, #tpu.memory_space<vmem>>, vector<16x128xf32>
    %125 = arith.maximumf %123, %124 : vector<16x128xf32>
    %c22_102 = arith.constant 22 : index
    %c0_103 = arith.constant 0 : index
    %126 = vector.load %arg6[%c22_102, %c0_103] : memref<40x128xf32, #tpu.memory_space<vmem>>, vector<16x128xf32>
    %127 = arith.maximumf %125, %126 : vector<16x128xf32>
    %c23 = arith.constant 23 : index
    %c0_104 = arith.constant 0 : index
    %128 = vector.load %arg6[%c23, %c0_104] : memref<40x128xf32, #tpu.memory_space<vmem>>, vector<16x128xf32>
    %129 = arith.maximumf %127, %128 : vector<16x128xf32>
    %c24 = arith.constant 24 : index
    %c0_105 = arith.constant 0 : index
    %130 = vector.load %arg6[%c24, %c0_105] : memref<40x128xf32, #tpu.memory_space<vmem>>, vector<16x128xf32>
    %131 = arith.maximumf %129, %130 : vector<16x128xf32>
    %132 = tpu.concatenate %122, %131 in 0 : vector<16x128xf32>, vector<16x128xf32> -> vector<32x128xf32>
    %133 = arith.truncf %132 : vector<32x128xf32> to vector<32x128xbf16>
    %c0_106 = arith.constant 0 : index
    %c128_107 = arith.constant 128 : index
    %134 = vector.load %arg5[%c0_106, %c128_107] : memref<32x384xbf16, #tpu.memory_space<vmem>>, vector<32x128xbf16>
    tpu.vector_store %arg5[%c0_106, %c128_107], %133 {strides = array<i32>} : memref<32x384xbf16, #tpu.memory_space<vmem>>, vector<32x128xbf16>,
    %135 = vector.extract_strided_slice %133 {offsets = [0, 0], sizes = [15, 128], strides = [1, 1]} : vector<32x128xbf16> to vector<15x128xbf16>
    %c1_108 = arith.constant 1 : index
    %c0_109 = arith.constant 0 : index
    %136 = vector.load %arg5[%c1_108, %c0_109] : memref<32x384xbf16, #tpu.memory_space<vmem>>, vector<15x128xbf16>
    tpu.vector_store %arg5[%c1_108, %c0_109], %135 {strides = array<i32>} : memref<32x384xbf16, #tpu.memory_space<vmem>>, vector<15x128xbf16>,
    %137 = vector.extract_strided_slice %133 {offsets = [1, 0], sizes = [15, 128], strides = [1, 1]} : vector<32x128xbf16> to vector<15x128xbf16>
    %c0_110 = arith.constant 0 : index
    %c256_111 = arith.constant 256 : index
    %138 = vector.load %arg5[%c0_110, %c256_111] : memref<32x384xbf16, #tpu.memory_space<vmem>>, vector<15x128xbf16>
    tpu.vector_store %arg5[%c0_110, %c256_111], %137 {strides = array<i32>} : memref<32x384xbf16, #tpu.memory_space<vmem>>, vector<15x128xbf16>,
    %139 = vector.extract_strided_slice %133 {offsets = [16, 0], sizes = [15, 128], strides = [1, 1]} : vector<32x128xbf16> to vector<15x128xbf16>
    %c17_112 = arith.constant 17 : index
    %c0_113 = arith.constant 0 : index
    %140 = vector.load %arg5[%c17_112, %c0_113] : memref<32x384xbf16, #tpu.memory_space<vmem>>, vector<15x128xbf16>
    tpu.vector_store %arg5[%c17_112, %c0_113], %139 {strides = array<i32>} : memref<32x384xbf16, #tpu.memory_space<vmem>>, vector<15x128xbf16>,
    %141 = vector.extract_strided_slice %133 {offsets = [17, 0], sizes = [15, 128], strides = [1, 1]} : vector<32x128xbf16> to vector<15x128xbf16>
    %c16_114 = arith.constant 16 : index
    %c256_115 = arith.constant 256 : index
    %142 = vector.load %arg5[%c16_114, %c256_115] : memref<32x384xbf16, #tpu.memory_space<vmem>>, vector<15x128xbf16>
    tpu.vector_store %arg5[%c16_114, %c256_115], %141 {strides = array<i32>} : memref<32x384xbf16, #tpu.memory_space<vmem>>, vector<15x128xbf16>,
    %c0_116 = arith.constant 0 : index
    %c0_117 = arith.constant 0 : index
    %143 = vector.load %arg5[%c0_116, %c0_117] : memref<32x384xbf16, #tpu.memory_space<vmem>>, vector<32x384xbf16>
    %c4_118 = arith.constant 4 : index
    %c0_119 = arith.constant 0 : index
    %c0_120 = arith.constant 0 : index
    %144 = vector.load %arg2[%c4_118, %c0_119, %c0_120] : memref<9x384x128xbf16, #tpu.memory_space<vmem>>, vector<1x384x128xbf16>
    %145 = vector.shape_cast %144 : vector<1x384x128xbf16> to vector<384x128xbf16>
    %cst_121 = arith.constant dense<0.000000e+00> : vector<32x128xf32>
    %146 = tpu.matmul %143, %145, %cst_121 {dimension_numbers = #tpu.dot_dimension_numbers<[1], [0], [0], [1], [0, 0, 1, 1], [], []>} : vector<32x384xbf16>, vector<384x128xbf16>, vector<32x128xf32> -> vector<32x128xf32>
    %147 = arith.addf %93, %146 : vector<32x128xf32>
    %c16_i32_122 = arith.constant 16 : i32
    %148 = tpu.dynamic_rotate %146 by %c16_i32_122 dim 1 : vector<32x128xf32>, i32 -> vector<32x128xf32>
    %cst_123 = arith.constant 0xFF800000 : f32
    %149 = vector.broadcast %cst_123 : f32 to vector<32x128xf32>
    %150 = arith.select %12, %148, %149 : vector<32x128xi1>, vector<32x128xf32>
    %151 = arith.maximumf %146, %150 : vector<32x128xf32>
    %c8_i32_124 = arith.constant 8 : i32
    %152 = tpu.dynamic_rotate %146 by %c8_i32_124 dim 1 : vector<32x128xf32>, i32 -> vector<32x128xf32>
    %cst_125 = arith.constant 0xFF800000 : f32
    %153 = vector.broadcast %cst_125 : f32 to vector<32x128xf32>
    %154 = arith.select %14, %152, %153 : vector<32x128xi1>, vector<32x128xf32>
    %155 = arith.maximumf %151, %154 : vector<32x128xf32>
    %c120_i32_126 = arith.constant 120 : i32
    %156 = tpu.dynamic_rotate %146 by %c120_i32_126 dim 1 : vector<32x128xf32>, i32 -> vector<32x128xf32>
    %cst_127 = arith.constant 0xFF800000 : f32
    %157 = vector.broadcast %cst_127 : f32 to vector<32x128xf32>
    %158 = arith.select %16, %156, %157 : vector<32x128xi1>, vector<32x128xf32>
    %159 = arith.maximumf %155, %158 : vector<32x128xf32>
    %c112_i32_128 = arith.constant 112 : i32
    %160 = tpu.dynamic_rotate %146 by %c112_i32_128 dim 1 : vector<32x128xf32>, i32 -> vector<32x128xf32>
    %cst_129 = arith.constant 0xFF800000 : f32
    %161 = vector.broadcast %cst_129 : f32 to vector<32x128xf32>
    %162 = arith.select %18, %160, %161 : vector<32x128xi1>, vector<32x128xf32>
    %163 = arith.maximumf %159, %162 : vector<32x128xf32>
    %164 = vector.extract_strided_slice %163 {offsets = [0, 0], sizes = [16, 128], strides = [1, 1]} : vector<32x128xf32> to vector<16x128xf32>
    %c2_130 = arith.constant 2 : index
    %c0_131 = arith.constant 0 : index
    %165 = vector.load %arg6[%c2_130, %c0_131] : memref<40x128xf32, #tpu.memory_space<vmem>>, vector<16x128xf32>
    tpu.vector_store %arg6[%c2_130, %c0_131], %164 {strides = array<i32>} : memref<40x128xf32, #tpu.memory_space<vmem>>, vector<16x128xf32>,
    %166 = vector.extract_strided_slice %163 {offsets = [16, 0], sizes = [16, 128], strides = [1, 1]} : vector<32x128xf32> to vector<16x128xf32>
    %c22_132 = arith.constant 22 : index
    %c0_133 = arith.constant 0 : index
    %167 = vector.load %arg6[%c22_132, %c0_133] : memref<40x128xf32, #tpu.memory_space<vmem>>, vector<16x128xf32>
    tpu.vector_store %arg6[%c22_132, %c0_133], %166 {strides = array<i32>} : memref<40x128xf32, #tpu.memory_space<vmem>>, vector<16x128xf32>,
    %c0_134 = arith.constant 0 : index
    %c0_135 = arith.constant 0 : index
    %168 = vector.load %arg6[%c0_134, %c0_135] : memref<40x128xf32, #tpu.memory_space<vmem>>, vector<16x128xf32>
    %c1_136 = arith.constant 1 : index
    %c0_137 = arith.constant 0 : index
    %169 = vector.load %arg6[%c1_136, %c0_137] : memref<40x128xf32, #tpu.memory_space<vmem>>, vector<16x128xf32>
    %170 = arith.maximumf %168, %169 : vector<16x128xf32>
    %c2_138 = arith.constant 2 : index
    %c0_139 = arith.constant 0 : index
    %171 = vector.load %arg6[%c2_138, %c0_139] : memref<40x128xf32, #tpu.memory_space<vmem>>, vector<16x128xf32>
    %172 = arith.maximumf %170, %171 : vector<16x128xf32>
    %c3_140 = arith.constant 3 : index
    %c0_141 = arith.constant 0 : index
    %173 = vector.load %arg6[%c3_140, %c0_141] : memref<40x128xf32, #tpu.memory_space<vmem>>, vector<16x128xf32>
    %174 = arith.maximumf %172, %173 : vector<16x128xf32>
    %c4_142 = arith.constant 4 : index
    %c0_143 = arith.constant 0 : index
    %175 = vector.load %arg6[%c4_142, %c0_143] : memref<40x128xf32, #tpu.memory_space<vmem>>, vector<16x128xf32>
    %176 = arith.maximumf %174, %175 : vector<16x128xf32>
    %c20_144 = arith.constant 20 : index
    %c0_145 = arith.constant 0 : index
    %177 = vector.load %arg6[%c20_144, %c0_145] : memref<40x128xf32, #tpu.memory_space<vmem>>, vector<16x128xf32>
    %c21_146 = arith.constant 21 : index
    %c0_147 = arith.constant 0 : index
    %178 = vector.load %arg6[%c21_146, %c0_147] : memref<40x128xf32, #tpu.memory_space<vmem>>, vector<16x128xf32>
    %179 = arith.maximumf %177, %178 : vector<16x128xf32>
    %c22_148 = arith.constant 22 : index
    %c0_149 = arith.constant 0 : index
    %180 = vector.load %arg6[%c22_148, %c0_149] : memref<40x128xf32, #tpu.memory_space<vmem>>, vector<16x128xf32>
    %181 = arith.maximumf %179, %180 : vector<16x128xf32>
    %c23_150 = arith.constant 23 : index
    %c0_151 = arith.constant 0 : index
    %182 = vector.load %arg6[%c23_150, %c0_151] : memref<40x128xf32, #tpu.memory_space<vmem>>, vector<16x128xf32>
    %183 = arith.maximumf %181, %182 : vector<16x128xf32>
    %c24_152 = arith.constant 24 : index
    %c0_153 = arith.constant 0 : index
    %184 = vector.load %arg6[%c24_152, %c0_153] : memref<40x128xf32, #tpu.memory_space<vmem>>, vector<16x128xf32>
    %185 = arith.maximumf %183, %184 : vector<16x128xf32>
    %186 = tpu.concatenate %176, %185 in 0 : vector<16x128xf32>, vector<16x128xf32> -> vector<32x128xf32>
    %187 = arith.truncf %186 : vector<32x128xf32> to vector<32x128xbf16>
    %c0_154 = arith.constant 0 : index
    %c128_155 = arith.constant 128 : index
    %188 = vector.load %arg5[%c0_154, %c128_155] : memref<32x384xbf16, #tpu.memory_space<vmem>>, vector<32x128xbf16>
    tpu.vector_store %arg5[%c0_154, %c128_155], %187 {strides = array<i32>} : memref<32x384xbf16, #tpu.memory_space<vmem>>, vector<32x128xbf16>,
    %189 = vector.extract_strided_slice %187 {offsets = [0, 0], sizes = [15, 128], strides = [1, 1]} : vector<32x128xbf16> to vector<15x128xbf16>
    %c1_156 = arith.constant 1 : index
    %c0_157 = arith.constant 0 : index
    %190 = vector.load %arg5[%c1_156, %c0_157] : memref<32x384xbf16, #tpu.memory_space<vmem>>, vector<15x128xbf16>
    tpu.vector_store %arg5[%c1_156, %c0_157], %189 {strides = array<i32>} : memref<32x384xbf16, #tpu.memory_space<vmem>>, vector<15x128xbf16>,
    %191 = vector.extract_strided_slice %187 {offsets = [1, 0], sizes = [15, 128], strides = [1, 1]} : vector<32x128xbf16> to vector<15x128xbf16>
    %c0_158 = arith.constant 0 : index
    %c256_159 = arith.constant 256 : index
    %192 = vector.load %arg5[%c0_158, %c256_159] : memref<32x384xbf16, #tpu.memory_space<vmem>>, vector<15x128xbf16>
    tpu.vector_store %arg5[%c0_158, %c256_159], %191 {strides = array<i32>} : memref<32x384xbf16, #tpu.memory_space<vmem>>, vector<15x128xbf16>,
    %193 = vector.extract_strided_slice %187 {offsets = [16, 0], sizes = [15, 128], strides = [1, 1]} : vector<32x128xbf16> to vector<15x128xbf16>
    %c17_160 = arith.constant 17 : index
    %c0_161 = arith.constant 0 : index
    %194 = vector.load %arg5[%c17_160, %c0_161] : memref<32x384xbf16, #tpu.memory_space<vmem>>, vector<15x128xbf16>
    tpu.vector_store %arg5[%c17_160, %c0_161], %193 {strides = array<i32>} : memref<32x384xbf16, #tpu.memory_space<vmem>>, vector<15x128xbf16>,
    %195 = vector.extract_strided_slice %187 {offsets = [17, 0], sizes = [15, 128], strides = [1, 1]} : vector<32x128xbf16> to vector<15x128xbf16>
    %c16_162 = arith.constant 16 : index
    %c256_163 = arith.constant 256 : index
    %196 = vector.load %arg5[%c16_162, %c256_163] : memref<32x384xbf16, #tpu.memory_space<vmem>>, vector<15x128xbf16>
    tpu.vector_store %arg5[%c16_162, %c256_163], %195 {strides = array<i32>} : memref<32x384xbf16, #tpu.memory_space<vmem>>, vector<15x128xbf16>,
    %c0_164 = arith.constant 0 : index
    %c0_165 = arith.constant 0 : index
    %197 = vector.load %arg5[%c0_164, %c0_165] : memref<32x384xbf16, #tpu.memory_space<vmem>>, vector<32x384xbf16>
    %c5 = arith.constant 5 : index
    %c0_166 = arith.constant 0 : index
    %c0_167 = arith.constant 0 : index
    %198 = vector.load %arg2[%c5, %c0_166, %c0_167] : memref<9x384x128xbf16, #tpu.memory_space<vmem>>, vector<1x384x128xbf16>
    %199 = vector.shape_cast %198 : vector<1x384x128xbf16> to vector<384x128xbf16>
    %cst_168 = arith.constant dense<0.000000e+00> : vector<32x128xf32>
    %200 = tpu.matmul %197, %199, %cst_168 {dimension_numbers = #tpu.dot_dimension_numbers<[1], [0], [0], [1], [0, 0, 1, 1], [], []>} : vector<32x384xbf16>, vector<384x128xbf16>, vector<32x128xf32> -> vector<32x128xf32>
    %201 = arith.addf %147, %200 : vector<32x128xf32>
    %c16_i32_169 = arith.constant 16 : i32
    %202 = tpu.dynamic_rotate %200 by %c16_i32_169 dim 1 : vector<32x128xf32>, i32 -> vector<32x128xf32>
    %cst_170 = arith.constant 0xFF800000 : f32
    %203 = vector.broadcast %cst_170 : f32 to vector<32x128xf32>
    %204 = arith.select %12, %202, %203 : vector<32x128xi1>, vector<32x128xf32>
    %205 = arith.maximumf %200, %204 : vector<32x128xf32>
    %c8_i32_171 = arith.constant 8 : i32
    %206 = tpu.dynamic_rotate %200 by %c8_i32_171 dim 1 : vector<32x128xf32>, i32 -> vector<32x128xf32>
    %cst_172 = arith.constant 0xFF800000 : f32
    %207 = vector.broadcast %cst_172 : f32 to vector<32x128xf32>
    %208 = arith.select %14, %206, %207 : vector<32x128xi1>, vector<32x128xf32>
    %209 = arith.maximumf %205, %208 : vector<32x128xf32>
    %c120_i32_173 = arith.constant 120 : i32
    %210 = tpu.dynamic_rotate %200 by %c120_i32_173 dim 1 : vector<32x128xf32>, i32 -> vector<32x128xf32>
    %cst_174 = arith.constant 0xFF800000 : f32
    %211 = vector.broadcast %cst_174 : f32 to vector<32x128xf32>
    %212 = arith.select %16, %210, %211 : vector<32x128xi1>, vector<32x128xf32>
    %213 = arith.maximumf %209, %212 : vector<32x128xf32>
    %c112_i32_175 = arith.constant 112 : i32
    %214 = tpu.dynamic_rotate %200 by %c112_i32_175 dim 1 : vector<32x128xf32>, i32 -> vector<32x128xf32>
    %cst_176 = arith.constant 0xFF800000 : f32
    %215 = vector.broadcast %cst_176 : f32 to vector<32x128xf32>
    %216 = arith.select %18, %214, %215 : vector<32x128xi1>, vector<32x128xf32>
    %217 = arith.maximumf %213, %216 : vector<32x128xf32>
    %218 = vector.extract_strided_slice %217 {offsets = [0, 0], sizes = [16, 128], strides = [1, 1]} : vector<32x128xf32> to vector<16x128xf32>
    %c2_177 = arith.constant 2 : index
    %c0_178 = arith.constant 0 : index
    %219 = vector.load %arg6[%c2_177, %c0_178] : memref<40x128xf32, #tpu.memory_space<vmem>>, vector<16x128xf32>
    tpu.vector_store %arg6[%c2_177, %c0_178], %218 {strides = array<i32>} : memref<40x128xf32, #tpu.memory_space<vmem>>, vector<16x128xf32>,
    %220 = vector.extract_strided_slice %217 {offsets = [16, 0], sizes = [16, 128], strides = [1, 1]} : vector<32x128xf32> to vector<16x128xf32>
    %c22_179 = arith.constant 22 : index
    %c0_180 = arith.constant 0 : index
    %221 = vector.load %arg6[%c22_179, %c0_180] : memref<40x128xf32, #tpu.memory_space<vmem>>, vector<16x128xf32>
    tpu.vector_store %arg6[%c22_179, %c0_180], %220 {strides = array<i32>} : memref<40x128xf32, #tpu.memory_space<vmem>>, vector<16x128xf32>,
    %c0_181 = arith.constant 0 : index
    %c0_182 = arith.constant 0 : index
    %222 = vector.load %arg6[%c0_181, %c0_182] : memref<40x128xf32, #tpu.memory_space<vmem>>, vector<16x128xf32>
    %c1_183 = arith.constant 1 : index
    %c0_184 = arith.constant 0 : index
    %223 = vector.load %arg6[%c1_183, %c0_184] : memref<40x128xf32, #tpu.memory_space<vmem>>, vector<16x128xf32>
    %224 = arith.maximumf %222, %223 : vector<16x128xf32>
    %c2_185 = arith.constant 2 : index
    %c0_186 = arith.constant 0 : index
    %225 = vector.load %arg6[%c2_185, %c0_186] : memref<40x128xf32, #tpu.memory_space<vmem>>, vector<16x128xf32>
    %226 = arith.maximumf %224, %225 : vector<16x128xf32>
    %c3_187 = arith.constant 3 : index
    %c0_188 = arith.constant 0 : index
    %227 = vector.load %arg6[%c3_187, %c0_188] : memref<40x128xf32, #tpu.memory_space<vmem>>, vector<16x128xf32>
    %228 = arith.maximumf %226, %227 : vector<16x128xf32>
    %c4_189 = arith.constant 4 : index
    %c0_190 = arith.constant 0 : index
    %229 = vector.load %arg6[%c4_189, %c0_190] : memref<40x128xf32, #tpu.memory_space<vmem>>, vector<16x128xf32>
    %230 = arith.maximumf %228, %229 : vector<16x128xf32>
    %c20_191 = arith.constant 20 : index
    %c0_192 = arith.constant 0 : index
    %231 = vector.load %arg6[%c20_191, %c0_192] : memref<40x128xf32, #tpu.memory_space<vmem>>, vector<16x128xf32>
    %c21_193 = arith.constant 21 : index
    %c0_194 = arith.constant 0 : index
    %232 = vector.load %arg6[%c21_193, %c0_194] : memref<40x128xf32, #tpu.memory_space<vmem>>, vector<16x128xf32>
    %233 = arith.maximumf %231, %232 : vector<16x128xf32>
    %c22_195 = arith.constant 22 : index
    %c0_196 = arith.constant 0 : index
    %234 = vector.load %arg6[%c22_195, %c0_196] : memref<40x128xf32, #tpu.memory_space<vmem>>, vector<16x128xf32>
    %235 = arith.maximumf %233, %234 : vector<16x128xf32>
    %c23_197 = arith.constant 23 : index
    %c0_198 = arith.constant 0 : index
    %236 = vector.load %arg6[%c23_197, %c0_198] : memref<40x128xf32, #tpu.memory_space<vmem>>, vector<16x128xf32>
    %237 = arith.maximumf %235, %236 : vector<16x128xf32>
    %c24_199 = arith.constant 24 : index
    %c0_200 = arith.constant 0 : index
    %238 = vector.load %arg6[%c24_199, %c0_200] : memref<40x128xf32, #tpu.memory_space<vmem>>, vector<16x128xf32>
    %239 = arith.maximumf %237, %238 : vector<16x128xf32>
    %240 = tpu.concatenate %230, %239 in 0 : vector<16x128xf32>, vector<16x128xf32> -> vector<32x128xf32>
    %241 = arith.truncf %240 : vector<32x128xf32> to vector<32x128xbf16>
    %c0_201 = arith.constant 0 : index
    %c128_202 = arith.constant 128 : index
    %242 = vector.load %arg5[%c0_201, %c128_202] : memref<32x384xbf16, #tpu.memory_space<vmem>>, vector<32x128xbf16>
    tpu.vector_store %arg5[%c0_201, %c128_202], %241 {strides = array<i32>} : memref<32x384xbf16, #tpu.memory_space<vmem>>, vector<32x128xbf16>,
    %243 = vector.extract_strided_slice %241 {offsets = [0, 0], sizes = [15, 128], strides = [1, 1]} : vector<32x128xbf16> to vector<15x128xbf16>
    %c1_203 = arith.constant 1 : index
    %c0_204 = arith.constant 0 : index
    %244 = vector.load %arg5[%c1_203, %c0_204] : memref<32x384xbf16, #tpu.memory_space<vmem>>, vector<15x128xbf16>
    tpu.vector_store %arg5[%c1_203, %c0_204], %243 {strides = array<i32>} : memref<32x384xbf16, #tpu.memory_space<vmem>>, vector<15x128xbf16>,
    %245 = vector.extract_strided_slice %241 {offsets = [1, 0], sizes = [15, 128], strides = [1, 1]} : vector<32x128xbf16> to vector<15x128xbf16>
    %c0_205 = arith.constant 0 : index
    %c256_206 = arith.constant 256 : index
    %246 = vector.load %arg5[%c0_205, %c256_206] : memref<32x384xbf16, #tpu.memory_space<vmem>>, vector<15x128xbf16>
    tpu.vector_store %arg5[%c0_205, %c256_206], %245 {strides = array<i32>} : memref<32x384xbf16, #tpu.memory_space<vmem>>, vector<15x128xbf16>,
    %247 = vector.extract_strided_slice %241 {offsets = [16, 0], sizes = [15, 128], strides = [1, 1]} : vector<32x128xbf16> to vector<15x128xbf16>
    %c17_207 = arith.constant 17 : index
    %c0_208 = arith.constant 0 : index
    %248 = vector.load %arg5[%c17_207, %c0_208] : memref<32x384xbf16, #tpu.memory_space<vmem>>, vector<15x128xbf16>
    tpu.vector_store %arg5[%c17_207, %c0_208], %247 {strides = array<i32>} : memref<32x384xbf16, #tpu.memory_space<vmem>>, vector<15x128xbf16>,
    %249 = vector.extract_strided_slice %241 {offsets = [17, 0], sizes = [15, 128], strides = [1, 1]} : vector<32x128xbf16> to vector<15x128xbf16>
    %c16_209 = arith.constant 16 : index
    %c256_210 = arith.constant 256 : index
    %250 = vector.load %arg5[%c16_209, %c256_210] : memref<32x384xbf16, #tpu.memory_space<vmem>>, vector<15x128xbf16>
    tpu.vector_store %arg5[%c16_209, %c256_210], %249 {strides = array<i32>} : memref<32x384xbf16, #tpu.memory_space<vmem>>, vector<15x128xbf16>,
    %c0_211 = arith.constant 0 : index
    %c0_212 = arith.constant 0 : index
    %251 = vector.load %arg5[%c0_211, %c0_212] : memref<32x384xbf16, #tpu.memory_space<vmem>>, vector<32x384xbf16>
    %c6 = arith.constant 6 : index
    %c0_213 = arith.constant 0 : index
    %c0_214 = arith.constant 0 : index
    %252 = vector.load %arg2[%c6, %c0_213, %c0_214] : memref<9x384x128xbf16, #tpu.memory_space<vmem>>, vector<1x384x128xbf16>
    %253 = vector.shape_cast %252 : vector<1x384x128xbf16> to vector<384x128xbf16>
    %cst_215 = arith.constant dense<0.000000e+00> : vector<32x128xf32>
    %254 = tpu.matmul %251, %253, %cst_215 {dimension_numbers = #tpu.dot_dimension_numbers<[1], [0], [0], [1], [0, 0, 1, 1], [], []>} : vector<32x384xbf16>, vector<384x128xbf16>, vector<32x128xf32> -> vector<32x128xf32>
    %255 = arith.addf %201, %254 : vector<32x128xf32>
    %cst_216 = arith.constant 0.000000e+00 : f32
    %256 = vector.broadcast %cst_216 : f32 to vector<32x128xf32>
    %257 = arith.maximumf %255, %256 : vector<32x128xf32>
    %258 = arith.truncf %257 : vector<32x128xf32> to vector<32x128xbf16>
    %c0_217 = arith.constant 0 : index
    %c128_218 = arith.constant 128 : index
    %259 = vector.load %arg5[%c0_217, %c128_218] : memref<32x384xbf16, #tpu.memory_space<vmem>>, vector<32x128xbf16>
    tpu.vector_store %arg5[%c0_217, %c128_218], %258 {strides = array<i32>} : memref<32x384xbf16, #tpu.memory_space<vmem>>, vector<32x128xbf16>,
    %260 = vector.extract_strided_slice %258 {offsets = [0, 0], sizes = [15, 128], strides = [1, 1]} : vector<32x128xbf16> to vector<15x128xbf16>
    %c1_219 = arith.constant 1 : index
    %c0_220 = arith.constant 0 : index
    %261 = vector.load %arg5[%c1_219, %c0_220] : memref<32x384xbf16, #tpu.memory_space<vmem>>, vector<15x128xbf16>
    tpu.vector_store %arg5[%c1_219, %c0_220], %260 {strides = array<i32>} : memref<32x384xbf16, #tpu.memory_space<vmem>>, vector<15x128xbf16>,
    %262 = vector.extract_strided_slice %258 {offsets = [1, 0], sizes = [15, 128], strides = [1, 1]} : vector<32x128xbf16> to vector<15x128xbf16>
    %c0_221 = arith.constant 0 : index
    %c256_222 = arith.constant 256 : index
    %263 = vector.load %arg5[%c0_221, %c256_222] : memref<32x384xbf16, #tpu.memory_space<vmem>>, vector<15x128xbf16>
    tpu.vector_store %arg5[%c0_221, %c256_222], %262 {strides = array<i32>} : memref<32x384xbf16, #tpu.memory_space<vmem>>, vector<15x128xbf16>,
    %264 = vector.extract_strided_slice %258 {offsets = [16, 0], sizes = [15, 128], strides = [1, 1]} : vector<32x128xbf16> to vector<15x128xbf16>
    %c17_223 = arith.constant 17 : index
    %c0_224 = arith.constant 0 : index
    %265 = vector.load %arg5[%c17_223, %c0_224] : memref<32x384xbf16, #tpu.memory_space<vmem>>, vector<15x128xbf16>
    tpu.vector_store %arg5[%c17_223, %c0_224], %264 {strides = array<i32>} : memref<32x384xbf16, #tpu.memory_space<vmem>>, vector<15x128xbf16>,
    %266 = vector.extract_strided_slice %258 {offsets = [17, 0], sizes = [15, 128], strides = [1, 1]} : vector<32x128xbf16> to vector<15x128xbf16>
    %c16_225 = arith.constant 16 : index
    %c256_226 = arith.constant 256 : index
    %267 = vector.load %arg5[%c16_225, %c256_226] : memref<32x384xbf16, #tpu.memory_space<vmem>>, vector<15x128xbf16>
    tpu.vector_store %arg5[%c16_225, %c256_226], %266 {strides = array<i32>} : memref<32x384xbf16, #tpu.memory_space<vmem>>, vector<15x128xbf16>,
    %c0_227 = arith.constant 0 : index
    %c0_228 = arith.constant 0 : index
    %268 = vector.load %arg5[%c0_227, %c0_228] : memref<32x384xbf16, #tpu.memory_space<vmem>>, vector<32x384xbf16>
    %c7 = arith.constant 7 : index
    %c0_229 = arith.constant 0 : index
    %c0_230 = arith.constant 0 : index
    %269 = vector.load %arg2[%c7, %c0_229, %c0_230] : memref<9x384x128xbf16, #tpu.memory_space<vmem>>, vector<1x384x128xbf16>
    %270 = vector.shape_cast %269 : vector<1x384x128xbf16> to vector<384x128xbf16>
    %cst_231 = arith.constant dense<0.000000e+00> : vector<32x128xf32>
    %271 = tpu.matmul %268, %270, %cst_231 {dimension_numbers = #tpu.dot_dimension_numbers<[1], [0], [0], [1], [0, 0, 1, 1], [], []>} : vector<32x384xbf16>, vector<384x128xbf16>, vector<32x128xf32> -> vector<32x128xf32>
    %c2_232 = arith.constant 2 : index
    %c0_233 = arith.constant 0 : index
    %272 = vector.load %arg3[%c2_232, %c0_233] : memref<3x128xf32, #tpu.memory_space<vmem>>, vector<1x128xf32>
    %273 = vector.broadcast %272 : vector<1x128xf32> to vector<32x128xf32>
    %274 = arith.addf %271, %273 : vector<32x128xf32>
    %cst_234 = arith.constant 0.000000e+00 : f32
    %275 = vector.broadcast %cst_234 : f32 to vector<32x128xf32>
    %276 = arith.maximumf %274, %275 : vector<32x128xf32>
    %277 = arith.truncf %276 : vector<32x128xf32> to vector<32x128xbf16>
    %c0_235 = arith.constant 0 : index
    %c128_236 = arith.constant 128 : index
    %278 = vector.load %arg5[%c0_235, %c128_236] : memref<32x384xbf16, #tpu.memory_space<vmem>>, vector<32x128xbf16>
    tpu.vector_store %arg5[%c0_235, %c128_236], %277 {strides = array<i32>} : memref<32x384xbf16, #tpu.memory_space<vmem>>, vector<32x128xbf16>,
    %279 = vector.extract_strided_slice %277 {offsets = [0, 0], sizes = [15, 128], strides = [1, 1]} : vector<32x128xbf16> to vector<15x128xbf16>
    %c1_237 = arith.constant 1 : index
    %c0_238 = arith.constant 0 : index
    %280 = vector.load %arg5[%c1_237, %c0_238] : memref<32x384xbf16, #tpu.memory_space<vmem>>, vector<15x128xbf16>
    tpu.vector_store %arg5[%c1_237, %c0_238], %279 {strides = array<i32>} : memref<32x384xbf16, #tpu.memory_space<vmem>>, vector<15x128xbf16>,
    %281 = vector.extract_strided_slice %277 {offsets = [1, 0], sizes = [15, 128], strides = [1, 1]} : vector<32x128xbf16> to vector<15x128xbf16>
    %c0_239 = arith.constant 0 : index
    %c256_240 = arith.constant 256 : index
    %282 = vector.load %arg5[%c0_239, %c256_240] : memref<32x384xbf16, #tpu.memory_space<vmem>>, vector<15x128xbf16>
    tpu.vector_store %arg5[%c0_239, %c256_240], %281 {strides = array<i32>} : memref<32x384xbf16, #tpu.memory_space<vmem>>, vector<15x128xbf16>,
    %283 = vector.extract_strided_slice %277 {offsets = [16, 0], sizes = [15, 128], strides = [1, 1]} : vector<32x128xbf16> to vector<15x128xbf16>
    %c17_241 = arith.constant 17 : index
    %c0_242 = arith.constant 0 : index
    %284 = vector.load %arg5[%c17_241, %c0_242] : memref<32x384xbf16, #tpu.memory_space<vmem>>, vector<15x128xbf16>
    tpu.vector_store %arg5[%c17_241, %c0_242], %283 {strides = array<i32>} : memref<32x384xbf16, #tpu.memory_space<vmem>>, vector<15x128xbf16>,
    %285 = vector.extract_strided_slice %277 {offsets = [17, 0], sizes = [15, 128], strides = [1, 1]} : vector<32x128xbf16> to vector<15x128xbf16>
    %c16_243 = arith.constant 16 : index
    %c256_244 = arith.constant 256 : index
    %286 = vector.load %arg5[%c16_243, %c256_244] : memref<32x384xbf16, #tpu.memory_space<vmem>>, vector<15x128xbf16>
    tpu.vector_store %arg5[%c16_243, %c256_244], %285 {strides = array<i32>} : memref<32x384xbf16, #tpu.memory_space<vmem>>, vector<15x128xbf16>,
    %c0_245 = arith.constant 0 : index
    %c0_246 = arith.constant 0 : index
    %287 = vector.load %arg5[%c0_245, %c0_246] : memref<32x384xbf16, #tpu.memory_space<vmem>>, vector<32x384xbf16>
    %c8 = arith.constant 8 : index
    %c0_247 = arith.constant 0 : index
    %c0_248 = arith.constant 0 : index
    %288 = vector.load %arg2[%c8, %c0_247, %c0_248] : memref<9x384x128xbf16, #tpu.memory_space<vmem>>, vector<1x384x128xbf16>
    %289 = vector.shape_cast %288 : vector<1x384x128xbf16> to vector<384x128xbf16>
    %cst_249 = arith.constant dense<0.000000e+00> : vector<32x128xf32>
    %290 = tpu.matmul %287, %289, %cst_249 {dimension_numbers = #tpu.dot_dimension_numbers<[1], [0], [0], [1], [0, 0, 1, 1], [], []>} : vector<32x384xbf16>, vector<384x128xbf16>, vector<32x128xf32> -> vector<32x128xf32>
    %291 = arith.addf %257, %290 : vector<32x128xf32>
    %c0_250 = arith.constant 0 : index
    %c0_251 = arith.constant 0 : index
    %292 = vector.load %arg4[%c0_250, %c0_251] : memref<32x128xf32, #tpu.memory_space<vmem>>, vector<32x128xf32>
    tpu.vector_store %arg4[%c0_250, %c0_251], %291 {strides = array<i32>} : memref<32x128xf32, #tpu.memory_space<vmem>>, vector<32x128xf32>,
    return
  }
  func.func @transform_0(%arg0: i32) -> (i32, i32) {
    %c0_i32 = arith.constant 0 : i32
    %c0_i32_0 = arith.constant 0 : i32
    return %arg0, %c0_i32 : i32, i32
  }
  func.func @transform_1(%arg0: i32) -> (i32, i32, i32) {
    %c0_i32 = arith.constant 0 : i32
    %c0_i32_0 = arith.constant 0 : i32
    %c0_i32_1 = arith.constant 0 : i32
    %c0_i32_2 = arith.constant 0 : i32
    return %c0_i32, %c0_i32_0, %c0_i32_1 : i32, i32, i32
  }
  func.func @transform_2(%arg0: i32) -> (i32, i32) {
    %c0_i32 = arith.constant 0 : i32
    %c0_i32_0 = arith.constant 0 : i32
    %c0_i32_1 = arith.constant 0 : i32
    return %c0_i32, %c0_i32_0 : i32, i32
  }
  func.func @transform_3(%arg0: i32) -> (i32, i32) {
    %c0_i32 = arith.constant 0 : i32
    %c0_i32_0 = arith.constant 0 : i32
    return %arg0, %c0_i32 : i32, i32
  }
}

module attributes {stable_mosaic.version = 11 : i64} {
  func.func @_refinenet_block_kernel(%arg0: i32, %arg1: memref<32x128xf32, #tpu.memory_space<vmem>>, %arg2: memref<9x384x128xbf16, #tpu.memory_space<vmem>>, %arg3: memref<3x128xf32, #tpu.memory_space<vmem>>, %arg4: memref<32x128xf32, #tpu.memory_space<vmem>>, %arg5: memref<32x384xbf16, #tpu.memory_space<vmem>>, %arg6: memref<40x128xf32, #tpu.memory_space<vmem>>) attributes {dimension_semantics = [#tpu.dimension_semantics<parallel>], iteration_bounds = array<i64: 2>, scalar_prefetch = 0 : i64, scratch_operands = 2 : i64, tpu.core_type = #tpu.core_type<tc>, window_params = [{transform_indices = @transform_0, window_bounds = array<i64: 32, 128>}, {pipeline_mode = #tpu.pipeline_mode<synchronous>, transform_indices = @transform_1, window_bounds = array<i64: 9, 384, 128>}, {pipeline_mode = #tpu.pipeline_mode<synchronous>, transform_indices = @transform_2, window_bounds = array<i64: 3, 128>}, {transform_indices = @transform_3, window_bounds = array<i64: 32, 128>}]} {
    %cst = arith.constant 0.000000e+00 : bf16
    %0 = vector.broadcast %cst : bf16 to vector<1x128xbf16>
    %cst_0 = arith.constant 0xFF800000 : f32
    %1 = vector.broadcast %cst_0 : f32 to vector<2x128xf32>
    %c0 = arith.constant 0 : index
    %c0_1 = arith.constant 0 : index
    %2 = vector.load %arg5[%c0, %c0_1] : memref<32x384xbf16, #tpu.memory_space<vmem>>, vector<1x128xbf16>
    tpu.vector_store %arg5[%c0, %c0_1], %0 {strides = array<i32>} : memref<32x384xbf16, #tpu.memory_space<vmem>>, vector<1x128xbf16>,
    %c15 = arith.constant 15 : index
    %c256 = arith.constant 256 : index
    %3 = vector.load %arg5[%c15, %c256] : memref<32x384xbf16, #tpu.memory_space<vmem>>, vector<1x128xbf16>
    tpu.vector_store %arg5[%c15, %c256], %0 {strides = array<i32>} : memref<32x384xbf16, #tpu.memory_space<vmem>>, vector<1x128xbf16>,
    %c0_2 = arith.constant 0 : index
    %c0_3 = arith.constant 0 : index
    %4 = vector.load %arg6[%c0_2, %c0_3] : memref<40x128xf32, #tpu.memory_space<vmem>>, vector<2x128xf32>
    tpu.vector_store %arg6[%c0_2, %c0_3], %1 {strides = array<i32>} : memref<40x128xf32, #tpu.memory_space<vmem>>, vector<2x128xf32>,
    %c18 = arith.constant 18 : index
    %c0_4 = arith.constant 0 : index
    %5 = vector.load %arg6[%c18, %c0_4] : memref<40x128xf32, #tpu.memory_space<vmem>>, vector<2x128xf32>
    tpu.vector_store %arg6[%c18, %c0_4], %1 {strides = array<i32>} : memref<40x128xf32, #tpu.memory_space<vmem>>, vector<2x128xf32>,
    %c16 = arith.constant 16 : index
    %c0_5 = arith.constant 0 : index
    %6 = vector.load %arg5[%c16, %c0_5] : memref<32x384xbf16, #tpu.memory_space<vmem>>, vector<1x128xbf16>
    tpu.vector_store %arg5[%c16, %c0_5], %0 {strides = array<i32>} : memref<32x384xbf16, #tpu.memory_space<vmem>>, vector<1x128xbf16>,
    %c31 = arith.constant 31 : index
    %c256_6 = arith.constant 256 : index
    %7 = vector.load %arg5[%c31, %c256_6] : memref<32x384xbf16, #tpu.memory_space<vmem>>, vector<1x128xbf16>
    tpu.vector_store %arg5[%c31, %c256_6], %0 {strides = array<i32>} : memref<32x384xbf16, #tpu.memory_space<vmem>>, vector<1x128xbf16>,
    %c20 = arith.constant 20 : index
    %c0_7 = arith.constant 0 : index
    %8 = vector.load %arg6[%c20, %c0_7] : memref<40x128xf32, #tpu.memory_space<vmem>>, vector<2x128xf32>
    tpu.vector_store %arg6[%c20, %c0_7], %1 {strides = array<i32>} : memref<40x128xf32, #tpu.memory_space<vmem>>, vector<2x128xf32>,
    %c38 = arith.constant 38 : index
    %c0_8 = arith.constant 0 : index
    %9 = vector.load %arg6[%c38, %c0_8] : memref<40x128xf32, #tpu.memory_space<vmem>>, vector<2x128xf32>
    tpu.vector_store %arg6[%c38, %c0_8], %1 {strides = array<i32>} : memref<40x128xf32, #tpu.memory_space<vmem>>, vector<2x128xf32>,
    %10 = tpu.iota {dimensions = array<i32: 1>} : vector<32x128xi32>
    %c16_i32 = arith.constant 16 : i32
    %11 = vector.broadcast %c16_i32 : i32 to vector<32x128xi32>
    %12 = arith.cmpi sge, %10, %11 : vector<32x128xi32>
    %c8_i32 = arith.constant 8 : i32
    %13 = vector.broadcast %c8_i32 : i32 to vector<32x128xi32>
    %14 = arith.cmpi sge, %10, %13 : vector<32x128xi32>
    %c120_i32 = arith.constant 120 : i32
    %15 = vector.broadcast %c120_i32 : i32 to vector<32x128xi32>
    %16 = arith.cmpi slt, %10, %15 : vector<32x128xi32>
    %c112_i32 = arith.constant 112 : i32
    %17 = vector.broadcast %c112_i32 : i32 to vector<32x128xi32>
    %18 = arith.cmpi slt, %10, %17 : vector<32x128xi32>
    %c0_9 = arith.constant 0 : index
    %c0_10 = arith.constant 0 : index
    %19 = vector.load %arg1[%c0_9, %c0_10] : memref<32x128xf32, #tpu.memory_space<vmem>>, vector<32x128xf32>
    %cst_11 = arith.constant 0.000000e+00 : f32
    %20 = vector.broadcast %cst_11 : f32 to vector<32x128xf32>
    %21 = arith.maximumf %19, %20 : vector<32x128xf32>
    %22 = arith.truncf %21 : vector<32x128xf32> to vector<32x128xbf16>
    %c0_12 = arith.constant 0 : index
    %c128 = arith.constant 128 : index
    %23 = vector.load %arg5[%c0_12, %c128] : memref<32x384xbf16, #tpu.memory_space<vmem>>, vector<32x128xbf16>
    tpu.vector_store %arg5[%c0_12, %c128], %22 {strides = array<i32>} : memref<32x384xbf16, #tpu.memory_space<vmem>>, vector<32x128xbf16>,
    %24 = vector.extract_strided_slice %22 {offsets = [0, 0], sizes = [15, 128], strides = [1, 1]} : vector<32x128xbf16> to vector<15x128xbf16>
    %c1 = arith.constant 1 : index
    %c0_13 = arith.constant 0 : index
    %25 = vector.load %arg5[%c1, %c0_13] : memref<32x384xbf16, #tpu.memory_space<vmem>>, vector<15x128xbf16>
    tpu.vector_store %arg5[%c1, %c0_13], %24 {strides = array<i32>} : memref<32x384xbf16, #tpu.memory_space<vmem>>, vector<15x128xbf16>,
    %26 = vector.extract_strided_slice %22 {offsets = [1, 0], sizes = [15, 128], strides = [1, 1]} : vector<32x128xbf16> to vector<15x128xbf16>
    %c0_14 = arith.constant 0 : index
    %c256_15 = arith.constant 256 : index
    %27 = vector.load %arg5[%c0_14, %c256_15] : memref<32x384xbf16, #tpu.memory_space<vmem>>, vector<15x128xbf16>
    tpu.vector_store %arg5[%c0_14, %c256_15], %26 {strides = array<i32>} : memref<32x384xbf16, #tpu.memory_space<vmem>>, vector<15x128xbf16>,
    %28 = vector.extract_strided_slice %22 {offsets = [16, 0], sizes = [15, 128], strides = [1, 1]} : vector<32x128xbf16> to vector<15x128xbf16>
    %c17 = arith.constant 17 : index
    %c0_16 = arith.constant 0 : index
    %29 = vector.load %arg5[%c17, %c0_16] : memref<32x384xbf16, #tpu.memory_space<vmem>>, vector<15x128xbf16>
    tpu.vector_store %arg5[%c17, %c0_16], %28 {strides = array<i32>} : memref<32x384xbf16, #tpu.memory_space<vmem>>, vector<15x128xbf16>,
    %30 = vector.extract_strided_slice %22 {offsets = [17, 0], sizes = [15, 128], strides = [1, 1]} : vector<32x128xbf16> to vector<15x128xbf16>
    %c16_17 = arith.constant 16 : index
    %c256_18 = arith.constant 256 : index
    %31 = vector.load %arg5[%c16_17, %c256_18] : memref<32x384xbf16, #tpu.memory_space<vmem>>, vector<15x128xbf16>
    tpu.vector_store %arg5[%c16_17, %c256_18], %30 {strides = array<i32>} : memref<32x384xbf16, #tpu.memory_space<vmem>>, vector<15x128xbf16>,
    %c0_19 = arith.constant 0 : index
    %c0_20 = arith.constant 0 : index
    %32 = vector.load %arg5[%c0_19, %c0_20] : memref<32x384xbf16, #tpu.memory_space<vmem>>, vector<32x384xbf16>
    %c0_21 = arith.constant 0 : index
    %c0_22 = arith.constant 0 : index
    %c0_23 = arith.constant 0 : index
    %33 = vector.load %arg2[%c0_21, %c0_22, %c0_23] : memref<9x384x128xbf16, #tpu.memory_space<vmem>>, vector<1x384x128xbf16>
    %34 = vector.shape_cast %33 : vector<1x384x128xbf16> to vector<384x128xbf16>
    %cst_24 = arith.constant dense<0.000000e+00> : vector<32x128xf32>
    %35 = tpu.matmul %32, %34, %cst_24 {dimension_numbers = #tpu.dot_dimension_numbers<[1], [0], [0], [1], [0, 0, 1, 1], [], []>} : vector<32x384xbf16>, vector<384x128xbf16>, vector<32x128xf32> -> vector<32x128xf32>
    %c0_25 = arith.constant 0 : index
    %c0_26 = arith.constant 0 : index
    %36 = vector.load %arg3[%c0_25, %c0_26] : memref<3x128xf32, #tpu.memory_space<vmem>>, vector<1x128xf32>
    %37 = vector.broadcast %36 : vector<1x128xf32> to vector<32x128xf32>
    %38 = arith.addf %35, %37 : vector<32x128xf32>
    %cst_27 = arith.constant 0.000000e+00 : f32
    %39 = vector.broadcast %cst_27 : f32 to vector<32x128xf32>
    %40 = arith.maximumf %38, %39 : vector<32x128xf32>
    %41 = arith.truncf %40 : vector<32x128xf32> to vector<32x128xbf16>
    %c0_28 = arith.constant 0 : index
    %c128_29 = arith.constant 128 : index
    %42 = vector.load %arg5[%c0_28, %c128_29] : memref<32x384xbf16, #tpu.memory_space<vmem>>, vector<32x128xbf16>
    tpu.vector_store %arg5[%c0_28, %c128_29], %41 {strides = array<i32>} : memref<32x384xbf16, #tpu.memory_space<vmem>>, vector<32x128xbf16>,
    %43 = vector.extract_strided_slice %41 {offsets = [0, 0], sizes = [15, 128], strides = [1, 1]} : vector<32x128xbf16> to vector<15x128xbf16>
    %c1_30 = arith.constant 1 : index
    %c0_31 = arith.constant 0 : index
    %44 = vector.load %arg5[%c1_30, %c0_31] : memref<32x384xbf16, #tpu.memory_space<vmem>>, vector<15x128xbf16>
    tpu.vector_store %arg5[%c1_30, %c0_31], %43 {strides = array<i32>} : memref<32x384xbf16, #tpu.memory_space<vmem>>, vector<15x128xbf16>,
    %45 = vector.extract_strided_slice %41 {offsets = [1, 0], sizes = [15, 128], strides = [1, 1]} : vector<32x128xbf16> to vector<15x128xbf16>
    %c0_32 = arith.constant 0 : index
    %c256_33 = arith.constant 256 : index
    %46 = vector.load %arg5[%c0_32, %c256_33] : memref<32x384xbf16, #tpu.memory_space<vmem>>, vector<15x128xbf16>
    tpu.vector_store %arg5[%c0_32, %c256_33], %45 {strides = array<i32>} : memref<32x384xbf16, #tpu.memory_space<vmem>>, vector<15x128xbf16>,
    %47 = vector.extract_strided_slice %41 {offsets = [16, 0], sizes = [15, 128], strides = [1, 1]} : vector<32x128xbf16> to vector<15x128xbf16>
    %c17_34 = arith.constant 17 : index
    %c0_35 = arith.constant 0 : index
    %48 = vector.load %arg5[%c17_34, %c0_35] : memref<32x384xbf16, #tpu.memory_space<vmem>>, vector<15x128xbf16>
    tpu.vector_store %arg5[%c17_34, %c0_35], %47 {strides = array<i32>} : memref<32x384xbf16, #tpu.memory_space<vmem>>, vector<15x128xbf16>,
    %49 = vector.extract_strided_slice %41 {offsets = [17, 0], sizes = [15, 128], strides = [1, 1]} : vector<32x128xbf16> to vector<15x128xbf16>
    %c16_36 = arith.constant 16 : index
    %c256_37 = arith.constant 256 : index
    %50 = vector.load %arg5[%c16_36, %c256_37] : memref<32x384xbf16, #tpu.memory_space<vmem>>, vector<15x128xbf16>
    tpu.vector_store %arg5[%c16_36, %c256_37], %49 {strides = array<i32>} : memref<32x384xbf16, #tpu.memory_space<vmem>>, vector<15x128xbf16>,
    %c0_38 = arith.constant 0 : index
    %c0_39 = arith.constant 0 : index
    %51 = vector.load %arg5[%c0_38, %c0_39] : memref<32x384xbf16, #tpu.memory_space<vmem>>, vector<32x384xbf16>
    %c1_40 = arith.constant 1 : index
    %c0_41 = arith.constant 0 : index
    %c0_42 = arith.constant 0 : index
    %52 = vector.load %arg2[%c1_40, %c0_41, %c0_42] : memref<9x384x128xbf16, #tpu.memory_space<vmem>>, vector<1x384x128xbf16>
    %53 = vector.shape_cast %52 : vector<1x384x128xbf16> to vector<384x128xbf16>
    %cst_43 = arith.constant dense<0.000000e+00> : vector<32x128xf32>
    %54 = tpu.matmul %51, %53, %cst_43 {dimension_numbers = #tpu.dot_dimension_numbers<[1], [0], [0], [1], [0, 0, 1, 1], [], []>} : vector<32x384xbf16>, vector<384x128xbf16>, vector<32x128xf32> -> vector<32x128xf32>
    %55 = arith.addf %21, %54 : vector<32x128xf32>
    %cst_44 = arith.constant 0.000000e+00 : f32
    %56 = vector.broadcast %cst_44 : f32 to vector<32x128xf32>
    %57 = arith.maximumf %55, %56 : vector<32x128xf32>
    %58 = arith.truncf %57 : vector<32x128xf32> to vector<32x128xbf16>
    %c0_45 = arith.constant 0 : index
    %c128_46 = arith.constant 128 : index
    %59 = vector.load %arg5[%c0_45, %c128_46] : memref<32x384xbf16, #tpu.memory_space<vmem>>, vector<32x128xbf16>
    tpu.vector_store %arg5[%c0_45, %c128_46], %58 {strides = array<i32>} : memref<32x384xbf16, #tpu.memory_space<vmem>>, vector<32x128xbf16>,
    %60 = vector.extract_strided_slice %58 {offsets = [0, 0], sizes = [15, 128], strides = [1, 1]} : vector<32x128xbf16> to vector<15x128xbf16>
    %c1_47 = arith.constant 1 : index
    %c0_48 = arith.constant 0 : index
    %61 = vector.load %arg5[%c1_47, %c0_48] : memref<32x384xbf16, #tpu.memory_space<vmem>>, vector<15x128xbf16>
    tpu.vector_store %arg5[%c1_47, %c0_48], %60 {strides = array<i32>} : memref<32x384xbf16, #tpu.memory_space<vmem>>, vector<15x128xbf16>,
    %62 = vector.extract_strided_slice %58 {offsets = [1, 0], sizes = [15, 128], strides = [1, 1]} : vector<32x128xbf16> to vector<15x128xbf16>
    %c0_49 = arith.constant 0 : index
    %c256_50 = arith.constant 256 : index
    %63 = vector.load %arg5[%c0_49, %c256_50] : memref<32x384xbf16, #tpu.memory_space<vmem>>, vector<15x128xbf16>
    tpu.vector_store %arg5[%c0_49, %c256_50], %62 {strides = array<i32>} : memref<32x384xbf16, #tpu.memory_space<vmem>>, vector<15x128xbf16>,
    %64 = vector.extract_strided_slice %58 {offsets = [16, 0], sizes = [15, 128], strides = [1, 1]} : vector<32x128xbf16> to vector<15x128xbf16>
    %c17_51 = arith.constant 17 : index
    %c0_52 = arith.constant 0 : index
    %65 = vector.load %arg5[%c17_51, %c0_52] : memref<32x384xbf16, #tpu.memory_space<vmem>>, vector<15x128xbf16>
    tpu.vector_store %arg5[%c17_51, %c0_52], %64 {strides = array<i32>} : memref<32x384xbf16, #tpu.memory_space<vmem>>, vector<15x128xbf16>,
    %66 = vector.extract_strided_slice %58 {offsets = [17, 0], sizes = [15, 128], strides = [1, 1]} : vector<32x128xbf16> to vector<15x128xbf16>
    %c16_53 = arith.constant 16 : index
    %c256_54 = arith.constant 256 : index
    %67 = vector.load %arg5[%c16_53, %c256_54] : memref<32x384xbf16, #tpu.memory_space<vmem>>, vector<15x128xbf16>
    tpu.vector_store %arg5[%c16_53, %c256_54], %66 {strides = array<i32>} : memref<32x384xbf16, #tpu.memory_space<vmem>>, vector<15x128xbf16>,
    %c0_55 = arith.constant 0 : index
    %c0_56 = arith.constant 0 : index
    %68 = vector.load %arg5[%c0_55, %c0_56] : memref<32x384xbf16, #tpu.memory_space<vmem>>, vector<32x384xbf16>
    %c2 = arith.constant 2 : index
    %c0_57 = arith.constant 0 : index
    %c0_58 = arith.constant 0 : index
    %69 = vector.load %arg2[%c2, %c0_57, %c0_58] : memref<9x384x128xbf16, #tpu.memory_space<vmem>>, vector<1x384x128xbf16>
    %70 = vector.shape_cast %69 : vector<1x384x128xbf16> to vector<384x128xbf16>
    %cst_59 = arith.constant dense<0.000000e+00> : vector<32x128xf32>
    %71 = tpu.matmul %68, %70, %cst_59 {dimension_numbers = #tpu.dot_dimension_numbers<[1], [0], [0], [1], [0, 0, 1, 1], [], []>} : vector<32x384xbf16>, vector<384x128xbf16>, vector<32x128xf32> -> vector<32x128xf32>
    %c1_60 = arith.constant 1 : index
    %c0_61 = arith.constant 0 : index
    %72 = vector.load %arg3[%c1_60, %c0_61] : memref<3x128xf32, #tpu.memory_space<vmem>>, vector<1x128xf32>
    %73 = vector.broadcast %72 : vector<1x128xf32> to vector<32x128xf32>
    %74 = arith.addf %71, %73 : vector<32x128xf32>
    %cst_62 = arith.constant 0.000000e+00 : f32
    %75 = vector.broadcast %cst_62 : f32 to vector<32x128xf32>
    %76 = arith.maximumf %74, %75 : vector<32x128xf32>
    %77 = arith.truncf %76 : vector<32x128xf32> to vector<32x128xbf16>
    %c0_63 = arith.constant 0 : index
    %c128_64 = arith.constant 128 : index
    %78 = vector.load %arg5[%c0_63, %c128_64] : memref<32x384xbf16, #tpu.memory_space<vmem>>, vector<32x128xbf16>
    tpu.vector_store %arg5[%c0_63, %c128_64], %77 {strides = array<i32>} : memref<32x384xbf16, #tpu.memory_space<vmem>>, vector<32x128xbf16>,
    %79 = vector.extract_strided_slice %77 {offsets = [0, 0], sizes = [15, 128], strides = [1, 1]} : vector<32x128xbf16> to vector<15x128xbf16>
    %c1_65 = arith.constant 1 : index
    %c0_66 = arith.constant 0 : index
    %80 = vector.load %arg5[%c1_65, %c0_66] : memref<32x384xbf16, #tpu.memory_space<vmem>>, vector<15x128xbf16>
    tpu.vector_store %arg5[%c1_65, %c0_66], %79 {strides = array<i32>} : memref<32x384xbf16, #tpu.memory_space<vmem>>, vector<15x128xbf16>,
    %81 = vector.extract_strided_slice %77 {offsets = [1, 0], sizes = [15, 128], strides = [1, 1]} : vector<32x128xbf16> to vector<15x128xbf16>
    %c0_67 = arith.constant 0 : index
    %c256_68 = arith.constant 256 : index
    %82 = vector.load %arg5[%c0_67, %c256_68] : memref<32x384xbf16, #tpu.memory_space<vmem>>, vector<15x128xbf16>
    tpu.vector_store %arg5[%c0_67, %c256_68], %81 {strides = array<i32>} : memref<32x384xbf16, #tpu.memory_space<vmem>>, vector<15x128xbf16>,
    %83 = vector.extract_strided_slice %77 {offsets = [16, 0], sizes = [15, 128], strides = [1, 1]} : vector<32x128xbf16> to vector<15x128xbf16>
    %c17_69 = arith.constant 17 : index
    %c0_70 = arith.constant 0 : index
    %84 = vector.load %arg5[%c17_69, %c0_70] : memref<32x384xbf16, #tpu.memory_space<vmem>>, vector<15x128xbf16>
    tpu.vector_store %arg5[%c17_69, %c0_70], %83 {strides = array<i32>} : memref<32x384xbf16, #tpu.memory_space<vmem>>, vector<15x128xbf16>,
    %85 = vector.extract_strided_slice %77 {offsets = [17, 0], sizes = [15, 128], strides = [1, 1]} : vector<32x128xbf16> to vector<15x128xbf16>
    %c16_71 = arith.constant 16 : index
    %c256_72 = arith.constant 256 : index
    %86 = vector.load %arg5[%c16_71, %c256_72] : memref<32x384xbf16, #tpu.memory_space<vmem>>, vector<15x128xbf16>
    tpu.vector_store %arg5[%c16_71, %c256_72], %85 {strides = array<i32>} : memref<32x384xbf16, #tpu.memory_space<vmem>>, vector<15x128xbf16>,
    %c0_73 = arith.constant 0 : index
    %c0_74 = arith.constant 0 : index
    %87 = vector.load %arg5[%c0_73, %c0_74] : memref<32x384xbf16, #tpu.memory_space<vmem>>, vector<32x384xbf16>
    %c3 = arith.constant 3 : index
    %c0_75 = arith.constant 0 : index
    %c0_76 = arith.constant 0 : index
    %88 = vector.load %arg2[%c3, %c0_75, %c0_76] : memref<9x384x128xbf16, #tpu.memory_space<vmem>>, vector<1x384x128xbf16>
    %89 = vector.shape_cast %88 : vector<1x384x128xbf16> to vector<384x128xbf16>
    %cst_77 = arith.constant dense<0.000000e+00> : vector<32x128xf32>
    %90 = tpu.matmul %87, %89, %cst_77 {dimension_numbers = #tpu.dot_dimension_numbers<[1], [0], [0], [1], [0, 0, 1, 1], [], []>} : vector<32x384xbf16>, vector<384x128xbf16>, vector<32x128xf32> -> vector<32x128xf32>
    %91 = arith.addf %57, %90 : vector<32x128xf32>
    %cst_78 = arith.constant 0.000000e+00 : f32
    %92 = vector.broadcast %cst_78 : f32 to vector<32x128xf32>
    %93 = arith.maximumf %91, %92 : vector<32x128xf32>
    %c16_i32_79 = arith.constant 16 : i32
    %94 = tpu.dynamic_rotate %93 by %c16_i32_79 dim 1 : vector<32x128xf32>, i32 -> vector<32x128xf32>
    %cst_80 = arith.constant 0xFF800000 : f32
    %95 = vector.broadcast %cst_80 : f32 to vector<32x128xf32>
    %96 = arith.select %12, %94, %95 : vector<32x128xi1>, vector<32x128xf32>
    %97 = arith.maximumf %93, %96 : vector<32x128xf32>
    %c8_i32_81 = arith.constant 8 : i32
    %98 = tpu.dynamic_rotate %93 by %c8_i32_81 dim 1 : vector<32x128xf32>, i32 -> vector<32x128xf32>
    %cst_82 = arith.constant 0xFF800000 : f32
    %99 = vector.broadcast %cst_82 : f32 to vector<32x128xf32>
    %100 = arith.select %14, %98, %99 : vector<32x128xi1>, vector<32x128xf32>
    %101 = arith.maximumf %97, %100 : vector<32x128xf32>
    %c120_i32_83 = arith.constant 120 : i32
    %102 = tpu.dynamic_rotate %93 by %c120_i32_83 dim 1 : vector<32x128xf32>, i32 -> vector<32x128xf32>
    %cst_84 = arith.constant 0xFF800000 : f32
    %103 = vector.broadcast %cst_84 : f32 to vector<32x128xf32>
    %104 = arith.select %16, %102, %103 : vector<32x128xi1>, vector<32x128xf32>
    %105 = arith.maximumf %101, %104 : vector<32x128xf32>
    %c112_i32_85 = arith.constant 112 : i32
    %106 = tpu.dynamic_rotate %93 by %c112_i32_85 dim 1 : vector<32x128xf32>, i32 -> vector<32x128xf32>
    %cst_86 = arith.constant 0xFF800000 : f32
    %107 = vector.broadcast %cst_86 : f32 to vector<32x128xf32>
    %108 = arith.select %18, %106, %107 : vector<32x128xi1>, vector<32x128xf32>
    %109 = arith.maximumf %105, %108 : vector<32x128xf32>
    %110 = vector.extract_strided_slice %109 {offsets = [0, 0], sizes = [16, 128], strides = [1, 1]} : vector<32x128xf32> to vector<16x128xf32>
    %c2_87 = arith.constant 2 : index
    %c0_88 = arith.constant 0 : index
    %111 = vector.load %arg6[%c2_87, %c0_88] : memref<40x128xf32, #tpu.memory_space<vmem>>, vector<16x128xf32>
    tpu.vector_store %arg6[%c2_87, %c0_88], %110 {strides = array<i32>} : memref<40x128xf32, #tpu.memory_space<vmem>>, vector<16x128xf32>,
    %112 = vector.extract_strided_slice %109 {offsets = [16, 0], sizes = [16, 128], strides = [1, 1]} : vector<32x128xf32> to vector<16x128xf32>
    %c22 = arith.constant 22 : index
    %c0_89 = arith.constant 0 : index
    %113 = vector.load %arg6[%c22, %c0_89] : memref<40x128xf32, #tpu.memory_space<vmem>>, vector<16x128xf32>
    tpu.vector_store %arg6[%c22, %c0_89], %112 {strides = array<i32>} : memref<40x128xf32, #tpu.memory_space<vmem>>, vector<16x128xf32>,
    %c0_90 = arith.constant 0 : index
    %c0_91 = arith.constant 0 : index
    %114 = vector.load %arg6[%c0_90, %c0_91] : memref<40x128xf32, #tpu.memory_space<vmem>>, vector<16x128xf32>
    %c1_92 = arith.constant 1 : index
    %c0_93 = arith.constant 0 : index
    %115 = vector.load %arg6[%c1_92, %c0_93] : memref<40x128xf32, #tpu.memory_space<vmem>>, vector<16x128xf32>
    %116 = arith.maximumf %114, %115 : vector<16x128xf32>
    %c2_94 = arith.constant 2 : index
    %c0_95 = arith.constant 0 : index
    %117 = vector.load %arg6[%c2_94, %c0_95] : memref<40x128xf32, #tpu.memory_space<vmem>>, vector<16x128xf32>
    %118 = arith.maximumf %116, %117 : vector<16x128xf32>
    %c3_96 = arith.constant 3 : index
    %c0_97 = arith.constant 0 : index
    %119 = vector.load %arg6[%c3_96, %c0_97] : memref<40x128xf32, #tpu.memory_space<vmem>>, vector<16x128xf32>
    %120 = arith.maximumf %118, %119 : vector<16x128xf32>
    %c4 = arith.constant 4 : index
    %c0_98 = arith.constant 0 : index
    %121 = vector.load %arg6[%c4, %c0_98] : memref<40x128xf32, #tpu.memory_space<vmem>>, vector<16x128xf32>
    %122 = arith.maximumf %120, %121 : vector<16x128xf32>
    %c20_99 = arith.constant 20 : index
    %c0_100 = arith.constant 0 : index
    %123 = vector.load %arg6[%c20_99, %c0_100] : memref<40x128xf32, #tpu.memory_space<vmem>>, vector<16x128xf32>
    %c21 = arith.constant 21 : index
    %c0_101 = arith.constant 0 : index
    %124 = vector.load %arg6[%c21, %c0_101] : memref<40x128xf32, #tpu.memory_space<vmem>>, vector<16x128xf32>
    %125 = arith.maximumf %123, %124 : vector<16x128xf32>
    %c22_102 = arith.constant 22 : index
    %c0_103 = arith.constant 0 : index
    %126 = vector.load %arg6[%c22_102, %c0_103] : memref<40x128xf32, #tpu.memory_space<vmem>>, vector<16x128xf32>
    %127 = arith.maximumf %125, %126 : vector<16x128xf32>
    %c23 = arith.constant 23 : index
    %c0_104 = arith.constant 0 : index
    %128 = vector.load %arg6[%c23, %c0_104] : memref<40x128xf32, #tpu.memory_space<vmem>>, vector<16x128xf32>
    %129 = arith.maximumf %127, %128 : vector<16x128xf32>
    %c24 = arith.constant 24 : index
    %c0_105 = arith.constant 0 : index
    %130 = vector.load %arg6[%c24, %c0_105] : memref<40x128xf32, #tpu.memory_space<vmem>>, vector<16x128xf32>
    %131 = arith.maximumf %129, %130 : vector<16x128xf32>
    %132 = tpu.concatenate %122, %131 in 0 : vector<16x128xf32>, vector<16x128xf32> -> vector<32x128xf32>
    %133 = arith.truncf %132 : vector<32x128xf32> to vector<32x128xbf16>
    %c0_106 = arith.constant 0 : index
    %c128_107 = arith.constant 128 : index
    %134 = vector.load %arg5[%c0_106, %c128_107] : memref<32x384xbf16, #tpu.memory_space<vmem>>, vector<32x128xbf16>
    tpu.vector_store %arg5[%c0_106, %c128_107], %133 {strides = array<i32>} : memref<32x384xbf16, #tpu.memory_space<vmem>>, vector<32x128xbf16>,
    %135 = vector.extract_strided_slice %133 {offsets = [0, 0], sizes = [15, 128], strides = [1, 1]} : vector<32x128xbf16> to vector<15x128xbf16>
    %c1_108 = arith.constant 1 : index
    %c0_109 = arith.constant 0 : index
    %136 = vector.load %arg5[%c1_108, %c0_109] : memref<32x384xbf16, #tpu.memory_space<vmem>>, vector<15x128xbf16>
    tpu.vector_store %arg5[%c1_108, %c0_109], %135 {strides = array<i32>} : memref<32x384xbf16, #tpu.memory_space<vmem>>, vector<15x128xbf16>,
    %137 = vector.extract_strided_slice %133 {offsets = [1, 0], sizes = [15, 128], strides = [1, 1]} : vector<32x128xbf16> to vector<15x128xbf16>
    %c0_110 = arith.constant 0 : index
    %c256_111 = arith.constant 256 : index
    %138 = vector.load %arg5[%c0_110, %c256_111] : memref<32x384xbf16, #tpu.memory_space<vmem>>, vector<15x128xbf16>
    tpu.vector_store %arg5[%c0_110, %c256_111], %137 {strides = array<i32>} : memref<32x384xbf16, #tpu.memory_space<vmem>>, vector<15x128xbf16>,
    %139 = vector.extract_strided_slice %133 {offsets = [16, 0], sizes = [15, 128], strides = [1, 1]} : vector<32x128xbf16> to vector<15x128xbf16>
    %c17_112 = arith.constant 17 : index
    %c0_113 = arith.constant 0 : index
    %140 = vector.load %arg5[%c17_112, %c0_113] : memref<32x384xbf16, #tpu.memory_space<vmem>>, vector<15x128xbf16>
    tpu.vector_store %arg5[%c17_112, %c0_113], %139 {strides = array<i32>} : memref<32x384xbf16, #tpu.memory_space<vmem>>, vector<15x128xbf16>,
    %141 = vector.extract_strided_slice %133 {offsets = [17, 0], sizes = [15, 128], strides = [1, 1]} : vector<32x128xbf16> to vector<15x128xbf16>
    %c16_114 = arith.constant 16 : index
    %c256_115 = arith.constant 256 : index
    %142 = vector.load %arg5[%c16_114, %c256_115] : memref<32x384xbf16, #tpu.memory_space<vmem>>, vector<15x128xbf16>
    tpu.vector_store %arg5[%c16_114, %c256_115], %141 {strides = array<i32>} : memref<32x384xbf16, #tpu.memory_space<vmem>>, vector<15x128xbf16>,
    %c0_116 = arith.constant 0 : index
    %c0_117 = arith.constant 0 : index
    %143 = vector.load %arg5[%c0_116, %c0_117] : memref<32x384xbf16, #tpu.memory_space<vmem>>, vector<32x384xbf16>
    %c4_118 = arith.constant 4 : index
    %c0_119 = arith.constant 0 : index
    %c0_120 = arith.constant 0 : index
    %144 = vector.load %arg2[%c4_118, %c0_119, %c0_120] : memref<9x384x128xbf16, #tpu.memory_space<vmem>>, vector<1x384x128xbf16>
    %145 = vector.shape_cast %144 : vector<1x384x128xbf16> to vector<384x128xbf16>
    %cst_121 = arith.constant dense<0.000000e+00> : vector<32x128xf32>
    %146 = tpu.matmul %143, %145, %cst_121 {dimension_numbers = #tpu.dot_dimension_numbers<[1], [0], [0], [1], [0, 0, 1, 1], [], []>} : vector<32x384xbf16>, vector<384x128xbf16>, vector<32x128xf32> -> vector<32x128xf32>
    %147 = arith.addf %93, %146 : vector<32x128xf32>
    %c16_i32_122 = arith.constant 16 : i32
    %148 = tpu.dynamic_rotate %146 by %c16_i32_122 dim 1 : vector<32x128xf32>, i32 -> vector<32x128xf32>
    %cst_123 = arith.constant 0xFF800000 : f32
    %149 = vector.broadcast %cst_123 : f32 to vector<32x128xf32>
    %150 = arith.select %12, %148, %149 : vector<32x128xi1>, vector<32x128xf32>
    %151 = arith.maximumf %146, %150 : vector<32x128xf32>
    %c8_i32_124 = arith.constant 8 : i32
    %152 = tpu.dynamic_rotate %146 by %c8_i32_124 dim 1 : vector<32x128xf32>, i32 -> vector<32x128xf32>
    %cst_125 = arith.constant 0xFF800000 : f32
    %153 = vector.broadcast %cst_125 : f32 to vector<32x128xf32>
    %154 = arith.select %14, %152, %153 : vector<32x128xi1>, vector<32x128xf32>
    %155 = arith.maximumf %151, %154 : vector<32x128xf32>
    %c120_i32_126 = arith.constant 120 : i32
    %156 = tpu.dynamic_rotate %146 by %c120_i32_126 dim 1 : vector<32x128xf32>, i32 -> vector<32x128xf32>
    %cst_127 = arith.constant 0xFF800000 : f32
    %157 = vector.broadcast %cst_127 : f32 to vector<32x128xf32>
    %158 = arith.select %16, %156, %157 : vector<32x128xi1>, vector<32x128xf32>
    %159 = arith.maximumf %155, %158 : vector<32x128xf32>
    %c112_i32_128 = arith.constant 112 : i32
    %160 = tpu.dynamic_rotate %146 by %c112_i32_128 dim 1 : vector<32x128xf32>, i32 -> vector<32x128xf32>
    %cst_129 = arith.constant 0xFF800000 : f32
    %161 = vector.broadcast %cst_129 : f32 to vector<32x128xf32>
    %162 = arith.select %18, %160, %161 : vector<32x128xi1>, vector<32x128xf32>
    %163 = arith.maximumf %159, %162 : vector<32x128xf32>
    %164 = vector.extract_strided_slice %163 {offsets = [0, 0], sizes = [16, 128], strides = [1, 1]} : vector<32x128xf32> to vector<16x128xf32>
    %c2_130 = arith.constant 2 : index
    %c0_131 = arith.constant 0 : index
    %165 = vector.load %arg6[%c2_130, %c0_131] : memref<40x128xf32, #tpu.memory_space<vmem>>, vector<16x128xf32>
    tpu.vector_store %arg6[%c2_130, %c0_131], %164 {strides = array<i32>} : memref<40x128xf32, #tpu.memory_space<vmem>>, vector<16x128xf32>,
    %166 = vector.extract_strided_slice %163 {offsets = [16, 0], sizes = [16, 128], strides = [1, 1]} : vector<32x128xf32> to vector<16x128xf32>
    %c22_132 = arith.constant 22 : index
    %c0_133 = arith.constant 0 : index
    %167 = vector.load %arg6[%c22_132, %c0_133] : memref<40x128xf32, #tpu.memory_space<vmem>>, vector<16x128xf32>
    tpu.vector_store %arg6[%c22_132, %c0_133], %166 {strides = array<i32>} : memref<40x128xf32, #tpu.memory_space<vmem>>, vector<16x128xf32>,
    %c0_134 = arith.constant 0 : index
    %c0_135 = arith.constant 0 : index
    %168 = vector.load %arg6[%c0_134, %c0_135] : memref<40x128xf32, #tpu.memory_space<vmem>>, vector<16x128xf32>
    %c1_136 = arith.constant 1 : index
    %c0_137 = arith.constant 0 : index
    %169 = vector.load %arg6[%c1_136, %c0_137] : memref<40x128xf32, #tpu.memory_space<vmem>>, vector<16x128xf32>
    %170 = arith.maximumf %168, %169 : vector<16x128xf32>
    %c2_138 = arith.constant 2 : index
    %c0_139 = arith.constant 0 : index
    %171 = vector.load %arg6[%c2_138, %c0_139] : memref<40x128xf32, #tpu.memory_space<vmem>>, vector<16x128xf32>
    %172 = arith.maximumf %170, %171 : vector<16x128xf32>
    %c3_140 = arith.constant 3 : index
    %c0_141 = arith.constant 0 : index
    %173 = vector.load %arg6[%c3_140, %c0_141] : memref<40x128xf32, #tpu.memory_space<vmem>>, vector<16x128xf32>
    %174 = arith.maximumf %172, %173 : vector<16x128xf32>
    %c4_142 = arith.constant 4 : index
    %c0_143 = arith.constant 0 : index
    %175 = vector.load %arg6[%c4_142, %c0_143] : memref<40x128xf32, #tpu.memory_space<vmem>>, vector<16x128xf32>
    %176 = arith.maximumf %174, %175 : vector<16x128xf32>
    %c20_144 = arith.constant 20 : index
    %c0_145 = arith.constant 0 : index
    %177 = vector.load %arg6[%c20_144, %c0_145] : memref<40x128xf32, #tpu.memory_space<vmem>>, vector<16x128xf32>
    %c21_146 = arith.constant 21 : index
    %c0_147 = arith.constant 0 : index
    %178 = vector.load %arg6[%c21_146, %c0_147] : memref<40x128xf32, #tpu.memory_space<vmem>>, vector<16x128xf32>
    %179 = arith.maximumf %177, %178 : vector<16x128xf32>
    %c22_148 = arith.constant 22 : index
    %c0_149 = arith.constant 0 : index
    %180 = vector.load %arg6[%c22_148, %c0_149] : memref<40x128xf32, #tpu.memory_space<vmem>>, vector<16x128xf32>
    %181 = arith.maximumf %179, %180 : vector<16x128xf32>
    %c23_150 = arith.constant 23 : index
    %c0_151 = arith.constant 0 : index
    %182 = vector.load %arg6[%c23_150, %c0_151] : memref<40x128xf32, #tpu.memory_space<vmem>>, vector<16x128xf32>
    %183 = arith.maximumf %181, %182 : vector<16x128xf32>
    %c24_152 = arith.constant 24 : index
    %c0_153 = arith.constant 0 : index
    %184 = vector.load %arg6[%c24_152, %c0_153] : memref<40x128xf32, #tpu.memory_space<vmem>>, vector<16x128xf32>
    %185 = arith.maximumf %183, %184 : vector<16x128xf32>
    %186 = tpu.concatenate %176, %185 in 0 : vector<16x128xf32>, vector<16x128xf32> -> vector<32x128xf32>
    %187 = arith.truncf %186 : vector<32x128xf32> to vector<32x128xbf16>
    %c0_154 = arith.constant 0 : index
    %c128_155 = arith.constant 128 : index
    %188 = vector.load %arg5[%c0_154, %c128_155] : memref<32x384xbf16, #tpu.memory_space<vmem>>, vector<32x128xbf16>
    tpu.vector_store %arg5[%c0_154, %c128_155], %187 {strides = array<i32>} : memref<32x384xbf16, #tpu.memory_space<vmem>>, vector<32x128xbf16>,
    %189 = vector.extract_strided_slice %187 {offsets = [0, 0], sizes = [15, 128], strides = [1, 1]} : vector<32x128xbf16> to vector<15x128xbf16>
    %c1_156 = arith.constant 1 : index
    %c0_157 = arith.constant 0 : index
    %190 = vector.load %arg5[%c1_156, %c0_157] : memref<32x384xbf16, #tpu.memory_space<vmem>>, vector<15x128xbf16>
    tpu.vector_store %arg5[%c1_156, %c0_157], %189 {strides = array<i32>} : memref<32x384xbf16, #tpu.memory_space<vmem>>, vector<15x128xbf16>,
    %191 = vector.extract_strided_slice %187 {offsets = [1, 0], sizes = [15, 128], strides = [1, 1]} : vector<32x128xbf16> to vector<15x128xbf16>
    %c0_158 = arith.constant 0 : index
    %c256_159 = arith.constant 256 : index
    %192 = vector.load %arg5[%c0_158, %c256_159] : memref<32x384xbf16, #tpu.memory_space<vmem>>, vector<15x128xbf16>
    tpu.vector_store %arg5[%c0_158, %c256_159], %191 {strides = array<i32>} : memref<32x384xbf16, #tpu.memory_space<vmem>>, vector<15x128xbf16>,
    %193 = vector.extract_strided_slice %187 {offsets = [16, 0], sizes = [15, 128], strides = [1, 1]} : vector<32x128xbf16> to vector<15x128xbf16>
    %c17_160 = arith.constant 17 : index
    %c0_161 = arith.constant 0 : index
    %194 = vector.load %arg5[%c17_160, %c0_161] : memref<32x384xbf16, #tpu.memory_space<vmem>>, vector<15x128xbf16>
    tpu.vector_store %arg5[%c17_160, %c0_161], %193 {strides = array<i32>} : memref<32x384xbf16, #tpu.memory_space<vmem>>, vector<15x128xbf16>,
    %195 = vector.extract_strided_slice %187 {offsets = [17, 0], sizes = [15, 128], strides = [1, 1]} : vector<32x128xbf16> to vector<15x128xbf16>
    %c16_162 = arith.constant 16 : index
    %c256_163 = arith.constant 256 : index
    %196 = vector.load %arg5[%c16_162, %c256_163] : memref<32x384xbf16, #tpu.memory_space<vmem>>, vector<15x128xbf16>
    tpu.vector_store %arg5[%c16_162, %c256_163], %195 {strides = array<i32>} : memref<32x384xbf16, #tpu.memory_space<vmem>>, vector<15x128xbf16>,
    %c0_164 = arith.constant 0 : index
    %c0_165 = arith.constant 0 : index
    %197 = vector.load %arg5[%c0_164, %c0_165] : memref<32x384xbf16, #tpu.memory_space<vmem>>, vector<32x384xbf16>
    %c5 = arith.constant 5 : index
    %c0_166 = arith.constant 0 : index
    %c0_167 = arith.constant 0 : index
    %198 = vector.load %arg2[%c5, %c0_166, %c0_167] : memref<9x384x128xbf16, #tpu.memory_space<vmem>>, vector<1x384x128xbf16>
    %199 = vector.shape_cast %198 : vector<1x384x128xbf16> to vector<384x128xbf16>
    %cst_168 = arith.constant dense<0.000000e+00> : vector<32x128xf32>
    %200 = tpu.matmul %197, %199, %cst_168 {dimension_numbers = #tpu.dot_dimension_numbers<[1], [0], [0], [1], [0, 0, 1, 1], [], []>} : vector<32x384xbf16>, vector<384x128xbf16>, vector<32x128xf32> -> vector<32x128xf32>
    %201 = arith.addf %147, %200 : vector<32x128xf32>
    %c16_i32_169 = arith.constant 16 : i32
    %202 = tpu.dynamic_rotate %200 by %c16_i32_169 dim 1 : vector<32x128xf32>, i32 -> vector<32x128xf32>
    %cst_170 = arith.constant 0xFF800000 : f32
    %203 = vector.broadcast %cst_170 : f32 to vector<32x128xf32>
    %204 = arith.select %12, %202, %203 : vector<32x128xi1>, vector<32x128xf32>
    %205 = arith.maximumf %200, %204 : vector<32x128xf32>
    %c8_i32_171 = arith.constant 8 : i32
    %206 = tpu.dynamic_rotate %200 by %c8_i32_171 dim 1 : vector<32x128xf32>, i32 -> vector<32x128xf32>
    %cst_172 = arith.constant 0xFF800000 : f32
    %207 = vector.broadcast %cst_172 : f32 to vector<32x128xf32>
    %208 = arith.select %14, %206, %207 : vector<32x128xi1>, vector<32x128xf32>
    %209 = arith.maximumf %205, %208 : vector<32x128xf32>
    %c120_i32_173 = arith.constant 120 : i32
    %210 = tpu.dynamic_rotate %200 by %c120_i32_173 dim 1 : vector<32x128xf32>, i32 -> vector<32x128xf32>
    %cst_174 = arith.constant 0xFF800000 : f32
    %211 = vector.broadcast %cst_174 : f32 to vector<32x128xf32>
    %212 = arith.select %16, %210, %211 : vector<32x128xi1>, vector<32x128xf32>
    %213 = arith.maximumf %209, %212 : vector<32x128xf32>
    %c112_i32_175 = arith.constant 112 : i32
    %214 = tpu.dynamic_rotate %200 by %c112_i32_175 dim 1 : vector<32x128xf32>, i32 -> vector<32x128xf32>
    %cst_176 = arith.constant 0xFF800000 : f32
    %215 = vector.broadcast %cst_176 : f32 to vector<32x128xf32>
    %216 = arith.select %18, %214, %215 : vector<32x128xi1>, vector<32x128xf32>
    %217 = arith.maximumf %213, %216 : vector<32x128xf32>
    %218 = vector.extract_strided_slice %217 {offsets = [0, 0], sizes = [16, 128], strides = [1, 1]} : vector<32x128xf32> to vector<16x128xf32>
    %c2_177 = arith.constant 2 : index
    %c0_178 = arith.constant 0 : index
    %219 = vector.load %arg6[%c2_177, %c0_178] : memref<40x128xf32, #tpu.memory_space<vmem>>, vector<16x128xf32>
    tpu.vector_store %arg6[%c2_177, %c0_178], %218 {strides = array<i32>} : memref<40x128xf32, #tpu.memory_space<vmem>>, vector<16x128xf32>,
    %220 = vector.extract_strided_slice %217 {offsets = [16, 0], sizes = [16, 128], strides = [1, 1]} : vector<32x128xf32> to vector<16x128xf32>
    %c22_179 = arith.constant 22 : index
    %c0_180 = arith.constant 0 : index
    %221 = vector.load %arg6[%c22_179, %c0_180] : memref<40x128xf32, #tpu.memory_space<vmem>>, vector<16x128xf32>
    tpu.vector_store %arg6[%c22_179, %c0_180], %220 {strides = array<i32>} : memref<40x128xf32, #tpu.memory_space<vmem>>, vector<16x128xf32>,
    %c0_181 = arith.constant 0 : index
    %c0_182 = arith.constant 0 : index
    %222 = vector.load %arg6[%c0_181, %c0_182] : memref<40x128xf32, #tpu.memory_space<vmem>>, vector<16x128xf32>
    %c1_183 = arith.constant 1 : index
    %c0_184 = arith.constant 0 : index
    %223 = vector.load %arg6[%c1_183, %c0_184] : memref<40x128xf32, #tpu.memory_space<vmem>>, vector<16x128xf32>
    %224 = arith.maximumf %222, %223 : vector<16x128xf32>
    %c2_185 = arith.constant 2 : index
    %c0_186 = arith.constant 0 : index
    %225 = vector.load %arg6[%c2_185, %c0_186] : memref<40x128xf32, #tpu.memory_space<vmem>>, vector<16x128xf32>
    %226 = arith.maximumf %224, %225 : vector<16x128xf32>
    %c3_187 = arith.constant 3 : index
    %c0_188 = arith.constant 0 : index
    %227 = vector.load %arg6[%c3_187, %c0_188] : memref<40x128xf32, #tpu.memory_space<vmem>>, vector<16x128xf32>
    %228 = arith.maximumf %226, %227 : vector<16x128xf32>
    %c4_189 = arith.constant 4 : index
    %c0_190 = arith.constant 0 : index
    %229 = vector.load %arg6[%c4_189, %c0_190] : memref<40x128xf32, #tpu.memory_space<vmem>>, vector<16x128xf32>
    %230 = arith.maximumf %228, %229 : vector<16x128xf32>
    %c20_191 = arith.constant 20 : index
    %c0_192 = arith.constant 0 : index
    %231 = vector.load %arg6[%c20_191, %c0_192] : memref<40x128xf32, #tpu.memory_space<vmem>>, vector<16x128xf32>
    %c21_193 = arith.constant 21 : index
    %c0_194 = arith.constant 0 : index
    %232 = vector.load %arg6[%c21_193, %c0_194] : memref<40x128xf32, #tpu.memory_space<vmem>>, vector<16x128xf32>
    %233 = arith.maximumf %231, %232 : vector<16x128xf32>
    %c22_195 = arith.constant 22 : index
    %c0_196 = arith.constant 0 : index
    %234 = vector.load %arg6[%c22_195, %c0_196] : memref<40x128xf32, #tpu.memory_space<vmem>>, vector<16x128xf32>
    %235 = arith.maximumf %233, %234 : vector<16x128xf32>
    %c23_197 = arith.constant 23 : index
    %c0_198 = arith.constant 0 : index
    %236 = vector.load %arg6[%c23_197, %c0_198] : memref<40x128xf32, #tpu.memory_space<vmem>>, vector<16x128xf32>
    %237 = arith.maximumf %235, %236 : vector<16x128xf32>
    %c24_199 = arith.constant 24 : index
    %c0_200 = arith.constant 0 : index
    %238 = vector.load %arg6[%c24_199, %c0_200] : memref<40x128xf32, #tpu.memory_space<vmem>>, vector<16x128xf32>
    %239 = arith.maximumf %237, %238 : vector<16x128xf32>
    %240 = tpu.concatenate %230, %239 in 0 : vector<16x128xf32>, vector<16x128xf32> -> vector<32x128xf32>
    %241 = arith.truncf %240 : vector<32x128xf32> to vector<32x128xbf16>
    %c0_201 = arith.constant 0 : index
    %c128_202 = arith.constant 128 : index
    %242 = vector.load %arg5[%c0_201, %c128_202] : memref<32x384xbf16, #tpu.memory_space<vmem>>, vector<32x128xbf16>
    tpu.vector_store %arg5[%c0_201, %c128_202], %241 {strides = array<i32>} : memref<32x384xbf16, #tpu.memory_space<vmem>>, vector<32x128xbf16>,
    %243 = vector.extract_strided_slice %241 {offsets = [0, 0], sizes = [15, 128], strides = [1, 1]} : vector<32x128xbf16> to vector<15x128xbf16>
    %c1_203 = arith.constant 1 : index
    %c0_204 = arith.constant 0 : index
    %244 = vector.load %arg5[%c1_203, %c0_204] : memref<32x384xbf16, #tpu.memory_space<vmem>>, vector<15x128xbf16>
    tpu.vector_store %arg5[%c1_203, %c0_204], %243 {strides = array<i32>} : memref<32x384xbf16, #tpu.memory_space<vmem>>, vector<15x128xbf16>,
    %245 = vector.extract_strided_slice %241 {offsets = [1, 0], sizes = [15, 128], strides = [1, 1]} : vector<32x128xbf16> to vector<15x128xbf16>
    %c0_205 = arith.constant 0 : index
    %c256_206 = arith.constant 256 : index
    %246 = vector.load %arg5[%c0_205, %c256_206] : memref<32x384xbf16, #tpu.memory_space<vmem>>, vector<15x128xbf16>
    tpu.vector_store %arg5[%c0_205, %c256_206], %245 {strides = array<i32>} : memref<32x384xbf16, #tpu.memory_space<vmem>>, vector<15x128xbf16>,
    %247 = vector.extract_strided_slice %241 {offsets = [16, 0], sizes = [15, 128], strides = [1, 1]} : vector<32x128xbf16> to vector<15x128xbf16>
    %c17_207 = arith.constant 17 : index
    %c0_208 = arith.constant 0 : index
    %248 = vector.load %arg5[%c17_207, %c0_208] : memref<32x384xbf16, #tpu.memory_space<vmem>>, vector<15x128xbf16>
    tpu.vector_store %arg5[%c17_207, %c0_208], %247 {strides = array<i32>} : memref<32x384xbf16, #tpu.memory_space<vmem>>, vector<15x128xbf16>,
    %249 = vector.extract_strided_slice %241 {offsets = [17, 0], sizes = [15, 128], strides = [1, 1]} : vector<32x128xbf16> to vector<15x128xbf16>
    %c16_209 = arith.constant 16 : index
    %c256_210 = arith.constant 256 : index
    %250 = vector.load %arg5[%c16_209, %c256_210] : memref<32x384xbf16, #tpu.memory_space<vmem>>, vector<15x128xbf16>
    tpu.vector_store %arg5[%c16_209, %c256_210], %249 {strides = array<i32>} : memref<32x384xbf16, #tpu.memory_space<vmem>>, vector<15x128xbf16>,
    %c0_211 = arith.constant 0 : index
    %c0_212 = arith.constant 0 : index
    %251 = vector.load %arg5[%c0_211, %c0_212] : memref<32x384xbf16, #tpu.memory_space<vmem>>, vector<32x384xbf16>
    %c6 = arith.constant 6 : index
    %c0_213 = arith.constant 0 : index
    %c0_214 = arith.constant 0 : index
    %252 = vector.load %arg2[%c6, %c0_213, %c0_214] : memref<9x384x128xbf16, #tpu.memory_space<vmem>>, vector<1x384x128xbf16>
    %253 = vector.shape_cast %252 : vector<1x384x128xbf16> to vector<384x128xbf16>
    %cst_215 = arith.constant dense<0.000000e+00> : vector<32x128xf32>
    %254 = tpu.matmul %251, %253, %cst_215 {dimension_numbers = #tpu.dot_dimension_numbers<[1], [0], [0], [1], [0, 0, 1, 1], [], []>} : vector<32x384xbf16>, vector<384x128xbf16>, vector<32x128xf32> -> vector<32x128xf32>
    %255 = arith.addf %201, %254 : vector<32x128xf32>
    %cst_216 = arith.constant 0.000000e+00 : f32
    %256 = vector.broadcast %cst_216 : f32 to vector<32x128xf32>
    %257 = arith.maximumf %255, %256 : vector<32x128xf32>
    %258 = arith.truncf %257 : vector<32x128xf32> to vector<32x128xbf16>
    %c0_217 = arith.constant 0 : index
    %c128_218 = arith.constant 128 : index
    %259 = vector.load %arg5[%c0_217, %c128_218] : memref<32x384xbf16, #tpu.memory_space<vmem>>, vector<32x128xbf16>
    tpu.vector_store %arg5[%c0_217, %c128_218], %258 {strides = array<i32>} : memref<32x384xbf16, #tpu.memory_space<vmem>>, vector<32x128xbf16>,
    %260 = vector.extract_strided_slice %258 {offsets = [0, 0], sizes = [15, 128], strides = [1, 1]} : vector<32x128xbf16> to vector<15x128xbf16>
    %c1_219 = arith.constant 1 : index
    %c0_220 = arith.constant 0 : index
    %261 = vector.load %arg5[%c1_219, %c0_220] : memref<32x384xbf16, #tpu.memory_space<vmem>>, vector<15x128xbf16>
    tpu.vector_store %arg5[%c1_219, %c0_220], %260 {strides = array<i32>} : memref<32x384xbf16, #tpu.memory_space<vmem>>, vector<15x128xbf16>,
    %262 = vector.extract_strided_slice %258 {offsets = [1, 0], sizes = [15, 128], strides = [1, 1]} : vector<32x128xbf16> to vector<15x128xbf16>
    %c0_221 = arith.constant 0 : index
    %c256_222 = arith.constant 256 : index
    %263 = vector.load %arg5[%c0_221, %c256_222] : memref<32x384xbf16, #tpu.memory_space<vmem>>, vector<15x128xbf16>
    tpu.vector_store %arg5[%c0_221, %c256_222], %262 {strides = array<i32>} : memref<32x384xbf16, #tpu.memory_space<vmem>>, vector<15x128xbf16>,
    %264 = vector.extract_strided_slice %258 {offsets = [16, 0], sizes = [15, 128], strides = [1, 1]} : vector<32x128xbf16> to vector<15x128xbf16>
    %c17_223 = arith.constant 17 : index
    %c0_224 = arith.constant 0 : index
    %265 = vector.load %arg5[%c17_223, %c0_224] : memref<32x384xbf16, #tpu.memory_space<vmem>>, vector<15x128xbf16>
    tpu.vector_store %arg5[%c17_223, %c0_224], %264 {strides = array<i32>} : memref<32x384xbf16, #tpu.memory_space<vmem>>, vector<15x128xbf16>,
    %266 = vector.extract_strided_slice %258 {offsets = [17, 0], sizes = [15, 128], strides = [1, 1]} : vector<32x128xbf16> to vector<15x128xbf16>
    %c16_225 = arith.constant 16 : index
    %c256_226 = arith.constant 256 : index
    %267 = vector.load %arg5[%c16_225, %c256_226] : memref<32x384xbf16, #tpu.memory_space<vmem>>, vector<15x128xbf16>
    tpu.vector_store %arg5[%c16_225, %c256_226], %266 {strides = array<i32>} : memref<32x384xbf16, #tpu.memory_space<vmem>>, vector<15x128xbf16>,
    %c0_227 = arith.constant 0 : index
    %c0_228 = arith.constant 0 : index
    %268 = vector.load %arg5[%c0_227, %c0_228] : memref<32x384xbf16, #tpu.memory_space<vmem>>, vector<32x384xbf16>
    %c7 = arith.constant 7 : index
    %c0_229 = arith.constant 0 : index
    %c0_230 = arith.constant 0 : index
    %269 = vector.load %arg2[%c7, %c0_229, %c0_230] : memref<9x384x128xbf16, #tpu.memory_space<vmem>>, vector<1x384x128xbf16>
    %270 = vector.shape_cast %269 : vector<1x384x128xbf16> to vector<384x128xbf16>
    %cst_231 = arith.constant dense<0.000000e+00> : vector<32x128xf32>
    %271 = tpu.matmul %268, %270, %cst_231 {dimension_numbers = #tpu.dot_dimension_numbers<[1], [0], [0], [1], [0, 0, 1, 1], [], []>} : vector<32x384xbf16>, vector<384x128xbf16>, vector<32x128xf32> -> vector<32x128xf32>
    %c2_232 = arith.constant 2 : index
    %c0_233 = arith.constant 0 : index
    %272 = vector.load %arg3[%c2_232, %c0_233] : memref<3x128xf32, #tpu.memory_space<vmem>>, vector<1x128xf32>
    %273 = vector.broadcast %272 : vector<1x128xf32> to vector<32x128xf32>
    %274 = arith.addf %271, %273 : vector<32x128xf32>
    %cst_234 = arith.constant 0.000000e+00 : f32
    %275 = vector.broadcast %cst_234 : f32 to vector<32x128xf32>
    %276 = arith.maximumf %274, %275 : vector<32x128xf32>
    %277 = arith.truncf %276 : vector<32x128xf32> to vector<32x128xbf16>
    %c0_235 = arith.constant 0 : index
    %c128_236 = arith.constant 128 : index
    %278 = vector.load %arg5[%c0_235, %c128_236] : memref<32x384xbf16, #tpu.memory_space<vmem>>, vector<32x128xbf16>
    tpu.vector_store %arg5[%c0_235, %c128_236], %277 {strides = array<i32>} : memref<32x384xbf16, #tpu.memory_space<vmem>>, vector<32x128xbf16>,
    %279 = vector.extract_strided_slice %277 {offsets = [0, 0], sizes = [15, 128], strides = [1, 1]} : vector<32x128xbf16> to vector<15x128xbf16>
    %c1_237 = arith.constant 1 : index
    %c0_238 = arith.constant 0 : index
    %280 = vector.load %arg5[%c1_237, %c0_238] : memref<32x384xbf16, #tpu.memory_space<vmem>>, vector<15x128xbf16>
    tpu.vector_store %arg5[%c1_237, %c0_238], %279 {strides = array<i32>} : memref<32x384xbf16, #tpu.memory_space<vmem>>, vector<15x128xbf16>,
    %281 = vector.extract_strided_slice %277 {offsets = [1, 0], sizes = [15, 128], strides = [1, 1]} : vector<32x128xbf16> to vector<15x128xbf16>
    %c0_239 = arith.constant 0 : index
    %c256_240 = arith.constant 256 : index
    %282 = vector.load %arg5[%c0_239, %c256_240] : memref<32x384xbf16, #tpu.memory_space<vmem>>, vector<15x128xbf16>
    tpu.vector_store %arg5[%c0_239, %c256_240], %281 {strides = array<i32>} : memref<32x384xbf16, #tpu.memory_space<vmem>>, vector<15x128xbf16>,
    %283 = vector.extract_strided_slice %277 {offsets = [16, 0], sizes = [15, 128], strides = [1, 1]} : vector<32x128xbf16> to vector<15x128xbf16>
    %c17_241 = arith.constant 17 : index
    %c0_242 = arith.constant 0 : index
    %284 = vector.load %arg5[%c17_241, %c0_242] : memref<32x384xbf16, #tpu.memory_space<vmem>>, vector<15x128xbf16>
    tpu.vector_store %arg5[%c17_241, %c0_242], %283 {strides = array<i32>} : memref<32x384xbf16, #tpu.memory_space<vmem>>, vector<15x128xbf16>,
    %285 = vector.extract_strided_slice %277 {offsets = [17, 0], sizes = [15, 128], strides = [1, 1]} : vector<32x128xbf16> to vector<15x128xbf16>
    %c16_243 = arith.constant 16 : index
    %c256_244 = arith.constant 256 : index
    %286 = vector.load %arg5[%c16_243, %c256_244] : memref<32x384xbf16, #tpu.memory_space<vmem>>, vector<15x128xbf16>
    tpu.vector_store %arg5[%c16_243, %c256_244], %285 {strides = array<i32>} : memref<32x384xbf16, #tpu.memory_space<vmem>>, vector<15x128xbf16>,
    %c0_245 = arith.constant 0 : index
    %c0_246 = arith.constant 0 : index
    %287 = vector.load %arg5[%c0_245, %c0_246] : memref<32x384xbf16, #tpu.memory_space<vmem>>, vector<32x384xbf16>
    %c8 = arith.constant 8 : index
    %c0_247 = arith.constant 0 : index
    %c0_248 = arith.constant 0 : index
    %288 = vector.load %arg2[%c8, %c0_247, %c0_248] : memref<9x384x128xbf16, #tpu.memory_space<vmem>>, vector<1x384x128xbf16>
    %289 = vector.shape_cast %288 : vector<1x384x128xbf16> to vector<384x128xbf16>
    %cst_249 = arith.constant dense<0.000000e+00> : vector<32x128xf32>
    %290 = tpu.matmul %287, %289, %cst_249 {dimension_numbers = #tpu.dot_dimension_numbers<[1], [0], [0], [1], [0, 0, 1, 1], [], []>} : vector<32x384xbf16>, vector<384x128xbf16>, vector<32x128xf32> -> vector<32x128xf32>
    %291 = arith.addf %257, %290 : vector<32x128xf32>
    %c0_250 = arith.constant 0 : index
    %c0_251 = arith.constant 0 : index
    %292 = vector.load %arg4[%c0_250, %c0_251] : memref<32x128xf32, #tpu.memory_space<vmem>>, vector<32x128xf32>
    tpu.vector_store %arg4[%c0_250, %c0_251], %291 {strides = array<i32>} : memref<32x128xf32, #tpu.memory_space<vmem>>, vector<32x128xf32>,
    return
  }
  func.func @transform_0(%arg0: i32) -> (i32, i32) {
    %c0_i32 = arith.constant 0 : i32
    %c0_i32_0 = arith.constant 0 : i32
    return %arg0, %c0_i32 : i32, i32
  }
  func.func @transform_1(%arg0: i32) -> (i32, i32, i32) {
    %c0_i32 = arith.constant 0 : i32
    %c0_i32_0 = arith.constant 0 : i32
    %c0_i32_1 = arith.constant 0 : i32
    %c0_i32_2 = arith.constant 0 : i32
    return %c0_i32, %c0_i32_0, %c0_i32_1 : i32, i32, i32
  }
  func.func @transform_2(%arg0: i32) -> (i32, i32) {
    %c0_i32 = arith.constant 0 : i32
    %c0_i32_0 = arith.constant 0 : i32
    %c0_i32_1 = arith.constant 0 : i32
    return %c0_i32, %c0_i32_0 : i32, i32
  }
  func.func @transform_3(%arg0: i32) -> (i32, i32) {
    %c0_i32 = arith.constant 0 : i32
    %c0_i32_0 = arith.constant 0 : i32
    return %arg0, %c0_i32 : i32, i32
  }
}

</mosaic_0001>

<llo_original>
// kernel: tpu_custom_call.1
$region0: #{tpu_custom_call.1}
  #allocation0 [shape = 'u32[]', space=smem, size = 0x4, offset = 0x4, fixed_abs, tag = 'smem constant byte address 0x4 - core index']
  #allocation1 [shape = 'u32[144,128]{1,0:T(1,128)}', space=vmem, size = 0x12000, scoped, tag = 'internal scratch']
  #allocation2 [shape = 'bf16[32,384]{1,0:T(16,128)(2,1)}', space=vmem, size = 0x6000, scoped, tag = 'scratch operand']
  #allocation3 [shape = 'f32[40,128]{1,0:T(8,128)}', space=vmem, size = 0x5000, scoped, tag = 'scratch operand']
  %s0 = inlined_call_operand.hbm [shape: f32[64,128], index: 0, kind: input, shape index: {}]
  %s1 = inlined_call_operand.hbm [shape: bf16[9,384,128], index: 1, kind: input, shape index: {}]
  %s2 = inlined_call_operand.vmem [shape: f32[3,128], index: 2, kind: input, shape index: {}]
  %s3 = inlined_call_operand.hbm [shape: f32[64,128], index: 3, kind: output, shape index: {}]
  %s4 = sld [smem:[#allocation0]]
  $region53: #{tpu_custom_call.1} parent=0
    _
  %s6 = ssub.s32 1, %s4
  %s7 = scalar_select 0, %s6, %s4
  $region1: #{tpu_custom_call.1} parent=0
    #allocation4 [shape = 'u8[32768]{0}', space=vmem, size = 0x8000, scoped, tag = 'input window, operand 0']
    #allocation5 [shape = 's32[2]{0}', space=sflag, size = 0x8, scoped, tag = 'scoped memory for tpu_custom_call.1']
    #allocation6 [shape = 's32[2]{0}', space=sflag, size = 0x8, scoped, tag = 'scoped memory for tpu_custom_call.1']
    #allocation7 [shape = 'u8[884736]{0}', space=vmem, size = 0xd8000, scoped, tag = 'input window, operand 1, single buffered']
    #allocation8 [shape = 's32[1]{0}', space=sflag, size = 0x4, scoped, tag = 'scoped memory for tpu_custom_call.1']
    #allocation9 [shape = 'u8[32768]{0}', space=vmem, size = 0x8000, scoped, tag = 'output window, operand 0']
    %8 = vsyncpa [#allocation5], 0
    %s9 = scalar_lea.sflag [#allocation5], 1
    %10 = vsyncpa %s9, 0
    %11 = vsyncpa [#allocation8], 0
    %12 = vsyncpa [#allocation6], 0
    %s13 = scalar_lea.sflag [#allocation6], 1
    %14 = vsyncpa %s13, 0
    loop: start=0, step=1, limit=4
    $region2: #{tpu_custom_call.1} parent=1 // loop_pre_header
      _
    $region3: #{tpu_custom_call.1} parent=1 // loop_header
      %s16 = sphi 0, %s20
      %p17 = scmp.ge.s32.totalorder %s16, 4
      %s26 = sphi 0, %s28
      %s29 = sphi 0, %s26
      %s30 = sphi 0, %s29
      %s46 = sphi 0, %s30
      %s50 = sphi 0, %s50
      %s52 = sphi 0, %s50
      %s53 = sphi 0, %s52
      %s67 = sphi 0, %s53
      %s71 = sphi 0, %s71
      %s73 = sphi 0, %s71
      %s74 = sphi 0, %s73
      %s88 = sphi 0, %s74
      %s94 = sphi 0, %s96
      %s97 = sphi 0, %s94
      %s98 = sphi 0, %s97
      %s114 = sphi 0, %s98
    $region4: #{tpu_custom_call.1} parent=1 // loop_header_branch
      %19 = sbr.rel (%p17) target = $region8
    $region5: #{tpu_custom_call.1} parent=1 // loop_body
      %s21 = ssub.s32 %s16, 1
      %s22 = ssub.s32 %s16, 2
      %s23 = sadd.s32 %s16, 1
      %s24 = ssub.s32 %s16, %s23
      %p25 = scmp.eq.s32.totalorder %s24, 0
      %s27 = sadd.s32 %s26, 1
      %s28 = scalar_select %p25, %s26, %s27
      %p31 = pneg %p25
      %p32 = scmp.eq.s32.totalorder %s16, 1
      %p33 = por %p31, %p32
      %p34 = scmp.ne.s32.totalorder %s26, %s29
      %p35 = scmp.eq.s32.totalorder %s16, 0
      %p36 = por %p34, %p35
      %p37 = scmp.ne.s32.totalorder %s26, %s29
      %p38 = scmp.eq.s32.totalorder %s21, 1
      %p39 = por %p37, %p38
      %p40 = scmp.ne.s32.totalorder %s29, %s30
      %p41 = scmp.eq.s32.totalorder %s21, 0
      %p42 = por %p40, %p41
      %p43 = scmp.ne.s32.totalorder %s29, %s30
      %p44 = scmp.eq.s32.totalorder %s22, 1
      %p45 = por %p43, %p44
      %p47 = scmp.ne.s32.totalorder %s30, %s46
      %p48 = scmp.eq.s32.totalorder %s22, 0
      %p49 = por %p47, %p48
      %s51 = sadd.s32 %s50, 1
      %p54 = scmp.eq.s32.totalorder %s16, 1
      %p55 = scmp.ne.s32.totalorder %s50, %s52
      %p56 = scmp.eq.s32.totalorder %s16, 0
      %p57 = por %p55, %p56
      %p58 = scmp.ne.s32.totalorder %s50, %s52
      %p59 = scmp.eq.s32.totalorder %s21, 1
      %p60 = por %p58, %p59
      %p61 = scmp.ne.s32.totalorder %s52, %s53
      %p62 = scmp.eq.s32.totalorder %s21, 0
      %p63 = por %p61, %p62
      %p64 = scmp.ne.s32.totalorder %s52, %s53
      %p65 = scmp.eq.s32.totalorder %s22, 1
      %p66 = por %p64, %p65
      %p68 = scmp.ne.s32.totalorder %s53, %s67
      %p69 = scmp.eq.s32.totalorder %s22, 0
      %p70 = por %p68, %p69
      %s72 = sadd.s32 %s71, 1
      %p75 = scmp.eq.s32.totalorder %s16, 1
      %p76 = scmp.ne.s32.totalorder %s71, %s73
      %p77 = scmp.eq.s32.totalorder %s16, 0
      %p78 = por %p76, %p77
      %p79 = scmp.ne.s32.totalorder %s71, %s73
      %p80 = scmp.eq.s32.totalorder %s21, 1
      %p81 = por %p79, %p80
      %p82 = scmp.ne.s32.totalorder %s73, %s74
      %p83 = scmp.eq.s32.totalorder %s21, 0
      %p84 = por %p82, %p83
      %p85 = scmp.ne.s32.totalorder %s73, %s74
      %p86 = scmp.eq.s32.totalorder %s22, 1
      %p87 = por %p85, %p86
      %p89 = scmp.ne.s32.totalorder %s74, %s88
      %p90 = scmp.eq.s32.totalorder %s22, 0
      %p91 = por %p89, %p90
      %s92 = ssub.s32 %s16, %s23
      %p93 = scmp.eq.s32.totalorder %s92, 0
      %s95 = sadd.s32 %s94, 1
      %s96 = scalar_select %p93, %s94, %s95
      %p99 = pneg %p93
      %p100 = scmp.eq.s32.totalorder %s16, 1
      %p101 = por %p99, %p100
      %p102 = scmp.ne.s32.totalorder %s94, %s97
      %p103 = scmp.eq.s32.totalorder %s16, 0
      %p104 = por %p102, %p103
      %p105 = scmp.ne.s32.totalorder %s94, %s97
      %p106 = scmp.eq.s32.totalorder %s21, 1
      %p107 = por %p105, %p106
      %p108 = scmp.ne.s32.totalorder %s97, %s98
      %p109 = scmp.eq.s32.totalorder %s21, 0
      %p110 = por %p108, %p109
      %p111 = scmp.ne.s32.totalorder %s97, %s98
      %p112 = scmp.eq.s32.totalorder %s22, 1
      %p113 = por %p111, %p112
      %p115 = scmp.ne.s32.totalorder %s98, %s114
      %p116 = scmp.eq.s32.totalorder %s22, 0
      %p117 = por %p115, %p116
      %p118 = scmp.le.s32.totalorder 1, %s16
      %p119 = scmp.lt.s32.totalorder %s16, 3
      %p120 = pnand %p118, %p119
      %p121 = pneg %p120
      // Predicated region
      $region9: #{tpu_custom_call.1} parent=5 // pred_check
        _
      $region10: #{tpu_custom_call.1} parent=5 // pred_check_branch
        %123 = sbr.rel (%p120) target = $region12
      $region11: #{tpu_custom_call.1} parent=5 // pred_region
        %s124 = ssub.s32 %s16, 1
        // Predicated region
        $region13: #{tpu_custom_call.1} parent=11 // pred_check
          %p125 = pneg %p63
        $region14: #{tpu_custom_call.1} parent=11 // pred_check_branch
          %127 = sbr.rel (%p125) target = $region16
        $region15: #{tpu_custom_call.1} parent=11 // pred_region
          %s129 = ssub.s32 27648, 27648
          %130 = vsyncadd [#allocation8], %s129
          %s131 = sshll.u32 [#allocation7], 4
          %s132 = int_to_ptr.vmem [resolvable:$true] %s131
          %137 = dma.hbm_to_vmem [thread:$0]  %s1, 27648, %s132, [#allocation8], 64, 64, 4
        $region16: #{tpu_custom_call.1} parent=11 // pred_fallthru
          _
        // Predicated region
        $region17: #{tpu_custom_call.1} parent=11 // pred_check
          %p138 = pneg %p84
        $region18: #{tpu_custom_call.1} parent=11 // pred_check_branch
          %140 = sbr.rel (%p138) target = $region20
        $region19: #{tpu_custom_call.1} parent=11 // pred_region
          _
        $region20: #{tpu_custom_call.1} parent=11 // pred_fallthru
          _
      $region12: #{tpu_custom_call.1} parent=5 // pred_fallthru
        _
      %p141 = scmp.lt.s32.totalorder %s16, 2
      // Predicated region
      $region21: #{tpu_custom_call.1} parent=5 // pred_check
        %p142 = pneg %p141
      $region22: #{tpu_custom_call.1} parent=5 // pred_check_branch
        %144 = sbr.rel (%p142) target = $region24
      $region23: #{tpu_custom_call.1} parent=5 // pred_region
        // Predicated region
        $region25: #{tpu_custom_call.1} parent=23 // pred_check
          %p145 = pneg %p36
        $region26: #{tpu_custom_call.1} parent=23 // pred_check_branch
          %147 = sbr.rel (%p145) target = $region28
        $region27: #{tpu_custom_call.1} parent=23 // pred_region
          %s148 = sand.u32 %s26, 1
          %s149 = scalar_lea.sflag [#allocation5], %s148
          %s150 = sand.u32 %s26, 1
          %s151 = smul.addr %s150, 32
          %s152 = scalar_lea.vmem [#allocation4], %s151
          %s153 = smul.u32 4, %s16
          %s155 = ssub.s32 512, 512
          %156 = vsyncadd %s149, %s155
          %s157 = smul.addr %s153, 128
          %s158 = scalar_lea.hbm %s0, %s157
          %s159 = sshll.u32 %s152, 4
          %s160 = int_to_ptr.vmem [resolvable:$true] %s159
          %165 = dma.hbm_to_vmem [thread:$0]  %s158, 512, %s160, %s149, 128, 128, 8
        $region28: #{tpu_custom_call.1} parent=23 // pred_fallthru
          _
      $region24: #{tpu_custom_call.1} parent=5 // pred_fallthru
        _
      %p166 = scmp.le.s32.totalorder 1, %s16
      %p167 = scmp.lt.s32.totalorder %s16, 3
      %p168 = pnand %p166, %p167
      %p169 = pneg %p168
      // Predicated region
      $region29: #{tpu_custom_call.1} parent=5 // pred_check
        _
      $region30: #{tpu_custom_call.1} parent=5 // pred_check_branch
        %171 = sbr.rel (%p168) target = $region32
      $region31: #{tpu_custom_call.1} parent=5 // pred_region
        %s172 = ssub.s32 %s16, 1
        %s173 = sand.u32 %s29, 1
        %s174 = scalar_lea.sflag [#allocation5], %s173
        %s175 = sand.u32 %s29, 1
        %s176 = smul.addr %s175, 32
        %s177 = scalar_lea.vmem [#allocation4], %s176
        // Predicated region
        $region33: #{tpu_custom_call.1} parent=31 // pred_check
          %p178 = pneg %p42
        $region34: #{tpu_custom_call.1} parent=31 // pred_check_branch
          %180 = sbr.rel (%p178) target = $region36
        $region35: #{tpu_custom_call.1} parent=31 // pred_region
          %181 = dma.done %s174, 512
        $region36: #{tpu_custom_call.1} parent=31 // pred_fallthru
          _
        // Predicated region
        $region37: #{tpu_custom_call.1} parent=31 // pred_check
          %p182 = pneg %p63
        $region38: #{tpu_custom_call.1} parent=31 // pred_check_branch
          %184 = sbr.rel (%p182) target = $region40
        $region39: #{tpu_custom_call.1} parent=31 // pred_region
          %185 = dma.done [#allocation8], 27648
        $region40: #{tpu_custom_call.1} parent=31 // pred_fallthru
          _
        %s186 = sand.u32 %s29, 1
        %s187 = scalar_lea.sflag [#allocation5], %s186
        %s188 = sand.u32 %s29, 1
        %s189 = smul.addr %s188, 32
        %s190 = scalar_lea.vmem [#allocation4], %s189
        %p191 = pneg %p42
        %p192 = pneg %p39
        %p193 = pneg %p63
        %p194 = pneg %p60
        %p195 = pneg %p84
        %p196 = pneg %p81
        %p197 = pneg %p110
        %p198 = pneg %p107
        %s199 = sand.u32 %s97, 1
        %s200 = scalar_lea.sflag [#allocation6], %s199
        %s201 = sand.u32 %s97, 1
        %s202 = smul.addr %s201, 32
        %s203 = scalar_lea.vmem [#allocation9], %s202
        %s204 = smul.u32 4, %s21
        %s205 = smul.u32 4, %s21
        %vm207 = vcmask 1040384
        %vm208 = vsmask.f32 256
        %vm209 = vmand %vm207, %vm208
        %v210 = vld [vmem:[#allocation2] sm:$0x1]
        %v211 = vsel %vm209, 0, %v210
        %212 = vst [vmem:[#allocation2] sm:$0x1] %v211
        %vm213 = vcmask 1047559
        %vm214 = vsmask.f32 7966
        %vm215 = vmand %vm213, %vm214
        %v216 = vld [vmem:[#allocation2 + $0x10] sm:$0x80]
        %v217 = vsel %vm215, 0, %v216
        %218 = vst [vmem:[#allocation2 + $0x10] sm:$0x80] %v217
        %219 = vst [vmem:[#allocation3] sm:$0x3] -inf
        %220 = vst [vmem:[#allocation3 + $0x12] sm:$0x3] -inf
        %v221 = vld [vmem:[#allocation2 + $0x18] sm:$0x1]
        %v222 = vsel %vm209, 0, %v221
        %223 = vst [vmem:[#allocation2 + $0x18] sm:$0x1] %v222
        %v224 = vld [vmem:[#allocation2 + $0x28] sm:$0x80]
        %v225 = vsel %vm215, 0, %v224
        %226 = vst [vmem:[#allocation2 + $0x28] sm:$0x80] %v225
        %227 = vst [vmem:[#allocation3 + $0x14] sm:$0x3] -inf
        %228 = vst [vmem:[#allocation3 + $0x26] sm:$0x3] -inf
        %v229 = vlaneseq
        %v230 = vand.u32 %v229, 127
        %vm231 = vcmp.ge.s32.totalorder %v230, 16
        %vm232 = vcmp.ge.s32.totalorder %v230, 8
        %vm233 = vcmp.lt.s32.totalorder %v230, 120
        %vm234 = vcmp.lt.s32.totalorder %v230, 112
        %v235 = vld [vmem:[%s177] sm:$0xff]
        %v236 = vld [vmem:[%s177 + $0x8] sm:$0xff]
        %v237 = vld [vmem:[%s177 + $0x10] sm:$0xff]
        %v238 = vld [vmem:[%s177 + $0x18] sm:$0xff]
        %v239 = vmax.f32 %v235, 0.0
        %v240 = vmax.f32 %v236, 0.0
        %v241 = vmax.f32 %v237, 0.0
        %v242 = vmax.f32 %v238, 0.0
        %v243 = vpack.c.bf16 %v240, %v239
        %v244 = vpack.c.bf16 %v242, %v241
        %245 = vst [vmem:[#allocation2 + $0x8] sm:$0xff] %v243
        %246 = vst [vmem:[#allocation2 + $0x20] sm:$0xff] %v244
        %v248 = vshrl.u32 %v243, 16
        %v250 = vrot.slane %v248, 7
        %v251 = vshll.u32 %v243, 16
        %v253 = vor.u32 %v250, %v251
        %vm255 = vcmask 1047552
        %vm256 = vsmask.f32 7938
        %vm257 = vmand %vm255, %vm256
        %v258 = vld [vmem:[#allocation2] sm:$0xff]
        %v259 = vsel %vm257, %v253, %v258
        %260 = vst [vmem:[#allocation2] sm:$0xff] %v259
        %v261 = vrot.slane %v251, 1
        %v262 = vor.u32 %v248, %v261
        %vm264 = vsmask.f32 7424
        %vm265 = vmand %vm255, %vm264
        %v266 = vld [vmem:[#allocation2 + $0x10] sm:$0xff]
        %v267 = vsel %vm265, %v262, %v266
        %268 = vst [vmem:[#allocation2 + $0x10] sm:$0xff] %v267
        %v270 = vshrl.u32 %v244, 16
        %v272 = vrot.slane %v270, 7
        %v273 = vshll.u32 %v244, 16
        %v275 = vor.u32 %v272, %v273
        %v277 = vld [vmem:[#allocation2 + $0x18] sm:$0xff]
        %v278 = vsel %vm257, %v275, %v277
        %279 = vst [vmem:[#allocation2 + $0x18] sm:$0xff] %v278
        %v280 = vrot.slane %v273, 1
        %v281 = vor.u32 %v270, %v280
        %v283 = vld [vmem:[#allocation2 + $0x28] sm:$0xff]
        %v284 = vsel %vm265, %v281, %v283
        %285 = vst [vmem:[#allocation2 + $0x28] sm:$0xff] %v284
        %v286 = vld [vmem:[#allocation2] sm:$0xff]
        %v287 = vld [vmem:[#allocation2 + $0x8] sm:$0xff]
        %v288 = vld [vmem:[#allocation2 + $0x10] sm:$0xff]
        %v289 = vld [vmem:[#allocation2 + $0x18] sm:$0xff]
        %v290 = vld [vmem:[#allocation2 + $0x20] sm:$0xff]
        %v291 = vld [vmem:[#allocation2 + $0x28] sm:$0xff]
        %v292 = vld [vmem:[#allocation7] sm:$0xf]
        %v293 = vld [vmem:[#allocation7 + $0x4] sm:$0xf]
        %v294 = vld [vmem:[#allocation7 + $0x8] sm:$0xf]
        %v295 = vld [vmem:[#allocation7 + $0xc] sm:$0xf]
        %v296 = vld [vmem:[#allocation7 + $0x10] sm:$0xf]
        %v297 = vld [vmem:[#allocation7 + $0x14] sm:$0xf]
        %v298 = vld [vmem:[#allocation7 + $0x18] sm:$0xf]
        %v299 = vld [vmem:[#allocation7 + $0x1c] sm:$0xf]
        %v300 = vld [vmem:[#allocation7 + $0x20] sm:$0xf]
        %v301 = vld [vmem:[#allocation7 + $0x24] sm:$0xf]
        %v302 = vld [vmem:[#allocation7 + $0x28] sm:$0xf]
        %v303 = vld [vmem:[#allocation7 + $0x2c] sm:$0xf]
        %v304 = vld [vmem:[#allocation7 + $0x30] sm:$0xf]
        %v305 = vld [vmem:[#allocation7 + $0x34] sm:$0xf]
        %v306 = vld [vmem:[#allocation7 + $0x38] sm:$0xf]
        %v307 = vld [vmem:[#allocation7 + $0x3c] sm:$0xf]
        %v308 = vld [vmem:[#allocation7 + $0x40] sm:$0xf]
        %v309 = vld [vmem:[#allocation7 + $0x44] sm:$0xf]
        %v310 = vld [vmem:[#allocation7 + $0x48] sm:$0xf]
        %v311 = vld [vmem:[#allocation7 + $0x4c] sm:$0xf]
        %v312 = vld [vmem:[#allocation7 + $0x50] sm:$0xf]
        %v313 = vld [vmem:[#allocation7 + $0x54] sm:$0xf]
        %v314 = vld [vmem:[#allocation7 + $0x58] sm:$0xf]
        %v315 = vld [vmem:[#allocation7 + $0x5c] sm:$0xf]
        %v316 = vld [vmem:[#allocation7 + $0x60] sm:$0xf]
        %v317 = vld [vmem:[#allocation7 + $0x64] sm:$0xf]
        %v318 = vld [vmem:[#allocation7 + $0x68] sm:$0xf]
        %v319 = vld [vmem:[#allocation7 + $0x6c] sm:$0xf]
        %v320 = vld [vmem:[#allocation7 + $0x70] sm:$0xf]
        %v321 = vld [vmem:[#allocation7 + $0x74] sm:$0xf]
        %v322 = vld [vmem:[#allocation7 + $0x78] sm:$0xf]
        %v323 = vld [vmem:[#allocation7 + $0x7c] sm:$0xf]
        %v324 = vld [vmem:[#allocation7 + $0x80] sm:$0xf]
        %v325 = vld [vmem:[#allocation7 + $0x84] sm:$0xf]
        %v326 = vld [vmem:[#allocation7 + $0x88] sm:$0xf]
        %v327 = vld [vmem:[#allocation7 + $0x8c] sm:$0xf]
        %v328 = vld [vmem:[#allocation7 + $0x90] sm:$0xf]
        %v329 = vld [vmem:[#allocation7 + $0x94] sm:$0xf]
        %v330 = vld [vmem:[#allocation7 + $0x98] sm:$0xf]
        %v331 = vld [vmem:[#allocation7 + $0x9c] sm:$0xf]
        %v332 = vld [vmem:[#allocation7 + $0xa0] sm:$0xf]
        %v333 = vld [vmem:[#allocation7 + $0xa4] sm:$0xf]
        %v334 = vld [vmem:[#allocation7 + $0xa8] sm:$0xf]
        %v335 = vld [vmem:[#allocation7 + $0xac] sm:$0xf]
        %v336 = vld [vmem:[#allocation7 + $0xb0] sm:$0xf]
        %v337 = vld [vmem:[#allocation7 + $0xb4] sm:$0xf]
        %v338 = vld [vmem:[#allocation7 + $0xb8] sm:$0xf]
        %v339 = vld [vmem:[#allocation7 + $0xbc] sm:$0xf]
        %v340 = vld [vmem:[%s2] sm:$0x1]
        %v341 = vlaneseq
        %v342 = vshrl.u32 %v341, 7
        %v343 = vsub.s32 0, %v342
        %v344 = vrot.slane %v340, %v343
        %v393 = vunpack.c.l.b16 %v292
        %v394 = vunpack.c.l.b16 %v293
        %v395 = vunpack.c.l.b16 %v294
        %v396 = vunpack.c.l.b16 %v295
        %v397 = vunpack.c.l.b16 %v296
        %v398 = vunpack.c.l.b16 %v297
        %v399 = vunpack.c.l.b16 %v298
        %v400 = vunpack.c.l.b16 %v299
        %v401 = vunpack.c.l.b16 %v300
        %v402 = vunpack.c.l.b16 %v301
        %v403 = vunpack.c.l.b16 %v302
        %v404 = vunpack.c.l.b16 %v303
        %v405 = vunpack.c.l.b16 %v304
        %v406 = vunpack.c.l.b16 %v305
        %v407 = vunpack.c.l.b16 %v306
        %v408 = vunpack.c.l.b16 %v307
        %v409 = vunpack.c.l.b16 %v308
        %v410 = vunpack.c.l.b16 %v309
        %v411 = vunpack.c.l.b16 %v310
        %v412 = vunpack.c.l.b16 %v311
        %v413 = vunpack.c.l.b16 %v312
        %v414 = vunpack.c.l.b16 %v313
        %v415 = vunpack.c.l.b16 %v314
        %v416 = vunpack.c.l.b16 %v315
        %v417 = vunpack.c.l.b16 %v316
        %v418 = vunpack.c.l.b16 %v317
        %v419 = vunpack.c.l.b16 %v318
        %v420 = vunpack.c.l.b16 %v319
        %v421 = vunpack.c.l.b16 %v320
        %v422 = vunpack.c.l.b16 %v321
        %v423 = vunpack.c.l.b16 %v322
        %v424 = vunpack.c.l.b16 %v323
        %v425 = vunpack.c.l.b16 %v324
        %v426 = vunpack.c.l.b16 %v325
        %v427 = vunpack.c.l.b16 %v326
        %v428 = vunpack.c.l.b16 %v327
        %v429 = vunpack.c.l.b16 %v328
        %v430 = vunpack.c.l.b16 %v329
        %v431 = vunpack.c.l.b16 %v330
        %v432 = vunpack.c.l.b16 %v331
        %v433 = vunpack.c.l.b16 %v332
        %v434 = vunpack.c.l.b16 %v333
        %v435 = vunpack.c.l.b16 %v334
        %v436 = vunpack.c.l.b16 %v335
        %v437 = vunpack.c.l.b16 %v336
        %v438 = vunpack.c.l.b16 %v337
        %v439 = vunpack.c.l.b16 %v338
        %v440 = vunpack.c.l.b16 %v339
        %v441 = vpack.c.b16 %v394, %v393
        %v442 = vpack.c.b16 %v396, %v395
        %v443 = vpack.c.b16 %v398, %v397
        %v444 = vpack.c.b16 %v400, %v399
        %v445 = vpack.c.b16 %v402, %v401
        %v446 = vpack.c.b16 %v404, %v403
        %v447 = vpack.c.b16 %v406, %v405
        %v448 = vpack.c.b16 %v408, %v407
        %v449 = vpack.c.b16 %v410, %v409
        %v450 = vpack.c.b16 %v412, %v411
        %v451 = vpack.c.b16 %v414, %v413
        %v452 = vpack.c.b16 %v416, %v415
        %v453 = vpack.c.b16 %v418, %v417
        %v454 = vpack.c.b16 %v420, %v419
        %v455 = vpack.c.b16 %v422, %v421
        %v456 = vpack.c.b16 %v424, %v423
        %v457 = vpack.c.b16 %v426, %v425
        %v458 = vpack.c.b16 %v428, %v427
        %v459 = vpack.c.b16 %v430, %v429
        %v460 = vpack.c.b16 %v432, %v431
        %v461 = vpack.c.b16 %v434, %v433
        %v462 = vpack.c.b16 %v436, %v435
        %v463 = vpack.c.b16 %v438, %v437
        %v464 = vpack.c.b16 %v440, %v439
        %489 = vmatprep.subr.bf16.mxu0 0
        %490 = vmatpush1.bf16.msra.mxu0 %v441
        %491 = vmatprep.subr.bf16.mxu0 0
        %492 = vmatpush1.bf16.msra.mxu0 %v442
        %493 = vmatprep.subr.bf16.mxu0 0
        %494 = vmatpush1.bf16.msra.mxu0 %v443
        %495 = vmatprep.subr.bf16.mxu0 0
        %496 = vmatpush1.bf16.msra.mxu0 %v444
        %497 = vmatprep.subr.bf16.mxu0 0
        %498 = vmatpush1.bf16.msra.mxu0 %v445
        %499 = vmatprep.subr.bf16.mxu0 0
        %500 = vmatpush1.bf16.msra.mxu0 %v446
        %501 = vmatprep.subr.bf16.mxu0 0
        %502 = vmatpush1.bf16.msra.mxu0 %v447
        %503 = vmatprep.subr.bf16.mxu0 0
        %504 = vmatpush1.bf16.msra.mxu0 %v448
        %505 = vmatprep.subr.bf16.mxu0 0
        %506 = vmatpush1.bf16.msra.mxu0 %v449
        %507 = vmatprep.subr.bf16.mxu0 0
        %508 = vmatpush1.bf16.msra.mxu0 %v450
        %509 = vmatprep.subr.bf16.mxu0 0
        %510 = vmatpush1.bf16.msra.mxu0 %v451
        %511 = vmatprep.subr.bf16.mxu0 0
        %512 = vmatpush1.bf16.msra.mxu0 %v452
        %513 = vmatprep.subr.bf16.mxu0 0
        %514 = vmatpush1.bf16.msra.mxu0 %v453
        %515 = vmatprep.subr.bf16.mxu0 0
        %516 = vmatpush1.bf16.msra.mxu0 %v454
        %517 = vmatprep.subr.bf16.mxu0 0
        %518 = vmatpush1.bf16.msra.mxu0 %v455
        %519 = vmatprep.subr.bf16.mxu0 0
        %520 = vmatpush1.bf16.msra.mxu0 %v456
        %521 = vmatprep.mubr.bf16.mxu0 %v287
        %522 = vmatmul.mubr.bf16.gmra.mrb[0].mxu0 %v286
        %v523 = vpop.f32.mrb[0].mxu0
        %v524 = vadd.f32 %v344, %v523
        %v525 = vpop.f32.mrb[0].mxu0
        %v526 = vpop.f32.mrb[0].mxu0
        %v527 = vadd.f32 %v344, %v526
        %v528 = vpop.f32.mrb[0].mxu0
        %529 = vmatprep.mubr.bf16.mxu0 %v290
        %530 = vmatmul.mubr.bf16.gmra.mrb[0].mxu0 %v289
        %v531 = vpop.f32.mrb[0].mxu0
        %v532 = vadd.f32 %v344, %v531
        %v533 = vpop.f32.mrb[0].mxu0
        %v534 = vpop.f32.mrb[0].mxu0
        %v535 = vadd.f32 %v344, %v534
        %v536 = vpop.f32.mrb[0].mxu0
        %537 = vdwg.mxu0
        %538 = vmatprep.subr.bf16.mxu0 0
        %539 = vmatpush1.bf16.msra.mxu0 %v457
        %540 = vmatprep.subr.bf16.mxu0 0
        %541 = vmatpush1.bf16.msra.mxu0 %v458
        %542 = vmatprep.subr.bf16.mxu0 0
        %543 = vmatpush1.bf16.msra.mxu0 %v459
        %544 = vmatprep.subr.bf16.mxu0 0
        %545 = vmatpush1.bf16.msra.mxu0 %v460
        %546 = vmatprep.subr.bf16.mxu0 0
        %547 = vmatpush1.bf16.msra.mxu0 %v461
        %548 = vmatprep.subr.bf16.mxu0 0
        %549 = vmatpush1.bf16.msra.mxu0 %v462
        %550 = vmatprep.subr.bf16.mxu0 0
        %551 = vmatpush1.bf16.msra.mxu0 %v463
        %552 = vmatprep.subr.bf16.mxu0 0
        %553 = vmatpush1.bf16.msra.mxu0 %v464
        %554 = vmatprep.subr.bf16.mxu0 0
        %555 = vmatpush1.bf16.msra.mxu0 0
        %556 = vmatprep.subr.bf16.mxu0 0
        %557 = vmatpush1.bf16.msra.mxu0 0
        %558 = vmatprep.subr.bf16.mxu0 0
        %559 = vmatpush1.bf16.msra.mxu0 0
        %560 = vmatprep.subr.bf16.mxu0 0
        %561 = vmatpush1.bf16.msra.mxu0 0
        %562 = vmatprep.subr.bf16.mxu0 0
        %563 = vmatpush1.bf16.msra.mxu0 0
        %564 = vmatprep.subr.bf16.mxu0 0
        %565 = vmatpush1.bf16.msra.mxu0 0
        %566 = vmatprep.subr.bf16.mxu0 0
        %567 = vmatpush1.bf16.msra.mxu0 0
        %568 = vmatprep.subr.bf16.mxu0 0
        %569 = vmatpush1.bf16.msra.mxu0 0
        %570 = vmatprep.mubr.bf16.mxu0 0
        %571 = vmatmul.mubr.bf16.gmra.mrb[0].mxu0 %v288
        %v572 = vpop.f32.mrb[0].mxu0
        %v573 = vadd.f32 %v524, %v572
        %v574 = vpop.f32.mrb[0].mxu0
        %v575 = vpop.f32.mrb[0].mxu0
        %v576 = vadd.f32 %v527, %v575
        %v577 = vpop.f32.mrb[0].mxu0
        %578 = vmatprep.mubr.bf16.mxu0 0
        %579 = vmatmul.mubr.bf16.gmra.mrb[0].mxu0 %v291
        %v580 = vpop.f32.mrb[0].mxu0
        %v581 = vadd.f32 %v532, %v580
        %v582 = vpop.f32.mrb[0].mxu0
        %v583 = vpop.f32.mrb[0].mxu0
        %v584 = vadd.f32 %v535, %v583
        %v585 = vpop.f32.mrb[0].mxu0
        %586 = vdwg.mxu0
        %v587 = vmax.f32 %v573, 0.0
        %v588 = vmax.f32 %v576, 0.0
        %v589 = vmax.f32 %v581, 0.0
        %v590 = vmax.f32 %v584, 0.0
        %v591 = vpack.c.bf16 %v588, %v587
        %v592 = vpack.c.bf16 %v590, %v589
        %593 = vst [vmem:[#allocation2 + $0x8] sm:$0xff] %v591
        %594 = vst [vmem:[#allocation2 + $0x20] sm:$0xff] %v592
        %v596 = vshrl.u32 %v591, 16
        %v598 = vrot.slane %v596, 7
        %v599 = vshll.u32 %v591, 16
        %v601 = vor.u32 %v598, %v599
        %v603 = vld [vmem:[#allocation2] sm:$0xff]
        %v604 = vsel %vm257, %v601, %v603
        %605 = vst [vmem:[#allocation2] sm:$0xff] %v604
        %v606 = vrot.slane %v599, 1
        %v607 = vor.u32 %v596, %v606
        %v609 = vld [vmem:[#allocation2 + $0x10] sm:$0xff]
        %v610 = vsel %vm265, %v607, %v609
        %611 = vst [vmem:[#allocation2 + $0x10] sm:$0xff] %v610
        %v613 = vshrl.u32 %v592, 16
        %v615 = vrot.slane %v613, 7
        %v616 = vshll.u32 %v592, 16
        %v618 = vor.u32 %v615, %v616
        %v620 = vld [vmem:[#allocation2 + $0x18] sm:$0xff]
        %v621 = vsel %vm257, %v618, %v620
        %622 = vst [vmem:[#allocation2 + $0x18] sm:$0xff] %v621
        %v623 = vrot.slane %v616, 1
        %v624 = vor.u32 %v613, %v623
        %v626 = vld [vmem:[#allocation2 + $0x28] sm:$0xff]
        %v627 = vsel %vm265, %v624, %v626
        %628 = vst [vmem:[#allocation2 + $0x28] sm:$0xff] %v627
        %v629 = vld [vmem:[#allocation2] sm:$0xff]
        %v630 = vld [vmem:[#allocation2 + $0x8] sm:$0xff]
        %v631 = vld [vmem:[#allocation2 + $0x10] sm:$0xff]
        %v632 = vld [vmem:[#allocation2 + $0x18] sm:$0xff]
        %v633 = vld [vmem:[#allocation2 + $0x20] sm:$0xff]
        %v634 = vld [vmem:[#allocation2 + $0x28] sm:$0xff]
        %s635 = scalar_lea.vmem [#allocation7], 192
        %v636 = vld [vmem:[%s635] sm:$0xf]
        %v637 = vld [vmem:[%s635 + $0x4] sm:$0xf]
        %v638 = vld [vmem:[%s635 + $0x8] sm:$0xf]
        %v639 = vld [vmem:[%s635 + $0xc] sm:$0xf]
        %v640 = vld [vmem:[%s635 + $0x10] sm:$0xf]
        %v641 = vld [vmem:[%s635 + $0x14] sm:$0xf]
        %v642 = vld [vmem:[%s635 + $0x18] sm:$0xf]
        %v643 = vld [vmem:[%s635 + $0x1c] sm:$0xf]
        %v644 = vld [vmem:[%s635 + $0x20] sm:$0xf]
        %v645 = vld [vmem:[%s635 + $0x24] sm:$0xf]
        %v646 = vld [vmem:[%s635 + $0x28] sm:$0xf]
        %v647 = vld [vmem:[%s635 + $0x2c] sm:$0xf]
        %v648 = vld [vmem:[%s635 + $0x30] sm:$0xf]
        %v649 = vld [vmem:[%s635 + $0x34] sm:$0xf]
        %v650 = vld [vmem:[%s635 + $0x38] sm:$0xf]
        %v651 = vld [vmem:[%s635 + $0x3c] sm:$0xf]
        %v652 = vld [vmem:[%s635 + $0x40] sm:$0xf]
        %v653 = vld [vmem:[%s635 + $0x44] sm:$0xf]
        %v654 = vld [vmem:[%s635 + $0x48] sm:$0xf]
        %v655 = vld [vmem:[%s635 + $0x4c] sm:$0xf]
        %v656 = vld [vmem:[%s635 + $0x50] sm:$0xf]
        %v657 = vld [vmem:[%s635 + $0x54] sm:$0xf]
        %v658 = vld [vmem:[%s635 + $0x58] sm:$0xf]
        %v659 = vld [vmem:[%s635 + $0x5c] sm:$0xf]
        %v660 = vld [vmem:[%s635 + $0x60] sm:$0xf]
        %v661 = vld [vmem:[%s635 + $0x64] sm:$0xf]
        %v662 = vld [vmem:[%s635 + $0x68] sm:$0xf]
        %v663 = vld [vmem:[%s635 + $0x6c] sm:$0xf]
        %v664 = vld [vmem:[%s635 + $0x70] sm:$0xf]
        %v665 = vld [vmem:[%s635 + $0x74] sm:$0xf]
        %v666 = vld [vmem:[%s635 + $0x78] sm:$0xf]
        %v667 = vld [vmem:[%s635 + $0x7c] sm:$0xf]
        %v668 = vld [vmem:[%s635 + $0x80] sm:$0xf]
        %v669 = vld [vmem:[%s635 + $0x84] sm:$0xf]
        %v670 = vld [vmem:[%s635 + $0x88] sm:$0xf]
        %v671 = vld [vmem:[%s635 + $0x8c] sm:$0xf]
        %v672 = vld [vmem:[%s635 + $0x90] sm:$0xf]
        %v673 = vld [vmem:[%s635 + $0x94] sm:$0xf]
        %v674 = vld [vmem:[%s635 + $0x98] sm:$0xf]
        %v675 = vld [vmem:[%s635 + $0x9c] sm:$0xf]
        %v676 = vld [vmem:[%s635 + $0xa0] sm:$0xf]
        %v677 = vld [vmem:[%s635 + $0xa4] sm:$0xf]
        %v678 = vld [vmem:[%s635 + $0xa8] sm:$0xf]
        %v679 = vld [vmem:[%s635 + $0xac] sm:$0xf]
        %v680 = vld [vmem:[%s635 + $0xb0] sm:$0xf]
        %v681 = vld [vmem:[%s635 + $0xb4] sm:$0xf]
        %v682 = vld [vmem:[%s635 + $0xb8] sm:$0xf]
        %v683 = vld [vmem:[%s635 + $0xbc] sm:$0xf]
        %v732 = vunpack.c.l.b16 %v636
        %v733 = vunpack.c.l.b16 %v637
        %v734 = vunpack.c.l.b16 %v638
        %v735 = vunpack.c.l.b16 %v639
        %v736 = vunpack.c.l.b16 %v640
        %v737 = vunpack.c.l.b16 %v641
        %v738 = vunpack.c.l.b16 %v642
        %v739 = vunpack.c.l.b16 %v643
        %v740 = vunpack.c.l.b16 %v644
        %v741 = vunpack.c.l.b16 %v645
        %v742 = vunpack.c.l.b16 %v646
        %v743 = vunpack.c.l.b16 %v647
        %v744 = vunpack.c.l.b16 %v648
        %v745 = vunpack.c.l.b16 %v649
        %v746 = vunpack.c.l.b16 %v650
        %v747 = vunpack.c.l.b16 %v651
        %v748 = vunpack.c.l.b16 %v652
        %v749 = vunpack.c.l.b16 %v653
        %v750 = vunpack.c.l.b16 %v654
        %v751 = vunpack.c.l.b16 %v655
        %v752 = vunpack.c.l.b16 %v656
        %v753 = vunpack.c.l.b16 %v657
        %v754 = vunpack.c.l.b16 %v658
        %v755 = vunpack.c.l.b16 %v659
        %v756 = vunpack.c.l.b16 %v660
        %v757 = vunpack.c.l.b16 %v661
        %v758 = vunpack.c.l.b16 %v662
        %v759 = vunpack.c.l.b16 %v663
        %v760 = vunpack.c.l.b16 %v664
        %v761 = vunpack.c.l.b16 %v665
        %v762 = vunpack.c.l.b16 %v666
        %v763 = vunpack.c.l.b16 %v667
        %v764 = vunpack.c.l.b16 %v668
        %v765 = vunpack.c.l.b16 %v669
        %v766 = vunpack.c.l.b16 %v670
        %v767 = vunpack.c.l.b16 %v671
        %v768 = vunpack.c.l.b16 %v672
        %v769 = vunpack.c.l.b16 %v673
        %v770 = vunpack.c.l.b16 %v674
        %v771 = vunpack.c.l.b16 %v675
        %v772 = vunpack.c.l.b16 %v676
        %v773 = vunpack.c.l.b16 %v677
        %v774 = vunpack.c.l.b16 %v678
        %v775 = vunpack.c.l.b16 %v679
        %v776 = vunpack.c.l.b16 %v680
        %v777 = vunpack.c.l.b16 %v681
        %v778 = vunpack.c.l.b16 %v682
        %v779 = vunpack.c.l.b16 %v683
        %v780 = vpack.c.b16 %v733, %v732
        %v781 = vpack.c.b16 %v735, %v734
        %v782 = vpack.c.b16 %v737, %v736
        %v783 = vpack.c.b16 %v739, %v738
        %v784 = vpack.c.b16 %v741, %v740
        %v785 = vpack.c.b16 %v743, %v742
        %v786 = vpack.c.b16 %v745, %v744
        %v787 = vpack.c.b16 %v747, %v746
        %v788 = vpack.c.b16 %v749, %v748
        %v789 = vpack.c.b16 %v751, %v750
        %v790 = vpack.c.b16 %v753, %v752
        %v791 = vpack.c.b16 %v755, %v754
        %v792 = vpack.c.b16 %v757, %v756
        %v793 = vpack.c.b16 %v759, %v758
        %v794 = vpack.c.b16 %v761, %v760
        %v795 = vpack.c.b16 %v763, %v762
        %v796 = vpack.c.b16 %v765, %v764
        %v797 = vpack.c.b16 %v767, %v766
        %v798 = vpack.c.b16 %v769, %v768
        %v799 = vpack.c.b16 %v771, %v770
        %v800 = vpack.c.b16 %v773, %v772
        %v801 = vpack.c.b16 %v775, %v774
        %v802 = vpack.c.b16 %v777, %v776
        %v803 = vpack.c.b16 %v779, %v778
        %828 = vmatprep.subr.bf16.mxu0 0
        %829 = vmatpush1.bf16.msra.mxu0 %v780
        %830 = vmatprep.subr.bf16.mxu0 0
        %831 = vmatpush1.bf16.msra.mxu0 %v781
        %832 = vmatprep.subr.bf16.mxu0 0
        %833 = vmatpush1.bf16.msra.mxu0 %v782
        %834 = vmatprep.subr.bf16.mxu0 0
        %835 = vmatpush1.bf16.msra.mxu0 %v783
        %836 = vmatprep.subr.bf16.mxu0 0
        %837 = vmatpush1.bf16.msra.mxu0 %v784
        %838 = vmatprep.subr.bf16.mxu0 0
        %839 = vmatpush1.bf16.msra.mxu0 %v785
        %840 = vmatprep.subr.bf16.mxu0 0
        %841 = vmatpush1.bf16.msra.mxu0 %v786
        %842 = vmatprep.subr.bf16.mxu0 0
        %843 = vmatpush1.bf16.msra.mxu0 %v787
        %844 = vmatprep.subr.bf16.mxu0 0
        %845 = vmatpush1.bf16.msra.mxu0 %v788
        %846 = vmatprep.subr.bf16.mxu0 0
        %847 = vmatpush1.bf16.msra.mxu0 %v789
        %848 = vmatprep.subr.bf16.mxu0 0
        %849 = vmatpush1.bf16.msra.mxu0 %v790
        %850 = vmatprep.subr.bf16.mxu0 0
        %851 = vmatpush1.bf16.msra.mxu0 %v791
        %852 = vmatprep.subr.bf16.mxu0 0
        %853 = vmatpush1.bf16.msra.mxu0 %v792
        %854 = vmatprep.subr.bf16.mxu0 0
        %855 = vmatpush1.bf16.msra.mxu0 %v793
        %856 = vmatprep.subr.bf16.mxu0 0
        %857 = vmatpush1.bf16.msra.mxu0 %v794
        %858 = vmatprep.subr.bf16.mxu0 0
        %859 = vmatpush1.bf16.msra.mxu0 %v795
        %860 = vmatprep.mubr.bf16.mxu0 %v630
        %861 = vmatmul.mubr.bf16.gmra.mrb[0].mxu0 %v629
        %v862 = vpop.f32.mrb[0].mxu0
        %v863 = vadd.f32 0.0, %v862
        %v864 = vpop.f32.mrb[0].mxu0
        %v865 = vpop.f32.mrb[0].mxu0
        %v866 = vadd.f32 0.0, %v865
        %v867 = vpop.f32.mrb[0].mxu0
        %868 = vmatprep.mubr.bf16.mxu0 %v633
        %869 = vmatmul.mubr.bf16.gmra.mrb[0].mxu0 %v632
        %v870 = vpop.f32.mrb[0].mxu0
        %v871 = vadd.f32 0.0, %v870
        %v872 = vpop.f32.mrb[0].mxu0
        %v873 = vpop.f32.mrb[0].mxu0
        %v874 = vadd.f32 0.0, %v873
        %v875 = vpop.f32.mrb[0].mxu0
        %876 = vdwg.mxu0
        %877 = vmatprep.subr.bf16.mxu0 0
        %878 = vmatpush1.bf16.msra.mxu0 %v796
        %879 = vmatprep.subr.bf16.mxu0 0
        %880 = vmatpush1.bf16.msra.mxu0 %v797
        %881 = vmatprep.subr.bf16.mxu0 0
        %882 = vmatpush1.bf16.msra.mxu0 %v798
        %883 = vmatprep.subr.bf16.mxu0 0
        %884 = vmatpush1.bf16.msra.mxu0 %v799
        %885 = vmatprep.subr.bf16.mxu0 0
        %886 = vmatpush1.bf16.msra.mxu0 %v800
        %887 = vmatprep.subr.bf16.mxu0 0
        %888 = vmatpush1.bf16.msra.mxu0 %v801
        %889 = vmatprep.subr.bf16.mxu0 0
        %890 = vmatpush1.bf16.msra.mxu0 %v802
        %891 = vmatprep.subr.bf16.mxu0 0
        %892 = vmatpush1.bf16.msra.mxu0 %v803
        %893 = vmatprep.subr.bf16.mxu0 0
        %894 = vmatpush1.bf16.msra.mxu0 0
        %895 = vmatprep.subr.bf16.mxu0 0
        %896 = vmatpush1.bf16.msra.mxu0 0
        %897 = vmatprep.subr.bf16.mxu0 0
        %898 = vmatpush1.bf16.msra.mxu0 0
        %899 = vmatprep.subr.bf16.mxu0 0
        %900 = vmatpush1.bf16.msra.mxu0 0
        %901 = vmatprep.subr.bf16.mxu0 0
        %902 = vmatpush1.bf16.msra.mxu0 0
        %903 = vmatprep.subr.bf16.mxu0 0
        %904 = vmatpush1.bf16.msra.mxu0 0
        %905 = vmatprep.subr.bf16.mxu0 0
        %906 = vmatpush1.bf16.msra.mxu0 0
        %907 = vmatprep.subr.bf16.mxu0 0
        %908 = vmatpush1.bf16.msra.mxu0 0
        %909 = vmatprep.mubr.bf16.mxu0 0
        %910 = vmatmul.mubr.bf16.gmra.mrb[0].mxu0 %v631
        %v911 = vpop.f32.mrb[0].mxu0
        %v912 = vadd.f32 %v863, %v911
        %v913 = vpop.f32.mrb[0].mxu0
        %v914 = vpop.f32.mrb[0].mxu0
        %v915 = vadd.f32 %v866, %v914
        %v916 = vpop.f32.mrb[0].mxu0
        %917 = vmatprep.mubr.bf16.mxu0 0
        %918 = vmatmul.mubr.bf16.gmra.mrb[0].mxu0 %v634
        %v919 = vpop.f32.mrb[0].mxu0
        %v920 = vadd.f32 %v871, %v919
        %v921 = vpop.f32.mrb[0].mxu0
        %v922 = vpop.f32.mrb[0].mxu0
        %v923 = vadd.f32 %v874, %v922
        %v924 = vpop.f32.mrb[0].mxu0
        %925 = vdwg.mxu0
        %v926 = vadd.f32 %v239, %v912
        %v927 = vadd.f32 %v240, %v915
        %v928 = vadd.f32 %v241, %v920
        %v929 = vadd.f32 %v242, %v923
        %v930 = vmax.f32 %v926, 0.0
        %v931 = vmax.f32 %v927, 0.0
        %v932 = vmax.f32 %v928, 0.0
        %v933 = vmax.f32 %v929, 0.0
        %v934 = vpack.c.bf16 %v931, %v930
        %v935 = vpack.c.bf16 %v933, %v932
        %936 = vst [vmem:[#allocation2 + $0x8] sm:$0xff] %v934
        %937 = vst [vmem:[#allocation2 + $0x20] sm:$0xff] %v935
        %v939 = vshrl.u32 %v934, 16
        %v941 = vrot.slane %v939, 7
        %v942 = vshll.u32 %v934, 16
        %v944 = vor.u32 %v941, %v942
        %v946 = vld [vmem:[#allocation2] sm:$0xff]
        %v947 = vsel %vm257, %v944, %v946
        %948 = vst [vmem:[#allocation2] sm:$0xff] %v947
        %v949 = vrot.slane %v942, 1
        %v950 = vor.u32 %v939, %v949
        %v952 = vld [vmem:[#allocation2 + $0x10] sm:$0xff]
        %v953 = vsel %vm265, %v950, %v952
        %954 = vst [vmem:[#allocation2 + $0x10] sm:$0xff] %v953
        %v956 = vshrl.u32 %v935, 16
        %v958 = vrot.slane %v956, 7
        %v959 = vshll.u32 %v935, 16
        %v961 = vor.u32 %v958, %v959
        %v963 = vld [vmem:[#allocation2 + $0x18] sm:$0xff]
        %v964 = vsel %vm257, %v961, %v963
        %965 = vst [vmem:[#allocation2 + $0x18] sm:$0xff] %v964
        %v966 = vrot.slane %v959, 1
        %v967 = vor.u32 %v956, %v966
        %v969 = vld [vmem:[#allocation2 + $0x28] sm:$0xff]
        %v970 = vsel %vm265, %v967, %v969
        %971 = vst [vmem:[#allocation2 + $0x28] sm:$0xff] %v970
        %v972 = vld [vmem:[#allocation2] sm:$0xff]
        %v973 = vld [vmem:[#allocation2 + $0x8] sm:$0xff]
        %v974 = vld [vmem:[#allocation2 + $0x10] sm:$0xff]
        %v975 = vld [vmem:[#allocation2 + $0x18] sm:$0xff]
        %v976 = vld [vmem:[#allocation2 + $0x20] sm:$0xff]
        %v977 = vld [vmem:[#allocation2 + $0x28] sm:$0xff]
        %s978 = scalar_lea.vmem [#allocation7], 384
        %v979 = vld [vmem:[%s978] sm:$0xf]
        %v980 = vld [vmem:[%s978 + $0x4] sm:$0xf]
        %v981 = vld [vmem:[%s978 + $0x8] sm:$0xf]
        %v982 = vld [vmem:[%s978 + $0xc] sm:$0xf]
        %v983 = vld [vmem:[%s978 + $0x10] sm:$0xf]
        %v984 = vld [vmem:[%s978 + $0x14] sm:$0xf]
        %v985 = vld [vmem:[%s978 + $0x18] sm:$0xf]
        %v986 = vld [vmem:[%s978 + $0x1c] sm:$0xf]
        %v987 = vld [vmem:[%s978 + $0x20] sm:$0xf]
        %v988 = vld [vmem:[%s978 + $0x24] sm:$0xf]
        %v989 = vld [vmem:[%s978 + $0x28] sm:$0xf]
        %v990 = vld [vmem:[%s978 + $0x2c] sm:$0xf]
        %v991 = vld [vmem:[%s978 + $0x30] sm:$0xf]
        %v992 = vld [vmem:[%s978 + $0x34] sm:$0xf]
        %v993 = vld [vmem:[%s978 + $0x38] sm:$0xf]
        %v994 = vld [vmem:[%s978 + $0x3c] sm:$0xf]
        %v995 = vld [vmem:[%s978 + $0x40] sm:$0xf]
        %v996 = vld [vmem:[%s978 + $0x44] sm:$0xf]
        %v997 = vld [vmem:[%s978 + $0x48] sm:$0xf]
        %v998 = vld [vmem:[%s978 + $0x4c] sm:$0xf]
        %v999 = vld [vmem:[%s978 + $0x50] sm:$0xf]
        %v1000 = vld [vmem:[%s978 + $0x54] sm:$0xf]
        %v1001 = vld [vmem:[%s978 + $0x58] sm:$0xf]
        %v1002 = vld [vmem:[%s978 + $0x5c] sm:$0xf]
        %v1003 = vld [vmem:[%s978 + $0x60] sm:$0xf]
        %v1004 = vld [vmem:[%s978 + $0x64] sm:$0xf]
        %v1005 = vld [vmem:[%s978 + $0x68] sm:$0xf]
        %v1006 = vld [vmem:[%s978 + $0x6c] sm:$0xf]
        %v1007 = vld [vmem:[%s978 + $0x70] sm:$0xf]
        %v1008 = vld [vmem:[%s978 + $0x74] sm:$0xf]
        %v1009 = vld [vmem:[%s978 + $0x78] sm:$0xf]
        %v1010 = vld [vmem:[%s978 + $0x7c] sm:$0xf]
        %v1011 = vld [vmem:[%s978 + $0x80] sm:$0xf]
        %v1012 = vld [vmem:[%s978 + $0x84] sm:$0xf]
        %v1013 = vld [vmem:[%s978 + $0x88] sm:$0xf]
        %v1014 = vld [vmem:[%s978 + $0x8c] sm:$0xf]
        %v1015 = vld [vmem:[%s978 + $0x90] sm:$0xf]
        %v1016 = vld [vmem:[%s978 + $0x94] sm:$0xf]
        %v1017 = vld [vmem:[%s978 + $0x98] sm:$0xf]
        %v1018 = vld [vmem:[%s978 + $0x9c] sm:$0xf]
        %v1019 = vld [vmem:[%s978 + $0xa0] sm:$0xf]
        %v1020 = vld [vmem:[%s978 + $0xa4] sm:$0xf]
        %v1021 = vld [vmem:[%s978 + $0xa8] sm:$0xf]
        %v1022 = vld [vmem:[%s978 + $0xac] sm:$0xf]
        %v1023 = vld [vmem:[%s978 + $0xb0] sm:$0xf]
        %v1024 = vld [vmem:[%s978 + $0xb4] sm:$0xf]
        %v1025 = vld [vmem:[%s978 + $0xb8] sm:$0xf]
        %v1026 = vld [vmem:[%s978 + $0xbc] sm:$0xf]
        %v1027 = vld [vmem:[%s2 + $0x1] sm:$0x1]
        %v1028 = vlaneseq
        %v1029 = vshrl.u32 %v1028, 7
        %v1030 = vsub.s32 0, %v1029
        %v1031 = vrot.slane %v1027, %v1030
        %v1080 = vunpack.c.l.b16 %v979
        %v1081 = vunpack.c.l.b16 %v980
        %v1082 = vunpack.c.l.b16 %v981
        %v1083 = vunpack.c.l.b16 %v982
        %v1084 = vunpack.c.l.b16 %v983
        %v1085 = vunpack.c.l.b16 %v984
        %v1086 = vunpack.c.l.b16 %v985
        %v1087 = vunpack.c.l.b16 %v986
        %v1088 = vunpack.c.l.b16 %v987
        %v1089 = vunpack.c.l.b16 %v988
        %v1090 = vunpack.c.l.b16 %v989
        %v1091 = vunpack.c.l.b16 %v990
        %v1092 = vunpack.c.l.b16 %v991
        %v1093 = vunpack.c.l.b16 %v992
        %v1094 = vunpack.c.l.b16 %v993
        %v1095 = vunpack.c.l.b16 %v994
        %v1096 = vunpack.c.l.b16 %v995
        %v1097 = vunpack.c.l.b16 %v996
        %v1098 = vunpack.c.l.b16 %v997
        %v1099 = vunpack.c.l.b16 %v998
        %v1100 = vunpack.c.l.b16 %v999
        %v1101 = vunpack.c.l.b16 %v1000
        %v1102 = vunpack.c.l.b16 %v1001
        %v1103 = vunpack.c.l.b16 %v1002
        %v1104 = vunpack.c.l.b16 %v1003
        %v1105 = vunpack.c.l.b16 %v1004
        %v1106 = vunpack.c.l.b16 %v1005
        %v1107 = vunpack.c.l.b16 %v1006
        %v1108 = vunpack.c.l.b16 %v1007
        %v1109 = vunpack.c.l.b16 %v1008
        %v1110 = vunpack.c.l.b16 %v1009
        %v1111 = vunpack.c.l.b16 %v1010
        %v1112 = vunpack.c.l.b16 %v1011
        %v1113 = vunpack.c.l.b16 %v1012
        %v1114 = vunpack.c.l.b16 %v1013
        %v1115 = vunpack.c.l.b16 %v1014
        %v1116 = vunpack.c.l.b16 %v1015
        %v1117 = vunpack.c.l.b16 %v1016
        %v1118 = vunpack.c.l.b16 %v1017
        %v1119 = vunpack.c.l.b16 %v1018
        %v1120 = vunpack.c.l.b16 %v1019
        %v1121 = vunpack.c.l.b16 %v1020
        %v1122 = vunpack.c.l.b16 %v1021
        %v1123 = vunpack.c.l.b16 %v1022
        %v1124 = vunpack.c.l.b16 %v1023
        %v1125 = vunpack.c.l.b16 %v1024
        %v1126 = vunpack.c.l.b16 %v1025
        %v1127 = vunpack.c.l.b16 %v1026
        %v1128 = vpack.c.b16 %v1081, %v1080
        %v1129 = vpack.c.b16 %v1083, %v1082
        %v1130 = vpack.c.b16 %v1085, %v1084
        %v1131 = vpack.c.b16 %v1087, %v1086
        %v1132 = vpack.c.b16 %v1089, %v1088
        %v1133 = vpack.c.b16 %v1091, %v1090
        %v1134 = vpack.c.b16 %v1093, %v1092
        %v1135 = vpack.c.b16 %v1095, %v1094
        %v1136 = vpack.c.b16 %v1097, %v1096
        %v1137 = vpack.c.b16 %v1099, %v1098
        %v1138 = vpack.c.b16 %v1101, %v1100
        %v1139 = vpack.c.b16 %v1103, %v1102
        %v1140 = vpack.c.b16 %v1105, %v1104
        %v1141 = vpack.c.b16 %v1107, %v1106
        %v1142 = vpack.c.b16 %v1109, %v1108
        %v1143 = vpack.c.b16 %v1111, %v1110
        %v1144 = vpack.c.b16 %v1113, %v1112
        %v1145 = vpack.c.b16 %v1115, %v1114
        %v1146 = vpack.c.b16 %v1117, %v1116
        %v1147 = vpack.c.b16 %v1119, %v1118
        %v1148 = vpack.c.b16 %v1121, %v1120
        %v1149 = vpack.c.b16 %v1123, %v1122
        %v1150 = vpack.c.b16 %v1125, %v1124
        %v1151 = vpack.c.b16 %v1127, %v1126
        %1176 = vmatprep.subr.bf16.mxu0 0
        %1177 = vmatpush1.bf16.msra.mxu0 %v1128
        %1178 = vmatprep.subr.bf16.mxu0 0
        %1179 = vmatpush1.bf16.msra.mxu0 %v1129
        %1180 = vmatprep.subr.bf16.mxu0 0
        %1181 = vmatpush1.bf16.msra.mxu0 %v1130
        %1182 = vmatprep.subr.bf16.mxu0 0
        %1183 = vmatpush1.bf16.msra.mxu0 %v1131
        %1184 = vmatprep.subr.bf16.mxu0 0
        %1185 = vmatpush1.bf16.msra.mxu0 %v1132
        %1186 = vmatprep.subr.bf16.mxu0 0
        %1187 = vmatpush1.bf16.msra.mxu0 %v1133
        %1188 = vmatprep.subr.bf16.mxu0 0
        %1189 = vmatpush1.bf16.msra.mxu0 %v1134
        %1190 = vmatprep.subr.bf16.mxu0 0
        %1191 = vmatpush1.bf16.msra.mxu0 %v1135
        %1192 = vmatprep.subr.bf16.mxu0 0
        %1193 = vmatpush1.bf16.msra.mxu0 %v1136
        %1194 = vmatprep.subr.bf16.mxu0 0
        %1195 = vmatpush1.bf16.msra.mxu0 %v1137
        %1196 = vmatprep.subr.bf16.mxu0 0
        %1197 = vmatpush1.bf16.msra.mxu0 %v1138
        %1198 = vmatprep.subr.bf16.mxu0 0
        %1199 = vmatpush1.bf16.msra.mxu0 %v1139
        %1200 = vmatprep.subr.bf16.mxu0 0
        %1201 = vmatpush1.bf16.msra.mxu0 %v1140
        %1202 = vmatprep.subr.bf16.mxu0 0
        %1203 = vmatpush1.bf16.msra.mxu0 %v1141
        %1204 = vmatprep.subr.bf16.mxu0 0
        %1205 = vmatpush1.bf16.msra.mxu0 %v1142
        %1206 = vmatprep.subr.bf16.mxu0 0
        %1207 = vmatpush1.bf16.msra.mxu0 %v1143
        %1208 = vmatprep.mubr.bf16.mxu0 %v973
        %1209 = vmatmul.mubr.bf16.gmra.mrb[0].mxu0 %v972
        %v1210 = vpop.f32.mrb[0].mxu0
        %v1211 = vadd.f32 %v1031, %v1210
        %v1212 = vpop.f32.mrb[0].mxu0
        %v1213 = vpop.f32.mrb[0].mxu0
        %v1214 = vadd.f32 %v1031, %v1213
        %v1215 = vpop.f32.mrb[0].mxu0
        %1216 = vmatprep.mubr.bf16.mxu0 %v976
        %1217 = vmatmul.mubr.bf16.gmra.mrb[0].mxu0 %v975
        %v1218 = vpop.f32.mrb[0].mxu0
        %v1219 = vadd.f32 %v1031, %v1218
        %v1220 = vpop.f32.mrb[0].mxu0
        %v1221 = vpop.f32.mrb[0].mxu0
        %v1222 = vadd.f32 %v1031, %v1221
        %v1223 = vpop.f32.mrb[0].mxu0
        %1224 = vdwg.mxu0
        %1225 = vmatprep.subr.bf16.mxu0 0
        %1226 = vmatpush1.bf16.msra.mxu0 %v1144
        %1227 = vmatprep.subr.bf16.mxu0 0
        %1228 = vmatpush1.bf16.msra.mxu0 %v1145
        %1229 = vmatprep.subr.bf16.mxu0 0
        %1230 = vmatpush1.bf16.msra.mxu0 %v1146
        %1231 = vmatprep.subr.bf16.mxu0 0
        %1232 = vmatpush1.bf16.msra.mxu0 %v1147
        %1233 = vmatprep.subr.bf16.mxu0 0
        %1234 = vmatpush1.bf16.msra.mxu0 %v1148
        %1235 = vmatprep.subr.bf16.mxu0 0
        %1236 = vmatpush1.bf16.msra.mxu0 %v1149
        %1237 = vmatprep.subr.bf16.mxu0 0
        %1238 = vmatpush1.bf16.msra.mxu0 %v1150
        %1239 = vmatprep.subr.bf16.mxu0 0
        %1240 = vmatpush1.bf16.msra.mxu0 %v1151
        %1241 = vmatprep.subr.bf16.mxu0 0
        %1242 = vmatpush1.bf16.msra.mxu0 0
        %1243 = vmatprep.subr.bf16.mxu0 0
        %1244 = vmatpush1.bf16.msra.mxu0 0
        %1245 = vmatprep.subr.bf16.mxu0 0
        %1246 = vmatpush1.bf16.msra.mxu0 0
        %1247 = vmatprep.subr.bf16.mxu0 0
        %1248 = vmatpush1.bf16.msra.mxu0 0
        %1249 = vmatprep.subr.bf16.mxu0 0
        %1250 = vmatpush1.bf16.msra.mxu0 0
        %1251 = vmatprep.subr.bf16.mxu0 0
        %1252 = vmatpush1.bf16.msra.mxu0 0
        %1253 = vmatprep.subr.bf16.mxu0 0
        %1254 = vmatpush1.bf16.msra.mxu0 0
        %1255 = vmatprep.subr.bf16.mxu0 0
        %1256 = vmatpush1.bf16.msra.mxu0 0
        %1257 = vmatprep.mubr.bf16.mxu0 0
        %1258 = vmatmul.mubr.bf16.gmra.mrb[0].mxu0 %v974
        %v1259 = vpop.f32.mrb[0].mxu0
        %v1260 = vadd.f32 %v1211, %v1259
        %v1261 = vpop.f32.mrb[0].mxu0
        %v1262 = vpop.f32.mrb[0].mxu0
        %v1263 = vadd.f32 %v1214, %v1262
        %v1264 = vpop.f32.mrb[0].mxu0
        %1265 = vmatprep.mubr.bf16.mxu0 0
        %1266 = vmatmul.mubr.bf16.gmra.mrb[0].mxu0 %v977
        %v1267 = vpop.f32.mrb[0].mxu0
        %v1268 = vadd.f32 %v1219, %v1267
        %v1269 = vpop.f32.mrb[0].mxu0
        %v1270 = vpop.f32.mrb[0].mxu0
        %v1271 = vadd.f32 %v1222, %v1270
        %v1272 = vpop.f32.mrb[0].mxu0
        %1273 = vdwg.mxu0
        %v1274 = vmax.f32 %v1260, 0.0
        %v1275 = vmax.f32 %v1263, 0.0
        %v1276 = vmax.f32 %v1268, 0.0
        %v1277 = vmax.f32 %v1271, 0.0
        %v1278 = vpack.c.bf16 %v1275, %v1274
        %v1279 = vpack.c.bf16 %v1277, %v1276
        %1280 = vst [vmem:[#allocation2 + $0x8] sm:$0xff] %v1278
        %1281 = vst [vmem:[#allocation2 + $0x20] sm:$0xff] %v1279
        %v1283 = vshrl.u32 %v1278, 16
        %v1285 = vrot.slane %v1283, 7
        %v1286 = vshll.u32 %v1278, 16
        %v1288 = vor.u32 %v1285, %v1286
        %v1290 = vld [vmem:[#allocation2] sm:$0xff]
        %v1291 = vsel %vm257, %v1288, %v1290
        %1292 = vst [vmem:[#allocation2] sm:$0xff] %v1291
        %v1293 = vrot.slane %v1286, 1
        %v1294 = vor.u32 %v1283, %v1293
        %v1296 = vld [vmem:[#allocation2 + $0x10] sm:$0xff]
        %v1297 = vsel %vm265, %v1294, %v1296
        %1298 = vst [vmem:[#allocation2 + $0x10] sm:$0xff] %v1297
        %v1300 = vshrl.u32 %v1279, 16
        %v1302 = vrot.slane %v1300, 7
        %v1303 = vshll.u32 %v1279, 16
        %v1305 = vor.u32 %v1302, %v1303
        %v1307 = vld [vmem:[#allocation2 + $0x18] sm:$0xff]
        %v1308 = vsel %vm257, %v1305, %v1307
        %1309 = vst [vmem:[#allocation2 + $0x18] sm:$0xff] %v1308
        %v1310 = vrot.slane %v1303, 1
        %v1311 = vor.u32 %v1300, %v1310
        %v1313 = vld [vmem:[#allocation2 + $0x28] sm:$0xff]
        %v1314 = vsel %vm265, %v1311, %v1313
        %1315 = vst [vmem:[#allocation2 + $0x28] sm:$0xff] %v1314
        %v1316 = vld [vmem:[#allocation2] sm:$0xff]
        %v1317 = vld [vmem:[#allocation2 + $0x8] sm:$0xff]
        %v1318 = vld [vmem:[#allocation2 + $0x10] sm:$0xff]
        %v1319 = vld [vmem:[#allocation2 + $0x18] sm:$0xff]
        %v1320 = vld [vmem:[#allocation2 + $0x20] sm:$0xff]
        %v1321 = vld [vmem:[#allocation2 + $0x28] sm:$0xff]
        %s1322 = scalar_lea.vmem [#allocation7], 576
        %v1323 = vld [vmem:[%s1322] sm:$0xf]
        %v1324 = vld [vmem:[%s1322 + $0x4] sm:$0xf]
        %v1325 = vld [vmem:[%s1322 + $0x8] sm:$0xf]
        %v1326 = vld [vmem:[%s1322 + $0xc] sm:$0xf]
        %v1327 = vld [vmem:[%s1322 + $0x10] sm:$0xf]
        %v1328 = vld [vmem:[%s1322 + $0x14] sm:$0xf]
        %v1329 = vld [vmem:[%s1322 + $0x18] sm:$0xf]
        %v1330 = vld [vmem:[%s1322 + $0x1c] sm:$0xf]
        %v1331 = vld [vmem:[%s1322 + $0x20] sm:$0xf]
        %v1332 = vld [vmem:[%s1322 + $0x24] sm:$0xf]
        %v1333 = vld [vmem:[%s1322 + $0x28] sm:$0xf]
        %v1334 = vld [vmem:[%s1322 + $0x2c] sm:$0xf]
        %v1335 = vld [vmem:[%s1322 + $0x30] sm:$0xf]
        %v1336 = vld [vmem:[%s1322 + $0x34] sm:$0xf]
        %v1337 = vld [vmem:[%s1322 + $0x38] sm:$0xf]
        %v1338 = vld [vmem:[%s1322 + $0x3c] sm:$0xf]
        %v1339 = vld [vmem:[%s1322 + $0x40] sm:$0xf]
        %v1340 = vld [vmem:[%s1322 + $0x44] sm:$0xf]
        %v1341 = vld [vmem:[%s1322 + $0x48] sm:$0xf]
        %v1342 = vld [vmem:[%s1322 + $0x4c] sm:$0xf]
        %v1343 = vld [vmem:[%s1322 + $0x50] sm:$0xf]
        %v1344 = vld [vmem:[%s1322 + $0x54] sm:$0xf]
        %v1345 = vld [vmem:[%s1322 + $0x58] sm:$0xf]
        %v1346 = vld [vmem:[%s1322 + $0x5c] sm:$0xf]
        %v1347 = vld [vmem:[%s1322 + $0x60] sm:$0xf]
        %v1348 = vld [vmem:[%s1322 + $0x64] sm:$0xf]
        %v1349 = vld [vmem:[%s1322 + $0x68] sm:$0xf]
        %v1350 = vld [vmem:[%s1322 + $0x6c] sm:$0xf]
        %v1351 = vld [vmem:[%s1322 + $0x70] sm:$0xf]
        %v1352 = vld [vmem:[%s1322 + $0x74] sm:$0xf]
        %v1353 = vld [vmem:[%s1322 + $0x78] sm:$0xf]
        %v1354 = vld [vmem:[%s1322 + $0x7c] sm:$0xf]
        %v1355 = vld [vmem:[%s1322 + $0x80] sm:$0xf]
        %v1356 = vld [vmem:[%s1322 + $0x84] sm:$0xf]
        %v1357 = vld [vmem:[%s1322 + $0x88] sm:$0xf]
        %v1358 = vld [vmem:[%s1322 + $0x8c] sm:$0xf]
        %v1359 = vld [vmem:[%s1322 + $0x90] sm:$0xf]
        %v1360 = vld [vmem:[%s1322 + $0x94] sm:$0xf]
        %v1361 = vld [vmem:[%s1322 + $0x98] sm:$0xf]
        %v1362 = vld [vmem:[%s1322 + $0x9c] sm:$0xf]
        %v1363 = vld [vmem:[%s1322 + $0xa0] sm:$0xf]
        %v1364 = vld [vmem:[%s1322 + $0xa4] sm:$0xf]
        %v1365 = vld [vmem:[%s1322 + $0xa8] sm:$0xf]
        %v1366 = vld [vmem:[%s1322 + $0xac] sm:$0xf]
        %v1367 = vld [vmem:[%s1322 + $0xb0] sm:$0xf]
        %v1368 = vld [vmem:[%s1322 + $0xb4] sm:$0xf]
        %v1369 = vld [vmem:[%s1322 + $0xb8] sm:$0xf]
        %v1370 = vld [vmem:[%s1322 + $0xbc] sm:$0xf]
        %v1419 = vunpack.c.l.b16 %v1323
        %v1420 = vunpack.c.l.b16 %v1324
        %v1421 = vunpack.c.l.b16 %v1325
        %v1422 = vunpack.c.l.b16 %v1326
        %v1423 = vunpack.c.l.b16 %v1327
        %v1424 = vunpack.c.l.b16 %v1328
        %v1425 = vunpack.c.l.b16 %v1329
        %v1426 = vunpack.c.l.b16 %v1330
        %v1427 = vunpack.c.l.b16 %v1331
        %v1428 = vunpack.c.l.b16 %v1332
        %v1429 = vunpack.c.l.b16 %v1333
        %v1430 = vunpack.c.l.b16 %v1334
        %v1431 = vunpack.c.l.b16 %v1335
        %v1432 = vunpack.c.l.b16 %v1336
        %v1433 = vunpack.c.l.b16 %v1337
        %v1434 = vunpack.c.l.b16 %v1338
        %v1435 = vunpack.c.l.b16 %v1339
        %v1436 = vunpack.c.l.b16 %v1340
        %v1437 = vunpack.c.l.b16 %v1341
        %v1438 = vunpack.c.l.b16 %v1342
        %v1439 = vunpack.c.l.b16 %v1343
        %v1440 = vunpack.c.l.b16 %v1344
        %v1441 = vunpack.c.l.b16 %v1345
        %v1442 = vunpack.c.l.b16 %v1346
        %v1443 = vunpack.c.l.b16 %v1347
        %v1444 = vunpack.c.l.b16 %v1348
        %v1445 = vunpack.c.l.b16 %v1349
        %v1446 = vunpack.c.l.b16 %v1350
        %v1447 = vunpack.c.l.b16 %v1351
        %v1448 = vunpack.c.l.b16 %v1352
        %v1449 = vunpack.c.l.b16 %v1353
        %v1450 = vunpack.c.l.b16 %v1354
        %v1451 = vunpack.c.l.b16 %v1355
        %v1452 = vunpack.c.l.b16 %v1356
        %v1453 = vunpack.c.l.b16 %v1357
        %v1454 = vunpack.c.l.b16 %v1358
        %v1455 = vunpack.c.l.b16 %v1359
        %v1456 = vunpack.c.l.b16 %v1360
        %v1457 = vunpack.c.l.b16 %v1361
        %v1458 = vunpack.c.l.b16 %v1362
        %v1459 = vunpack.c.l.b16 %v1363
        %v1460 = vunpack.c.l.b16 %v1364
        %v1461 = vunpack.c.l.b16 %v1365
        %v1462 = vunpack.c.l.b16 %v1366
        %v1463 = vunpack.c.l.b16 %v1367
        %v1464 = vunpack.c.l.b16 %v1368
        %v1465 = vunpack.c.l.b16 %v1369
        %v1466 = vunpack.c.l.b16 %v1370
        %v1467 = vpack.c.b16 %v1420, %v1419
        %v1468 = vpack.c.b16 %v1422, %v1421
        %v1469 = vpack.c.b16 %v1424, %v1423
        %v1470 = vpack.c.b16 %v1426, %v1425
        %v1471 = vpack.c.b16 %v1428, %v1427
        %v1472 = vpack.c.b16 %v1430, %v1429
        %v1473 = vpack.c.b16 %v1432, %v1431
        %v1474 = vpack.c.b16 %v1434, %v1433
        %v1475 = vpack.c.b16 %v1436, %v1435
        %v1476 = vpack.c.b16 %v1438, %v1437
        %v1477 = vpack.c.b16 %v1440, %v1439
        %v1478 = vpack.c.b16 %v1442, %v1441
        %v1479 = vpack.c.b16 %v1444, %v1443
        %v1480 = vpack.c.b16 %v1446, %v1445
        %v1481 = vpack.c.b16 %v1448, %v1447
        %v1482 = vpack.c.b16 %v1450, %v1449
        %v1483 = vpack.c.b16 %v1452, %v1451
        %v1484 = vpack.c.b16 %v1454, %v1453
        %v1485 = vpack.c.b16 %v1456, %v1455
        %v1486 = vpack.c.b16 %v1458, %v1457
        %v1487 = vpack.c.b16 %v1460, %v1459
        %v1488 = vpack.c.b16 %v1462, %v1461
        %v1489 = vpack.c.b16 %v1464, %v1463
        %v1490 = vpack.c.b16 %v1466, %v1465
        %1515 = vmatprep.subr.bf16.mxu0 0
        %1516 = vmatpush1.bf16.msra.mxu0 %v1467
        %1517 = vmatprep.subr.bf16.mxu0 0
        %1518 = vmatpush1.bf16.msra.mxu0 %v1468
        %1519 = vmatprep.subr.bf16.mxu0 0
        %1520 = vmatpush1.bf16.msra.mxu0 %v1469
        %1521 = vmatprep.subr.bf16.mxu0 0
        %1522 = vmatpush1.bf16.msra.mxu0 %v1470
        %1523 = vmatprep.subr.bf16.mxu0 0
        %1524 = vmatpush1.bf16.msra.mxu0 %v1471
        %1525 = vmatprep.subr.bf16.mxu0 0
        %1526 = vmatpush1.bf16.msra.mxu0 %v1472
        %1527 = vmatprep.subr.bf16.mxu0 0
        %1528 = vmatpush1.bf16.msra.mxu0 %v1473
        %1529 = vmatprep.subr.bf16.mxu0 0
        %1530 = vmatpush1.bf16.msra.mxu0 %v1474
        %1531 = vmatprep.subr.bf16.mxu0 0
        %1532 = vmatpush1.bf16.msra.mxu0 %v1475
        %1533 = vmatprep.subr.bf16.mxu0 0
        %1534 = vmatpush1.bf16.msra.mxu0 %v1476
        %1535 = vmatprep.subr.bf16.mxu0 0
        %1536 = vmatpush1.bf16.msra.mxu0 %v1477
        %1537 = vmatprep.subr.bf16.mxu0 0
        %1538 = vmatpush1.bf16.msra.mxu0 %v1478
        %1539 = vmatprep.subr.bf16.mxu0 0
        %1540 = vmatpush1.bf16.msra.mxu0 %v1479
        %1541 = vmatprep.subr.bf16.mxu0 0
        %1542 = vmatpush1.bf16.msra.mxu0 %v1480
        %1543 = vmatprep.subr.bf16.mxu0 0
        %1544 = vmatpush1.bf16.msra.mxu0 %v1481
        %1545 = vmatprep.subr.bf16.mxu0 0
        %1546 = vmatpush1.bf16.msra.mxu0 %v1482
        %1547 = vmatprep.mubr.bf16.mxu0 %v1317
        %1548 = vmatmul.mubr.bf16.gmra.mrb[0].mxu0 %v1316
        %v1549 = vpop.f32.mrb[0].mxu0
        %v1550 = vadd.f32 0.0, %v1549
        %v1551 = vpop.f32.mrb[0].mxu0
        %v1552 = vpop.f32.mrb[0].mxu0
        %v1553 = vadd.f32 0.0, %v1552
        %v1554 = vpop.f32.mrb[0].mxu0
        %1555 = vmatprep.mubr.bf16.mxu0 %v1320
        %1556 = vmatmul.mubr.bf16.gmra.mrb[0].mxu0 %v1319
        %v1557 = vpop.f32.mrb[0].mxu0
        %v1558 = vadd.f32 0.0, %v1557
        %v1559 = vpop.f32.mrb[0].mxu0
        %v1560 = vpop.f32.mrb[0].mxu0
        %v1561 = vadd.f32 0.0, %v1560
        %v1562 = vpop.f32.mrb[0].mxu0
        %1563 = vdwg.mxu0
        %1564 = vmatprep.subr.bf16.mxu0 0
        %1565 = vmatpush1.bf16.msra.mxu0 %v1483
        %1566 = vmatprep.subr.bf16.mxu0 0
        %1567 = vmatpush1.bf16.msra.mxu0 %v1484
        %1568 = vmatprep.subr.bf16.mxu0 0
        %1569 = vmatpush1.bf16.msra.mxu0 %v1485
        %1570 = vmatprep.subr.bf16.mxu0 0
        %1571 = vmatpush1.bf16.msra.mxu0 %v1486
        %1572 = vmatprep.subr.bf16.mxu0 0
        %1573 = vmatpush1.bf16.msra.mxu0 %v1487
        %1574 = vmatprep.subr.bf16.mxu0 0
        %1575 = vmatpush1.bf16.msra.mxu0 %v1488
        %1576 = vmatprep.subr.bf16.mxu0 0
        %1577 = vmatpush1.bf16.msra.mxu0 %v1489
        %1578 = vmatprep.subr.bf16.mxu0 0
        %1579 = vmatpush1.bf16.msra.mxu0 %v1490
        %1580 = vmatprep.subr.bf16.mxu0 0
        %1581 = vmatpush1.bf16.msra.mxu0 0
        %1582 = vmatprep.subr.bf16.mxu0 0
        %1583 = vmatpush1.bf16.msra.mxu0 0
        %1584 = vmatprep.subr.bf16.mxu0 0
        %1585 = vmatpush1.bf16.msra.mxu0 0
        %1586 = vmatprep.subr.bf16.mxu0 0
        %1587 = vmatpush1.bf16.msra.mxu0 0
        %1588 = vmatprep.subr.bf16.mxu0 0
        %1589 = vmatpush1.bf16.msra.mxu0 0
        %1590 = vmatprep.subr.bf16.mxu0 0
        %1591 = vmatpush1.bf16.msra.mxu0 0
        %1592 = vmatprep.subr.bf16.mxu0 0
        %1593 = vmatpush1.bf16.msra.mxu0 0
        %1594 = vmatprep.subr.bf16.mxu0 0
        %1595 = vmatpush1.bf16.msra.mxu0 0
        %1596 = vmatprep.mubr.bf16.mxu0 0
        %1597 = vmatmul.mubr.bf16.gmra.mrb[0].mxu0 %v1318
        %v1598 = vpop.f32.mrb[0].mxu0
        %v1599 = vadd.f32 %v1550, %v1598
        %v1600 = vpop.f32.mrb[0].mxu0
        %v1601 = vpop.f32.mrb[0].mxu0
        %v1602 = vadd.f32 %v1553, %v1601
        %v1603 = vpop.f32.mrb[0].mxu0
        %1604 = vmatprep.mubr.bf16.mxu0 0
        %1605 = vmatmul.mubr.bf16.gmra.mrb[0].mxu0 %v1321
        %v1606 = vpop.f32.mrb[0].mxu0
        %v1607 = vadd.f32 %v1558, %v1606
        %v1608 = vpop.f32.mrb[0].mxu0
        %v1609 = vpop.f32.mrb[0].mxu0
        %v1610 = vadd.f32 %v1561, %v1609
        %v1611 = vpop.f32.mrb[0].mxu0
        %1612 = vdwg.mxu0
        %v1613 = vadd.f32 %v930, %v1599
        %v1614 = vadd.f32 %v931, %v1602
        %v1615 = vadd.f32 %v932, %v1607
        %v1616 = vadd.f32 %v933, %v1610
        %v1617 = vmax.f32 %v1613, 0.0
        %v1618 = vmax.f32 %v1614, 0.0
        %v1619 = vmax.f32 %v1615, 0.0
        %v1620 = vmax.f32 %v1616, 0.0
        %1621 = vrot.lane.b32.xlu0 %v1617, 16
        %v1622 = vpop.permute.xlu0 %1621
        %1623 = vrot.lane.b32.xlu0 %v1618, 16
        %v1624 = vpop.permute.xlu0 %1623
        %1625 = vrot.lane.b32.xlu0 %v1619, 16
        %v1626 = vpop.permute.xlu0 %1625
        %1627 = vrot.lane.b32.xlu0 %v1620, 16
        %v1628 = vpop.permute.xlu0 %1627
        %v1629 = vsel %vm231, %v1622, -inf
        %v1630 = vsel %vm231, %v1624, -inf
        %v1631 = vsel %vm231, %v1626, -inf
        %v1632 = vsel %vm231, %v1628, -inf
        %v1633 = vmax.f32 %v1617, %v1629
        %v1634 = vmax.f32 %v1618, %v1630
        %v1635 = vmax.f32 %v1619, %v1631
        %v1636 = vmax.f32 %v1620, %v1632
        %1637 = vrot.lane.b32.xlu0 %v1617, 8
        %v1638 = vpop.permute.xlu0 %1637
        %1639 = vrot.lane.b32.xlu0 %v1618, 8
        %v1640 = vpop.permute.xlu0 %1639
        %1641 = vrot.lane.b32.xlu0 %v1619, 8
        %v1642 = vpop.permute.xlu0 %1641
        %1643 = vrot.lane.b32.xlu0 %v1620, 8
        %v1644 = vpop.permute.xlu0 %1643
        %v1645 = vsel %vm232, %v1638, -inf
        %v1646 = vsel %vm232, %v1640, -inf
        %v1647 = vsel %vm232, %v1642, -inf
        %v1648 = vsel %vm232, %v1644, -inf
        %v1649 = vmax.f32 %v1633, %v1645
        %v1650 = vmax.f32 %v1634, %v1646
        %v1651 = vmax.f32 %v1635, %v1647
        %v1652 = vmax.f32 %v1636, %v1648
        %1653 = vrot.lane.b32.xlu0 %v1617, 120
        %v1654 = vpop.permute.xlu0 %1653
        %1655 = vrot.lane.b32.xlu0 %v1618, 120
        %v1656 = vpop.permute.xlu0 %1655
        %1657 = vrot.lane.b32.xlu0 %v1619, 120
        %v1658 = vpop.permute.xlu0 %1657
        %1659 = vrot.lane.b32.xlu0 %v1620, 120
        %v1660 = vpop.permute.xlu0 %1659
        %v1661 = vsel %vm233, %v1654, -inf
        %v1662 = vsel %vm233, %v1656, -inf
        %v1663 = vsel %vm233, %v1658, -inf
        %v1664 = vsel %vm233, %v1660, -inf
        %v1665 = vmax.f32 %v1649, %v1661
        %v1666 = vmax.f32 %v1650, %v1662
        %v1667 = vmax.f32 %v1651, %v1663
        %v1668 = vmax.f32 %v1652, %v1664
        %1669 = vrot.lane.b32.xlu0 %v1617, 112
        %v1670 = vpop.permute.xlu0 %1669
        %1671 = vrot.lane.b32.xlu0 %v1618, 112
        %v1672 = vpop.permute.xlu0 %1671
        %1673 = vrot.lane.b32.xlu0 %v1619, 112
        %v1674 = vpop.permute.xlu0 %1673
        %1675 = vrot.lane.b32.xlu0 %v1620, 112
        %v1676 = vpop.permute.xlu0 %1675
        %v1677 = vsel %vm234, %v1670, -inf
        %v1678 = vsel %vm234, %v1672, -inf
        %v1679 = vsel %vm234, %v1674, -inf
        %v1680 = vsel %vm234, %v1676, -inf
        %v1681 = vmax.f32 %v1665, %v1677
        %v1682 = vmax.f32 %v1666, %v1678
        %v1683 = vmax.f32 %v1667, %v1679
        %v1684 = vmax.f32 %v1668, %v1680
        %1685 = vst [vmem:[#allocation3 + $0x2] sm:$0xff] %v1681
        %1686 = vst [vmem:[#allocation3 + $0xa] sm:$0xff] %v1682
        %1687 = vst [vmem:[#allocation3 + $0x16] sm:$0xff] %v1683
        %1688 = vst [vmem:[#allocation3 + $0x1e] sm:$0xff] %v1684
        %v1689 = vld [vmem:[#allocation3] sm:$0xff]
        %v1690 = vld [vmem:[#allocation3 + $0x8] sm:$0xff]
        %v1691 = vld [vmem:[#allocation3 + $0x1] sm:$0xff]
        %v1692 = vld [vmem:[#allocation3 + $0x9] sm:$0xff]
        %v1693 = vmax.f32 %v1689, %v1691
        %v1694 = vmax.f32 %v1690, %v1692
        %v1695 = vld [vmem:[#allocation3 + $0x2] sm:$0xff]
        %v1696 = vld [vmem:[#allocation3 + $0xa] sm:$0xff]
        %v1697 = vmax.f32 %v1693, %v1695
        %v1698 = vmax.f32 %v1694, %v1696
        %v1699 = vld [vmem:[#allocation3 + $0x3] sm:$0xff]
        %v1700 = vld [vmem:[#allocation3 + $0xb] sm:$0xff]
        %v1701 = vmax.f32 %v1697, %v1699
        %v1702 = vmax.f32 %v1698, %v1700
        %v1703 = vld [vmem:[#allocation3 + $0x4] sm:$0xff]
        %v1704 = vld [vmem:[#allocation3 + $0xc] sm:$0xff]
        %v1705 = vmax.f32 %v1701, %v1703
        %v1706 = vmax.f32 %v1702, %v1704
        %v1707 = vld [vmem:[#allocation3 + $0x14] sm:$0xff]
        %v1708 = vld [vmem:[#allocation3 + $0x1c] sm:$0xff]
        %v1709 = vld [vmem:[#allocation3 + $0x15] sm:$0xff]
        %v1710 = vld [vmem:[#allocation3 + $0x1d] sm:$0xff]
        %v1711 = vmax.f32 %v1707, %v1709
        %v1712 = vmax.f32 %v1708, %v1710
        %v1713 = vld [vmem:[#allocation3 + $0x16] sm:$0xff]
        %v1714 = vld [vmem:[#allocation3 + $0x1e] sm:$0xff]
        %v1715 = vmax.f32 %v1711, %v1713
        %v1716 = vmax.f32 %v1712, %v1714
        %v1717 = vld [vmem:[#allocation3 + $0x17] sm:$0xff]
        %v1718 = vld [vmem:[#allocation3 + $0x1f] sm:$0xff]
        %v1719 = vmax.f32 %v1715, %v1717
        %v1720 = vmax.f32 %v1716, %v1718
        %v1721 = vld [vmem:[#allocation3 + $0x18] sm:$0xff]
        %v1722 = vld [vmem:[#allocation3 + $0x20] sm:$0xff]
        %v1723 = vmax.f32 %v1719, %v1721
        %v1724 = vmax.f32 %v1720, %v1722
        %v1725 = vpack.c.bf16 %v1706, %v1705
        %v1726 = vpack.c.bf16 %v1724, %v1723
        %1727 = vst [vmem:[#allocation2 + $0x8] sm:$0xff] %v1725
        %1728 = vst [vmem:[#allocation2 + $0x20] sm:$0xff] %v1726
        %v1730 = vshrl.u32 %v1725, 16
        %v1732 = vrot.slane %v1730, 7
        %v1733 = vshll.u32 %v1725, 16
        %v1735 = vor.u32 %v1732, %v1733
        %v1737 = vld [vmem:[#allocation2] sm:$0xff]
        %v1738 = vsel %vm257, %v1735, %v1737
        %1739 = vst [vmem:[#allocation2] sm:$0xff] %v1738
        %v1740 = vrot.slane %v1733, 1
        %v1741 = vor.u32 %v1730, %v1740
        %v1743 = vld [vmem:[#allocation2 + $0x10] sm:$0xff]
        %v1744 = vsel %vm265, %v1741, %v1743
        %1745 = vst [vmem:[#allocation2 + $0x10] sm:$0xff] %v1744
        %v1747 = vshrl.u32 %v1726, 16
        %v1749 = vrot.slane %v1747, 7
        %v1750 = vshll.u32 %v1726, 16
        %v1752 = vor.u32 %v1749, %v1750
        %v1754 = vld [vmem:[#allocation2 + $0x18] sm:$0xff]
        %v1755 = vsel %vm257, %v1752, %v1754
        %1756 = vst [vmem:[#allocation2 + $0x18] sm:$0xff] %v1755
        %v1757 = vrot.slane %v1750, 1
        %v1758 = vor.u32 %v1747, %v1757
        %v1760 = vld [vmem:[#allocation2 + $0x28] sm:$0xff]
        %v1761 = vsel %vm265, %v1758, %v1760
        %1762 = vst [vmem:[#allocation2 + $0x28] sm:$0xff] %v1761
        %v1763 = vld [vmem:[#allocation2] sm:$0xff]
        %v1764 = vld [vmem:[#allocation2 + $0x8] sm:$0xff]
        %v1765 = vld [vmem:[#allocation2 + $0x10] sm:$0xff]
        %v1766 = vld [vmem:[#allocation2 + $0x18] sm:$0xff]
        %v1767 = vld [vmem:[#allocation2 + $0x20] sm:$0xff]
        %v1768 = vld [vmem:[#allocation2 + $0x28] sm:$0xff]
        %s1769 = scalar_lea.vmem [#allocation7], 768
        %v1770 = vld [vmem:[%s1769] sm:$0xf]
        %v1771 = vld [vmem:[%s1769 + $0x4] sm:$0xf]
        %v1772 = vld [vmem:[%s1769 + $0x8] sm:$0xf]
        %v1773 = vld [vmem:[%s1769 + $0xc] sm:$0xf]
        %v1774 = vld [vmem:[%s1769 + $0x10] sm:$0xf]
        %v1775 = vld [vmem:[%s1769 + $0x14] sm:$0xf]
        %v1776 = vld [vmem:[%s1769 + $0x18] sm:$0xf]
        %v1777 = vld [vmem:[%s1769 + $0x1c] sm:$0xf]
        %v1778 = vld [vmem:[%s1769 + $0x20] sm:$0xf]
        %v1779 = vld [vmem:[%s1769 + $0x24] sm:$0xf]
        %v1780 = vld [vmem:[%s1769 + $0x28] sm:$0xf]
        %v1781 = vld [vmem:[%s1769 + $0x2c] sm:$0xf]
        %v1782 = vld [vmem:[%s1769 + $0x30] sm:$0xf]
        %v1783 = vld [vmem:[%s1769 + $0x34] sm:$0xf]
        %v1784 = vld [vmem:[%s1769 + $0x38] sm:$0xf]
        %v1785 = vld [vmem:[%s1769 + $0x3c] sm:$0xf]
        %v1786 = vld [vmem:[%s1769 + $0x40] sm:$0xf]
        %v1787 = vld [vmem:[%s1769 + $0x44] sm:$0xf]
        %v1788 = vld [vmem:[%s1769 + $0x48] sm:$0xf]
        %v1789 = vld [vmem:[%s1769 + $0x4c] sm:$0xf]
        %v1790 = vld [vmem:[%s1769 + $0x50] sm:$0xf]
        %v1791 = vld [vmem:[%s1769 + $0x54] sm:$0xf]
        %v1792 = vld [vmem:[%s1769 + $0x58] sm:$0xf]
        %v1793 = vld [vmem:[%s1769 + $0x5c] sm:$0xf]
        %v1794 = vld [vmem:[%s1769 + $0x60] sm:$0xf]
        %v1795 = vld [vmem:[%s1769 + $0x64] sm:$0xf]
        %v1796 = vld [vmem:[%s1769 + $0x68] sm:$0xf]
        %v1797 = vld [vmem:[%s1769 + $0x6c] sm:$0xf]
        %v1798 = vld [vmem:[%s1769 + $0x70] sm:$0xf]
        %v1799 = vld [vmem:[%s1769 + $0x74] sm:$0xf]
        %v1800 = vld [vmem:[%s1769 + $0x78] sm:$0xf]
        %v1801 = vld [vmem:[%s1769 + $0x7c] sm:$0xf]
        %v1802 = vld [vmem:[%s1769 + $0x80] sm:$0xf]
        %v1803 = vld [vmem:[%s1769 + $0x84] sm:$0xf]
        %v1804 = vld [vmem:[%s1769 + $0x88] sm:$0xf]
        %v1805 = vld [vmem:[%s1769 + $0x8c] sm:$0xf]
        %v1806 = vld [vmem:[%s1769 + $0x90] sm:$0xf]
        %v1807 = vld [vmem:[%s1769 + $0x94] sm:$0xf]
        %v1808 = vld [vmem:[%s1769 + $0x98] sm:$0xf]
        %v1809 = vld [vmem:[%s1769 + $0x9c] sm:$0xf]
        %v1810 = vld [vmem:[%s1769 + $0xa0] sm:$0xf]
        %v1811 = vld [vmem:[%s1769 + $0xa4] sm:$0xf]
        %v1812 = vld [vmem:[%s1769 + $0xa8] sm:$0xf]
        %v1813 = vld [vmem:[%s1769 + $0xac] sm:$0xf]
        %v1814 = vld [vmem:[%s1769 + $0xb0] sm:$0xf]
        %v1815 = vld [vmem:[%s1769 + $0xb4] sm:$0xf]
        %v1816 = vld [vmem:[%s1769 + $0xb8] sm:$0xf]
        %v1817 = vld [vmem:[%s1769 + $0xbc] sm:$0xf]
        %v1866 = vunpack.c.l.b16 %v1770
        %v1867 = vunpack.c.l.b16 %v1771
        %v1868 = vunpack.c.l.b16 %v1772
        %v1869 = vunpack.c.l.b16 %v1773
        %v1870 = vunpack.c.l.b16 %v1774
        %v1871 = vunpack.c.l.b16 %v1775
        %v1872 = vunpack.c.l.b16 %v1776
        %v1873 = vunpack.c.l.b16 %v1777
        %v1874 = vunpack.c.l.b16 %v1778
        %v1875 = vunpack.c.l.b16 %v1779
        %v1876 = vunpack.c.l.b16 %v1780
        %v1877 = vunpack.c.l.b16 %v1781
        %v1878 = vunpack.c.l.b16 %v1782
        %v1879 = vunpack.c.l.b16 %v1783
        %v1880 = vunpack.c.l.b16 %v1784
        %v1881 = vunpack.c.l.b16 %v1785
        %v1882 = vunpack.c.l.b16 %v1786
        %v1883 = vunpack.c.l.b16 %v1787
        %v1884 = vunpack.c.l.b16 %v1788
        %v1885 = vunpack.c.l.b16 %v1789
        %v1886 = vunpack.c.l.b16 %v1790
        %v1887 = vunpack.c.l.b16 %v1791
        %v1888 = vunpack.c.l.b16 %v1792
        %v1889 = vunpack.c.l.b16 %v1793
        %v1890 = vunpack.c.l.b16 %v1794
        %v1891 = vunpack.c.l.b16 %v1795
        %v1892 = vunpack.c.l.b16 %v1796
        %v1893 = vunpack.c.l.b16 %v1797
        %v1894 = vunpack.c.l.b16 %v1798
        %v1895 = vunpack.c.l.b16 %v1799
        %v1896 = vunpack.c.l.b16 %v1800
        %v1897 = vunpack.c.l.b16 %v1801
        %v1898 = vunpack.c.l.b16 %v1802
        %v1899 = vunpack.c.l.b16 %v1803
        %v1900 = vunpack.c.l.b16 %v1804
        %v1901 = vunpack.c.l.b16 %v1805
        %v1902 = vunpack.c.l.b16 %v1806
        %v1903 = vunpack.c.l.b16 %v1807
        %v1904 = vunpack.c.l.b16 %v1808
        %v1905 = vunpack.c.l.b16 %v1809
        %v1906 = vunpack.c.l.b16 %v1810
        %v1907 = vunpack.c.l.b16 %v1811
        %v1908 = vunpack.c.l.b16 %v1812
        %v1909 = vunpack.c.l.b16 %v1813
        %v1910 = vunpack.c.l.b16 %v1814
        %v1911 = vunpack.c.l.b16 %v1815
        %v1912 = vunpack.c.l.b16 %v1816
        %v1913 = vunpack.c.l.b16 %v1817
        %v1914 = vpack.c.b16 %v1867, %v1866
        %v1915 = vpack.c.b16 %v1869, %v1868
        %v1916 = vpack.c.b16 %v1871, %v1870
        %v1917 = vpack.c.b16 %v1873, %v1872
        %v1918 = vpack.c.b16 %v1875, %v1874
        %v1919 = vpack.c.b16 %v1877, %v1876
        %v1920 = vpack.c.b16 %v1879, %v1878
        %v1921 = vpack.c.b16 %v1881, %v1880
        %v1922 = vpack.c.b16 %v1883, %v1882
        %v1923 = vpack.c.b16 %v1885, %v1884
        %v1924 = vpack.c.b16 %v1887, %v1886
        %v1925 = vpack.c.b16 %v1889, %v1888
        %v1926 = vpack.c.b16 %v1891, %v1890
        %v1927 = vpack.c.b16 %v1893, %v1892
        %v1928 = vpack.c.b16 %v1895, %v1894
        %v1929 = vpack.c.b16 %v1897, %v1896
        %v1930 = vpack.c.b16 %v1899, %v1898
        %v1931 = vpack.c.b16 %v1901, %v1900
        %v1932 = vpack.c.b16 %v1903, %v1902
        %v1933 = vpack.c.b16 %v1905, %v1904
        %v1934 = vpack.c.b16 %v1907, %v1906
        %v1935 = vpack.c.b16 %v1909, %v1908
        %v1936 = vpack.c.b16 %v1911, %v1910
        %v1937 = vpack.c.b16 %v1913, %v1912
        %1962 = vmatprep.subr.bf16.mxu0 0
        %1963 = vmatpush1.bf16.msra.mxu0 %v1914
        %1964 = vmatprep.subr.bf16.mxu0 0
        %1965 = vmatpush1.bf16.msra.mxu0 %v1915
        %1966 = vmatprep.subr.bf16.mxu0 0
        %1967 = vmatpush1.bf16.msra.mxu0 %v1916
        %1968 = vmatprep.subr.bf16.mxu0 0
        %1969 = vmatpush1.bf16.msra.mxu0 %v1917
        %1970 = vmatprep.subr.bf16.mxu0 0
        %1971 = vmatpush1.bf16.msra.mxu0 %v1918
        %1972 = vmatprep.subr.bf16.mxu0 0
        %1973 = vmatpush1.bf16.msra.mxu0 %v1919
        %1974 = vmatprep.subr.bf16.mxu0 0
        %1975 = vmatpush1.bf16.msra.mxu0 %v1920
        %1976 = vmatprep.subr.bf16.mxu0 0
        %1977 = vmatpush1.bf16.msra.mxu0 %v1921
        %1978 = vmatprep.subr.bf16.mxu0 0
        %1979 = vmatpush1.bf16.msra.mxu0 %v1922
        %1980 = vmatprep.subr.bf16.mxu0 0
        %1981 = vmatpush1.bf16.msra.mxu0 %v1923
        %1982 = vmatprep.subr.bf16.mxu0 0
        %1983 = vmatpush1.bf16.msra.mxu0 %v1924
        %1984 = vmatprep.subr.bf16.mxu0 0
        %1985 = vmatpush1.bf16.msra.mxu0 %v1925
        %1986 = vmatprep.subr.bf16.mxu0 0
        %1987 = vmatpush1.bf16.msra.mxu0 %v1926
        %1988 = vmatprep.subr.bf16.mxu0 0
        %1989 = vmatpush1.bf16.msra.mxu0 %v1927
        %1990 = vmatprep.subr.bf16.mxu0 0
        %1991 = vmatpush1.bf16.msra.mxu0 %v1928
        %1992 = vmatprep.subr.bf16.mxu0 0
        %1993 = vmatpush1.bf16.msra.mxu0 %v1929
        %1994 = vmatprep.mubr.bf16.mxu0 %v1764
        %1995 = vmatmul.mubr.bf16.gmra.mrb[0].mxu0 %v1763
        %v1996 = vpop.f32.mrb[0].mxu0
        %v1997 = vadd.f32 0.0, %v1996
        %v1998 = vpop.f32.mrb[0].mxu0
        %v1999 = vpop.f32.mrb[0].mxu0
        %v2000 = vadd.f32 0.0, %v1999
        %v2001 = vpop.f32.mrb[0].mxu0
        %2002 = vmatprep.mubr.bf16.mxu0 %v1767
        %2003 = vmatmul.mubr.bf16.gmra.mrb[0].mxu0 %v1766
        %v2004 = vpop.f32.mrb[0].mxu0
        %v2005 = vadd.f32 0.0, %v2004
        %v2006 = vpop.f32.mrb[0].mxu0
        %v2007 = vpop.f32.mrb[0].mxu0
        %v2008 = vadd.f32 0.0, %v2007
        %v2009 = vpop.f32.mrb[0].mxu0
        %2010 = vdwg.mxu0
        %2011 = vmatprep.subr.bf16.mxu0 0
        %2012 = vmatpush1.bf16.msra.mxu0 %v1930
        %2013 = vmatprep.subr.bf16.mxu0 0
        %2014 = vmatpush1.bf16.msra.mxu0 %v1931
        %2015 = vmatprep.subr.bf16.mxu0 0
        %2016 = vmatpush1.bf16.msra.mxu0 %v1932
        %2017 = vmatprep.subr.bf16.mxu0 0
        %2018 = vmatpush1.bf16.msra.mxu0 %v1933
        %2019 = vmatprep.subr.bf16.mxu0 0
        %2020 = vmatpush1.bf16.msra.mxu0 %v1934
        %2021 = vmatprep.subr.bf16.mxu0 0
        %2022 = vmatpush1.bf16.msra.mxu0 %v1935
        %2023 = vmatprep.subr.bf16.mxu0 0
        %2024 = vmatpush1.bf16.msra.mxu0 %v1936
        %2025 = vmatprep.subr.bf16.mxu0 0
        %2026 = vmatpush1.bf16.msra.mxu0 %v1937
        %2027 = vmatprep.subr.bf16.mxu0 0
        %2028 = vmatpush1.bf16.msra.mxu0 0
        %2029 = vmatprep.subr.bf16.mxu0 0
        %2030 = vmatpush1.bf16.msra.mxu0 0
        %2031 = vmatprep.subr.bf16.mxu0 0
        %2032 = vmatpush1.bf16.msra.mxu0 0
        %2033 = vmatprep.subr.bf16.mxu0 0
        %2034 = vmatpush1.bf16.msra.mxu0 0
        %2035 = vmatprep.subr.bf16.mxu0 0
        %2036 = vmatpush1.bf16.msra.mxu0 0
        %2037 = vmatprep.subr.bf16.mxu0 0
        %2038 = vmatpush1.bf16.msra.mxu0 0
        %2039 = vmatprep.subr.bf16.mxu0 0
        %2040 = vmatpush1.bf16.msra.mxu0 0
        %2041 = vmatprep.subr.bf16.mxu0 0
        %2042 = vmatpush1.bf16.msra.mxu0 0
        %2043 = vmatprep.mubr.bf16.mxu0 0
        %2044 = vmatmul.mubr.bf16.gmra.mrb[0].mxu0 %v1765
        %v2045 = vpop.f32.mrb[0].mxu0
        %v2046 = vadd.f32 %v1997, %v2045
        %v2047 = vpop.f32.mrb[0].mxu0
        %v2048 = vpop.f32.mrb[0].mxu0
        %v2049 = vadd.f32 %v2000, %v2048
        %v2050 = vpop.f32.mrb[0].mxu0
        %2051 = vmatprep.mubr.bf16.mxu0 0
        %2052 = vmatmul.mubr.bf16.gmra.mrb[0].mxu0 %v1768
        %v2053 = vpop.f32.mrb[0].mxu0
        %v2054 = vadd.f32 %v2005, %v2053
        %v2055 = vpop.f32.mrb[0].mxu0
        %v2056 = vpop.f32.mrb[0].mxu0
        %v2057 = vadd.f32 %v2008, %v2056
        %v2058 = vpop.f32.mrb[0].mxu0
        %2059 = vdwg.mxu0
        %v2060 = vadd.f32 %v1617, %v2046
        %v2061 = vadd.f32 %v1618, %v2049
        %v2062 = vadd.f32 %v1619, %v2054
        %v2063 = vadd.f32 %v1620, %v2057
        %2064 = vrot.lane.b32.xlu0 %v2046, 16
        %v2065 = vpop.permute.xlu0 %2064
        %2066 = vrot.lane.b32.xlu0 %v2049, 16
        %v2067 = vpop.permute.xlu0 %2066
        %2068 = vrot.lane.b32.xlu0 %v2054, 16
        %v2069 = vpop.permute.xlu0 %2068
        %2070 = vrot.lane.b32.xlu0 %v2057, 16
        %v2071 = vpop.permute.xlu0 %2070
        %v2072 = vsel %vm231, %v2065, -inf
        %v2073 = vsel %vm231, %v2067, -inf
        %v2074 = vsel %vm231, %v2069, -inf
        %v2075 = vsel %vm231, %v2071, -inf
        %v2076 = vmax.f32 %v2046, %v2072
        %v2077 = vmax.f32 %v2049, %v2073
        %v2078 = vmax.f32 %v2054, %v2074
        %v2079 = vmax.f32 %v2057, %v2075
        %2080 = vrot.lane.b32.xlu0 %v2046, 8
        %v2081 = vpop.permute.xlu0 %2080
        %2082 = vrot.lane.b32.xlu0 %v2049, 8
        %v2083 = vpop.permute.xlu0 %2082
        %2084 = vrot.lane.b32.xlu0 %v2054, 8
        %v2085 = vpop.permute.xlu0 %2084
        %2086 = vrot.lane.b32.xlu0 %v2057, 8
        %v2087 = vpop.permute.xlu0 %2086
        %v2088 = vsel %vm232, %v2081, -inf
        %v2089 = vsel %vm232, %v2083, -inf
        %v2090 = vsel %vm232, %v2085, -inf
        %v2091 = vsel %vm232, %v2087, -inf
        %v2092 = vmax.f32 %v2076, %v2088
        %v2093 = vmax.f32 %v2077, %v2089
        %v2094 = vmax.f32 %v2078, %v2090
        %v2095 = vmax.f32 %v2079, %v2091
        %2096 = vrot.lane.b32.xlu0 %v2046, 120
        %v2097 = vpop.permute.xlu0 %2096
        %2098 = vrot.lane.b32.xlu0 %v2049, 120
        %v2099 = vpop.permute.xlu0 %2098
        %2100 = vrot.lane.b32.xlu0 %v2054, 120
        %v2101 = vpop.permute.xlu0 %2100
        %2102 = vrot.lane.b32.xlu0 %v2057, 120
        %v2103 = vpop.permute.xlu0 %2102
        %v2104 = vsel %vm233, %v2097, -inf
        %v2105 = vsel %vm233, %v2099, -inf
        %v2106 = vsel %vm233, %v2101, -inf
        %v2107 = vsel %vm233, %v2103, -inf
        %v2108 = vmax.f32 %v2092, %v2104
        %v2109 = vmax.f32 %v2093, %v2105
        %v2110 = vmax.f32 %v2094, %v2106
        %v2111 = vmax.f32 %v2095, %v2107
        %2112 = vrot.lane.b32.xlu0 %v2046, 112
        %v2113 = vpop.permute.xlu0 %2112
        %2114 = vrot.lane.b32.xlu0 %v2049, 112
        %v2115 = vpop.permute.xlu0 %2114
        %2116 = vrot.lane.b32.xlu0 %v2054, 112
        %v2117 = vpop.permute.xlu0 %2116
        %2118 = vrot.lane.b32.xlu0 %v2057, 112
        %v2119 = vpop.permute.xlu0 %2118
        %v2120 = vsel %vm234, %v2113, -inf
        %v2121 = vsel %vm234, %v2115, -inf
        %v2122 = vsel %vm234, %v2117, -inf
        %v2123 = vsel %vm234, %v2119, -inf
        %v2124 = vmax.f32 %v2108, %v2120
        %v2125 = vmax.f32 %v2109, %v2121
        %v2126 = vmax.f32 %v2110, %v2122
        %v2127 = vmax.f32 %v2111, %v2123
        %2128 = vst [vmem:[#allocation3 + $0x2] sm:$0xff] %v2124
        %2129 = vst [vmem:[#allocation3 + $0xa] sm:$0xff] %v2125
        %2130 = vst [vmem:[#allocation3 + $0x16] sm:$0xff] %v2126
        %2131 = vst [vmem:[#allocation3 + $0x1e] sm:$0xff] %v2127
        %v2132 = vld [vmem:[#allocation3] sm:$0xff]
        %v2133 = vld [vmem:[#allocation3 + $0x8] sm:$0xff]
        %v2134 = vld [vmem:[#allocation3 + $0x1] sm:$0xff]
        %v2135 = vld [vmem:[#allocation3 + $0x9] sm:$0xff]
        %v2136 = vmax.f32 %v2132, %v2134
        %v2137 = vmax.f32 %v2133, %v2135
        %v2138 = vld [vmem:[#allocation3 + $0x2] sm:$0xff]
        %v2139 = vld [vmem:[#allocation3 + $0xa] sm:$0xff]
        %v2140 = vmax.f32 %v2136, %v2138
        %v2141 = vmax.f32 %v2137, %v2139
        %v2142 = vld [vmem:[#allocation3 + $0x3] sm:$0xff]
        %v2143 = vld [vmem:[#allocation3 + $0xb] sm:$0xff]
        %v2144 = vmax.f32 %v2140, %v2142
        %v2145 = vmax.f32 %v2141, %v2143
        %v2146 = vld [vmem:[#allocation3 + $0x4] sm:$0xff]
        %v2147 = vld [vmem:[#allocation3 + $0xc] sm:$0xff]
        %v2148 = vmax.f32 %v2144, %v2146
        %v2149 = vmax.f32 %v2145, %v2147
        %v2150 = vld [vmem:[#allocation3 + $0x14] sm:$0xff]
        %v2151 = vld [vmem:[#allocation3 + $0x1c] sm:$0xff]
        %v2152 = vld [vmem:[#allocation3 + $0x15] sm:$0xff]
        %v2153 = vld [vmem:[#allocation3 + $0x1d] sm:$0xff]
        %v2154 = vmax.f32 %v2150, %v2152
        %v2155 = vmax.f32 %v2151, %v2153
        %v2156 = vld [vmem:[#allocation3 + $0x16] sm:$0xff]
        %v2157 = vld [vmem:[#allocation3 + $0x1e] sm:$0xff]
        %v2158 = vmax.f32 %v2154, %v2156
        %v2159 = vmax.f32 %v2155, %v2157
        %v2160 = vld [vmem:[#allocation3 + $0x17] sm:$0xff]
        %v2161 = vld [vmem:[#allocation3 + $0x1f] sm:$0xff]
        %v2162 = vmax.f32 %v2158, %v2160
        %v2163 = vmax.f32 %v2159, %v2161
        %v2164 = vld [vmem:[#allocation3 + $0x18] sm:$0xff]
        %v2165 = vld [vmem:[#allocation3 + $0x20] sm:$0xff]
        %v2166 = vmax.f32 %v2162, %v2164
        %v2167 = vmax.f32 %v2163, %v2165
        %v2168 = vpack.c.bf16 %v2149, %v2148
        %v2169 = vpack.c.bf16 %v2167, %v2166
        %2170 = vst [vmem:[#allocation2 + $0x8] sm:$0xff] %v2168
        %2171 = vst [vmem:[#allocation2 + $0x20] sm:$0xff] %v2169
        %v2173 = vshrl.u32 %v2168, 16
        %v2175 = vrot.slane %v2173, 7
        %v2176 = vshll.u32 %v2168, 16
        %v2178 = vor.u32 %v2175, %v2176
        %v2180 = vld [vmem:[#allocation2] sm:$0xff]
        %v2181 = vsel %vm257, %v2178, %v2180
        %2182 = vst [vmem:[#allocation2] sm:$0xff] %v2181
        %v2183 = vrot.slane %v2176, 1
        %v2184 = vor.u32 %v2173, %v2183
        %v2186 = vld [vmem:[#allocation2 + $0x10] sm:$0xff]
        %v2187 = vsel %vm265, %v2184, %v2186
        %2188 = vst [vmem:[#allocation2 + $0x10] sm:$0xff] %v2187
        %v2190 = vshrl.u32 %v2169, 16
        %v2192 = vrot.slane %v2190, 7
        %v2193 = vshll.u32 %v2169, 16
        %v2195 = vor.u32 %v2192, %v2193
        %v2197 = vld [vmem:[#allocation2 + $0x18] sm:$0xff]
        %v2198 = vsel %vm257, %v2195, %v2197
        %2199 = vst [vmem:[#allocation2 + $0x18] sm:$0xff] %v2198
        %v2200 = vrot.slane %v2193, 1
        %v2201 = vor.u32 %v2190, %v2200
        %v2203 = vld [vmem:[#allocation2 + $0x28] sm:$0xff]
        %v2204 = vsel %vm265, %v2201, %v2203
        %2205 = vst [vmem:[#allocation2 + $0x28] sm:$0xff] %v2204
        %v2206 = vld [vmem:[#allocation2] sm:$0xff]
        %v2207 = vld [vmem:[#allocation2 + $0x8] sm:$0xff]
        %v2208 = vld [vmem:[#allocation2 + $0x10] sm:$0xff]
        %v2209 = vld [vmem:[#allocation2 + $0x18] sm:$0xff]
        %v2210 = vld [vmem:[#allocation2 + $0x20] sm:$0xff]
        %v2211 = vld [vmem:[#allocation2 + $0x28] sm:$0xff]
        %s2212 = scalar_lea.vmem [#allocation7], 960
        %v2213 = vld [vmem:[%s2212] sm:$0xf]
        %v2214 = vld [vmem:[%s2212 + $0x4] sm:$0xf]
        %v2215 = vld [vmem:[%s2212 + $0x8] sm:$0xf]
        %v2216 = vld [vmem:[%s2212 + $0xc] sm:$0xf]
        %v2217 = vld [vmem:[%s2212 + $0x10] sm:$0xf]
        %v2218 = vld [vmem:[%s2212 + $0x14] sm:$0xf]
        %v2219 = vld [vmem:[%s2212 + $0x18] sm:$0xf]
        %v2220 = vld [vmem:[%s2212 + $0x1c] sm:$0xf]
        %v2221 = vld [vmem:[%s2212 + $0x20] sm:$0xf]
        %v2222 = vld [vmem:[%s2212 + $0x24] sm:$0xf]
        %v2223 = vld [vmem:[%s2212 + $0x28] sm:$0xf]
        %v2224 = vld [vmem:[%s2212 + $0x2c] sm:$0xf]
        %v2225 = vld [vmem:[%s2212 + $0x30] sm:$0xf]
        %v2226 = vld [vmem:[%s2212 + $0x34] sm:$0xf]
        %v2227 = vld [vmem:[%s2212 + $0x38] sm:$0xf]
        %v2228 = vld [vmem:[%s2212 + $0x3c] sm:$0xf]
        %v2229 = vld [vmem:[%s2212 + $0x40] sm:$0xf]
        %v2230 = vld [vmem:[%s2212 + $0x44] sm:$0xf]
        %v2231 = vld [vmem:[%s2212 + $0x48] sm:$0xf]
        %v2232 = vld [vmem:[%s2212 + $0x4c] sm:$0xf]
        %v2233 = vld [vmem:[%s2212 + $0x50] sm:$0xf]
        %v2234 = vld [vmem:[%s2212 + $0x54] sm:$0xf]
        %v2235 = vld [vmem:[%s2212 + $0x58] sm:$0xf]
        %v2236 = vld [vmem:[%s2212 + $0x5c] sm:$0xf]
        %v2237 = vld [vmem:[%s2212 + $0x60] sm:$0xf]
        %v2238 = vld [vmem:[%s2212 + $0x64] sm:$0xf]
        %v2239 = vld [vmem:[%s2212 + $0x68] sm:$0xf]
        %v2240 = vld [vmem:[%s2212 + $0x6c] sm:$0xf]
        %v2241 = vld [vmem:[%s2212 + $0x70] sm:$0xf]
        %v2242 = vld [vmem:[%s2212 + $0x74] sm:$0xf]
        %v2243 = vld [vmem:[%s2212 + $0x78] sm:$0xf]
        %v2244 = vld [vmem:[%s2212 + $0x7c] sm:$0xf]
        %v2245 = vld [vmem:[%s2212 + $0x80] sm:$0xf]
        %v2246 = vld [vmem:[%s2212 + $0x84] sm:$0xf]
        %v2247 = vld [vmem:[%s2212 + $0x88] sm:$0xf]
        %v2248 = vld [vmem:[%s2212 + $0x8c] sm:$0xf]
        %v2249 = vld [vmem:[%s2212 + $0x90] sm:$0xf]
        %v2250 = vld [vmem:[%s2212 + $0x94] sm:$0xf]
        %v2251 = vld [vmem:[%s2212 + $0x98] sm:$0xf]
        %v2252 = vld [vmem:[%s2212 + $0x9c] sm:$0xf]
        %v2253 = vld [vmem:[%s2212 + $0xa0] sm:$0xf]
        %v2254 = vld [vmem:[%s2212 + $0xa4] sm:$0xf]
        %v2255 = vld [vmem:[%s2212 + $0xa8] sm:$0xf]
        %v2256 = vld [vmem:[%s2212 + $0xac] sm:$0xf]
        %v2257 = vld [vmem:[%s2212 + $0xb0] sm:$0xf]
        %v2258 = vld [vmem:[%s2212 + $0xb4] sm:$0xf]
        %v2259 = vld [vmem:[%s2212 + $0xb8] sm:$0xf]
        %v2260 = vld [vmem:[%s2212 + $0xbc] sm:$0xf]
        %v2309 = vunpack.c.l.b16 %v2213
        %v2310 = vunpack.c.l.b16 %v2214
        %v2311 = vunpack.c.l.b16 %v2215
        %v2312 = vunpack.c.l.b16 %v2216
        %v2313 = vunpack.c.l.b16 %v2217
        %v2314 = vunpack.c.l.b16 %v2218
        %v2315 = vunpack.c.l.b16 %v2219
        %v2316 = vunpack.c.l.b16 %v2220
        %v2317 = vunpack.c.l.b16 %v2221
        %v2318 = vunpack.c.l.b16 %v2222
        %v2319 = vunpack.c.l.b16 %v2223
        %v2320 = vunpack.c.l.b16 %v2224
        %v2321 = vunpack.c.l.b16 %v2225
        %v2322 = vunpack.c.l.b16 %v2226
        %v2323 = vunpack.c.l.b16 %v2227
        %v2324 = vunpack.c.l.b16 %v2228
        %v2325 = vunpack.c.l.b16 %v2229
        %v2326 = vunpack.c.l.b16 %v2230
        %v2327 = vunpack.c.l.b16 %v2231
        %v2328 = vunpack.c.l.b16 %v2232
        %v2329 = vunpack.c.l.b16 %v2233
        %v2330 = vunpack.c.l.b16 %v2234
        %v2331 = vunpack.c.l.b16 %v2235
        %v2332 = vunpack.c.l.b16 %v2236
        %v2333 = vunpack.c.l.b16 %v2237
        %v2334 = vunpack.c.l.b16 %v2238
        %v2335 = vunpack.c.l.b16 %v2239
        %v2336 = vunpack.c.l.b16 %v2240
        %v2337 = vunpack.c.l.b16 %v2241
        %v2338 = vunpack.c.l.b16 %v2242
        %v2339 = vunpack.c.l.b16 %v2243
        %v2340 = vunpack.c.l.b16 %v2244
        %v2341 = vunpack.c.l.b16 %v2245
        %v2342 = vunpack.c.l.b16 %v2246
        %v2343 = vunpack.c.l.b16 %v2247
        %v2344 = vunpack.c.l.b16 %v2248
        %v2345 = vunpack.c.l.b16 %v2249
        %v2346 = vunpack.c.l.b16 %v2250
        %v2347 = vunpack.c.l.b16 %v2251
        %v2348 = vunpack.c.l.b16 %v2252
        %v2349 = vunpack.c.l.b16 %v2253
        %v2350 = vunpack.c.l.b16 %v2254
        %v2351 = vunpack.c.l.b16 %v2255
        %v2352 = vunpack.c.l.b16 %v2256
        %v2353 = vunpack.c.l.b16 %v2257
        %v2354 = vunpack.c.l.b16 %v2258
        %v2355 = vunpack.c.l.b16 %v2259
        %v2356 = vunpack.c.l.b16 %v2260
        %v2357 = vpack.c.b16 %v2310, %v2309
        %v2358 = vpack.c.b16 %v2312, %v2311
        %v2359 = vpack.c.b16 %v2314, %v2313
        %v2360 = vpack.c.b16 %v2316, %v2315
        %v2361 = vpack.c.b16 %v2318, %v2317
        %v2362 = vpack.c.b16 %v2320, %v2319
        %v2363 = vpack.c.b16 %v2322, %v2321
        %v2364 = vpack.c.b16 %v2324, %v2323
        %v2365 = vpack.c.b16 %v2326, %v2325
        %v2366 = vpack.c.b16 %v2328, %v2327
        %v2367 = vpack.c.b16 %v2330, %v2329
        %v2368 = vpack.c.b16 %v2332, %v2331
        %v2369 = vpack.c.b16 %v2334, %v2333
        %v2370 = vpack.c.b16 %v2336, %v2335
        %v2371 = vpack.c.b16 %v2338, %v2337
        %v2372 = vpack.c.b16 %v2340, %v2339
        %v2373 = vpack.c.b16 %v2342, %v2341
        %v2374 = vpack.c.b16 %v2344, %v2343
        %v2375 = vpack.c.b16 %v2346, %v2345
        %v2376 = vpack.c.b16 %v2348, %v2347
        %v2377 = vpack.c.b16 %v2350, %v2349
        %v2378 = vpack.c.b16 %v2352, %v2351
        %v2379 = vpack.c.b16 %v2354, %v2353
        %v2380 = vpack.c.b16 %v2356, %v2355
        %2405 = vmatprep.subr.bf16.mxu0 0
        %2406 = vmatpush1.bf16.msra.mxu0 %v2357
        %2407 = vmatprep.subr.bf16.mxu0 0
        %2408 = vmatpush1.bf16.msra.mxu0 %v2358
        %2409 = vmatprep.subr.bf16.mxu0 0
        %2410 = vmatpush1.bf16.msra.mxu0 %v2359
        %2411 = vmatprep.subr.bf16.mxu0 0
        %2412 = vmatpush1.bf16.msra.mxu0 %v2360
        %2413 = vmatprep.subr.bf16.mxu0 0
        %2414 = vmatpush1.bf16.msra.mxu0 %v2361
        %2415 = vmatprep.subr.bf16.mxu0 0
        %2416 = vmatpush1.bf16.msra.mxu0 %v2362
        %2417 = vmatprep.subr.bf16.mxu0 0
        %2418 = vmatpush1.bf16.msra.mxu0 %v2363
        %2419 = vmatprep.subr.bf16.mxu0 0
        %2420 = vmatpush1.bf16.msra.mxu0 %v2364
        %2421 = vmatprep.subr.bf16.mxu0 0
        %2422 = vmatpush1.bf16.msra.mxu0 %v2365
        %2423 = vmatprep.subr.bf16.mxu0 0
        %2424 = vmatpush1.bf16.msra.mxu0 %v2366
        %2425 = vmatprep.subr.bf16.mxu0 0
        %2426 = vmatpush1.bf16.msra.mxu0 %v2367
        %2427 = vmatprep.subr.bf16.mxu0 0
        %2428 = vmatpush1.bf16.msra.mxu0 %v2368
        %2429 = vmatprep.subr.bf16.mxu0 0
        %2430 = vmatpush1.bf16.msra.mxu0 %v2369
        %2431 = vmatprep.subr.bf16.mxu0 0
        %2432 = vmatpush1.bf16.msra.mxu0 %v2370
        %2433 = vmatprep.subr.bf16.mxu0 0
        %2434 = vmatpush1.bf16.msra.mxu0 %v2371
        %2435 = vmatprep.subr.bf16.mxu0 0
        %2436 = vmatpush1.bf16.msra.mxu0 %v2372
        %2437 = vmatprep.mubr.bf16.mxu0 %v2207
        %2438 = vmatmul.mubr.bf16.gmra.mrb[0].mxu0 %v2206
        %v2439 = vpop.f32.mrb[0].mxu0
        %v2440 = vadd.f32 0.0, %v2439
        %v2441 = vpop.f32.mrb[0].mxu0
        %v2442 = vpop.f32.mrb[0].mxu0
        %v2443 = vadd.f32 0.0, %v2442
        %v2444 = vpop.f32.mrb[0].mxu0
        %2445 = vmatprep.mubr.bf16.mxu0 %v2210
        %2446 = vmatmul.mubr.bf16.gmra.mrb[0].mxu0 %v2209
        %v2447 = vpop.f32.mrb[0].mxu0
        %v2448 = vadd.f32 0.0, %v2447
        %v2449 = vpop.f32.mrb[0].mxu0
        %v2450 = vpop.f32.mrb[0].mxu0
        %v2451 = vadd.f32 0.0, %v2450
        %v2452 = vpop.f32.mrb[0].mxu0
        %2453 = vdwg.mxu0
        %2454 = vmatprep.subr.bf16.mxu0 0
        %2455 = vmatpush1.bf16.msra.mxu0 %v2373
        %2456 = vmatprep.subr.bf16.mxu0 0
        %2457 = vmatpush1.bf16.msra.mxu0 %v2374
        %2458 = vmatprep.subr.bf16.mxu0 0
        %2459 = vmatpush1.bf16.msra.mxu0 %v2375
        %2460 = vmatprep.subr.bf16.mxu0 0
        %2461 = vmatpush1.bf16.msra.mxu0 %v2376
        %2462 = vmatprep.subr.bf16.mxu0 0
        %2463 = vmatpush1.bf16.msra.mxu0 %v2377
        %2464 = vmatprep.subr.bf16.mxu0 0
        %2465 = vmatpush1.bf16.msra.mxu0 %v2378
        %2466 = vmatprep.subr.bf16.mxu0 0
        %2467 = vmatpush1.bf16.msra.mxu0 %v2379
        %2468 = vmatprep.subr.bf16.mxu0 0
        %2469 = vmatpush1.bf16.msra.mxu0 %v2380
        %2470 = vmatprep.subr.bf16.mxu0 0
        %2471 = vmatpush1.bf16.msra.mxu0 0
        %2472 = vmatprep.subr.bf16.mxu0 0
        %2473 = vmatpush1.bf16.msra.mxu0 0
        %2474 = vmatprep.subr.bf16.mxu0 0
        %2475 = vmatpush1.bf16.msra.mxu0 0
        %2476 = vmatprep.subr.bf16.mxu0 0
        %2477 = vmatpush1.bf16.msra.mxu0 0
        %2478 = vmatprep.subr.bf16.mxu0 0
        %2479 = vmatpush1.bf16.msra.mxu0 0
        %2480 = vmatprep.subr.bf16.mxu0 0
        %2481 = vmatpush1.bf16.msra.mxu0 0
        %2482 = vmatprep.subr.bf16.mxu0 0
        %2483 = vmatpush1.bf16.msra.mxu0 0
        %2484 = vmatprep.subr.bf16.mxu0 0
        %2485 = vmatpush1.bf16.msra.mxu0 0
        %2486 = vmatprep.mubr.bf16.mxu0 0
        %2487 = vmatmul.mubr.bf16.gmra.mrb[0].mxu0 %v2208
        %v2488 = vpop.f32.mrb[0].mxu0
        %v2489 = vadd.f32 %v2440, %v2488
        %v2490 = vpop.f32.mrb[0].mxu0
        %v2491 = vpop.f32.mrb[0].mxu0
        %v2492 = vadd.f32 %v2443, %v2491
        %v2493 = vpop.f32.mrb[0].mxu0
        %2494 = vmatprep.mubr.bf16.mxu0 0
        %2495 = vmatmul.mubr.bf16.gmra.mrb[0].mxu0 %v2211
        %v2496 = vpop.f32.mrb[0].mxu0
        %v2497 = vadd.f32 %v2448, %v2496
        %v2498 = vpop.f32.mrb[0].mxu0
        %v2499 = vpop.f32.mrb[0].mxu0
        %v2500 = vadd.f32 %v2451, %v2499
        %v2501 = vpop.f32.mrb[0].mxu0
        %2502 = vdwg.mxu0
        %v2503 = vadd.f32 %v2060, %v2489
        %v2504 = vadd.f32 %v2061, %v2492
        %v2505 = vadd.f32 %v2062, %v2497
        %v2506 = vadd.f32 %v2063, %v2500
        %2507 = vrot.lane.b32.xlu0 %v2489, 16
        %v2508 = vpop.permute.xlu0 %2507
        %2509 = vrot.lane.b32.xlu0 %v2492, 16
        %v2510 = vpop.permute.xlu0 %2509
        %2511 = vrot.lane.b32.xlu0 %v2497, 16
        %v2512 = vpop.permute.xlu0 %2511
        %2513 = vrot.lane.b32.xlu0 %v2500, 16
        %v2514 = vpop.permute.xlu0 %2513
        %v2515 = vsel %vm231, %v2508, -inf
        %v2516 = vsel %vm231, %v2510, -inf
        %v2517 = vsel %vm231, %v2512, -inf
        %v2518 = vsel %vm231, %v2514, -inf
        %v2519 = vmax.f32 %v2489, %v2515
        %v2520 = vmax.f32 %v2492, %v2516
        %v2521 = vmax.f32 %v2497, %v2517
        %v2522 = vmax.f32 %v2500, %v2518
        %2523 = vrot.lane.b32.xlu0 %v2489, 8
        %v2524 = vpop.permute.xlu0 %2523
        %2525 = vrot.lane.b32.xlu0 %v2492, 8
        %v2526 = vpop.permute.xlu0 %2525
        %2527 = vrot.lane.b32.xlu0 %v2497, 8
        %v2528 = vpop.permute.xlu0 %2527
        %2529 = vrot.lane.b32.xlu0 %v2500, 8
        %v2530 = vpop.permute.xlu0 %2529
        %v2531 = vsel %vm232, %v2524, -inf
        %v2532 = vsel %vm232, %v2526, -inf
        %v2533 = vsel %vm232, %v2528, -inf
        %v2534 = vsel %vm232, %v2530, -inf
        %v2535 = vmax.f32 %v2519, %v2531
        %v2536 = vmax.f32 %v2520, %v2532
        %v2537 = vmax.f32 %v2521, %v2533
        %v2538 = vmax.f32 %v2522, %v2534
        %2539 = vrot.lane.b32.xlu0 %v2489, 120
        %v2540 = vpop.permute.xlu0 %2539
        %2541 = vrot.lane.b32.xlu0 %v2492, 120
        %v2542 = vpop.permute.xlu0 %2541
        %2543 = vrot.lane.b32.xlu0 %v2497, 120
        %v2544 = vpop.permute.xlu0 %2543
        %2545 = vrot.lane.b32.xlu0 %v2500, 120
        %v2546 = vpop.permute.xlu0 %2545
        %v2547 = vsel %vm233, %v2540, -inf
        %v2548 = vsel %vm233, %v2542, -inf
        %v2549 = vsel %vm233, %v2544, -inf
        %v2550 = vsel %vm233, %v2546, -inf
        %v2551 = vmax.f32 %v2535, %v2547
        %v2552 = vmax.f32 %v2536, %v2548
        %v2553 = vmax.f32 %v2537, %v2549
        %v2554 = vmax.f32 %v2538, %v2550
        %2555 = vrot.lane.b32.xlu0 %v2489, 112
        %v2556 = vpop.permute.xlu0 %2555
        %2557 = vrot.lane.b32.xlu0 %v2492, 112
        %v2558 = vpop.permute.xlu0 %2557
        %2559 = vrot.lane.b32.xlu0 %v2497, 112
        %v2560 = vpop.permute.xlu0 %2559
        %2561 = vrot.lane.b32.xlu0 %v2500, 112
        %v2562 = vpop.permute.xlu0 %2561
        %v2563 = vsel %vm234, %v2556, -inf
        %v2564 = vsel %vm234, %v2558, -inf
        %v2565 = vsel %vm234, %v2560, -inf
        %v2566 = vsel %vm234, %v2562, -inf
        %v2567 = vmax.f32 %v2551, %v2563
        %v2568 = vmax.f32 %v2552, %v2564
        %v2569 = vmax.f32 %v2553, %v2565
        %v2570 = vmax.f32 %v2554, %v2566
        %2571 = vst [vmem:[#allocation3 + $0x2] sm:$0xff] %v2567
        %2572 = vst [vmem:[#allocation3 + $0xa] sm:$0xff] %v2568
        %2573 = vst [vmem:[#allocation3 + $0x16] sm:$0xff] %v2569
        %2574 = vst [vmem:[#allocation3 + $0x1e] sm:$0xff] %v2570
        %v2575 = vld [vmem:[#allocation3] sm:$0xff]
        %v2576 = vld [vmem:[#allocation3 + $0x8] sm:$0xff]
        %v2577 = vld [vmem:[#allocation3 + $0x1] sm:$0xff]
        %v2578 = vld [vmem:[#allocation3 + $0x9] sm:$0xff]
        %v2579 = vmax.f32 %v2575, %v2577
        %v2580 = vmax.f32 %v2576, %v2578
        %v2581 = vld [vmem:[#allocation3 + $0x2] sm:$0xff]
        %v2582 = vld [vmem:[#allocation3 + $0xa] sm:$0xff]
        %v2583 = vmax.f32 %v2579, %v2581
        %v2584 = vmax.f32 %v2580, %v2582
        %v2585 = vld [vmem:[#allocation3 + $0x3] sm:$0xff]
        %v2586 = vld [vmem:[#allocation3 + $0xb] sm:$0xff]
        %v2587 = vmax.f32 %v2583, %v2585
        %v2588 = vmax.f32 %v2584, %v2586
        %v2589 = vld [vmem:[#allocation3 + $0x4] sm:$0xff]
        %v2590 = vld [vmem:[#allocation3 + $0xc] sm:$0xff]
        %v2591 = vmax.f32 %v2587, %v2589
        %v2592 = vmax.f32 %v2588, %v2590
        %v2593 = vld [vmem:[#allocation3 + $0x14] sm:$0xff]
        %v2594 = vld [vmem:[#allocation3 + $0x1c] sm:$0xff]
        %v2595 = vld [vmem:[#allocation3 + $0x15] sm:$0xff]
        %v2596 = vld [vmem:[#allocation3 + $0x1d] sm:$0xff]
        %v2597 = vmax.f32 %v2593, %v2595
        %v2598 = vmax.f32 %v2594, %v2596
        %v2599 = vld [vmem:[#allocation3 + $0x16] sm:$0xff]
        %v2600 = vld [vmem:[#allocation3 + $0x1e] sm:$0xff]
        %v2601 = vmax.f32 %v2597, %v2599
        %v2602 = vmax.f32 %v2598, %v2600
        %v2603 = vld [vmem:[#allocation3 + $0x17] sm:$0xff]
        %v2604 = vld [vmem:[#allocation3 + $0x1f] sm:$0xff]
        %v2605 = vmax.f32 %v2601, %v2603
        %v2606 = vmax.f32 %v2602, %v2604
        %v2607 = vld [vmem:[#allocation3 + $0x18] sm:$0xff]
        %v2608 = vld [vmem:[#allocation3 + $0x20] sm:$0xff]
        %v2609 = vmax.f32 %v2605, %v2607
        %v2610 = vmax.f32 %v2606, %v2608
        %v2611 = vpack.c.bf16 %v2592, %v2591
        %v2612 = vpack.c.bf16 %v2610, %v2609
        %2613 = vst [vmem:[#allocation2 + $0x8] sm:$0xff] %v2611
        %2614 = vst [vmem:[#allocation2 + $0x20] sm:$0xff] %v2612
        %v2616 = vshrl.u32 %v2611, 16
        %v2618 = vrot.slane %v2616, 7
        %v2619 = vshll.u32 %v2611, 16
        %v2621 = vor.u32 %v2618, %v2619
        %v2623 = vld [vmem:[#allocation2] sm:$0xff]
        %v2624 = vsel %vm257, %v2621, %v2623
        %2625 = vst [vmem:[#allocation2] sm:$0xff] %v2624
        %v2626 = vrot.slane %v2619, 1
        %v2627 = vor.u32 %v2616, %v2626
        %v2629 = vld [vmem:[#allocation2 + $0x10] sm:$0xff]
        %v2630 = vsel %vm265, %v2627, %v2629
        %2631 = vst [vmem:[#allocation2 + $0x10] sm:$0xff] %v2630
        %v2633 = vshrl.u32 %v2612, 16
        %v2635 = vrot.slane %v2633, 7
        %v2636 = vshll.u32 %v2612, 16
        %v2638 = vor.u32 %v2635, %v2636
        %v2640 = vld [vmem:[#allocation2 + $0x18] sm:$0xff]
        %v2641 = vsel %vm257, %v2638, %v2640
        %2642 = vst [vmem:[#allocation2 + $0x18] sm:$0xff] %v2641
        %v2643 = vrot.slane %v2636, 1
        %v2644 = vor.u32 %v2633, %v2643
        %v2646 = vld [vmem:[#allocation2 + $0x28] sm:$0xff]
        %v2647 = vsel %vm265, %v2644, %v2646
        %2648 = vst [vmem:[#allocation2 + $0x28] sm:$0xff] %v2647
        %v2649 = vld [vmem:[#allocation2] sm:$0xff]
        %v2650 = vld [vmem:[#allocation2 + $0x8] sm:$0xff]
        %v2651 = vld [vmem:[#allocation2 + $0x10] sm:$0xff]
        %v2652 = vld [vmem:[#allocation2 + $0x18] sm:$0xff]
        %v2653 = vld [vmem:[#allocation2 + $0x20] sm:$0xff]
        %v2654 = vld [vmem:[#allocation2 + $0x28] sm:$0xff]
        %s2655 = scalar_lea.vmem [#allocation7], 1152
        %v2656 = vld [vmem:[%s2655] sm:$0xf]
        %v2657 = vld [vmem:[%s2655 + $0x4] sm:$0xf]
        %v2658 = vld [vmem:[%s2655 + $0x8] sm:$0xf]
        %v2659 = vld [vmem:[%s2655 + $0xc] sm:$0xf]
        %v2660 = vld [vmem:[%s2655 + $0x10] sm:$0xf]
        %v2661 = vld [vmem:[%s2655 + $0x14] sm:$0xf]
        %v2662 = vld [vmem:[%s2655 + $0x18] sm:$0xf]
        %v2663 = vld [vmem:[%s2655 + $0x1c] sm:$0xf]
        %v2664 = vld [vmem:[%s2655 + $0x20] sm:$0xf]
        %v2665 = vld [vmem:[%s2655 + $0x24] sm:$0xf]
        %v2666 = vld [vmem:[%s2655 + $0x28] sm:$0xf]
        %v2667 = vld [vmem:[%s2655 + $0x2c] sm:$0xf]
        %v2668 = vld [vmem:[%s2655 + $0x30] sm:$0xf]
        %v2669 = vld [vmem:[%s2655 + $0x34] sm:$0xf]
        %v2670 = vld [vmem:[%s2655 + $0x38] sm:$0xf]
        %v2671 = vld [vmem:[%s2655 + $0x3c] sm:$0xf]
        %v2672 = vld [vmem:[%s2655 + $0x40] sm:$0xf]
        %v2673 = vld [vmem:[%s2655 + $0x44] sm:$0xf]
        %v2674 = vld [vmem:[%s2655 + $0x48] sm:$0xf]
        %v2675 = vld [vmem:[%s2655 + $0x4c] sm:$0xf]
        %v2676 = vld [vmem:[%s2655 + $0x50] sm:$0xf]
        %v2677 = vld [vmem:[%s2655 + $0x54] sm:$0xf]
        %v2678 = vld [vmem:[%s2655 + $0x58] sm:$0xf]
        %v2679 = vld [vmem:[%s2655 + $0x5c] sm:$0xf]
        %v2680 = vld [vmem:[%s2655 + $0x60] sm:$0xf]
        %v2681 = vld [vmem:[%s2655 + $0x64] sm:$0xf]
        %v2682 = vld [vmem:[%s2655 + $0x68] sm:$0xf]
        %v2683 = vld [vmem:[%s2655 + $0x6c] sm:$0xf]
        %v2684 = vld [vmem:[%s2655 + $0x70] sm:$0xf]
        %v2685 = vld [vmem:[%s2655 + $0x74] sm:$0xf]
        %v2686 = vld [vmem:[%s2655 + $0x78] sm:$0xf]
        %v2687 = vld [vmem:[%s2655 + $0x7c] sm:$0xf]
        %v2688 = vld [vmem:[%s2655 + $0x80] sm:$0xf]
        %v2689 = vld [vmem:[%s2655 + $0x84] sm:$0xf]
        %v2690 = vld [vmem:[%s2655 + $0x88] sm:$0xf]
        %v2691 = vld [vmem:[%s2655 + $0x8c] sm:$0xf]
        %v2692 = vld [vmem:[%s2655 + $0x90] sm:$0xf]
        %v2693 = vld [vmem:[%s2655 + $0x94] sm:$0xf]
        %v2694 = vld [vmem:[%s2655 + $0x98] sm:$0xf]
        %v2695 = vld [vmem:[%s2655 + $0x9c] sm:$0xf]
        %v2696 = vld [vmem:[%s2655 + $0xa0] sm:$0xf]
        %v2697 = vld [vmem:[%s2655 + $0xa4] sm:$0xf]
        %v2698 = vld [vmem:[%s2655 + $0xa8] sm:$0xf]
        %v2699 = vld [vmem:[%s2655 + $0xac] sm:$0xf]
        %v2700 = vld [vmem:[%s2655 + $0xb0] sm:$0xf]
        %v2701 = vld [vmem:[%s2655 + $0xb4] sm:$0xf]
        %v2702 = vld [vmem:[%s2655 + $0xb8] sm:$0xf]
        %v2703 = vld [vmem:[%s2655 + $0xbc] sm:$0xf]
        %v2752 = vunpack.c.l.b16 %v2656
        %v2753 = vunpack.c.l.b16 %v2657
        %v2754 = vunpack.c.l.b16 %v2658
        %v2755 = vunpack.c.l.b16 %v2659
        %v2756 = vunpack.c.l.b16 %v2660
        %v2757 = vunpack.c.l.b16 %v2661
        %v2758 = vunpack.c.l.b16 %v2662
        %v2759 = vunpack.c.l.b16 %v2663
        %v2760 = vunpack.c.l.b16 %v2664
        %v2761 = vunpack.c.l.b16 %v2665
        %v2762 = vunpack.c.l.b16 %v2666
        %v2763 = vunpack.c.l.b16 %v2667
        %v2764 = vunpack.c.l.b16 %v2668
        %v2765 = vunpack.c.l.b16 %v2669
        %v2766 = vunpack.c.l.b16 %v2670
        %v2767 = vunpack.c.l.b16 %v2671
        %v2768 = vunpack.c.l.b16 %v2672
        %v2769 = vunpack.c.l.b16 %v2673
        %v2770 = vunpack.c.l.b16 %v2674
        %v2771 = vunpack.c.l.b16 %v2675
        %v2772 = vunpack.c.l.b16 %v2676
        %v2773 = vunpack.c.l.b16 %v2677
        %v2774 = vunpack.c.l.b16 %v2678
        %v2775 = vunpack.c.l.b16 %v2679
        %v2776 = vunpack.c.l.b16 %v2680
        %v2777 = vunpack.c.l.b16 %v2681
        %v2778 = vunpack.c.l.b16 %v2682
        %v2779 = vunpack.c.l.b16 %v2683
        %v2780 = vunpack.c.l.b16 %v2684
        %v2781 = vunpack.c.l.b16 %v2685
        %v2782 = vunpack.c.l.b16 %v2686
        %v2783 = vunpack.c.l.b16 %v2687
        %v2784 = vunpack.c.l.b16 %v2688
        %v2785 = vunpack.c.l.b16 %v2689
        %v2786 = vunpack.c.l.b16 %v2690
        %v2787 = vunpack.c.l.b16 %v2691
        %v2788 = vunpack.c.l.b16 %v2692
        %v2789 = vunpack.c.l.b16 %v2693
        %v2790 = vunpack.c.l.b16 %v2694
        %v2791 = vunpack.c.l.b16 %v2695
        %v2792 = vunpack.c.l.b16 %v2696
        %v2793 = vunpack.c.l.b16 %v2697
        %v2794 = vunpack.c.l.b16 %v2698
        %v2795 = vunpack.c.l.b16 %v2699
        %v2796 = vunpack.c.l.b16 %v2700
        %v2797 = vunpack.c.l.b16 %v2701
        %v2798 = vunpack.c.l.b16 %v2702
        %v2799 = vunpack.c.l.b16 %v2703
        %v2800 = vpack.c.b16 %v2753, %v2752
        %v2801 = vpack.c.b16 %v2755, %v2754
        %v2802 = vpack.c.b16 %v2757, %v2756
        %v2803 = vpack.c.b16 %v2759, %v2758
        %v2804 = vpack.c.b16 %v2761, %v2760
        %v2805 = vpack.c.b16 %v2763, %v2762
        %v2806 = vpack.c.b16 %v2765, %v2764
        %v2807 = vpack.c.b16 %v2767, %v2766
        %v2808 = vpack.c.b16 %v2769, %v2768
        %v2809 = vpack.c.b16 %v2771, %v2770
        %v2810 = vpack.c.b16 %v2773, %v2772
        %v2811 = vpack.c.b16 %v2775, %v2774
        %v2812 = vpack.c.b16 %v2777, %v2776
        %v2813 = vpack.c.b16 %v2779, %v2778
        %v2814 = vpack.c.b16 %v2781, %v2780
        %v2815 = vpack.c.b16 %v2783, %v2782
        %v2816 = vpack.c.b16 %v2785, %v2784
        %v2817 = vpack.c.b16 %v2787, %v2786
        %v2818 = vpack.c.b16 %v2789, %v2788
        %v2819 = vpack.c.b16 %v2791, %v2790
        %v2820 = vpack.c.b16 %v2793, %v2792
        %v2821 = vpack.c.b16 %v2795, %v2794
        %v2822 = vpack.c.b16 %v2797, %v2796
        %v2823 = vpack.c.b16 %v2799, %v2798
        %2848 = vmatprep.subr.bf16.mxu0 0
        %2849 = vmatpush1.bf16.msra.mxu0 %v2800
        %2850 = vmatprep.subr.bf16.mxu0 0
        %2851 = vmatpush1.bf16.msra.mxu0 %v2801
        %2852 = vmatprep.subr.bf16.mxu0 0
        %2853 = vmatpush1.bf16.msra.mxu0 %v2802
        %2854 = vmatprep.subr.bf16.mxu0 0
        %2855 = vmatpush1.bf16.msra.mxu0 %v2803
        %2856 = vmatprep.subr.bf16.mxu0 0
        %2857 = vmatpush1.bf16.msra.mxu0 %v2804
        %2858 = vmatprep.subr.bf16.mxu0 0
        %2859 = vmatpush1.bf16.msra.mxu0 %v2805
        %2860 = vmatprep.subr.bf16.mxu0 0
        %2861 = vmatpush1.bf16.msra.mxu0 %v2806
        %2862 = vmatprep.subr.bf16.mxu0 0
        %2863 = vmatpush1.bf16.msra.mxu0 %v2807
        %2864 = vmatprep.subr.bf16.mxu0 0
        %2865 = vmatpush1.bf16.msra.mxu0 %v2808
        %2866 = vmatprep.subr.bf16.mxu0 0
        %2867 = vmatpush1.bf16.msra.mxu0 %v2809
        %2868 = vmatprep.subr.bf16.mxu0 0
        %2869 = vmatpush1.bf16.msra.mxu0 %v2810
        %2870 = vmatprep.subr.bf16.mxu0 0
        %2871 = vmatpush1.bf16.msra.mxu0 %v2811
        %2872 = vmatprep.subr.bf16.mxu0 0
        %2873 = vmatpush1.bf16.msra.mxu0 %v2812
        %2874 = vmatprep.subr.bf16.mxu0 0
        %2875 = vmatpush1.bf16.msra.mxu0 %v2813
        %2876 = vmatprep.subr.bf16.mxu0 0
        %2877 = vmatpush1.bf16.msra.mxu0 %v2814
        %2878 = vmatprep.subr.bf16.mxu0 0
        %2879 = vmatpush1.bf16.msra.mxu0 %v2815
        %2880 = vmatprep.mubr.bf16.mxu0 %v2650
        %2881 = vmatmul.mubr.bf16.gmra.mrb[0].mxu0 %v2649
        %v2882 = vpop.f32.mrb[0].mxu0
        %v2883 = vadd.f32 0.0, %v2882
        %v2884 = vpop.f32.mrb[0].mxu0
        %v2885 = vpop.f32.mrb[0].mxu0
        %v2886 = vadd.f32 0.0, %v2885
        %v2887 = vpop.f32.mrb[0].mxu0
        %2888 = vmatprep.mubr.bf16.mxu0 %v2653
        %2889 = vmatmul.mubr.bf16.gmra.mrb[0].mxu0 %v2652
        %v2890 = vpop.f32.mrb[0].mxu0
        %v2891 = vadd.f32 0.0, %v2890
        %v2892 = vpop.f32.mrb[0].mxu0
        %v2893 = vpop.f32.mrb[0].mxu0
        %v2894 = vadd.f32 0.0, %v2893
        %v2895 = vpop.f32.mrb[0].mxu0
        %2896 = vdwg.mxu0
        %2897 = vmatprep.subr.bf16.mxu0 0
        %2898 = vmatpush1.bf16.msra.mxu0 %v2816
        %2899 = vmatprep.subr.bf16.mxu0 0
        %2900 = vmatpush1.bf16.msra.mxu0 %v2817
        %2901 = vmatprep.subr.bf16.mxu0 0
        %2902 = vmatpush1.bf16.msra.mxu0 %v2818
        %2903 = vmatprep.subr.bf16.mxu0 0
        %2904 = vmatpush1.bf16.msra.mxu0 %v2819
        %2905 = vmatprep.subr.bf16.mxu0 0
        %2906 = vmatpush1.bf16.msra.mxu0 %v2820
        %2907 = vmatprep.subr.bf16.mxu0 0
        %2908 = vmatpush1.bf16.msra.mxu0 %v2821
        %2909 = vmatprep.subr.bf16.mxu0 0
        %2910 = vmatpush1.bf16.msra.mxu0 %v2822
        %2911 = vmatprep.subr.bf16.mxu0 0
        %2912 = vmatpush1.bf16.msra.mxu0 %v2823
        %2913 = vmatprep.subr.bf16.mxu0 0
        %2914 = vmatpush1.bf16.msra.mxu0 0
        %2915 = vmatprep.subr.bf16.mxu0 0
        %2916 = vmatpush1.bf16.msra.mxu0 0
        %2917 = vmatprep.subr.bf16.mxu0 0
        %2918 = vmatpush1.bf16.msra.mxu0 0
        %2919 = vmatprep.subr.bf16.mxu0 0
        %2920 = vmatpush1.bf16.msra.mxu0 0
        %2921 = vmatprep.subr.bf16.mxu0 0
        %2922 = vmatpush1.bf16.msra.mxu0 0
        %2923 = vmatprep.subr.bf16.mxu0 0
        %2924 = vmatpush1.bf16.msra.mxu0 0
        %2925 = vmatprep.subr.bf16.mxu0 0
        %2926 = vmatpush1.bf16.msra.mxu0 0
        %2927 = vmatprep.subr.bf16.mxu0 0
        %2928 = vmatpush1.bf16.msra.mxu0 0
        %2929 = vmatprep.mubr.bf16.mxu0 0
        %2930 = vmatmul.mubr.bf16.gmra.mrb[0].mxu0 %v2651
        %v2931 = vpop.f32.mrb[0].mxu0
        %v2932 = vadd.f32 %v2883, %v2931
        %v2933 = vpop.f32.mrb[0].mxu0
        %v2934 = vpop.f32.mrb[0].mxu0
        %v2935 = vadd.f32 %v2886, %v2934
        %v2936 = vpop.f32.mrb[0].mxu0
        %2937 = vmatprep.mubr.bf16.mxu0 0
        %2938 = vmatmul.mubr.bf16.gmra.mrb[0].mxu0 %v2654
        %v2939 = vpop.f32.mrb[0].mxu0
        %v2940 = vadd.f32 %v2891, %v2939
        %v2941 = vpop.f32.mrb[0].mxu0
        %v2942 = vpop.f32.mrb[0].mxu0
        %v2943 = vadd.f32 %v2894, %v2942
        %v2944 = vpop.f32.mrb[0].mxu0
        %2945 = vdwg.mxu0
        %v2946 = vadd.f32 %v2503, %v2932
        %v2947 = vadd.f32 %v2504, %v2935
        %v2948 = vadd.f32 %v2505, %v2940
        %v2949 = vadd.f32 %v2506, %v2943
        %v2950 = vmax.f32 %v2946, 0.0
        %v2951 = vmax.f32 %v2947, 0.0
        %v2952 = vmax.f32 %v2948, 0.0
        %v2953 = vmax.f32 %v2949, 0.0
        %v2954 = vpack.c.bf16 %v2951, %v2950
        %v2955 = vpack.c.bf16 %v2953, %v2952
        %2956 = vst [vmem:[#allocation2 + $0x8] sm:$0xff] %v2954
        %2957 = vst [vmem:[#allocation2 + $0x20] sm:$0xff] %v2955
        %v2959 = vshrl.u32 %v2954, 16
        %v2961 = vrot.slane %v2959, 7
        %v2962 = vshll.u32 %v2954, 16
        %v2964 = vor.u32 %v2961, %v2962
        %v2966 = vld [vmem:[#allocation2] sm:$0xff]
        %v2967 = vsel %vm257, %v2964, %v2966
        %2968 = vst [vmem:[#allocation2] sm:$0xff] %v2967
        %v2969 = vrot.slane %v2962, 1
        %v2970 = vor.u32 %v2959, %v2969
        %v2972 = vld [vmem:[#allocation2 + $0x10] sm:$0xff]
        %v2973 = vsel %vm265, %v2970, %v2972
        %2974 = vst [vmem:[#allocation2 + $0x10] sm:$0xff] %v2973
        %v2976 = vshrl.u32 %v2955, 16
        %v2978 = vrot.slane %v2976, 7
        %v2979 = vshll.u32 %v2955, 16
        %v2981 = vor.u32 %v2978, %v2979
        %v2983 = vld [vmem:[#allocation2 + $0x18] sm:$0xff]
        %v2984 = vsel %vm257, %v2981, %v2983
        %2985 = vst [vmem:[#allocation2 + $0x18] sm:$0xff] %v2984
        %v2986 = vrot.slane %v2979, 1
        %v2987 = vor.u32 %v2976, %v2986
        %v2989 = vld [vmem:[#allocation2 + $0x28] sm:$0xff]
        %v2990 = vsel %vm265, %v2987, %v2989
        %2991 = vst [vmem:[#allocation2 + $0x28] sm:$0xff] %v2990
        %v2992 = vld [vmem:[#allocation2] sm:$0xff]
        %v2993 = vld [vmem:[#allocation2 + $0x8] sm:$0xff]
        %v2994 = vld [vmem:[#allocation2 + $0x10] sm:$0xff]
        %v2995 = vld [vmem:[#allocation2 + $0x18] sm:$0xff]
        %v2996 = vld [vmem:[#allocation2 + $0x20] sm:$0xff]
        %v2997 = vld [vmem:[#allocation2 + $0x28] sm:$0xff]
        %s2998 = scalar_lea.vmem [#allocation7], 1344
        %v2999 = vld [vmem:[%s2998] sm:$0xf]
        %v3000 = vld [vmem:[%s2998 + $0x4] sm:$0xf]
        %v3001 = vld [vmem:[%s2998 + $0x8] sm:$0xf]
        %v3002 = vld [vmem:[%s2998 + $0xc] sm:$0xf]
        %v3003 = vld [vmem:[%s2998 + $0x10] sm:$0xf]
        %v3004 = vld [vmem:[%s2998 + $0x14] sm:$0xf]
        %v3005 = vld [vmem:[%s2998 + $0x18] sm:$0xf]
        %v3006 = vld [vmem:[%s2998 + $0x1c] sm:$0xf]
        %v3007 = vld [vmem:[%s2998 + $0x20] sm:$0xf]
        %v3008 = vld [vmem:[%s2998 + $0x24] sm:$0xf]
        %v3009 = vld [vmem:[%s2998 + $0x28] sm:$0xf]
        %v3010 = vld [vmem:[%s2998 + $0x2c] sm:$0xf]
        %v3011 = vld [vmem:[%s2998 + $0x30] sm:$0xf]
        %v3012 = vld [vmem:[%s2998 + $0x34] sm:$0xf]
        %v3013 = vld [vmem:[%s2998 + $0x38] sm:$0xf]
        %v3014 = vld [vmem:[%s2998 + $0x3c] sm:$0xf]
        %v3015 = vld [vmem:[%s2998 + $0x40] sm:$0xf]
        %v3016 = vld [vmem:[%s2998 + $0x44] sm:$0xf]
        %v3017 = vld [vmem:[%s2998 + $0x48] sm:$0xf]
        %v3018 = vld [vmem:[%s2998 + $0x4c] sm:$0xf]
        %v3019 = vld [vmem:[%s2998 + $0x50] sm:$0xf]
        %v3020 = vld [vmem:[%s2998 + $0x54] sm:$0xf]
        %v3021 = vld [vmem:[%s2998 + $0x58] sm:$0xf]
        %v3022 = vld [vmem:[%s2998 + $0x5c] sm:$0xf]
        %v3023 = vld [vmem:[%s2998 + $0x60] sm:$0xf]
        %v3024 = vld [vmem:[%s2998 + $0x64] sm:$0xf]
        %v3025 = vld [vmem:[%s2998 + $0x68] sm:$0xf]
        %v3026 = vld [vmem:[%s2998 + $0x6c] sm:$0xf]
        %v3027 = vld [vmem:[%s2998 + $0x70] sm:$0xf]
        %v3028 = vld [vmem:[%s2998 + $0x74] sm:$0xf]
        %v3029 = vld [vmem:[%s2998 + $0x78] sm:$0xf]
        %v3030 = vld [vmem:[%s2998 + $0x7c] sm:$0xf]
        %v3031 = vld [vmem:[%s2998 + $0x80] sm:$0xf]
        %v3032 = vld [vmem:[%s2998 + $0x84] sm:$0xf]
        %v3033 = vld [vmem:[%s2998 + $0x88] sm:$0xf]
        %v3034 = vld [vmem:[%s2998 + $0x8c] sm:$0xf]
        %v3035 = vld [vmem:[%s2998 + $0x90] sm:$0xf]
        %v3036 = vld [vmem:[%s2998 + $0x94] sm:$0xf]
        %v3037 = vld [vmem:[%s2998 + $0x98] sm:$0xf]
        %v3038 = vld [vmem:[%s2998 + $0x9c] sm:$0xf]
        %v3039 = vld [vmem:[%s2998 + $0xa0] sm:$0xf]
        %v3040 = vld [vmem:[%s2998 + $0xa4] sm:$0xf]
        %v3041 = vld [vmem:[%s2998 + $0xa8] sm:$0xf]
        %v3042 = vld [vmem:[%s2998 + $0xac] sm:$0xf]
        %v3043 = vld [vmem:[%s2998 + $0xb0] sm:$0xf]
        %v3044 = vld [vmem:[%s2998 + $0xb4] sm:$0xf]
        %v3045 = vld [vmem:[%s2998 + $0xb8] sm:$0xf]
        %v3046 = vld [vmem:[%s2998 + $0xbc] sm:$0xf]
        %v3047 = vld [vmem:[%s2 + $0x2] sm:$0x1]
        %v3048 = vlaneseq
        %v3049 = vshrl.u32 %v3048, 7
        %v3050 = vsub.s32 0, %v3049
        %v3051 = vrot.slane %v3047, %v3050
        %v3100 = vunpack.c.l.b16 %v2999
        %v3101 = vunpack.c.l.b16 %v3000
        %v3102 = vunpack.c.l.b16 %v3001
        %v3103 = vunpack.c.l.b16 %v3002
        %v3104 = vunpack.c.l.b16 %v3003
        %v3105 = vunpack.c.l.b16 %v3004
        %v3106 = vunpack.c.l.b16 %v3005
        %v3107 = vunpack.c.l.b16 %v3006
        %v3108 = vunpack.c.l.b16 %v3007
        %v3109 = vunpack.c.l.b16 %v3008
        %v3110 = vunpack.c.l.b16 %v3009
        %v3111 = vunpack.c.l.b16 %v3010
        %v3112 = vunpack.c.l.b16 %v3011
        %v3113 = vunpack.c.l.b16 %v3012
        %v3114 = vunpack.c.l.b16 %v3013
        %v3115 = vunpack.c.l.b16 %v3014
        %v3116 = vunpack.c.l.b16 %v3015
        %v3117 = vunpack.c.l.b16 %v3016
        %v3118 = vunpack.c.l.b16 %v3017
        %v3119 = vunpack.c.l.b16 %v3018
        %v3120 = vunpack.c.l.b16 %v3019
        %v3121 = vunpack.c.l.b16 %v3020
        %v3122 = vunpack.c.l.b16 %v3021
        %v3123 = vunpack.c.l.b16 %v3022
        %v3124 = vunpack.c.l.b16 %v3023
        %v3125 = vunpack.c.l.b16 %v3024
        %v3126 = vunpack.c.l.b16 %v3025
        %v3127 = vunpack.c.l.b16 %v3026
        %v3128 = vunpack.c.l.b16 %v3027
        %v3129 = vunpack.c.l.b16 %v3028
        %v3130 = vunpack.c.l.b16 %v3029
        %v3131 = vunpack.c.l.b16 %v3030
        %v3132 = vunpack.c.l.b16 %v3031
        %v3133 = vunpack.c.l.b16 %v3032
        %v3134 = vunpack.c.l.b16 %v3033
        %v3135 = vunpack.c.l.b16 %v3034
        %v3136 = vunpack.c.l.b16 %v3035
        %v3137 = vunpack.c.l.b16 %v3036
        %v3138 = vunpack.c.l.b16 %v3037
        %v3139 = vunpack.c.l.b16 %v3038
        %v3140 = vunpack.c.l.b16 %v3039
        %v3141 = vunpack.c.l.b16 %v3040
        %v3142 = vunpack.c.l.b16 %v3041
        %v3143 = vunpack.c.l.b16 %v3042
        %v3144 = vunpack.c.l.b16 %v3043
        %v3145 = vunpack.c.l.b16 %v3044
        %v3146 = vunpack.c.l.b16 %v3045
        %v3147 = vunpack.c.l.b16 %v3046
        %v3148 = vpack.c.b16 %v3101, %v3100
        %v3149 = vpack.c.b16 %v3103, %v3102
        %v3150 = vpack.c.b16 %v3105, %v3104
        %v3151 = vpack.c.b16 %v3107, %v3106
        %v3152 = vpack.c.b16 %v3109, %v3108
        %v3153 = vpack.c.b16 %v3111, %v3110
        %v3154 = vpack.c.b16 %v3113, %v3112
        %v3155 = vpack.c.b16 %v3115, %v3114
        %v3156 = vpack.c.b16 %v3117, %v3116
        %v3157 = vpack.c.b16 %v3119, %v3118
        %v3158 = vpack.c.b16 %v3121, %v3120
        %v3159 = vpack.c.b16 %v3123, %v3122
        %v3160 = vpack.c.b16 %v3125, %v3124
        %v3161 = vpack.c.b16 %v3127, %v3126
        %v3162 = vpack.c.b16 %v3129, %v3128
        %v3163 = vpack.c.b16 %v3131, %v3130
        %v3164 = vpack.c.b16 %v3133, %v3132
        %v3165 = vpack.c.b16 %v3135, %v3134
        %v3166 = vpack.c.b16 %v3137, %v3136
        %v3167 = vpack.c.b16 %v3139, %v3138
        %v3168 = vpack.c.b16 %v3141, %v3140
        %v3169 = vpack.c.b16 %v3143, %v3142
        %v3170 = vpack.c.b16 %v3145, %v3144
        %v3171 = vpack.c.b16 %v3147, %v3146
        %3196 = vmatprep.subr.bf16.mxu0 0
        %3197 = vmatpush1.bf16.msra.mxu0 %v3148
        %3198 = vmatprep.subr.bf16.mxu0 0
        %3199 = vmatpush1.bf16.msra.mxu0 %v3149
        %3200 = vmatprep.subr.bf16.mxu0 0
        %3201 = vmatpush1.bf16.msra.mxu0 %v3150
        %3202 = vmatprep.subr.bf16.mxu0 0
        %3203 = vmatpush1.bf16.msra.mxu0 %v3151
        %3204 = vmatprep.subr.bf16.mxu0 0
        %3205 = vmatpush1.bf16.msra.mxu0 %v3152
        %3206 = vmatprep.subr.bf16.mxu0 0
        %3207 = vmatpush1.bf16.msra.mxu0 %v3153
        %3208 = vmatprep.subr.bf16.mxu0 0
        %3209 = vmatpush1.bf16.msra.mxu0 %v3154
        %3210 = vmatprep.subr.bf16.mxu0 0
        %3211 = vmatpush1.bf16.msra.mxu0 %v3155
        %3212 = vmatprep.subr.bf16.mxu0 0
        %3213 = vmatpush1.bf16.msra.mxu0 %v3156
        %3214 = vmatprep.subr.bf16.mxu0 0
        %3215 = vmatpush1.bf16.msra.mxu0 %v3157
        %3216 = vmatprep.subr.bf16.mxu0 0
        %3217 = vmatpush1.bf16.msra.mxu0 %v3158
        %3218 = vmatprep.subr.bf16.mxu0 0
        %3219 = vmatpush1.bf16.msra.mxu0 %v3159
        %3220 = vmatprep.subr.bf16.mxu0 0
        %3221 = vmatpush1.bf16.msra.mxu0 %v3160
        %3222 = vmatprep.subr.bf16.mxu0 0
        %3223 = vmatpush1.bf16.msra.mxu0 %v3161
        %3224 = vmatprep.subr.bf16.mxu0 0
        %3225 = vmatpush1.bf16.msra.mxu0 %v3162
        %3226 = vmatprep.subr.bf16.mxu0 0
        %3227 = vmatpush1.bf16.msra.mxu0 %v3163
        %3228 = vmatprep.mubr.bf16.mxu0 %v2993
        %3229 = vmatmul.mubr.bf16.gmra.mrb[0].mxu0 %v2992
        %v3230 = vpop.f32.mrb[0].mxu0
        %v3231 = vadd.f32 %v3051, %v3230
        %v3232 = vpop.f32.mrb[0].mxu0
        %v3233 = vpop.f32.mrb[0].mxu0
        %v3234 = vadd.f32 %v3051, %v3233
        %v3235 = vpop.f32.mrb[0].mxu0
        %3236 = vmatprep.mubr.bf16.mxu0 %v2996
        %3237 = vmatmul.mubr.bf16.gmra.mrb[0].mxu0 %v2995
        %v3238 = vpop.f32.mrb[0].mxu0
        %v3239 = vadd.f32 %v3051, %v3238
        %v3240 = vpop.f32.mrb[0].mxu0
        %v3241 = vpop.f32.mrb[0].mxu0
        %v3242 = vadd.f32 %v3051, %v3241
        %v3243 = vpop.f32.mrb[0].mxu0
        %3244 = vdwg.mxu0
        %3245 = vmatprep.subr.bf16.mxu0 0
        %3246 = vmatpush1.bf16.msra.mxu0 %v3164
        %3247 = vmatprep.subr.bf16.mxu0 0
        %3248 = vmatpush1.bf16.msra.mxu0 %v3165
        %3249 = vmatprep.subr.bf16.mxu0 0
        %3250 = vmatpush1.bf16.msra.mxu0 %v3166
        %3251 = vmatprep.subr.bf16.mxu0 0
        %3252 = vmatpush1.bf16.msra.mxu0 %v3167
        %3253 = vmatprep.subr.bf16.mxu0 0
        %3254 = vmatpush1.bf16.msra.mxu0 %v3168
        %3255 = vmatprep.subr.bf16.mxu0 0
        %3256 = vmatpush1.bf16.msra.mxu0 %v3169
        %3257 = vmatprep.subr.bf16.mxu0 0
        %3258 = vmatpush1.bf16.msra.mxu0 %v3170
        %3259 = vmatprep.subr.bf16.mxu0 0
        %3260 = vmatpush1.bf16.msra.mxu0 %v3171
        %3261 = vmatprep.subr.bf16.mxu0 0
        %3262 = vmatpush1.bf16.msra.mxu0 0
        %3263 = vmatprep.subr.bf16.mxu0 0
        %3264 = vmatpush1.bf16.msra.mxu0 0
        %3265 = vmatprep.subr.bf16.mxu0 0
        %3266 = vmatpush1.bf16.msra.mxu0 0
        %3267 = vmatprep.subr.bf16.mxu0 0
        %3268 = vmatpush1.bf16.msra.mxu0 0
        %3269 = vmatprep.subr.bf16.mxu0 0
        %3270 = vmatpush1.bf16.msra.mxu0 0
        %3271 = vmatprep.subr.bf16.mxu0 0
        %3272 = vmatpush1.bf16.msra.mxu0 0
        %3273 = vmatprep.subr.bf16.mxu0 0
        %3274 = vmatpush1.bf16.msra.mxu0 0
        %3275 = vmatprep.subr.bf16.mxu0 0
        %3276 = vmatpush1.bf16.msra.mxu0 0
        %3277 = vmatprep.mubr.bf16.mxu0 0
        %3278 = vmatmul.mubr.bf16.gmra.mrb[0].mxu0 %v2994
        %v3279 = vpop.f32.mrb[0].mxu0
        %v3280 = vadd.f32 %v3231, %v3279
        %v3281 = vpop.f32.mrb[0].mxu0
        %v3282 = vpop.f32.mrb[0].mxu0
        %v3283 = vadd.f32 %v3234, %v3282
        %v3284 = vpop.f32.mrb[0].mxu0
        %3285 = vmatprep.mubr.bf16.mxu0 0
        %3286 = vmatmul.mubr.bf16.gmra.mrb[0].mxu0 %v2997
        %v3287 = vpop.f32.mrb[0].mxu0
        %v3288 = vadd.f32 %v3239, %v3287
        %v3289 = vpop.f32.mrb[0].mxu0
        %v3290 = vpop.f32.mrb[0].mxu0
        %v3291 = vadd.f32 %v3242, %v3290
        %v3292 = vpop.f32.mrb[0].mxu0
        %3293 = vdwg.mxu0
        %v3294 = vmax.f32 %v3280, 0.0
        %v3295 = vmax.f32 %v3283, 0.0
        %v3296 = vmax.f32 %v3288, 0.0
        %v3297 = vmax.f32 %v3291, 0.0
        %v3298 = vpack.c.bf16 %v3295, %v3294
        %v3299 = vpack.c.bf16 %v3297, %v3296
        %3300 = vst [vmem:[#allocation2 + $0x8] sm:$0xff] %v3298
        %3301 = vst [vmem:[#allocation2 + $0x20] sm:$0xff] %v3299
        %v3303 = vshrl.u32 %v3298, 16
        %v3305 = vrot.slane %v3303, 7
        %v3306 = vshll.u32 %v3298, 16
        %v3308 = vor.u32 %v3305, %v3306
        %v3310 = vld [vmem:[#allocation2] sm:$0xff]
        %v3311 = vsel %vm257, %v3308, %v3310
        %3312 = vst [vmem:[#allocation2] sm:$0xff] %v3311
        %v3313 = vrot.slane %v3306, 1
        %v3314 = vor.u32 %v3303, %v3313
        %v3316 = vld [vmem:[#allocation2 + $0x10] sm:$0xff]
        %v3317 = vsel %vm265, %v3314, %v3316
        %3318 = vst [vmem:[#allocation2 + $0x10] sm:$0xff] %v3317
        %v3320 = vshrl.u32 %v3299, 16
        %v3322 = vrot.slane %v3320, 7
        %v3323 = vshll.u32 %v3299, 16
        %v3325 = vor.u32 %v3322, %v3323
        %v3327 = vld [vmem:[#allocation2 + $0x18] sm:$0xff]
        %v3328 = vsel %vm257, %v3325, %v3327
        %3329 = vst [vmem:[#allocation2 + $0x18] sm:$0xff] %v3328
        %v3330 = vrot.slane %v3323, 1
        %v3331 = vor.u32 %v3320, %v3330
        %v3333 = vld [vmem:[#allocation2 + $0x28] sm:$0xff]
        %v3334 = vsel %vm265, %v3331, %v3333
        %3335 = vst [vmem:[#allocation2 + $0x28] sm:$0xff] %v3334
        %v3336 = vld [vmem:[#allocation2] sm:$0xff]
        %v3337 = vld [vmem:[#allocation2 + $0x8] sm:$0xff]
        %v3338 = vld [vmem:[#allocation2 + $0x10] sm:$0xff]
        %v3339 = vld [vmem:[#allocation2 + $0x18] sm:$0xff]
        %v3340 = vld [vmem:[#allocation2 + $0x20] sm:$0xff]
        %v3341 = vld [vmem:[#allocation2 + $0x28] sm:$0xff]
        %s3342 = scalar_lea.vmem [#allocation7], 1536
        %v3343 = vld [vmem:[%s3342] sm:$0xf]
        %v3344 = vld [vmem:[%s3342 + $0x4] sm:$0xf]
        %v3345 = vld [vmem:[%s3342 + $0x8] sm:$0xf]
        %v3346 = vld [vmem:[%s3342 + $0xc] sm:$0xf]
        %v3347 = vld [vmem:[%s3342 + $0x10] sm:$0xf]
        %v3348 = vld [vmem:[%s3342 + $0x14] sm:$0xf]
        %v3349 = vld [vmem:[%s3342 + $0x18] sm:$0xf]
        %v3350 = vld [vmem:[%s3342 + $0x1c] sm:$0xf]
        %v3351 = vld [vmem:[%s3342 + $0x20] sm:$0xf]
        %v3352 = vld [vmem:[%s3342 + $0x24] sm:$0xf]
        %v3353 = vld [vmem:[%s3342 + $0x28] sm:$0xf]
        %v3354 = vld [vmem:[%s3342 + $0x2c] sm:$0xf]
        %v3355 = vld [vmem:[%s3342 + $0x30] sm:$0xf]
        %v3356 = vld [vmem:[%s3342 + $0x34] sm:$0xf]
        %v3357 = vld [vmem:[%s3342 + $0x38] sm:$0xf]
        %v3358 = vld [vmem:[%s3342 + $0x3c] sm:$0xf]
        %v3359 = vld [vmem:[%s3342 + $0x40] sm:$0xf]
        %v3360 = vld [vmem:[%s3342 + $0x44] sm:$0xf]
        %v3361 = vld [vmem:[%s3342 + $0x48] sm:$0xf]
        %v3362 = vld [vmem:[%s3342 + $0x4c] sm:$0xf]
        %v3363 = vld [vmem:[%s3342 + $0x50] sm:$0xf]
        %v3364 = vld [vmem:[%s3342 + $0x54] sm:$0xf]
        %v3365 = vld [vmem:[%s3342 + $0x58] sm:$0xf]
        %v3366 = vld [vmem:[%s3342 + $0x5c] sm:$0xf]
        %v3367 = vld [vmem:[%s3342 + $0x60] sm:$0xf]
        %v3368 = vld [vmem:[%s3342 + $0x64] sm:$0xf]
        %v3369 = vld [vmem:[%s3342 + $0x68] sm:$0xf]
        %v3370 = vld [vmem:[%s3342 + $0x6c] sm:$0xf]
        %v3371 = vld [vmem:[%s3342 + $0x70] sm:$0xf]
        %v3372 = vld [vmem:[%s3342 + $0x74] sm:$0xf]
        %v3373 = vld [vmem:[%s3342 + $0x78] sm:$0xf]
        %v3374 = vld [vmem:[%s3342 + $0x7c] sm:$0xf]
        %v3375 = vld [vmem:[%s3342 + $0x80] sm:$0xf]
        %v3376 = vld [vmem:[%s3342 + $0x84] sm:$0xf]
        %v3377 = vld [vmem:[%s3342 + $0x88] sm:$0xf]
        %v3378 = vld [vmem:[%s3342 + $0x8c] sm:$0xf]
        %v3379 = vld [vmem:[%s3342 + $0x90] sm:$0xf]
        %v3380 = vld [vmem:[%s3342 + $0x94] sm:$0xf]
        %v3381 = vld [vmem:[%s3342 + $0x98] sm:$0xf]
        %v3382 = vld [vmem:[%s3342 + $0x9c] sm:$0xf]
        %v3383 = vld [vmem:[%s3342 + $0xa0] sm:$0xf]
        %v3384 = vld [vmem:[%s3342 + $0xa4] sm:$0xf]
        %v3385 = vld [vmem:[%s3342 + $0xa8] sm:$0xf]
        %v3386 = vld [vmem:[%s3342 + $0xac] sm:$0xf]
        %v3387 = vld [vmem:[%s3342 + $0xb0] sm:$0xf]
        %v3388 = vld [vmem:[%s3342 + $0xb4] sm:$0xf]
        %v3389 = vld [vmem:[%s3342 + $0xb8] sm:$0xf]
        %v3390 = vld [vmem:[%s3342 + $0xbc] sm:$0xf]
        %v3439 = vunpack.c.l.b16 %v3343
        %v3440 = vunpack.c.l.b16 %v3344
        %v3441 = vunpack.c.l.b16 %v3345
        %v3442 = vunpack.c.l.b16 %v3346
        %v3443 = vunpack.c.l.b16 %v3347
        %v3444 = vunpack.c.l.b16 %v3348
        %v3445 = vunpack.c.l.b16 %v3349
        %v3446 = vunpack.c.l.b16 %v3350
        %v3447 = vunpack.c.l.b16 %v3351
        %v3448 = vunpack.c.l.b16 %v3352
        %v3449 = vunpack.c.l.b16 %v3353
        %v3450 = vunpack.c.l.b16 %v3354
        %v3451 = vunpack.c.l.b16 %v3355
        %v3452 = vunpack.c.l.b16 %v3356
        %v3453 = vunpack.c.l.b16 %v3357
        %v3454 = vunpack.c.l.b16 %v3358
        %v3455 = vunpack.c.l.b16 %v3359
        %v3456 = vunpack.c.l.b16 %v3360
        %v3457 = vunpack.c.l.b16 %v3361
        %v3458 = vunpack.c.l.b16 %v3362
        %v3459 = vunpack.c.l.b16 %v3363
        %v3460 = vunpack.c.l.b16 %v3364
        %v3461 = vunpack.c.l.b16 %v3365
        %v3462 = vunpack.c.l.b16 %v3366
        %v3463 = vunpack.c.l.b16 %v3367
        %v3464 = vunpack.c.l.b16 %v3368
        %v3465 = vunpack.c.l.b16 %v3369
        %v3466 = vunpack.c.l.b16 %v3370
        %v3467 = vunpack.c.l.b16 %v3371
        %v3468 = vunpack.c.l.b16 %v3372
        %v3469 = vunpack.c.l.b16 %v3373
        %v3470 = vunpack.c.l.b16 %v3374
        %v3471 = vunpack.c.l.b16 %v3375
        %v3472 = vunpack.c.l.b16 %v3376
        %v3473 = vunpack.c.l.b16 %v3377
        %v3474 = vunpack.c.l.b16 %v3378
        %v3475 = vunpack.c.l.b16 %v3379
        %v3476 = vunpack.c.l.b16 %v3380
        %v3477 = vunpack.c.l.b16 %v3381
        %v3478 = vunpack.c.l.b16 %v3382
        %v3479 = vunpack.c.l.b16 %v3383
        %v3480 = vunpack.c.l.b16 %v3384
        %v3481 = vunpack.c.l.b16 %v3385
        %v3482 = vunpack.c.l.b16 %v3386
        %v3483 = vunpack.c.l.b16 %v3387
        %v3484 = vunpack.c.l.b16 %v3388
        %v3485 = vunpack.c.l.b16 %v3389
        %v3486 = vunpack.c.l.b16 %v3390
        %v3487 = vpack.c.b16 %v3440, %v3439
        %v3488 = vpack.c.b16 %v3442, %v3441
        %v3489 = vpack.c.b16 %v3444, %v3443
        %v3490 = vpack.c.b16 %v3446, %v3445
        %v3491 = vpack.c.b16 %v3448, %v3447
        %v3492 = vpack.c.b16 %v3450, %v3449
        %v3493 = vpack.c.b16 %v3452, %v3451
        %v3494 = vpack.c.b16 %v3454, %v3453
        %v3495 = vpack.c.b16 %v3456, %v3455
        %v3496 = vpack.c.b16 %v3458, %v3457
        %v3497 = vpack.c.b16 %v3460, %v3459
        %v3498 = vpack.c.b16 %v3462, %v3461
        %v3499 = vpack.c.b16 %v3464, %v3463
        %v3500 = vpack.c.b16 %v3466, %v3465
        %v3501 = vpack.c.b16 %v3468, %v3467
        %v3502 = vpack.c.b16 %v3470, %v3469
        %v3503 = vpack.c.b16 %v3472, %v3471
        %v3504 = vpack.c.b16 %v3474, %v3473
        %v3505 = vpack.c.b16 %v3476, %v3475
        %v3506 = vpack.c.b16 %v3478, %v3477
        %v3507 = vpack.c.b16 %v3480, %v3479
        %v3508 = vpack.c.b16 %v3482, %v3481
        %v3509 = vpack.c.b16 %v3484, %v3483
        %v3510 = vpack.c.b16 %v3486, %v3485
        %3535 = vmatprep.subr.bf16.mxu0 0
        %3536 = vmatpush1.bf16.msra.mxu0 %v3487
        %3537 = vmatprep.subr.bf16.mxu0 0
        %3538 = vmatpush1.bf16.msra.mxu0 %v3488
        %3539 = vmatprep.subr.bf16.mxu0 0
        %3540 = vmatpush1.bf16.msra.mxu0 %v3489
        %3541 = vmatprep.subr.bf16.mxu0 0
        %3542 = vmatpush1.bf16.msra.mxu0 %v3490
        %3543 = vmatprep.subr.bf16.mxu0 0
        %3544 = vmatpush1.bf16.msra.mxu0 %v3491
        %3545 = vmatprep.subr.bf16.mxu0 0
        %3546 = vmatpush1.bf16.msra.mxu0 %v3492
        %3547 = vmatprep.subr.bf16.mxu0 0
        %3548 = vmatpush1.bf16.msra.mxu0 %v3493
        %3549 = vmatprep.subr.bf16.mxu0 0
        %3550 = vmatpush1.bf16.msra.mxu0 %v3494
        %3551 = vmatprep.subr.bf16.mxu0 0
        %3552 = vmatpush1.bf16.msra.mxu0 %v3495
        %3553 = vmatprep.subr.bf16.mxu0 0
        %3554 = vmatpush1.bf16.msra.mxu0 %v3496
        %3555 = vmatprep.subr.bf16.mxu0 0
        %3556 = vmatpush1.bf16.msra.mxu0 %v3497
        %3557 = vmatprep.subr.bf16.mxu0 0
        %3558 = vmatpush1.bf16.msra.mxu0 %v3498
        %3559 = vmatprep.subr.bf16.mxu0 0
        %3560 = vmatpush1.bf16.msra.mxu0 %v3499
        %3561 = vmatprep.subr.bf16.mxu0 0
        %3562 = vmatpush1.bf16.msra.mxu0 %v3500
        %3563 = vmatprep.subr.bf16.mxu0 0
        %3564 = vmatpush1.bf16.msra.mxu0 %v3501
        %3565 = vmatprep.subr.bf16.mxu0 0
        %3566 = vmatpush1.bf16.msra.mxu0 %v3502
        %3567 = vmatprep.mubr.bf16.mxu0 %v3337
        %3568 = vmatmul.mubr.bf16.gmra.mrb[0].mxu0 %v3336
        %v3569 = vpop.f32.mrb[0].mxu0
        %v3570 = vadd.f32 0.0, %v3569
        %v3571 = vpop.f32.mrb[0].mxu0
        %v3572 = vpop.f32.mrb[0].mxu0
        %v3573 = vadd.f32 0.0, %v3572
        %v3574 = vpop.f32.mrb[0].mxu0
        %3575 = vmatprep.mubr.bf16.mxu0 %v3340
        %3576 = vmatmul.mubr.bf16.gmra.mrb[0].mxu0 %v3339
        %v3577 = vpop.f32.mrb[0].mxu0
        %v3578 = vadd.f32 0.0, %v3577
        %v3579 = vpop.f32.mrb[0].mxu0
        %v3580 = vpop.f32.mrb[0].mxu0
        %v3581 = vadd.f32 0.0, %v3580
        %v3582 = vpop.f32.mrb[0].mxu0
        %3583 = vdwg.mxu0
        %3584 = vmatprep.subr.bf16.mxu0 0
        %3585 = vmatpush1.bf16.msra.mxu0 %v3503
        %3586 = vmatprep.subr.bf16.mxu0 0
        %3587 = vmatpush1.bf16.msra.mxu0 %v3504
        %3588 = vmatprep.subr.bf16.mxu0 0
        %3589 = vmatpush1.bf16.msra.mxu0 %v3505
        %3590 = vmatprep.subr.bf16.mxu0 0
        %3591 = vmatpush1.bf16.msra.mxu0 %v3506
        %3592 = vmatprep.subr.bf16.mxu0 0
        %3593 = vmatpush1.bf16.msra.mxu0 %v3507
        %3594 = vmatprep.subr.bf16.mxu0 0
        %3595 = vmatpush1.bf16.msra.mxu0 %v3508
        %3596 = vmatprep.subr.bf16.mxu0 0
        %3597 = vmatpush1.bf16.msra.mxu0 %v3509
        %3598 = vmatprep.subr.bf16.mxu0 0
        %3599 = vmatpush1.bf16.msra.mxu0 %v3510
        %3600 = vmatprep.subr.bf16.mxu0 0
        %3601 = vmatpush1.bf16.msra.mxu0 0
        %3602 = vmatprep.subr.bf16.mxu0 0
        %3603 = vmatpush1.bf16.msra.mxu0 0
        %3604 = vmatprep.subr.bf16.mxu0 0
        %3605 = vmatpush1.bf16.msra.mxu0 0
        %3606 = vmatprep.subr.bf16.mxu0 0
        %3607 = vmatpush1.bf16.msra.mxu0 0
        %3608 = vmatprep.subr.bf16.mxu0 0
        %3609 = vmatpush1.bf16.msra.mxu0 0
        %3610 = vmatprep.subr.bf16.mxu0 0
        %3611 = vmatpush1.bf16.msra.mxu0 0
        %3612 = vmatprep.subr.bf16.mxu0 0
        %3613 = vmatpush1.bf16.msra.mxu0 0
        %3614 = vmatprep.subr.bf16.mxu0 0
        %3615 = vmatpush1.bf16.msra.mxu0 0
        %3616 = vmatprep.mubr.bf16.mxu0 0
        %3617 = vmatmul.mubr.bf16.gmra.mrb[0].mxu0 %v3338
        %v3618 = vpop.f32.mrb[0].mxu0
        %v3619 = vadd.f32 %v3570, %v3618
        %v3620 = vpop.f32.mrb[0].mxu0
        %v3621 = vpop.f32.mrb[0].mxu0
        %v3622 = vadd.f32 %v3573, %v3621
        %v3623 = vpop.f32.mrb[0].mxu0
        %3624 = vmatprep.mubr.bf16.mxu0 0
        %3625 = vmatmul.mubr.bf16.gmra.mrb[0].mxu0 %v3341
        %v3626 = vpop.f32.mrb[0].mxu0
        %v3627 = vadd.f32 %v3578, %v3626
        %v3628 = vpop.f32.mrb[0].mxu0
        %v3629 = vpop.f32.mrb[0].mxu0
        %v3630 = vadd.f32 %v3581, %v3629
        %v3631 = vpop.f32.mrb[0].mxu0
        %3632 = vdwg.mxu0
        %v3633 = vadd.f32 %v2950, %v3619
        %v3634 = vadd.f32 %v2951, %v3622
        %v3635 = vadd.f32 %v2952, %v3627
        %v3636 = vadd.f32 %v2953, %v3630
        %3637 = vst [vmem:[%s203] sm:$0xff] %v3633
        %3638 = vst [vmem:[%s203 + $0x8] sm:$0xff] %v3634
        %3639 = vst [vmem:[%s203 + $0x10] sm:$0xff] %v3635
        %3640 = vst [vmem:[%s203 + $0x18] sm:$0xff] %v3636
        %s3641 = sand.u32 %s97, 1
        %s3642 = scalar_lea.sflag [#allocation6], %s3641
        %s3643 = sand.u32 %s97, 1
        %s3644 = smul.addr %s3643, 32
        %s3645 = scalar_lea.vmem [#allocation9], %s3644
        // Predicated region
        $region41: #{tpu_custom_call.1} parent=31 // pred_check
          %p3646 = pneg %p107
        $region42: #{tpu_custom_call.1} parent=31 // pred_check_branch
          %3648 = sbr.rel (%p3646) target = $region44
        $region43: #{tpu_custom_call.1} parent=31 // pred_region
          %s3649 = smul.u32 4, %s21
          %s3651 = ssub.s32 512, 512
          %3652 = vsyncadd %s3642, %s3651
          %s3653 = smul.addr %s3649, 128
          %s3654 = scalar_lea.hbm %s3, %s3653
          %s3655 = sshll.u32 %s3645, 4
          %s3656 = int_to_ptr.vmem [resolvable:$true] %s3655
          %3661 = dma.vmem_to_hbm [thread:$0]  %s3656, 512, %s3654, %s3642, 128, 128, 8
        $region44: #{tpu_custom_call.1} parent=31 // pred_fallthru
          _
      $region32: #{tpu_custom_call.1} parent=5 // pred_fallthru
        _
      %p3662 = scmp.le.s32.totalorder 2, %s16
      // Predicated region
      $region45: #{tpu_custom_call.1} parent=5 // pred_check
        %p3663 = pneg %p3662
      $region46: #{tpu_custom_call.1} parent=5 // pred_check_branch
        %3665 = sbr.rel (%p3663) target = $region48
      $region47: #{tpu_custom_call.1} parent=5 // pred_region
        %s3666 = ssub.s32 %s16, 2
        // Predicated region
        $region49: #{tpu_custom_call.1} parent=47 // pred_check
          %p3667 = pneg %p113
        $region50: #{tpu_custom_call.1} parent=47 // pred_check_branch
          %3669 = sbr.rel (%p3667) target = $region52
        $region51: #{tpu_custom_call.1} parent=47 // pred_region
          %s3670 = sand.u32 %s98, 1
          %s3671 = scalar_lea.sflag [#allocation6], %s3670
          %s3672 = sand.u32 %s98, 1
          %s3673 = smul.addr %s3672, 32
          %s3674 = scalar_lea.vmem [#allocation9], %s3673
          %3675 = dma.done %s3671, 512
        $region52: #{tpu_custom_call.1} parent=47 // pred_fallthru
          _
      $region48: #{tpu_custom_call.1} parent=5 // pred_fallthru
        _
    $region6: #{tpu_custom_call.1} parent=1 // loop_footer
      %s20 = sadd.s32 1, %s16
    $region7: #{tpu_custom_call.1} parent=1 // loop_footer_branch
      %15 = sbr.rel target = $region3
    $region8: #{tpu_custom_call.1} parent=1 // loop_exit
      _
    %3676 = vsyncpa [#allocation5], 1
    %s3677 = scalar_lea.sflag [#allocation5], 1
    %3678 = vsyncpa %s3677, 1
    %3679 = vsyncpa [#allocation8], 1
    %3680 = vsyncpa [#allocation6], 1
    %s3681 = scalar_lea.sflag [#allocation6], 1
    %3682 = vsyncpa %s3681, 1

// kernel: tpu_custom_call.1
$region0: #{tpu_custom_call.1}
  #allocation0 [shape = 'u32[]', space=smem, size = 0x4, offset = 0x4, fixed_abs, tag = 'smem constant byte address 0x4 - core index']
  #allocation1 [shape = 'u32[144,128]{1,0:T(1,128)}', space=vmem, size = 0x12000, scoped, tag = 'internal scratch']
  #allocation2 [shape = 'bf16[32,384]{1,0:T(16,128)(2,1)}', space=vmem, size = 0x6000, scoped, tag = 'scratch operand']
  #allocation3 [shape = 'f32[40,128]{1,0:T(8,128)}', space=vmem, size = 0x5000, scoped, tag = 'scratch operand']
  %s0 = inlined_call_operand.hbm [shape: f32[64,128], index: 0, kind: input, shape index: {}]
  %s1 = inlined_call_operand.hbm [shape: bf16[9,384,128], index: 1, kind: input, shape index: {}]
  %s2 = inlined_call_operand.vmem [shape: f32[3,128], index: 2, kind: input, shape index: {}]
  %s3 = inlined_call_operand.hbm [shape: f32[64,128], index: 3, kind: output, shape index: {}]
  %s4 = sld [smem:[#allocation0]]
  $region53: #{tpu_custom_call.1} parent=0
    _
  %s6 = ssub.s32 1, %s4
  %s7 = scalar_select 0, %s6, %s4
  $region1: #{tpu_custom_call.1} parent=0
    #allocation4 [shape = 'u8[32768]{0}', space=vmem, size = 0x8000, scoped, tag = 'input window, operand 0']
    #allocation5 [shape = 's32[2]{0}', space=sflag, size = 0x8, scoped, tag = 'scoped memory for tpu_custom_call.1']
    #allocation6 [shape = 's32[2]{0}', space=sflag, size = 0x8, scoped, tag = 'scoped memory for tpu_custom_call.1']
    #allocation7 [shape = 'u8[884736]{0}', space=vmem, size = 0xd8000, scoped, tag = 'input window, operand 1, single buffered']
    #allocation8 [shape = 's32[1]{0}', space=sflag, size = 0x4, scoped, tag = 'scoped memory for tpu_custom_call.1']
    #allocation9 [shape = 'u8[32768]{0}', space=vmem, size = 0x8000, scoped, tag = 'output window, operand 0']
    %8 = vsyncpa [#allocation5], 0
    %s9 = scalar_lea.sflag [#allocation5], 1
    %10 = vsyncpa %s9, 0
    %11 = vsyncpa [#allocation8], 0
    %12 = vsyncpa [#allocation6], 0
    %s13 = scalar_lea.sflag [#allocation6], 1
    %14 = vsyncpa %s13, 0
    loop: start=0, step=1, limit=4
    $region2: #{tpu_custom_call.1} parent=1 // loop_pre_header
      _
    $region3: #{tpu_custom_call.1} parent=1 // loop_header
      %s16 = sphi 0, %s20
      %p17 = scmp.ge.s32.totalorder %s16, 4
      %s26 = sphi 0, %s28
      %s29 = sphi 0, %s26
      %s30 = sphi 0, %s29
      %s46 = sphi 0, %s30
      %s50 = sphi 0, %s50
      %s52 = sphi 0, %s50
      %s53 = sphi 0, %s52
      %s67 = sphi 0, %s53
      %s71 = sphi 0, %s71
      %s73 = sphi 0, %s71
      %s74 = sphi 0, %s73
      %s88 = sphi 0, %s74
      %s94 = sphi 0, %s96
      %s97 = sphi 0, %s94
      %s98 = sphi 0, %s97
      %s114 = sphi 0, %s98
    $region4: #{tpu_custom_call.1} parent=1 // loop_header_branch
      %19 = sbr.rel (%p17) target = $region8
    $region5: #{tpu_custom_call.1} parent=1 // loop_body
      %s21 = ssub.s32 %s16, 1
      %s22 = ssub.s32 %s16, 2
      %s23 = sadd.s32 %s16, 1
      %s24 = ssub.s32 %s16, %s23
      %p25 = scmp.eq.s32.totalorder %s24, 0
      %s27 = sadd.s32 %s26, 1
      %s28 = scalar_select %p25, %s26, %s27
      %p31 = pneg %p25
      %p32 = scmp.eq.s32.totalorder %s16, 1
      %p33 = por %p31, %p32
      %p34 = scmp.ne.s32.totalorder %s26, %s29
      %p35 = scmp.eq.s32.totalorder %s16, 0
      %p36 = por %p34, %p35
      %p37 = scmp.ne.s32.totalorder %s26, %s29
      %p38 = scmp.eq.s32.totalorder %s21, 1
      %p39 = por %p37, %p38
      %p40 = scmp.ne.s32.totalorder %s29, %s30
      %p41 = scmp.eq.s32.totalorder %s21, 0
      %p42 = por %p40, %p41
      %p43 = scmp.ne.s32.totalorder %s29, %s30
      %p44 = scmp.eq.s32.totalorder %s22, 1
      %p45 = por %p43, %p44
      %p47 = scmp.ne.s32.totalorder %s30, %s46
      %p48 = scmp.eq.s32.totalorder %s22, 0
      %p49 = por %p47, %p48
      %s51 = sadd.s32 %s50, 1
      %p54 = scmp.eq.s32.totalorder %s16, 1
      %p55 = scmp.ne.s32.totalorder %s50, %s52
      %p56 = scmp.eq.s32.totalorder %s16, 0
      %p57 = por %p55, %p56
      %p58 = scmp.ne.s32.totalorder %s50, %s52
      %p59 = scmp.eq.s32.totalorder %s21, 1
      %p60 = por %p58, %p59
      %p61 = scmp.ne.s32.totalorder %s52, %s53
      %p62 = scmp.eq.s32.totalorder %s21, 0
      %p63 = por %p61, %p62
      %p64 = scmp.ne.s32.totalorder %s52, %s53
      %p65 = scmp.eq.s32.totalorder %s22, 1
      %p66 = por %p64, %p65
      %p68 = scmp.ne.s32.totalorder %s53, %s67
      %p69 = scmp.eq.s32.totalorder %s22, 0
      %p70 = por %p68, %p69
      %s72 = sadd.s32 %s71, 1
      %p75 = scmp.eq.s32.totalorder %s16, 1
      %p76 = scmp.ne.s32.totalorder %s71, %s73
      %p77 = scmp.eq.s32.totalorder %s16, 0
      %p78 = por %p76, %p77
      %p79 = scmp.ne.s32.totalorder %s71, %s73
      %p80 = scmp.eq.s32.totalorder %s21, 1
      %p81 = por %p79, %p80
      %p82 = scmp.ne.s32.totalorder %s73, %s74
      %p83 = scmp.eq.s32.totalorder %s21, 0
      %p84 = por %p82, %p83
      %p85 = scmp.ne.s32.totalorder %s73, %s74
      %p86 = scmp.eq.s32.totalorder %s22, 1
      %p87 = por %p85, %p86
      %p89 = scmp.ne.s32.totalorder %s74, %s88
      %p90 = scmp.eq.s32.totalorder %s22, 0
      %p91 = por %p89, %p90
      %s92 = ssub.s32 %s16, %s23
      %p93 = scmp.eq.s32.totalorder %s92, 0
      %s95 = sadd.s32 %s94, 1
      %s96 = scalar_select %p93, %s94, %s95
      %p99 = pneg %p93
      %p100 = scmp.eq.s32.totalorder %s16, 1
      %p101 = por %p99, %p100
      %p102 = scmp.ne.s32.totalorder %s94, %s97
      %p103 = scmp.eq.s32.totalorder %s16, 0
      %p104 = por %p102, %p103
      %p105 = scmp.ne.s32.totalorder %s94, %s97
      %p106 = scmp.eq.s32.totalorder %s21, 1
      %p107 = por %p105, %p106
      %p108 = scmp.ne.s32.totalorder %s97, %s98
      %p109 = scmp.eq.s32.totalorder %s21, 0
      %p110 = por %p108, %p109
      %p111 = scmp.ne.s32.totalorder %s97, %s98
      %p112 = scmp.eq.s32.totalorder %s22, 1
      %p113 = por %p111, %p112
      %p115 = scmp.ne.s32.totalorder %s98, %s114
      %p116 = scmp.eq.s32.totalorder %s22, 0
      %p117 = por %p115, %p116
      %p118 = scmp.le.s32.totalorder 1, %s16
      %p119 = scmp.lt.s32.totalorder %s16, 3
      %p120 = pnand %p118, %p119
      %p121 = pneg %p120
      // Predicated region
      $region9: #{tpu_custom_call.1} parent=5 // pred_check
        _
      $region10: #{tpu_custom_call.1} parent=5 // pred_check_branch
        %123 = sbr.rel (%p120) target = $region12
      $region11: #{tpu_custom_call.1} parent=5 // pred_region
        %s124 = ssub.s32 %s16, 1
        // Predicated region
        $region13: #{tpu_custom_call.1} parent=11 // pred_check
          %p125 = pneg %p63
        $region14: #{tpu_custom_call.1} parent=11 // pred_check_branch
          %127 = sbr.rel (%p125) target = $region16
        $region15: #{tpu_custom_call.1} parent=11 // pred_region
          %s129 = ssub.s32 27648, 27648
          %130 = vsyncadd [#allocation8], %s129
          %s131 = sshll.u32 [#allocation7], 4
          %s132 = int_to_ptr.vmem [resolvable:$true] %s131
          %137 = dma.hbm_to_vmem [thread:$0]  %s1, 27648, %s132, [#allocation8], 64, 64, 4
        $region16: #{tpu_custom_call.1} parent=11 // pred_fallthru
          _
        // Predicated region
        $region17: #{tpu_custom_call.1} parent=11 // pred_check
          %p138 = pneg %p84
        $region18: #{tpu_custom_call.1} parent=11 // pred_check_branch
          %140 = sbr.rel (%p138) target = $region20
        $region19: #{tpu_custom_call.1} parent=11 // pred_region
          _
        $region20: #{tpu_custom_call.1} parent=11 // pred_fallthru
          _
      $region12: #{tpu_custom_call.1} parent=5 // pred_fallthru
        _
      %p141 = scmp.lt.s32.totalorder %s16, 2
      // Predicated region
      $region21: #{tpu_custom_call.1} parent=5 // pred_check
        %p142 = pneg %p141
      $region22: #{tpu_custom_call.1} parent=5 // pred_check_branch
        %144 = sbr.rel (%p142) target = $region24
      $region23: #{tpu_custom_call.1} parent=5 // pred_region
        // Predicated region
        $region25: #{tpu_custom_call.1} parent=23 // pred_check
          %p145 = pneg %p36
        $region26: #{tpu_custom_call.1} parent=23 // pred_check_branch
          %147 = sbr.rel (%p145) target = $region28
        $region27: #{tpu_custom_call.1} parent=23 // pred_region
          %s148 = sand.u32 %s26, 1
          %s149 = scalar_lea.sflag [#allocation5], %s148
          %s150 = sand.u32 %s26, 1
          %s151 = smul.addr %s150, 32
          %s152 = scalar_lea.vmem [#allocation4], %s151
          %s153 = smul.u32 4, %s16
          %s155 = ssub.s32 512, 512
          %156 = vsyncadd %s149, %s155
          %s157 = smul.addr %s153, 128
          %s158 = scalar_lea.hbm %s0, %s157
          %s159 = sshll.u32 %s152, 4
          %s160 = int_to_ptr.vmem [resolvable:$true] %s159
          %165 = dma.hbm_to_vmem [thread:$0]  %s158, 512, %s160, %s149, 128, 128, 8
        $region28: #{tpu_custom_call.1} parent=23 // pred_fallthru
          _
      $region24: #{tpu_custom_call.1} parent=5 // pred_fallthru
        _
      %p166 = scmp.le.s32.totalorder 1, %s16
      %p167 = scmp.lt.s32.totalorder %s16, 3
      %p168 = pnand %p166, %p167
      %p169 = pneg %p168
      // Predicated region
      $region29: #{tpu_custom_call.1} parent=5 // pred_check
        _
      $region30: #{tpu_custom_call.1} parent=5 // pred_check_branch
        %171 = sbr.rel (%p168) target = $region32
      $region31: #{tpu_custom_call.1} parent=5 // pred_region
        %s172 = ssub.s32 %s16, 1
        %s173 = sand.u32 %s29, 1
        %s174 = scalar_lea.sflag [#allocation5], %s173
        %s175 = sand.u32 %s29, 1
        %s176 = smul.addr %s175, 32
        %s177 = scalar_lea.vmem [#allocation4], %s176
        // Predicated region
        $region33: #{tpu_custom_call.1} parent=31 // pred_check
          %p178 = pneg %p42
        $region34: #{tpu_custom_call.1} parent=31 // pred_check_branch
          %180 = sbr.rel (%p178) target = $region36
        $region35: #{tpu_custom_call.1} parent=31 // pred_region
          %181 = dma.done %s174, 512
        $region36: #{tpu_custom_call.1} parent=31 // pred_fallthru
          _
        // Predicated region
        $region37: #{tpu_custom_call.1} parent=31 // pred_check
          %p182 = pneg %p63
        $region38: #{tpu_custom_call.1} parent=31 // pred_check_branch
          %184 = sbr.rel (%p182) target = $region40
        $region39: #{tpu_custom_call.1} parent=31 // pred_region
          %185 = dma.done [#allocation8], 27648
        $region40: #{tpu_custom_call.1} parent=31 // pred_fallthru
          _
        %s186 = sand.u32 %s29, 1
        %s187 = scalar_lea.sflag [#allocation5], %s186
        %s188 = sand.u32 %s29, 1
        %s189 = smul.addr %s188, 32
        %s190 = scalar_lea.vmem [#allocation4], %s189
        %p191 = pneg %p42
        %p192 = pneg %p39
        %p193 = pneg %p63
        %p194 = pneg %p60
        %p195 = pneg %p84
        %p196 = pneg %p81
        %p197 = pneg %p110
        %p198 = pneg %p107
        %s199 = sand.u32 %s97, 1
        %s200 = scalar_lea.sflag [#allocation6], %s199
        %s201 = sand.u32 %s97, 1
        %s202 = smul.addr %s201, 32
        %s203 = scalar_lea.vmem [#allocation9], %s202
        %s204 = smul.u32 4, %s21
        %s205 = smul.u32 4, %s21
        %vm207 = vcmask 1040384
        %vm208 = vsmask.f32 256
        %vm209 = vmand %vm207, %vm208
        %v210 = vld [vmem:[#allocation2] sm:$0x1]
        %v211 = vsel %vm209, 0, %v210
        %212 = vst [vmem:[#allocation2] sm:$0x1] %v211
        %vm213 = vcmask 1047559
        %vm214 = vsmask.f32 7966
        %vm215 = vmand %vm213, %vm214
        %v216 = vld [vmem:[#allocation2 + $0x10] sm:$0x80]
        %v217 = vsel %vm215, 0, %v216
        %218 = vst [vmem:[#allocation2 + $0x10] sm:$0x80] %v217
        %219 = vst [vmem:[#allocation3] sm:$0x3] -inf
        %220 = vst [vmem:[#allocation3 + $0x12] sm:$0x3] -inf
        %v221 = vld [vmem:[#allocation2 + $0x18] sm:$0x1]
        %v222 = vsel %vm209, 0, %v221
        %223 = vst [vmem:[#allocation2 + $0x18] sm:$0x1] %v222
        %v224 = vld [vmem:[#allocation2 + $0x28] sm:$0x80]
        %v225 = vsel %vm215, 0, %v224
        %226 = vst [vmem:[#allocation2 + $0x28] sm:$0x80] %v225
        %227 = vst [vmem:[#allocation3 + $0x14] sm:$0x3] -inf
        %228 = vst [vmem:[#allocation3 + $0x26] sm:$0x3] -inf
        %v229 = vlaneseq
        %v230 = vand.u32 %v229, 127
        %vm231 = vcmp.ge.s32.totalorder %v230, 16
        %vm232 = vcmp.ge.s32.totalorder %v230, 8
        %vm233 = vcmp.lt.s32.totalorder %v230, 120
        %vm234 = vcmp.lt.s32.totalorder %v230, 112
        %v235 = vld [vmem:[%s177] sm:$0xff]
        %v236 = vld [vmem:[%s177 + $0x8] sm:$0xff]
        %v237 = vld [vmem:[%s177 + $0x10] sm:$0xff]
        %v238 = vld [vmem:[%s177 + $0x18] sm:$0xff]
        %v239 = vmax.f32 %v235, 0.0
        %v240 = vmax.f32 %v236, 0.0
        %v241 = vmax.f32 %v237, 0.0
        %v242 = vmax.f32 %v238, 0.0
        %v243 = vpack.c.bf16 %v240, %v239
        %v244 = vpack.c.bf16 %v242, %v241
        %245 = vst [vmem:[#allocation2 + $0x8] sm:$0xff] %v243
        %246 = vst [vmem:[#allocation2 + $0x20] sm:$0xff] %v244
        %v248 = vshrl.u32 %v243, 16
        %v250 = vrot.slane %v248, 7
        %v251 = vshll.u32 %v243, 16
        %v253 = vor.u32 %v250, %v251
        %vm255 = vcmask 1047552
        %vm256 = vsmask.f32 7938
        %vm257 = vmand %vm255, %vm256
        %v258 = vld [vmem:[#allocation2] sm:$0xff]
        %v259 = vsel %vm257, %v253, %v258
        %260 = vst [vmem:[#allocation2] sm:$0xff] %v259
        %v261 = vrot.slane %v251, 1
        %v262 = vor.u32 %v248, %v261
        %vm264 = vsmask.f32 7424
        %vm265 = vmand %vm255, %vm264
        %v266 = vld [vmem:[#allocation2 + $0x10] sm:$0xff]
        %v267 = vsel %vm265, %v262, %v266
        %268 = vst [vmem:[#allocation2 + $0x10] sm:$0xff] %v267
        %v270 = vshrl.u32 %v244, 16
        %v272 = vrot.slane %v270, 7
        %v273 = vshll.u32 %v244, 16
        %v275 = vor.u32 %v272, %v273
        %v277 = vld [vmem:[#allocation2 + $0x18] sm:$0xff]
        %v278 = vsel %vm257, %v275, %v277
        %279 = vst [vmem:[#allocation2 + $0x18] sm:$0xff] %v278
        %v280 = vrot.slane %v273, 1
        %v281 = vor.u32 %v270, %v280
        %v283 = vld [vmem:[#allocation2 + $0x28] sm:$0xff]
        %v284 = vsel %vm265, %v281, %v283
        %285 = vst [vmem:[#allocation2 + $0x28] sm:$0xff] %v284
        %v286 = vld [vmem:[#allocation2] sm:$0xff]
        %v287 = vld [vmem:[#allocation2 + $0x8] sm:$0xff]
        %v288 = vld [vmem:[#allocation2 + $0x10] sm:$0xff]
        %v289 = vld [vmem:[#allocation2 + $0x18] sm:$0xff]
        %v290 = vld [vmem:[#allocation2 + $0x20] sm:$0xff]
        %v291 = vld [vmem:[#allocation2 + $0x28] sm:$0xff]
        %v292 = vld [vmem:[#allocation7] sm:$0xf]
        %v293 = vld [vmem:[#allocation7 + $0x4] sm:$0xf]
        %v294 = vld [vmem:[#allocation7 + $0x8] sm:$0xf]
        %v295 = vld [vmem:[#allocation7 + $0xc] sm:$0xf]
        %v296 = vld [vmem:[#allocation7 + $0x10] sm:$0xf]
        %v297 = vld [vmem:[#allocation7 + $0x14] sm:$0xf]
        %v298 = vld [vmem:[#allocation7 + $0x18] sm:$0xf]
        %v299 = vld [vmem:[#allocation7 + $0x1c] sm:$0xf]
        %v300 = vld [vmem:[#allocation7 + $0x20] sm:$0xf]
        %v301 = vld [vmem:[#allocation7 + $0x24] sm:$0xf]
        %v302 = vld [vmem:[#allocation7 + $0x28] sm:$0xf]
        %v303 = vld [vmem:[#allocation7 + $0x2c] sm:$0xf]
        %v304 = vld [vmem:[#allocation7 + $0x30] sm:$0xf]
        %v305 = vld [vmem:[#allocation7 + $0x34] sm:$0xf]
        %v306 = vld [vmem:[#allocation7 + $0x38] sm:$0xf]
        %v307 = vld [vmem:[#allocation7 + $0x3c] sm:$0xf]
        %v308 = vld [vmem:[#allocation7 + $0x40] sm:$0xf]
        %v309 = vld [vmem:[#allocation7 + $0x44] sm:$0xf]
        %v310 = vld [vmem:[#allocation7 + $0x48] sm:$0xf]
        %v311 = vld [vmem:[#allocation7 + $0x4c] sm:$0xf]
        %v312 = vld [vmem:[#allocation7 + $0x50] sm:$0xf]
        %v313 = vld [vmem:[#allocation7 + $0x54] sm:$0xf]
        %v314 = vld [vmem:[#allocation7 + $0x58] sm:$0xf]
        %v315 = vld [vmem:[#allocation7 + $0x5c] sm:$0xf]
        %v316 = vld [vmem:[#allocation7 + $0x60] sm:$0xf]
        %v317 = vld [vmem:[#allocation7 + $0x64] sm:$0xf]
        %v318 = vld [vmem:[#allocation7 + $0x68] sm:$0xf]
        %v319 = vld [vmem:[#allocation7 + $0x6c] sm:$0xf]
        %v320 = vld [vmem:[#allocation7 + $0x70] sm:$0xf]
        %v321 = vld [vmem:[#allocation7 + $0x74] sm:$0xf]
        %v322 = vld [vmem:[#allocation7 + $0x78] sm:$0xf]
        %v323 = vld [vmem:[#allocation7 + $0x7c] sm:$0xf]
        %v324 = vld [vmem:[#allocation7 + $0x80] sm:$0xf]
        %v325 = vld [vmem:[#allocation7 + $0x84] sm:$0xf]
        %v326 = vld [vmem:[#allocation7 + $0x88] sm:$0xf]
        %v327 = vld [vmem:[#allocation7 + $0x8c] sm:$0xf]
        %v328 = vld [vmem:[#allocation7 + $0x90] sm:$0xf]
        %v329 = vld [vmem:[#allocation7 + $0x94] sm:$0xf]
        %v330 = vld [vmem:[#allocation7 + $0x98] sm:$0xf]
        %v331 = vld [vmem:[#allocation7 + $0x9c] sm:$0xf]
        %v332 = vld [vmem:[#allocation7 + $0xa0] sm:$0xf]
        %v333 = vld [vmem:[#allocation7 + $0xa4] sm:$0xf]
        %v334 = vld [vmem:[#allocation7 + $0xa8] sm:$0xf]
        %v335 = vld [vmem:[#allocation7 + $0xac] sm:$0xf]
        %v336 = vld [vmem:[#allocation7 + $0xb0] sm:$0xf]
        %v337 = vld [vmem:[#allocation7 + $0xb4] sm:$0xf]
        %v338 = vld [vmem:[#allocation7 + $0xb8] sm:$0xf]
        %v339 = vld [vmem:[#allocation7 + $0xbc] sm:$0xf]
        %v340 = vld [vmem:[%s2] sm:$0x1]
        %v341 = vlaneseq
        %v342 = vshrl.u32 %v341, 7
        %v343 = vsub.s32 0, %v342
        %v344 = vrot.slane %v340, %v343
        %v393 = vunpack.c.l.b16 %v292
        %v394 = vunpack.c.l.b16 %v293
        %v395 = vunpack.c.l.b16 %v294
        %v396 = vunpack.c.l.b16 %v295
        %v397 = vunpack.c.l.b16 %v296
        %v398 = vunpack.c.l.b16 %v297
        %v399 = vunpack.c.l.b16 %v298
        %v400 = vunpack.c.l.b16 %v299
        %v401 = vunpack.c.l.b16 %v300
        %v402 = vunpack.c.l.b16 %v301
        %v403 = vunpack.c.l.b16 %v302
        %v404 = vunpack.c.l.b16 %v303
        %v405 = vunpack.c.l.b16 %v304
        %v406 = vunpack.c.l.b16 %v305
        %v407 = vunpack.c.l.b16 %v306
        %v408 = vunpack.c.l.b16 %v307
        %v409 = vunpack.c.l.b16 %v308
        %v410 = vunpack.c.l.b16 %v309
        %v411 = vunpack.c.l.b16 %v310
        %v412 = vunpack.c.l.b16 %v311
        %v413 = vunpack.c.l.b16 %v312
        %v414 = vunpack.c.l.b16 %v313
        %v415 = vunpack.c.l.b16 %v314
        %v416 = vunpack.c.l.b16 %v315
        %v417 = vunpack.c.l.b16 %v316
        %v418 = vunpack.c.l.b16 %v317
        %v419 = vunpack.c.l.b16 %v318
        %v420 = vunpack.c.l.b16 %v319
        %v421 = vunpack.c.l.b16 %v320
        %v422 = vunpack.c.l.b16 %v321
        %v423 = vunpack.c.l.b16 %v322
        %v424 = vunpack.c.l.b16 %v323
        %v425 = vunpack.c.l.b16 %v324
        %v426 = vunpack.c.l.b16 %v325
        %v427 = vunpack.c.l.b16 %v326
        %v428 = vunpack.c.l.b16 %v327
        %v429 = vunpack.c.l.b16 %v328
        %v430 = vunpack.c.l.b16 %v329
        %v431 = vunpack.c.l.b16 %v330
        %v432 = vunpack.c.l.b16 %v331
        %v433 = vunpack.c.l.b16 %v332
        %v434 = vunpack.c.l.b16 %v333
        %v435 = vunpack.c.l.b16 %v334
        %v436 = vunpack.c.l.b16 %v335
        %v437 = vunpack.c.l.b16 %v336
        %v438 = vunpack.c.l.b16 %v337
        %v439 = vunpack.c.l.b16 %v338
        %v440 = vunpack.c.l.b16 %v339
        %v441 = vpack.c.b16 %v394, %v393
        %v442 = vpack.c.b16 %v396, %v395
        %v443 = vpack.c.b16 %v398, %v397
        %v444 = vpack.c.b16 %v400, %v399
        %v445 = vpack.c.b16 %v402, %v401
        %v446 = vpack.c.b16 %v404, %v403
        %v447 = vpack.c.b16 %v406, %v405
        %v448 = vpack.c.b16 %v408, %v407
        %v449 = vpack.c.b16 %v410, %v409
        %v450 = vpack.c.b16 %v412, %v411
        %v451 = vpack.c.b16 %v414, %v413
        %v452 = vpack.c.b16 %v416, %v415
        %v453 = vpack.c.b16 %v418, %v417
        %v454 = vpack.c.b16 %v420, %v419
        %v455 = vpack.c.b16 %v422, %v421
        %v456 = vpack.c.b16 %v424, %v423
        %v457 = vpack.c.b16 %v426, %v425
        %v458 = vpack.c.b16 %v428, %v427
        %v459 = vpack.c.b16 %v430, %v429
        %v460 = vpack.c.b16 %v432, %v431
        %v461 = vpack.c.b16 %v434, %v433
        %v462 = vpack.c.b16 %v436, %v435
        %v463 = vpack.c.b16 %v438, %v437
        %v464 = vpack.c.b16 %v440, %v439
        %489 = vmatprep.subr.bf16.mxu0 0
        %490 = vmatpush1.bf16.msra.mxu0 %v441
        %491 = vmatprep.subr.bf16.mxu0 0
        %492 = vmatpush1.bf16.msra.mxu0 %v442
        %493 = vmatprep.subr.bf16.mxu0 0
        %494 = vmatpush1.bf16.msra.mxu0 %v443
        %495 = vmatprep.subr.bf16.mxu0 0
        %496 = vmatpush1.bf16.msra.mxu0 %v444
        %497 = vmatprep.subr.bf16.mxu0 0
        %498 = vmatpush1.bf16.msra.mxu0 %v445
        %499 = vmatprep.subr.bf16.mxu0 0
        %500 = vmatpush1.bf16.msra.mxu0 %v446
        %501 = vmatprep.subr.bf16.mxu0 0
        %502 = vmatpush1.bf16.msra.mxu0 %v447
        %503 = vmatprep.subr.bf16.mxu0 0
        %504 = vmatpush1.bf16.msra.mxu0 %v448
        %505 = vmatprep.subr.bf16.mxu0 0
        %506 = vmatpush1.bf16.msra.mxu0 %v449
        %507 = vmatprep.subr.bf16.mxu0 0
        %508 = vmatpush1.bf16.msra.mxu0 %v450
        %509 = vmatprep.subr.bf16.mxu0 0
        %510 = vmatpush1.bf16.msra.mxu0 %v451
        %511 = vmatprep.subr.bf16.mxu0 0
        %512 = vmatpush1.bf16.msra.mxu0 %v452
        %513 = vmatprep.subr.bf16.mxu0 0
        %514 = vmatpush1.bf16.msra.mxu0 %v453
        %515 = vmatprep.subr.bf16.mxu0 0
        %516 = vmatpush1.bf16.msra.mxu0 %v454
        %517 = vmatprep.subr.bf16.mxu0 0
        %518 = vmatpush1.bf16.msra.mxu0 %v455
        %519 = vmatprep.subr.bf16.mxu0 0
        %520 = vmatpush1.bf16.msra.mxu0 %v456
        %521 = vmatprep.mubr.bf16.mxu0 %v287
        %522 = vmatmul.mubr.bf16.gmra.mrb[0].mxu0 %v286
        %v523 = vpop.f32.mrb[0].mxu0
        %v524 = vadd.f32 %v344, %v523
        %v525 = vpop.f32.mrb[0].mxu0
        %v526 = vpop.f32.mrb[0].mxu0
        %v527 = vadd.f32 %v344, %v526
        %v528 = vpop.f32.mrb[0].mxu0
        %529 = vmatprep.mubr.bf16.mxu0 %v290
        %530 = vmatmul.mubr.bf16.gmra.mrb[0].mxu0 %v289
        %v531 = vpop.f32.mrb[0].mxu0
        %v532 = vadd.f32 %v344, %v531
        %v533 = vpop.f32.mrb[0].mxu0
        %v534 = vpop.f32.mrb[0].mxu0
        %v535 = vadd.f32 %v344, %v534
        %v536 = vpop.f32.mrb[0].mxu0
        %537 = vdwg.mxu0
        %538 = vmatprep.subr.bf16.mxu0 0
        %539 = vmatpush1.bf16.msra.mxu0 %v457
        %540 = vmatprep.subr.bf16.mxu0 0
        %541 = vmatpush1.bf16.msra.mxu0 %v458
        %542 = vmatprep.subr.bf16.mxu0 0
        %543 = vmatpush1.bf16.msra.mxu0 %v459
        %544 = vmatprep.subr.bf16.mxu0 0
        %545 = vmatpush1.bf16.msra.mxu0 %v460
        %546 = vmatprep.subr.bf16.mxu0 0
        %547 = vmatpush1.bf16.msra.mxu0 %v461
        %548 = vmatprep.subr.bf16.mxu0 0
        %549 = vmatpush1.bf16.msra.mxu0 %v462
        %550 = vmatprep.subr.bf16.mxu0 0
        %551 = vmatpush1.bf16.msra.mxu0 %v463
        %552 = vmatprep.subr.bf16.mxu0 0
        %553 = vmatpush1.bf16.msra.mxu0 %v464
        %554 = vmatprep.subr.bf16.mxu0 0
        %555 = vmatpush1.bf16.msra.mxu0 0
        %556 = vmatprep.subr.bf16.mxu0 0
        %557 = vmatpush1.bf16.msra.mxu0 0
        %558 = vmatprep.subr.bf16.mxu0 0
        %559 = vmatpush1.bf16.msra.mxu0 0
        %560 = vmatprep.subr.bf16.mxu0 0
        %561 = vmatpush1.bf16.msra.mxu0 0
        %562 = vmatprep.subr.bf16.mxu0 0
        %563 = vmatpush1.bf16.msra.mxu0 0
        %564 = vmatprep.subr.bf16.mxu0 0
        %565 = vmatpush1.bf16.msra.mxu0 0
        %566 = vmatprep.subr.bf16.mxu0 0
        %567 = vmatpush1.bf16.msra.mxu0 0
        %568 = vmatprep.subr.bf16.mxu0 0
        %569 = vmatpush1.bf16.msra.mxu0 0
        %570 = vmatprep.mubr.bf16.mxu0 0
        %571 = vmatmul.mubr.bf16.gmra.mrb[0].mxu0 %v288
        %v572 = vpop.f32.mrb[0].mxu0
        %v573 = vadd.f32 %v524, %v572
        %v574 = vpop.f32.mrb[0].mxu0
        %v575 = vpop.f32.mrb[0].mxu0
        %v576 = vadd.f32 %v527, %v575
        %v577 = vpop.f32.mrb[0].mxu0
        %578 = vmatprep.mubr.bf16.mxu0 0
        %579 = vmatmul.mubr.bf16.gmra.mrb[0].mxu0 %v291
        %v580 = vpop.f32.mrb[0].mxu0
        %v581 = vadd.f32 %v532, %v580
        %v582 = vpop.f32.mrb[0].mxu0
        %v583 = vpop.f32.mrb[0].mxu0
        %v584 = vadd.f32 %v535, %v583
        %v585 = vpop.f32.mrb[0].mxu0
        %586 = vdwg.mxu0
        %v587 = vmax.f32 %v573, 0.0
        %v588 = vmax.f32 %v576, 0.0
        %v589 = vmax.f32 %v581, 0.0
        %v590 = vmax.f32 %v584, 0.0
        %v591 = vpack.c.bf16 %v588, %v587
        %v592 = vpack.c.bf16 %v590, %v589
        %593 = vst [vmem:[#allocation2 + $0x8] sm:$0xff] %v591
        %594 = vst [vmem:[#allocation2 + $0x20] sm:$0xff] %v592
        %v596 = vshrl.u32 %v591, 16
        %v598 = vrot.slane %v596, 7
        %v599 = vshll.u32 %v591, 16
        %v601 = vor.u32 %v598, %v599
        %v603 = vld [vmem:[#allocation2] sm:$0xff]
        %v604 = vsel %vm257, %v601, %v603
        %605 = vst [vmem:[#allocation2] sm:$0xff] %v604
        %v606 = vrot.slane %v599, 1
        %v607 = vor.u32 %v596, %v606
        %v609 = vld [vmem:[#allocation2 + $0x10] sm:$0xff]
        %v610 = vsel %vm265, %v607, %v609
        %611 = vst [vmem:[#allocation2 + $0x10] sm:$0xff] %v610
        %v613 = vshrl.u32 %v592, 16
        %v615 = vrot.slane %v613, 7
        %v616 = vshll.u32 %v592, 16
        %v618 = vor.u32 %v615, %v616
        %v620 = vld [vmem:[#allocation2 + $0x18] sm:$0xff]
        %v621 = vsel %vm257, %v618, %v620
        %622 = vst [vmem:[#allocation2 + $0x18] sm:$0xff] %v621
        %v623 = vrot.slane %v616, 1
        %v624 = vor.u32 %v613, %v623
        %v626 = vld [vmem:[#allocation2 + $0x28] sm:$0xff]
        %v627 = vsel %vm265, %v624, %v626
        %628 = vst [vmem:[#allocation2 + $0x28] sm:$0xff] %v627
        %v629 = vld [vmem:[#allocation2] sm:$0xff]
        %v630 = vld [vmem:[#allocation2 + $0x8] sm:$0xff]
        %v631 = vld [vmem:[#allocation2 + $0x10] sm:$0xff]
        %v632 = vld [vmem:[#allocation2 + $0x18] sm:$0xff]
        %v633 = vld [vmem:[#allocation2 + $0x20] sm:$0xff]
        %v634 = vld [vmem:[#allocation2 + $0x28] sm:$0xff]
        %s635 = scalar_lea.vmem [#allocation7], 192
        %v636 = vld [vmem:[%s635] sm:$0xf]
        %v637 = vld [vmem:[%s635 + $0x4] sm:$0xf]
        %v638 = vld [vmem:[%s635 + $0x8] sm:$0xf]
        %v639 = vld [vmem:[%s635 + $0xc] sm:$0xf]
        %v640 = vld [vmem:[%s635 + $0x10] sm:$0xf]
        %v641 = vld [vmem:[%s635 + $0x14] sm:$0xf]
        %v642 = vld [vmem:[%s635 + $0x18] sm:$0xf]
        %v643 = vld [vmem:[%s635 + $0x1c] sm:$0xf]
        %v644 = vld [vmem:[%s635 + $0x20] sm:$0xf]
        %v645 = vld [vmem:[%s635 + $0x24] sm:$0xf]
        %v646 = vld [vmem:[%s635 + $0x28] sm:$0xf]
        %v647 = vld [vmem:[%s635 + $0x2c] sm:$0xf]
        %v648 = vld [vmem:[%s635 + $0x30] sm:$0xf]
        %v649 = vld [vmem:[%s635 + $0x34] sm:$0xf]
        %v650 = vld [vmem:[%s635 + $0x38] sm:$0xf]
        %v651 = vld [vmem:[%s635 + $0x3c] sm:$0xf]
        %v652 = vld [vmem:[%s635 + $0x40] sm:$0xf]
        %v653 = vld [vmem:[%s635 + $0x44] sm:$0xf]
        %v654 = vld [vmem:[%s635 + $0x48] sm:$0xf]
        %v655 = vld [vmem:[%s635 + $0x4c] sm:$0xf]
        %v656 = vld [vmem:[%s635 + $0x50] sm:$0xf]
        %v657 = vld [vmem:[%s635 + $0x54] sm:$0xf]
        %v658 = vld [vmem:[%s635 + $0x58] sm:$0xf]
        %v659 = vld [vmem:[%s635 + $0x5c] sm:$0xf]
        %v660 = vld [vmem:[%s635 + $0x60] sm:$0xf]
        %v661 = vld [vmem:[%s635 + $0x64] sm:$0xf]
        %v662 = vld [vmem:[%s635 + $0x68] sm:$0xf]
        %v663 = vld [vmem:[%s635 + $0x6c] sm:$0xf]
        %v664 = vld [vmem:[%s635 + $0x70] sm:$0xf]
        %v665 = vld [vmem:[%s635 + $0x74] sm:$0xf]
        %v666 = vld [vmem:[%s635 + $0x78] sm:$0xf]
        %v667 = vld [vmem:[%s635 + $0x7c] sm:$0xf]
        %v668 = vld [vmem:[%s635 + $0x80] sm:$0xf]
        %v669 = vld [vmem:[%s635 + $0x84] sm:$0xf]
        %v670 = vld [vmem:[%s635 + $0x88] sm:$0xf]
        %v671 = vld [vmem:[%s635 + $0x8c] sm:$0xf]
        %v672 = vld [vmem:[%s635 + $0x90] sm:$0xf]
        %v673 = vld [vmem:[%s635 + $0x94] sm:$0xf]
        %v674 = vld [vmem:[%s635 + $0x98] sm:$0xf]
        %v675 = vld [vmem:[%s635 + $0x9c] sm:$0xf]
        %v676 = vld [vmem:[%s635 + $0xa0] sm:$0xf]
        %v677 = vld [vmem:[%s635 + $0xa4] sm:$0xf]
        %v678 = vld [vmem:[%s635 + $0xa8] sm:$0xf]
        %v679 = vld [vmem:[%s635 + $0xac] sm:$0xf]
        %v680 = vld [vmem:[%s635 + $0xb0] sm:$0xf]
        %v681 = vld [vmem:[%s635 + $0xb4] sm:$0xf]
        %v682 = vld [vmem:[%s635 + $0xb8] sm:$0xf]
        %v683 = vld [vmem:[%s635 + $0xbc] sm:$0xf]
        %v732 = vunpack.c.l.b16 %v636
        %v733 = vunpack.c.l.b16 %v637
        %v734 = vunpack.c.l.b16 %v638
        %v735 = vunpack.c.l.b16 %v639
        %v736 = vunpack.c.l.b16 %v640
        %v737 = vunpack.c.l.b16 %v641
        %v738 = vunpack.c.l.b16 %v642
        %v739 = vunpack.c.l.b16 %v643
        %v740 = vunpack.c.l.b16 %v644
        %v741 = vunpack.c.l.b16 %v645
        %v742 = vunpack.c.l.b16 %v646
        %v743 = vunpack.c.l.b16 %v647
        %v744 = vunpack.c.l.b16 %v648
        %v745 = vunpack.c.l.b16 %v649
        %v746 = vunpack.c.l.b16 %v650
        %v747 = vunpack.c.l.b16 %v651
        %v748 = vunpack.c.l.b16 %v652
        %v749 = vunpack.c.l.b16 %v653
        %v750 = vunpack.c.l.b16 %v654
        %v751 = vunpack.c.l.b16 %v655
        %v752 = vunpack.c.l.b16 %v656
        %v753 = vunpack.c.l.b16 %v657
        %v754 = vunpack.c.l.b16 %v658
        %v755 = vunpack.c.l.b16 %v659
        %v756 = vunpack.c.l.b16 %v660
        %v757 = vunpack.c.l.b16 %v661
        %v758 = vunpack.c.l.b16 %v662
        %v759 = vunpack.c.l.b16 %v663
        %v760 = vunpack.c.l.b16 %v664
        %v761 = vunpack.c.l.b16 %v665
        %v762 = vunpack.c.l.b16 %v666
        %v763 = vunpack.c.l.b16 %v667
        %v764 = vunpack.c.l.b16 %v668
        %v765 = vunpack.c.l.b16 %v669
        %v766 = vunpack.c.l.b16 %v670
        %v767 = vunpack.c.l.b16 %v671
        %v768 = vunpack.c.l.b16 %v672
        %v769 = vunpack.c.l.b16 %v673
        %v770 = vunpack.c.l.b16 %v674
        %v771 = vunpack.c.l.b16 %v675
        %v772 = vunpack.c.l.b16 %v676
        %v773 = vunpack.c.l.b16 %v677
        %v774 = vunpack.c.l.b16 %v678
        %v775 = vunpack.c.l.b16 %v679
        %v776 = vunpack.c.l.b16 %v680
        %v777 = vunpack.c.l.b16 %v681
        %v778 = vunpack.c.l.b16 %v682
        %v779 = vunpack.c.l.b16 %v683
        %v780 = vpack.c.b16 %v733, %v732
        %v781 = vpack.c.b16 %v735, %v734
        %v782 = vpack.c.b16 %v737, %v736
        %v783 = vpack.c.b16 %v739, %v738
        %v784 = vpack.c.b16 %v741, %v740
        %v785 = vpack.c.b16 %v743, %v742
        %v786 = vpack.c.b16 %v745, %v744
        %v787 = vpack.c.b16 %v747, %v746
        %v788 = vpack.c.b16 %v749, %v748
        %v789 = vpack.c.b16 %v751, %v750
        %v790 = vpack.c.b16 %v753, %v752
        %v791 = vpack.c.b16 %v755, %v754
        %v792 = vpack.c.b16 %v757, %v756
        %v793 = vpack.c.b16 %v759, %v758
        %v794 = vpack.c.b16 %v761, %v760
        %v795 = vpack.c.b16 %v763, %v762
        %v796 = vpack.c.b16 %v765, %v764
        %v797 = vpack.c.b16 %v767, %v766
        %v798 = vpack.c.b16 %v769, %v768
        %v799 = vpack.c.b16 %v771, %v770
        %v800 = vpack.c.b16 %v773, %v772
        %v801 = vpack.c.b16 %v775, %v774
        %v802 = vpack.c.b16 %v777, %v776
        %v803 = vpack.c.b16 %v779, %v778
        %828 = vmatprep.subr.bf16.mxu0 0
        %829 = vmatpush1.bf16.msra.mxu0 %v780
        %830 = vmatprep.subr.bf16.mxu0 0
        %831 = vmatpush1.bf16.msra.mxu0 %v781
        %832 = vmatprep.subr.bf16.mxu0 0
        %833 = vmatpush1.bf16.msra.mxu0 %v782
        %834 = vmatprep.subr.bf16.mxu0 0
        %835 = vmatpush1.bf16.msra.mxu0 %v783
        %836 = vmatprep.subr.bf16.mxu0 0
        %837 = vmatpush1.bf16.msra.mxu0 %v784
        %838 = vmatprep.subr.bf16.mxu0 0
        %839 = vmatpush1.bf16.msra.mxu0 %v785
        %840 = vmatprep.subr.bf16.mxu0 0
        %841 = vmatpush1.bf16.msra.mxu0 %v786
        %842 = vmatprep.subr.bf16.mxu0 0
        %843 = vmatpush1.bf16.msra.mxu0 %v787
        %844 = vmatprep.subr.bf16.mxu0 0
        %845 = vmatpush1.bf16.msra.mxu0 %v788
        %846 = vmatprep.subr.bf16.mxu0 0
        %847 = vmatpush1.bf16.msra.mxu0 %v789
        %848 = vmatprep.subr.bf16.mxu0 0
        %849 = vmatpush1.bf16.msra.mxu0 %v790
        %850 = vmatprep.subr.bf16.mxu0 0
        %851 = vmatpush1.bf16.msra.mxu0 %v791
        %852 = vmatprep.subr.bf16.mxu0 0
        %853 = vmatpush1.bf16.msra.mxu0 %v792
        %854 = vmatprep.subr.bf16.mxu0 0
        %855 = vmatpush1.bf16.msra.mxu0 %v793
        %856 = vmatprep.subr.bf16.mxu0 0
        %857 = vmatpush1.bf16.msra.mxu0 %v794
        %858 = vmatprep.subr.bf16.mxu0 0
        %859 = vmatpush1.bf16.msra.mxu0 %v795
        %860 = vmatprep.mubr.bf16.mxu0 %v630
        %861 = vmatmul.mubr.bf16.gmra.mrb[0].mxu0 %v629
        %v862 = vpop.f32.mrb[0].mxu0
        %v863 = vadd.f32 0.0, %v862
        %v864 = vpop.f32.mrb[0].mxu0
        %v865 = vpop.f32.mrb[0].mxu0
        %v866 = vadd.f32 0.0, %v865
        %v867 = vpop.f32.mrb[0].mxu0
        %868 = vmatprep.mubr.bf16.mxu0 %v633
        %869 = vmatmul.mubr.bf16.gmra.mrb[0].mxu0 %v632
        %v870 = vpop.f32.mrb[0].mxu0
        %v871 = vadd.f32 0.0, %v870
        %v872 = vpop.f32.mrb[0].mxu0
        %v873 = vpop.f32.mrb[0].mxu0
        %v874 = vadd.f32 0.0, %v873
        %v875 = vpop.f32.mrb[0].mxu0
        %876 = vdwg.mxu0
        %877 = vmatprep.subr.bf16.mxu0 0
        %878 = vmatpush1.bf16.msra.mxu0 %v796
        %879 = vmatprep.subr.bf16.mxu0 0
        %880 = vmatpush1.bf16.msra.mxu0 %v797
        %881 = vmatprep.subr.bf16.mxu0 0
        %882 = vmatpush1.bf16.msra.mxu0 %v798
        %883 = vmatprep.subr.bf16.mxu0 0
        %884 = vmatpush1.bf16.msra.mxu0 %v799
        %885 = vmatprep.subr.bf16.mxu0 0
        %886 = vmatpush1.bf16.msra.mxu0 %v800
        %887 = vmatprep.subr.bf16.mxu0 0
        %888 = vmatpush1.bf16.msra.mxu0 %v801
        %889 = vmatprep.subr.bf16.mxu0 0
        %890 = vmatpush1.bf16.msra.mxu0 %v802
        %891 = vmatprep.subr.bf16.mxu0 0
        %892 = vmatpush1.bf16.msra.mxu0 %v803
        %893 = vmatprep.subr.bf16.mxu0 0
        %894 = vmatpush1.bf16.msra.mxu0 0
        %895 = vmatprep.subr.bf16.mxu0 0
        %896 = vmatpush1.bf16.msra.mxu0 0
        %897 = vmatprep.subr.bf16.mxu0 0
        %898 = vmatpush1.bf16.msra.mxu0 0
        %899 = vmatprep.subr.bf16.mxu0 0
        %900 = vmatpush1.bf16.msra.mxu0 0
        %901 = vmatprep.subr.bf16.mxu0 0
        %902 = vmatpush1.bf16.msra.mxu0 0
        %903 = vmatprep.subr.bf16.mxu0 0
        %904 = vmatpush1.bf16.msra.mxu0 0
        %905 = vmatprep.subr.bf16.mxu0 0
        %906 = vmatpush1.bf16.msra.mxu0 0
        %907 = vmatprep.subr.bf16.mxu0 0
        %908 = vmatpush1.bf16.msra.mxu0 0
        %909 = vmatprep.mubr.bf16.mxu0 0
        %910 = vmatmul.mubr.bf16.gmra.mrb[0].mxu0 %v631
        %v911 = vpop.f32.mrb[0].mxu0
        %v912 = vadd.f32 %v863, %v911
        %v913 = vpop.f32.mrb[0].mxu0
        %v914 = vpop.f32.mrb[0].mxu0
        %v915 = vadd.f32 %v866, %v914
        %v916 = vpop.f32.mrb[0].mxu0
        %917 = vmatprep.mubr.bf16.mxu0 0
        %918 = vmatmul.mubr.bf16.gmra.mrb[0].mxu0 %v634
        %v919 = vpop.f32.mrb[0].mxu0
        %v920 = vadd.f32 %v871, %v919
        %v921 = vpop.f32.mrb[0].mxu0
        %v922 = vpop.f32.mrb[0].mxu0
        %v923 = vadd.f32 %v874, %v922
        %v924 = vpop.f32.mrb[0].mxu0
        %925 = vdwg.mxu0
        %v926 = vadd.f32 %v239, %v912
        %v927 = vadd.f32 %v240, %v915
        %v928 = vadd.f32 %v241, %v920
        %v929 = vadd.f32 %v242, %v923
        %v930 = vmax.f32 %v926, 0.0
        %v931 = vmax.f32 %v927, 0.0
        %v932 = vmax.f32 %v928, 0.0
        %v933 = vmax.f32 %v929, 0.0
        %v934 = vpack.c.bf16 %v931, %v930
        %v935 = vpack.c.bf16 %v933, %v932
        %936 = vst [vmem:[#allocation2 + $0x8] sm:$0xff] %v934
        %937 = vst [vmem:[#allocation2 + $0x20] sm:$0xff] %v935
        %v939 = vshrl.u32 %v934, 16
        %v941 = vrot.slane %v939, 7
        %v942 = vshll.u32 %v934, 16
        %v944 = vor.u32 %v941, %v942
        %v946 = vld [vmem:[#allocation2] sm:$0xff]
        %v947 = vsel %vm257, %v944, %v946
        %948 = vst [vmem:[#allocation2] sm:$0xff] %v947
        %v949 = vrot.slane %v942, 1
        %v950 = vor.u32 %v939, %v949
        %v952 = vld [vmem:[#allocation2 + $0x10] sm:$0xff]
        %v953 = vsel %vm265, %v950, %v952
        %954 = vst [vmem:[#allocation2 + $0x10] sm:$0xff] %v953
        %v956 = vshrl.u32 %v935, 16
        %v958 = vrot.slane %v956, 7
        %v959 = vshll.u32 %v935, 16
        %v961 = vor.u32 %v958, %v959
        %v963 = vld [vmem:[#allocation2 + $0x18] sm:$0xff]
        %v964 = vsel %vm257, %v961, %v963
        %965 = vst [vmem:[#allocation2 + $0x18] sm:$0xff] %v964
        %v966 = vrot.slane %v959, 1
        %v967 = vor.u32 %v956, %v966
        %v969 = vld [vmem:[#allocation2 + $0x28] sm:$0xff]
        %v970 = vsel %vm265, %v967, %v969
        %971 = vst [vmem:[#allocation2 + $0x28] sm:$0xff] %v970
        %v972 = vld [vmem:[#allocation2] sm:$0xff]
        %v973 = vld [vmem:[#allocation2 + $0x8] sm:$0xff]
        %v974 = vld [vmem:[#allocation2 + $0x10] sm:$0xff]
        %v975 = vld [vmem:[#allocation2 + $0x18] sm:$0xff]
        %v976 = vld [vmem:[#allocation2 + $0x20] sm:$0xff]
        %v977 = vld [vmem:[#allocation2 + $0x28] sm:$0xff]
        %s978 = scalar_lea.vmem [#allocation7], 384
        %v979 = vld [vmem:[%s978] sm:$0xf]
        %v980 = vld [vmem:[%s978 + $0x4] sm:$0xf]
        %v981 = vld [vmem:[%s978 + $0x8] sm:$0xf]
        %v982 = vld [vmem:[%s978 + $0xc] sm:$0xf]
        %v983 = vld [vmem:[%s978 + $0x10] sm:$0xf]
        %v984 = vld [vmem:[%s978 + $0x14] sm:$0xf]
        %v985 = vld [vmem:[%s978 + $0x18] sm:$0xf]
        %v986 = vld [vmem:[%s978 + $0x1c] sm:$0xf]
        %v987 = vld [vmem:[%s978 + $0x20] sm:$0xf]
        %v988 = vld [vmem:[%s978 + $0x24] sm:$0xf]
        %v989 = vld [vmem:[%s978 + $0x28] sm:$0xf]
        %v990 = vld [vmem:[%s978 + $0x2c] sm:$0xf]
        %v991 = vld [vmem:[%s978 + $0x30] sm:$0xf]
        %v992 = vld [vmem:[%s978 + $0x34] sm:$0xf]
        %v993 = vld [vmem:[%s978 + $0x38] sm:$0xf]
        %v994 = vld [vmem:[%s978 + $0x3c] sm:$0xf]
        %v995 = vld [vmem:[%s978 + $0x40] sm:$0xf]
        %v996 = vld [vmem:[%s978 + $0x44] sm:$0xf]
        %v997 = vld [vmem:[%s978 + $0x48] sm:$0xf]
        %v998 = vld [vmem:[%s978 + $0x4c] sm:$0xf]
        %v999 = vld [vmem:[%s978 + $0x50] sm:$0xf]
        %v1000 = vld [vmem:[%s978 + $0x54] sm:$0xf]
        %v1001 = vld [vmem:[%s978 + $0x58] sm:$0xf]
        %v1002 = vld [vmem:[%s978 + $0x5c] sm:$0xf]
        %v1003 = vld [vmem:[%s978 + $0x60] sm:$0xf]
        %v1004 = vld [vmem:[%s978 + $0x64] sm:$0xf]
        %v1005 = vld [vmem:[%s978 + $0x68] sm:$0xf]
        %v1006 = vld [vmem:[%s978 + $0x6c] sm:$0xf]
        %v1007 = vld [vmem:[%s978 + $0x70] sm:$0xf]
        %v1008 = vld [vmem:[%s978 + $0x74] sm:$0xf]
        %v1009 = vld [vmem:[%s978 + $0x78] sm:$0xf]
        %v1010 = vld [vmem:[%s978 + $0x7c] sm:$0xf]
        %v1011 = vld [vmem:[%s978 + $0x80] sm:$0xf]
        %v1012 = vld [vmem:[%s978 + $0x84] sm:$0xf]
        %v1013 = vld [vmem:[%s978 + $0x88] sm:$0xf]
        %v1014 = vld [vmem:[%s978 + $0x8c] sm:$0xf]
        %v1015 = vld [vmem:[%s978 + $0x90] sm:$0xf]
        %v1016 = vld [vmem:[%s978 + $0x94] sm:$0xf]
        %v1017 = vld [vmem:[%s978 + $0x98] sm:$0xf]
        %v1018 = vld [vmem:[%s978 + $0x9c] sm:$0xf]
        %v1019 = vld [vmem:[%s978 + $0xa0] sm:$0xf]
        %v1020 = vld [vmem:[%s978 + $0xa4] sm:$0xf]
        %v1021 = vld [vmem:[%s978 + $0xa8] sm:$0xf]
        %v1022 = vld [vmem:[%s978 + $0xac] sm:$0xf]
        %v1023 = vld [vmem:[%s978 + $0xb0] sm:$0xf]
        %v1024 = vld [vmem:[%s978 + $0xb4] sm:$0xf]
        %v1025 = vld [vmem:[%s978 + $0xb8] sm:$0xf]
        %v1026 = vld [vmem:[%s978 + $0xbc] sm:$0xf]
        %v1027 = vld [vmem:[%s2 + $0x1] sm:$0x1]
        %v1028 = vlaneseq
        %v1029 = vshrl.u32 %v1028, 7
        %v1030 = vsub.s32 0, %v1029
        %v1031 = vrot.slane %v1027, %v1030
        %v1080 = vunpack.c.l.b16 %v979
        %v1081 = vunpack.c.l.b16 %v980
        %v1082 = vunpack.c.l.b16 %v981
        %v1083 = vunpack.c.l.b16 %v982
        %v1084 = vunpack.c.l.b16 %v983
        %v1085 = vunpack.c.l.b16 %v984
        %v1086 = vunpack.c.l.b16 %v985
        %v1087 = vunpack.c.l.b16 %v986
        %v1088 = vunpack.c.l.b16 %v987
        %v1089 = vunpack.c.l.b16 %v988
        %v1090 = vunpack.c.l.b16 %v989
        %v1091 = vunpack.c.l.b16 %v990
        %v1092 = vunpack.c.l.b16 %v991
        %v1093 = vunpack.c.l.b16 %v992
        %v1094 = vunpack.c.l.b16 %v993
        %v1095 = vunpack.c.l.b16 %v994
        %v1096 = vunpack.c.l.b16 %v995
        %v1097 = vunpack.c.l.b16 %v996
        %v1098 = vunpack.c.l.b16 %v997
        %v1099 = vunpack.c.l.b16 %v998
        %v1100 = vunpack.c.l.b16 %v999
        %v1101 = vunpack.c.l.b16 %v1000
        %v1102 = vunpack.c.l.b16 %v1001
        %v1103 = vunpack.c.l.b16 %v1002
        %v1104 = vunpack.c.l.b16 %v1003
        %v1105 = vunpack.c.l.b16 %v1004
        %v1106 = vunpack.c.l.b16 %v1005
        %v1107 = vunpack.c.l.b16 %v1006
        %v1108 = vunpack.c.l.b16 %v1007
        %v1109 = vunpack.c.l.b16 %v1008
        %v1110 = vunpack.c.l.b16 %v1009
        %v1111 = vunpack.c.l.b16 %v1010
        %v1112 = vunpack.c.l.b16 %v1011
        %v1113 = vunpack.c.l.b16 %v1012
        %v1114 = vunpack.c.l.b16 %v1013
        %v1115 = vunpack.c.l.b16 %v1014
        %v1116 = vunpack.c.l.b16 %v1015
        %v1117 = vunpack.c.l.b16 %v1016
        %v1118 = vunpack.c.l.b16 %v1017
        %v1119 = vunpack.c.l.b16 %v1018
        %v1120 = vunpack.c.l.b16 %v1019
        %v1121 = vunpack.c.l.b16 %v1020
        %v1122 = vunpack.c.l.b16 %v1021
        %v1123 = vunpack.c.l.b16 %v1022
        %v1124 = vunpack.c.l.b16 %v1023
        %v1125 = vunpack.c.l.b16 %v1024
        %v1126 = vunpack.c.l.b16 %v1025
        %v1127 = vunpack.c.l.b16 %v1026
        %v1128 = vpack.c.b16 %v1081, %v1080
        %v1129 = vpack.c.b16 %v1083, %v1082
        %v1130 = vpack.c.b16 %v1085, %v1084
        %v1131 = vpack.c.b16 %v1087, %v1086
        %v1132 = vpack.c.b16 %v1089, %v1088
        %v1133 = vpack.c.b16 %v1091, %v1090
        %v1134 = vpack.c.b16 %v1093, %v1092
        %v1135 = vpack.c.b16 %v1095, %v1094
        %v1136 = vpack.c.b16 %v1097, %v1096
        %v1137 = vpack.c.b16 %v1099, %v1098
        %v1138 = vpack.c.b16 %v1101, %v1100
        %v1139 = vpack.c.b16 %v1103, %v1102
        %v1140 = vpack.c.b16 %v1105, %v1104
        %v1141 = vpack.c.b16 %v1107, %v1106
        %v1142 = vpack.c.b16 %v1109, %v1108
        %v1143 = vpack.c.b16 %v1111, %v1110
        %v1144 = vpack.c.b16 %v1113, %v1112
        %v1145 = vpack.c.b16 %v1115, %v1114
        %v1146 = vpack.c.b16 %v1117, %v1116
        %v1147 = vpack.c.b16 %v1119, %v1118
        %v1148 = vpack.c.b16 %v1121, %v1120
        %v1149 = vpack.c.b16 %v1123, %v1122
        %v1150 = vpack.c.b16 %v1125, %v1124
        %v1151 = vpack.c.b16 %v1127, %v1126
        %1176 = vmatprep.subr.bf16.mxu0 0
        %1177 = vmatpush1.bf16.msra.mxu0 %v1128
        %1178 = vmatprep.subr.bf16.mxu0 0
        %1179 = vmatpush1.bf16.msra.mxu0 %v1129
        %1180 = vmatprep.subr.bf16.mxu0 0
        %1181 = vmatpush1.bf16.msra.mxu0 %v1130
        %1182 = vmatprep.subr.bf16.mxu0 0
        %1183 = vmatpush1.bf16.msra.mxu0 %v1131
        %1184 = vmatprep.subr.bf16.mxu0 0
        %1185 = vmatpush1.bf16.msra.mxu0 %v1132
        %1186 = vmatprep.subr.bf16.mxu0 0
        %1187 = vmatpush1.bf16.msra.mxu0 %v1133
        %1188 = vmatprep.subr.bf16.mxu0 0
        %1189 = vmatpush1.bf16.msra.mxu0 %v1134
        %1190 = vmatprep.subr.bf16.mxu0 0
        %1191 = vmatpush1.bf16.msra.mxu0 %v1135
        %1192 = vmatprep.subr.bf16.mxu0 0
        %1193 = vmatpush1.bf16.msra.mxu0 %v1136
        %1194 = vmatprep.subr.bf16.mxu0 0
        %1195 = vmatpush1.bf16.msra.mxu0 %v1137
        %1196 = vmatprep.subr.bf16.mxu0 0
        %1197 = vmatpush1.bf16.msra.mxu0 %v1138
        %1198 = vmatprep.subr.bf16.mxu0 0
        %1199 = vmatpush1.bf16.msra.mxu0 %v1139
        %1200 = vmatprep.subr.bf16.mxu0 0
        %1201 = vmatpush1.bf16.msra.mxu0 %v1140
        %1202 = vmatprep.subr.bf16.mxu0 0
        %1203 = vmatpush1.bf16.msra.mxu0 %v1141
        %1204 = vmatprep.subr.bf16.mxu0 0
        %1205 = vmatpush1.bf16.msra.mxu0 %v1142
        %1206 = vmatprep.subr.bf16.mxu0 0
        %1207 = vmatpush1.bf16.msra.mxu0 %v1143
        %1208 = vmatprep.mubr.bf16.mxu0 %v973
        %1209 = vmatmul.mubr.bf16.gmra.mrb[0].mxu0 %v972
        %v1210 = vpop.f32.mrb[0].mxu0
        %v1211 = vadd.f32 %v1031, %v1210
        %v1212 = vpop.f32.mrb[0].mxu0
        %v1213 = vpop.f32.mrb[0].mxu0
        %v1214 = vadd.f32 %v1031, %v1213
        %v1215 = vpop.f32.mrb[0].mxu0
        %1216 = vmatprep.mubr.bf16.mxu0 %v976
        %1217 = vmatmul.mubr.bf16.gmra.mrb[0].mxu0 %v975
        %v1218 = vpop.f32.mrb[0].mxu0
        %v1219 = vadd.f32 %v1031, %v1218
        %v1220 = vpop.f32.mrb[0].mxu0
        %v1221 = vpop.f32.mrb[0].mxu0
        %v1222 = vadd.f32 %v1031, %v1221
        %v1223 = vpop.f32.mrb[0].mxu0
        %1224 = vdwg.mxu0
        %1225 = vmatprep.subr.bf16.mxu0 0
        %1226 = vmatpush1.bf16.msra.mxu0 %v1144
        %1227 = vmatprep.subr.bf16.mxu0 0
        %1228 = vmatpush1.bf16.msra.mxu0 %v1145
        %1229 = vmatprep.subr.bf16.mxu0 0
        %1230 = vmatpush1.bf16.msra.mxu0 %v1146
        %1231 = vmatprep.subr.bf16.mxu0 0
        %1232 = vmatpush1.bf16.msra.mxu0 %v1147
        %1233 = vmatprep.subr.bf16.mxu0 0
        %1234 = vmatpush1.bf16.msra.mxu0 %v1148
        %1235 = vmatprep.subr.bf16.mxu0 0
        %1236 = vmatpush1.bf16.msra.mxu0 %v1149
        %1237 = vmatprep.subr.bf16.mxu0 0
        %1238 = vmatpush1.bf16.msra.mxu0 %v1150
        %1239 = vmatprep.subr.bf16.mxu0 0
        %1240 = vmatpush1.bf16.msra.mxu0 %v1151
        %1241 = vmatprep.subr.bf16.mxu0 0
        %1242 = vmatpush1.bf16.msra.mxu0 0
        %1243 = vmatprep.subr.bf16.mxu0 0
        %1244 = vmatpush1.bf16.msra.mxu0 0
        %1245 = vmatprep.subr.bf16.mxu0 0
        %1246 = vmatpush1.bf16.msra.mxu0 0
        %1247 = vmatprep.subr.bf16.mxu0 0
        %1248 = vmatpush1.bf16.msra.mxu0 0
        %1249 = vmatprep.subr.bf16.mxu0 0
        %1250 = vmatpush1.bf16.msra.mxu0 0
        %1251 = vmatprep.subr.bf16.mxu0 0
        %1252 = vmatpush1.bf16.msra.mxu0 0
        %1253 = vmatprep.subr.bf16.mxu0 0
        %1254 = vmatpush1.bf16.msra.mxu0 0
        %1255 = vmatprep.subr.bf16.mxu0 0
        %1256 = vmatpush1.bf16.msra.mxu0 0
        %1257 = vmatprep.mubr.bf16.mxu0 0
        %1258 = vmatmul.mubr.bf16.gmra.mrb[0].mxu0 %v974
        %v1259 = vpop.f32.mrb[0].mxu0
        %v1260 = vadd.f32 %v1211, %v1259
        %v1261 = vpop.f32.mrb[0].mxu0
        %v1262 = vpop.f32.mrb[0].mxu0
        %v1263 = vadd.f32 %v1214, %v1262
        %v1264 = vpop.f32.mrb[0].mxu0
        %1265 = vmatprep.mubr.bf16.mxu0 0
        %1266 = vmatmul.mubr.bf16.gmra.mrb[0].mxu0 %v977
        %v1267 = vpop.f32.mrb[0].mxu0
        %v1268 = vadd.f32 %v1219, %v1267
        %v1269 = vpop.f32.mrb[0].mxu0
        %v1270 = vpop.f32.mrb[0].mxu0
        %v1271 = vadd.f32 %v1222, %v1270
        %v1272 = vpop.f32.mrb[0].mxu0
        %1273 = vdwg.mxu0
        %v1274 = vmax.f32 %v1260, 0.0
        %v1275 = vmax.f32 %v1263, 0.0
        %v1276 = vmax.f32 %v1268, 0.0
        %v1277 = vmax.f32 %v1271, 0.0
        %v1278 = vpack.c.bf16 %v1275, %v1274
        %v1279 = vpack.c.bf16 %v1277, %v1276
        %1280 = vst [vmem:[#allocation2 + $0x8] sm:$0xff] %v1278
        %1281 = vst [vmem:[#allocation2 + $0x20] sm:$0xff] %v1279
        %v1283 = vshrl.u32 %v1278, 16
        %v1285 = vrot.slane %v1283, 7
        %v1286 = vshll.u32 %v1278, 16
        %v1288 = vor.u32 %v1285, %v1286
        %v1290 = vld [vmem:[#allocation2] sm:$0xff]
        %v1291 = vsel %vm257, %v1288, %v1290
        %1292 = vst [vmem:[#allocation2] sm:$0xff] %v1291
        %v1293 = vrot.slane %v1286, 1
        %v1294 = vor.u32 %v1283, %v1293
        %v1296 = vld [vmem:[#allocation2 + $0x10] sm:$0xff]
        %v1297 = vsel %vm265, %v1294, %v1296
        %1298 = vst [vmem:[#allocation2 + $0x10] sm:$0xff] %v1297
        %v1300 = vshrl.u32 %v1279, 16
        %v1302 = vrot.slane %v1300, 7
        %v1303 = vshll.u32 %v1279, 16
        %v1305 = vor.u32 %v1302, %v1303
        %v1307 = vld [vmem:[#allocation2 + $0x18] sm:$0xff]
        %v1308 = vsel %vm257, %v1305, %v1307
        %1309 = vst [vmem:[#allocation2 + $0x18] sm:$0xff] %v1308
        %v1310 = vrot.slane %v1303, 1
        %v1311 = vor.u32 %v1300, %v1310
        %v1313 = vld [vmem:[#allocation2 + $0x28] sm:$0xff]
        %v1314 = vsel %vm265, %v1311, %v1313
        %1315 = vst [vmem:[#allocation2 + $0x28] sm:$0xff] %v1314
        %v1316 = vld [vmem:[#allocation2] sm:$0xff]
        %v1317 = vld [vmem:[#allocation2 + $0x8] sm:$0xff]
        %v1318 = vld [vmem:[#allocation2 + $0x10] sm:$0xff]
        %v1319 = vld [vmem:[#allocation2 + $0x18] sm:$0xff]
        %v1320 = vld [vmem:[#allocation2 + $0x20] sm:$0xff]
        %v1321 = vld [vmem:[#allocation2 + $0x28] sm:$0xff]
        %s1322 = scalar_lea.vmem [#allocation7], 576
        %v1323 = vld [vmem:[%s1322] sm:$0xf]
        %v1324 = vld [vmem:[%s1322 + $0x4] sm:$0xf]
        %v1325 = vld [vmem:[%s1322 + $0x8] sm:$0xf]
        %v1326 = vld [vmem:[%s1322 + $0xc] sm:$0xf]
        %v1327 = vld [vmem:[%s1322 + $0x10] sm:$0xf]
        %v1328 = vld [vmem:[%s1322 + $0x14] sm:$0xf]
        %v1329 = vld [vmem:[%s1322 + $0x18] sm:$0xf]
        %v1330 = vld [vmem:[%s1322 + $0x1c] sm:$0xf]
        %v1331 = vld [vmem:[%s1322 + $0x20] sm:$0xf]
        %v1332 = vld [vmem:[%s1322 + $0x24] sm:$0xf]
        %v1333 = vld [vmem:[%s1322 + $0x28] sm:$0xf]
        %v1334 = vld [vmem:[%s1322 + $0x2c] sm:$0xf]
        %v1335 = vld [vmem:[%s1322 + $0x30] sm:$0xf]
        %v1336 = vld [vmem:[%s1322 + $0x34] sm:$0xf]
        %v1337 = vld [vmem:[%s1322 + $0x38] sm:$0xf]
        %v1338 = vld [vmem:[%s1322 + $0x3c] sm:$0xf]
        %v1339 = vld [vmem:[%s1322 + $0x40] sm:$0xf]
        %v1340 = vld [vmem:[%s1322 + $0x44] sm:$0xf]
        %v1341 = vld [vmem:[%s1322 + $0x48] sm:$0xf]
        %v1342 = vld [vmem:[%s1322 + $0x4c] sm:$0xf]
        %v1343 = vld [vmem:[%s1322 + $0x50] sm:$0xf]
        %v1344 = vld [vmem:[%s1322 + $0x54] sm:$0xf]
        %v1345 = vld [vmem:[%s1322 + $0x58] sm:$0xf]
        %v1346 = vld [vmem:[%s1322 + $0x5c] sm:$0xf]
        %v1347 = vld [vmem:[%s1322 + $0x60] sm:$0xf]
        %v1348 = vld [vmem:[%s1322 + $0x64] sm:$0xf]
        %v1349 = vld [vmem:[%s1322 + $0x68] sm:$0xf]
        %v1350 = vld [vmem:[%s1322 + $0x6c] sm:$0xf]
        %v1351 = vld [vmem:[%s1322 + $0x70] sm:$0xf]
        %v1352 = vld [vmem:[%s1322 + $0x74] sm:$0xf]
        %v1353 = vld [vmem:[%s1322 + $0x78] sm:$0xf]
        %v1354 = vld [vmem:[%s1322 + $0x7c] sm:$0xf]
        %v1355 = vld [vmem:[%s1322 + $0x80] sm:$0xf]
        %v1356 = vld [vmem:[%s1322 + $0x84] sm:$0xf]
        %v1357 = vld [vmem:[%s1322 + $0x88] sm:$0xf]
        %v1358 = vld [vmem:[%s1322 + $0x8c] sm:$0xf]
        %v1359 = vld [vmem:[%s1322 + $0x90] sm:$0xf]
        %v1360 = vld [vmem:[%s1322 + $0x94] sm:$0xf]
        %v1361 = vld [vmem:[%s1322 + $0x98] sm:$0xf]
        %v1362 = vld [vmem:[%s1322 + $0x9c] sm:$0xf]
        %v1363 = vld [vmem:[%s1322 + $0xa0] sm:$0xf]
        %v1364 = vld [vmem:[%s1322 + $0xa4] sm:$0xf]
        %v1365 = vld [vmem:[%s1322 + $0xa8] sm:$0xf]
        %v1366 = vld [vmem:[%s1322 + $0xac] sm:$0xf]
        %v1367 = vld [vmem:[%s1322 + $0xb0] sm:$0xf]
        %v1368 = vld [vmem:[%s1322 + $0xb4] sm:$0xf]
        %v1369 = vld [vmem:[%s1322 + $0xb8] sm:$0xf]
        %v1370 = vld [vmem:[%s1322 + $0xbc] sm:$0xf]
        %v1419 = vunpack.c.l.b16 %v1323
        %v1420 = vunpack.c.l.b16 %v1324
        %v1421 = vunpack.c.l.b16 %v1325
        %v1422 = vunpack.c.l.b16 %v1326
        %v1423 = vunpack.c.l.b16 %v1327
        %v1424 = vunpack.c.l.b16 %v1328
        %v1425 = vunpack.c.l.b16 %v1329
        %v1426 = vunpack.c.l.b16 %v1330
        %v1427 = vunpack.c.l.b16 %v1331
        %v1428 = vunpack.c.l.b16 %v1332
        %v1429 = vunpack.c.l.b16 %v1333
        %v1430 = vunpack.c.l.b16 %v1334
        %v1431 = vunpack.c.l.b16 %v1335
        %v1432 = vunpack.c.l.b16 %v1336
        %v1433 = vunpack.c.l.b16 %v1337
        %v1434 = vunpack.c.l.b16 %v1338
        %v1435 = vunpack.c.l.b16 %v1339
        %v1436 = vunpack.c.l.b16 %v1340
        %v1437 = vunpack.c.l.b16 %v1341
        %v1438 = vunpack.c.l.b16 %v1342
        %v1439 = vunpack.c.l.b16 %v1343
        %v1440 = vunpack.c.l.b16 %v1344
        %v1441 = vunpack.c.l.b16 %v1345
        %v1442 = vunpack.c.l.b16 %v1346
        %v1443 = vunpack.c.l.b16 %v1347
        %v1444 = vunpack.c.l.b16 %v1348
        %v1445 = vunpack.c.l.b16 %v1349
        %v1446 = vunpack.c.l.b16 %v1350
        %v1447 = vunpack.c.l.b16 %v1351
        %v1448 = vunpack.c.l.b16 %v1352
        %v1449 = vunpack.c.l.b16 %v1353
        %v1450 = vunpack.c.l.b16 %v1354
        %v1451 = vunpack.c.l.b16 %v1355
        %v1452 = vunpack.c.l.b16 %v1356
        %v1453 = vunpack.c.l.b16 %v1357
        %v1454 = vunpack.c.l.b16 %v1358
        %v1455 = vunpack.c.l.b16 %v1359
        %v1456 = vunpack.c.l.b16 %v1360
        %v1457 = vunpack.c.l.b16 %v1361
        %v1458 = vunpack.c.l.b16 %v1362
        %v1459 = vunpack.c.l.b16 %v1363
        %v1460 = vunpack.c.l.b16 %v1364
        %v1461 = vunpack.c.l.b16 %v1365
        %v1462 = vunpack.c.l.b16 %v1366
        %v1463 = vunpack.c.l.b16 %v1367
        %v1464 = vunpack.c.l.b16 %v1368
        %v1465 = vunpack.c.l.b16 %v1369
        %v1466 = vunpack.c.l.b16 %v1370
        %v1467 = vpack.c.b16 %v1420, %v1419
        %v1468 = vpack.c.b16 %v1422, %v1421
        %v1469 = vpack.c.b16 %v1424, %v1423
        %v1470 = vpack.c.b16 %v1426, %v1425
        %v1471 = vpack.c.b16 %v1428, %v1427
        %v1472 = vpack.c.b16 %v1430, %v1429
        %v1473 = vpack.c.b16 %v1432, %v1431
        %v1474 = vpack.c.b16 %v1434, %v1433
        %v1475 = vpack.c.b16 %v1436, %v1435
        %v1476 = vpack.c.b16 %v1438, %v1437
        %v1477 = vpack.c.b16 %v1440, %v1439
        %v1478 = vpack.c.b16 %v1442, %v1441
        %v1479 = vpack.c.b16 %v1444, %v1443
        %v1480 = vpack.c.b16 %v1446, %v1445
        %v1481 = vpack.c.b16 %v1448, %v1447
        %v1482 = vpack.c.b16 %v1450, %v1449
        %v1483 = vpack.c.b16 %v1452, %v1451
        %v1484 = vpack.c.b16 %v1454, %v1453
        %v1485 = vpack.c.b16 %v1456, %v1455
        %v1486 = vpack.c.b16 %v1458, %v1457
        %v1487 = vpack.c.b16 %v1460, %v1459
        %v1488 = vpack.c.b16 %v1462, %v1461
        %v1489 = vpack.c.b16 %v1464, %v1463
        %v1490 = vpack.c.b16 %v1466, %v1465
        %1515 = vmatprep.subr.bf16.mxu0 0
        %1516 = vmatpush1.bf16.msra.mxu0 %v1467
        %1517 = vmatprep.subr.bf16.mxu0 0
        %1518 = vmatpush1.bf16.msra.mxu0 %v1468
        %1519 = vmatprep.subr.bf16.mxu0 0
        %1520 = vmatpush1.bf16.msra.mxu0 %v1469
        %1521 = vmatprep.subr.bf16.mxu0 0
        %1522 = vmatpush1.bf16.msra.mxu0 %v1470
        %1523 = vmatprep.subr.bf16.mxu0 0
        %1524 = vmatpush1.bf16.msra.mxu0 %v1471
        %1525 = vmatprep.subr.bf16.mxu0 0
        %1526 = vmatpush1.bf16.msra.mxu0 %v1472
        %1527 = vmatprep.subr.bf16.mxu0 0
        %1528 = vmatpush1.bf16.msra.mxu0 %v1473
        %1529 = vmatprep.subr.bf16.mxu0 0
        %1530 = vmatpush1.bf16.msra.mxu0 %v1474
        %1531 = vmatprep.subr.bf16.mxu0 0
        %1532 = vmatpush1.bf16.msra.mxu0 %v1475
        %1533 = vmatprep.subr.bf16.mxu0 0
        %1534 = vmatpush1.bf16.msra.mxu0 %v1476
        %1535 = vmatprep.subr.bf16.mxu0 0
        %1536 = vmatpush1.bf16.msra.mxu0 %v1477
        %1537 = vmatprep.subr.bf16.mxu0 0
        %1538 = vmatpush1.bf16.msra.mxu0 %v1478
        %1539 = vmatprep.subr.bf16.mxu0 0
        %1540 = vmatpush1.bf16.msra.mxu0 %v1479
        %1541 = vmatprep.subr.bf16.mxu0 0
        %1542 = vmatpush1.bf16.msra.mxu0 %v1480
        %1543 = vmatprep.subr.bf16.mxu0 0
        %1544 = vmatpush1.bf16.msra.mxu0 %v1481
        %1545 = vmatprep.subr.bf16.mxu0 0
        %1546 = vmatpush1.bf16.msra.mxu0 %v1482
        %1547 = vmatprep.mubr.bf16.mxu0 %v1317
        %1548 = vmatmul.mubr.bf16.gmra.mrb[0].mxu0 %v1316
        %v1549 = vpop.f32.mrb[0].mxu0
        %v1550 = vadd.f32 0.0, %v1549
        %v1551 = vpop.f32.mrb[0].mxu0
        %v1552 = vpop.f32.mrb[0].mxu0
        %v1553 = vadd.f32 0.0, %v1552
        %v1554 = vpop.f32.mrb[0].mxu0
        %1555 = vmatprep.mubr.bf16.mxu0 %v1320
        %1556 = vmatmul.mubr.bf16.gmra.mrb[0].mxu0 %v1319
        %v1557 = vpop.f32.mrb[0].mxu0
        %v1558 = vadd.f32 0.0, %v1557
        %v1559 = vpop.f32.mrb[0].mxu0
        %v1560 = vpop.f32.mrb[0].mxu0
        %v1561 = vadd.f32 0.0, %v1560
        %v1562 = vpop.f32.mrb[0].mxu0
        %1563 = vdwg.mxu0
        %1564 = vmatprep.subr.bf16.mxu0 0
        %1565 = vmatpush1.bf16.msra.mxu0 %v1483
        %1566 = vmatprep.subr.bf16.mxu0 0
        %1567 = vmatpush1.bf16.msra.mxu0 %v1484
        %1568 = vmatprep.subr.bf16.mxu0 0
        %1569 = vmatpush1.bf16.msra.mxu0 %v1485
        %1570 = vmatprep.subr.bf16.mxu0 0
        %1571 = vmatpush1.bf16.msra.mxu0 %v1486
        %1572 = vmatprep.subr.bf16.mxu0 0
        %1573 = vmatpush1.bf16.msra.mxu0 %v1487
        %1574 = vmatprep.subr.bf16.mxu0 0
        %1575 = vmatpush1.bf16.msra.mxu0 %v1488
        %1576 = vmatprep.subr.bf16.mxu0 0
        %1577 = vmatpush1.bf16.msra.mxu0 %v1489
        %1578 = vmatprep.subr.bf16.mxu0 0
        %1579 = vmatpush1.bf16.msra.mxu0 %v1490
        %1580 = vmatprep.subr.bf16.mxu0 0
        %1581 = vmatpush1.bf16.msra.mxu0 0
        %1582 = vmatprep.subr.bf16.mxu0 0
        %1583 = vmatpush1.bf16.msra.mxu0 0
        %1584 = vmatprep.subr.bf16.mxu0 0
        %1585 = vmatpush1.bf16.msra.mxu0 0
        %1586 = vmatprep.subr.bf16.mxu0 0
        %1587 = vmatpush1.bf16.msra.mxu0 0
        %1588 = vmatprep.subr.bf16.mxu0 0
        %1589 = vmatpush1.bf16.msra.mxu0 0
        %1590 = vmatprep.subr.bf16.mxu0 0
        %1591 = vmatpush1.bf16.msra.mxu0 0
        %1592 = vmatprep.subr.bf16.mxu0 0
        %1593 = vmatpush1.bf16.msra.mxu0 0
        %1594 = vmatprep.subr.bf16.mxu0 0
        %1595 = vmatpush1.bf16.msra.mxu0 0
        %1596 = vmatprep.mubr.bf16.mxu0 0
        %1597 = vmatmul.mubr.bf16.gmra.mrb[0].mxu0 %v1318
        %v1598 = vpop.f32.mrb[0].mxu0
        %v1599 = vadd.f32 %v1550, %v1598
        %v1600 = vpop.f32.mrb[0].mxu0
        %v1601 = vpop.f32.mrb[0].mxu0
        %v1602 = vadd.f32 %v1553, %v1601
        %v1603 = vpop.f32.mrb[0].mxu0
        %1604 = vmatprep.mubr.bf16.mxu0 0
        %1605 = vmatmul.mubr.bf16.gmra.mrb[0].mxu0 %v1321
        %v1606 = vpop.f32.mrb[0].mxu0
        %v1607 = vadd.f32 %v1558, %v1606
        %v1608 = vpop.f32.mrb[0].mxu0
        %v1609 = vpop.f32.mrb[0].mxu0
        %v1610 = vadd.f32 %v1561, %v1609
        %v1611 = vpop.f32.mrb[0].mxu0
        %1612 = vdwg.mxu0
        %v1613 = vadd.f32 %v930, %v1599
        %v1614 = vadd.f32 %v931, %v1602
        %v1615 = vadd.f32 %v932, %v1607
        %v1616 = vadd.f32 %v933, %v1610
        %v1617 = vmax.f32 %v1613, 0.0
        %v1618 = vmax.f32 %v1614, 0.0
        %v1619 = vmax.f32 %v1615, 0.0
        %v1620 = vmax.f32 %v1616, 0.0
        %1621 = vrot.lane.b32.xlu0 %v1617, 16
        %v1622 = vpop.permute.xlu0 %1621
        %1623 = vrot.lane.b32.xlu0 %v1618, 16
        %v1624 = vpop.permute.xlu0 %1623
        %1625 = vrot.lane.b32.xlu0 %v1619, 16
        %v1626 = vpop.permute.xlu0 %1625
        %1627 = vrot.lane.b32.xlu0 %v1620, 16
        %v1628 = vpop.permute.xlu0 %1627
        %v1629 = vsel %vm231, %v1622, -inf
        %v1630 = vsel %vm231, %v1624, -inf
        %v1631 = vsel %vm231, %v1626, -inf
        %v1632 = vsel %vm231, %v1628, -inf
        %v1633 = vmax.f32 %v1617, %v1629
        %v1634 = vmax.f32 %v1618, %v1630
        %v1635 = vmax.f32 %v1619, %v1631
        %v1636 = vmax.f32 %v1620, %v1632
        %1637 = vrot.lane.b32.xlu0 %v1617, 8
        %v1638 = vpop.permute.xlu0 %1637
        %1639 = vrot.lane.b32.xlu0 %v1618, 8
        %v1640 = vpop.permute.xlu0 %1639
        %1641 = vrot.lane.b32.xlu0 %v1619, 8
        %v1642 = vpop.permute.xlu0 %1641
        %1643 = vrot.lane.b32.xlu0 %v1620, 8
        %v1644 = vpop.permute.xlu0 %1643
        %v1645 = vsel %vm232, %v1638, -inf
        %v1646 = vsel %vm232, %v1640, -inf
        %v1647 = vsel %vm232, %v1642, -inf
        %v1648 = vsel %vm232, %v1644, -inf
        %v1649 = vmax.f32 %v1633, %v1645
        %v1650 = vmax.f32 %v1634, %v1646
        %v1651 = vmax.f32 %v1635, %v1647
        %v1652 = vmax.f32 %v1636, %v1648
        %1653 = vrot.lane.b32.xlu0 %v1617, 120
        %v1654 = vpop.permute.xlu0 %1653
        %1655 = vrot.lane.b32.xlu0 %v1618, 120
        %v1656 = vpop.permute.xlu0 %1655
        %1657 = vrot.lane.b32.xlu0 %v1619, 120
        %v1658 = vpop.permute.xlu0 %1657
        %1659 = vrot.lane.b32.xlu0 %v1620, 120
        %v1660 = vpop.permute.xlu0 %1659
        %v1661 = vsel %vm233, %v1654, -inf
        %v1662 = vsel %vm233, %v1656, -inf
        %v1663 = vsel %vm233, %v1658, -inf
        %v1664 = vsel %vm233, %v1660, -inf
        %v1665 = vmax.f32 %v1649, %v1661
        %v1666 = vmax.f32 %v1650, %v1662
        %v1667 = vmax.f32 %v1651, %v1663
        %v1668 = vmax.f32 %v1652, %v1664
        %1669 = vrot.lane.b32.xlu0 %v1617, 112
        %v1670 = vpop.permute.xlu0 %1669
        %1671 = vrot.lane.b32.xlu0 %v1618, 112
        %v1672 = vpop.permute.xlu0 %1671
        %1673 = vrot.lane.b32.xlu0 %v1619, 112
        %v1674 = vpop.permute.xlu0 %1673
        %1675 = vrot.lane.b32.xlu0 %v1620, 112
        %v1676 = vpop.permute.xlu0 %1675
        %v1677 = vsel %vm234, %v1670, -inf
        %v1678 = vsel %vm234, %v1672, -inf
        %v1679 = vsel %vm234, %v1674, -inf
        %v1680 = vsel %vm234, %v1676, -inf
        %v1681 = vmax.f32 %v1665, %v1677
        %v1682 = vmax.f32 %v1666, %v1678
        %v1683 = vmax.f32 %v1667, %v1679
        %v1684 = vmax.f32 %v1668, %v1680
        %1685 = vst [vmem:[#allocation3 + $0x2] sm:$0xff] %v1681
        %1686 = vst [vmem:[#allocation3 + $0xa] sm:$0xff] %v1682
        %1687 = vst [vmem:[#allocation3 + $0x16] sm:$0xff] %v1683
        %1688 = vst [vmem:[#allocation3 + $0x1e] sm:$0xff] %v1684
        %v1689 = vld [vmem:[#allocation3] sm:$0xff]
        %v1690 = vld [vmem:[#allocation3 + $0x8] sm:$0xff]
        %v1691 = vld [vmem:[#allocation3 + $0x1] sm:$0xff]
        %v1692 = vld [vmem:[#allocation3 + $0x9] sm:$0xff]
        %v1693 = vmax.f32 %v1689, %v1691
        %v1694 = vmax.f32 %v1690, %v1692
        %v1695 = vld [vmem:[#allocation3 + $0x2] sm:$0xff]
        %v1696 = vld [vmem:[#allocation3 + $0xa] sm:$0xff]
        %v1697 = vmax.f32 %v1693, %v1695
        %v1698 = vmax.f32 %v1694, %v1696
        %v1699 = vld [vmem:[#allocation3 + $0x3] sm:$0xff]
        %v1700 = vld [vmem:[#allocation3 + $0xb] sm:$0xff]
        %v1701 = vmax.f32 %v1697, %v1699
        %v1702 = vmax.f32 %v1698, %v1700
        %v1703 = vld [vmem:[#allocation3 + $0x4] sm:$0xff]
        %v1704 = vld [vmem:[#allocation3 + $0xc] sm:$0xff]
        %v1705 = vmax.f32 %v1701, %v1703
        %v1706 = vmax.f32 %v1702, %v1704
        %v1707 = vld [vmem:[#allocation3 + $0x14] sm:$0xff]
        %v1708 = vld [vmem:[#allocation3 + $0x1c] sm:$0xff]
        %v1709 = vld [vmem:[#allocation3 + $0x15] sm:$0xff]
        %v1710 = vld [vmem:[#allocation3 + $0x1d] sm:$0xff]
        %v1711 = vmax.f32 %v1707, %v1709
        %v1712 = vmax.f32 %v1708, %v1710
        %v1713 = vld [vmem:[#allocation3 + $0x16] sm:$0xff]
        %v1714 = vld [vmem:[#allocation3 + $0x1e] sm:$0xff]
        %v1715 = vmax.f32 %v1711, %v1713
        %v1716 = vmax.f32 %v1712, %v1714
        %v1717 = vld [vmem:[#allocation3 + $0x17] sm:$0xff]
        %v1718 = vld [vmem:[#allocation3 + $0x1f] sm:$0xff]
        %v1719 = vmax.f32 %v1715, %v1717
        %v1720 = vmax.f32 %v1716, %v1718
        %v1721 = vld [vmem:[#allocation3 + $0x18] sm:$0xff]
        %v1722 = vld [vmem:[#allocation3 + $0x20] sm:$0xff]
        %v1723 = vmax.f32 %v1719, %v1721
        %v1724 = vmax.f32 %v1720, %v1722
        %v1725 = vpack.c.bf16 %v1706, %v1705
        %v1726 = vpack.c.bf16 %v1724, %v1723
        %1727 = vst [vmem:[#allocation2 + $0x8] sm:$0xff] %v1725
        %1728 = vst [vmem:[#allocation2 + $0x20] sm:$0xff] %v1726
        %v1730 = vshrl.u32 %v1725, 16
        %v1732 = vrot.slane %v1730, 7
        %v1733 = vshll.u32 %v1725, 16
        %v1735 = vor.u32 %v1732, %v1733
        %v1737 = vld [vmem:[#allocation2] sm:$0xff]
        %v1738 = vsel %vm257, %v1735, %v1737
        %1739 = vst [vmem:[#allocation2] sm:$0xff] %v1738
        %v1740 = vrot.slane %v1733, 1
        %v1741 = vor.u32 %v1730, %v1740
        %v1743 = vld [vmem:[#allocation2 + $0x10] sm:$0xff]
        %v1744 = vsel %vm265, %v1741, %v1743
        %1745 = vst [vmem:[#allocation2 + $0x10] sm:$0xff] %v1744
        %v1747 = vshrl.u32 %v1726, 16
        %v1749 = vrot.slane %v1747, 7
        %v1750 = vshll.u32 %v1726, 16
        %v1752 = vor.u32 %v1749, %v1750
        %v1754 = vld [vmem:[#allocation2 + $0x18] sm:$0xff]
        %v1755 = vsel %vm257, %v1752, %v1754
        %1756 = vst [vmem:[#allocation2 + $0x18] sm:$0xff] %v1755
        %v1757 = vrot.slane %v1750, 1
        %v1758 = vor.u32 %v1747, %v1757
        %v1760 = vld [vmem:[#allocation2 + $0x28] sm:$0xff]
        %v1761 = vsel %vm265, %v1758, %v1760
        %1762 = vst [vmem:[#allocation2 + $0x28] sm:$0xff] %v1761
        %v1763 = vld [vmem:[#allocation2] sm:$0xff]
        %v1764 = vld [vmem:[#allocation2 + $0x8] sm:$0xff]
        %v1765 = vld [vmem:[#allocation2 + $0x10] sm:$0xff]
        %v1766 = vld [vmem:[#allocation2 + $0x18] sm:$0xff]
        %v1767 = vld [vmem:[#allocation2 + $0x20] sm:$0xff]
        %v1768 = vld [vmem:[#allocation2 + $0x28] sm:$0xff]
        %s1769 = scalar_lea.vmem [#allocation7], 768
        %v1770 = vld [vmem:[%s1769] sm:$0xf]
        %v1771 = vld [vmem:[%s1769 + $0x4] sm:$0xf]
        %v1772 = vld [vmem:[%s1769 + $0x8] sm:$0xf]
        %v1773 = vld [vmem:[%s1769 + $0xc] sm:$0xf]
        %v1774 = vld [vmem:[%s1769 + $0x10] sm:$0xf]
        %v1775 = vld [vmem:[%s1769 + $0x14] sm:$0xf]
        %v1776 = vld [vmem:[%s1769 + $0x18] sm:$0xf]
        %v1777 = vld [vmem:[%s1769 + $0x1c] sm:$0xf]
        %v1778 = vld [vmem:[%s1769 + $0x20] sm:$0xf]
        %v1779 = vld [vmem:[%s1769 + $0x24] sm:$0xf]
        %v1780 = vld [vmem:[%s1769 + $0x28] sm:$0xf]
        %v1781 = vld [vmem:[%s1769 + $0x2c] sm:$0xf]
        %v1782 = vld [vmem:[%s1769 + $0x30] sm:$0xf]
        %v1783 = vld [vmem:[%s1769 + $0x34] sm:$0xf]
        %v1784 = vld [vmem:[%s1769 + $0x38] sm:$0xf]
        %v1785 = vld [vmem:[%s1769 + $0x3c] sm:$0xf]
        %v1786 = vld [vmem:[%s1769 + $0x40] sm:$0xf]
        %v1787 = vld [vmem:[%s1769 + $0x44] sm:$0xf]
        %v1788 = vld [vmem:[%s1769 + $0x48] sm:$0xf]
        %v1789 = vld [vmem:[%s1769 + $0x4c] sm:$0xf]
        %v1790 = vld [vmem:[%s1769 + $0x50] sm:$0xf]
        %v1791 = vld [vmem:[%s1769 + $0x54] sm:$0xf]
        %v1792 = vld [vmem:[%s1769 + $0x58] sm:$0xf]
        %v1793 = vld [vmem:[%s1769 + $0x5c] sm:$0xf]
        %v1794 = vld [vmem:[%s1769 + $0x60] sm:$0xf]
        %v1795 = vld [vmem:[%s1769 + $0x64] sm:$0xf]
        %v1796 = vld [vmem:[%s1769 + $0x68] sm:$0xf]
        %v1797 = vld [vmem:[%s1769 + $0x6c] sm:$0xf]
        %v1798 = vld [vmem:[%s1769 + $0x70] sm:$0xf]
        %v1799 = vld [vmem:[%s1769 + $0x74] sm:$0xf]
        %v1800 = vld [vmem:[%s1769 + $0x78] sm:$0xf]
        %v1801 = vld [vmem:[%s1769 + $0x7c] sm:$0xf]
        %v1802 = vld [vmem:[%s1769 + $0x80] sm:$0xf]
        %v1803 = vld [vmem:[%s1769 + $0x84] sm:$0xf]
        %v1804 = vld [vmem:[%s1769 + $0x88] sm:$0xf]
        %v1805 = vld [vmem:[%s1769 + $0x8c] sm:$0xf]
        %v1806 = vld [vmem:[%s1769 + $0x90] sm:$0xf]
        %v1807 = vld [vmem:[%s1769 + $0x94] sm:$0xf]
        %v1808 = vld [vmem:[%s1769 + $0x98] sm:$0xf]
        %v1809 = vld [vmem:[%s1769 + $0x9c] sm:$0xf]
        %v1810 = vld [vmem:[%s1769 + $0xa0] sm:$0xf]
        %v1811 = vld [vmem:[%s1769 + $0xa4] sm:$0xf]
        %v1812 = vld [vmem:[%s1769 + $0xa8] sm:$0xf]
        %v1813 = vld [vmem:[%s1769 + $0xac] sm:$0xf]
        %v1814 = vld [vmem:[%s1769 + $0xb0] sm:$0xf]
        %v1815 = vld [vmem:[%s1769 + $0xb4] sm:$0xf]
        %v1816 = vld [vmem:[%s1769 + $0xb8] sm:$0xf]
        %v1817 = vld [vmem:[%s1769 + $0xbc] sm:$0xf]
        %v1866 = vunpack.c.l.b16 %v1770
        %v1867 = vunpack.c.l.b16 %v1771
        %v1868 = vunpack.c.l.b16 %v1772
        %v1869 = vunpack.c.l.b16 %v1773
        %v1870 = vunpack.c.l.b16 %v1774
        %v1871 = vunpack.c.l.b16 %v1775
        %v1872 = vunpack.c.l.b16 %v1776
        %v1873 = vunpack.c.l.b16 %v1777
        %v1874 = vunpack.c.l.b16 %v1778
        %v1875 = vunpack.c.l.b16 %v1779
        %v1876 = vunpack.c.l.b16 %v1780
        %v1877 = vunpack.c.l.b16 %v1781
        %v1878 = vunpack.c.l.b16 %v1782
        %v1879 = vunpack.c.l.b16 %v1783
        %v1880 = vunpack.c.l.b16 %v1784
        %v1881 = vunpack.c.l.b16 %v1785
        %v1882 = vunpack.c.l.b16 %v1786
        %v1883 = vunpack.c.l.b16 %v1787
        %v1884 = vunpack.c.l.b16 %v1788
        %v1885 = vunpack.c.l.b16 %v1789
        %v1886 = vunpack.c.l.b16 %v1790
        %v1887 = vunpack.c.l.b16 %v1791
        %v1888 = vunpack.c.l.b16 %v1792
        %v1889 = vunpack.c.l.b16 %v1793
        %v1890 = vunpack.c.l.b16 %v1794
        %v1891 = vunpack.c.l.b16 %v1795
        %v1892 = vunpack.c.l.b16 %v1796
        %v1893 = vunpack.c.l.b16 %v1797
        %v1894 = vunpack.c.l.b16 %v1798
        %v1895 = vunpack.c.l.b16 %v1799
        %v1896 = vunpack.c.l.b16 %v1800
        %v1897 = vunpack.c.l.b16 %v1801
        %v1898 = vunpack.c.l.b16 %v1802
        %v1899 = vunpack.c.l.b16 %v1803
        %v1900 = vunpack.c.l.b16 %v1804
        %v1901 = vunpack.c.l.b16 %v1805
        %v1902 = vunpack.c.l.b16 %v1806
        %v1903 = vunpack.c.l.b16 %v1807
        %v1904 = vunpack.c.l.b16 %v1808
        %v1905 = vunpack.c.l.b16 %v1809
        %v1906 = vunpack.c.l.b16 %v1810
        %v1907 = vunpack.c.l.b16 %v1811
        %v1908 = vunpack.c.l.b16 %v1812
        %v1909 = vunpack.c.l.b16 %v1813
        %v1910 = vunpack.c.l.b16 %v1814
        %v1911 = vunpack.c.l.b16 %v1815
        %v1912 = vunpack.c.l.b16 %v1816
        %v1913 = vunpack.c.l.b16 %v1817
        %v1914 = vpack.c.b16 %v1867, %v1866
        %v1915 = vpack.c.b16 %v1869, %v1868
        %v1916 = vpack.c.b16 %v1871, %v1870
        %v1917 = vpack.c.b16 %v1873, %v1872
        %v1918 = vpack.c.b16 %v1875, %v1874
        %v1919 = vpack.c.b16 %v1877, %v1876
        %v1920 = vpack.c.b16 %v1879, %v1878
        %v1921 = vpack.c.b16 %v1881, %v1880
        %v1922 = vpack.c.b16 %v1883, %v1882
        %v1923 = vpack.c.b16 %v1885, %v1884
        %v1924 = vpack.c.b16 %v1887, %v1886
        %v1925 = vpack.c.b16 %v1889, %v1888
        %v1926 = vpack.c.b16 %v1891, %v1890
        %v1927 = vpack.c.b16 %v1893, %v1892
        %v1928 = vpack.c.b16 %v1895, %v1894
        %v1929 = vpack.c.b16 %v1897, %v1896
        %v1930 = vpack.c.b16 %v1899, %v1898
        %v1931 = vpack.c.b16 %v1901, %v1900
        %v1932 = vpack.c.b16 %v1903, %v1902
        %v1933 = vpack.c.b16 %v1905, %v1904
        %v1934 = vpack.c.b16 %v1907, %v1906
        %v1935 = vpack.c.b16 %v1909, %v1908
        %v1936 = vpack.c.b16 %v1911, %v1910
        %v1937 = vpack.c.b16 %v1913, %v1912
        %1962 = vmatprep.subr.bf16.mxu0 0
        %1963 = vmatpush1.bf16.msra.mxu0 %v1914
        %1964 = vmatprep.subr.bf16.mxu0 0
        %1965 = vmatpush1.bf16.msra.mxu0 %v1915
        %1966 = vmatprep.subr.bf16.mxu0 0
        %1967 = vmatpush1.bf16.msra.mxu0 %v1916
        %1968 = vmatprep.subr.bf16.mxu0 0
        %1969 = vmatpush1.bf16.msra.mxu0 %v1917
        %1970 = vmatprep.subr.bf16.mxu0 0
        %1971 = vmatpush1.bf16.msra.mxu0 %v1918
        %1972 = vmatprep.subr.bf16.mxu0 0
        %1973 = vmatpush1.bf16.msra.mxu0 %v1919
        %1974 = vmatprep.subr.bf16.mxu0 0
        %1975 = vmatpush1.bf16.msra.mxu0 %v1920
        %1976 = vmatprep.subr.bf16.mxu0 0
        %1977 = vmatpush1.bf16.msra.mxu0 %v1921
        %1978 = vmatprep.subr.bf16.mxu0 0
        %1979 = vmatpush1.bf16.msra.mxu0 %v1922
        %1980 = vmatprep.subr.bf16.mxu0 0
        %1981 = vmatpush1.bf16.msra.mxu0 %v1923
        %1982 = vmatprep.subr.bf16.mxu0 0
        %1983 = vmatpush1.bf16.msra.mxu0 %v1924
        %1984 = vmatprep.subr.bf16.mxu0 0
        %1985 = vmatpush1.bf16.msra.mxu0 %v1925
        %1986 = vmatprep.subr.bf16.mxu0 0
        %1987 = vmatpush1.bf16.msra.mxu0 %v1926
        %1988 = vmatprep.subr.bf16.mxu0 0
        %1989 = vmatpush1.bf16.msra.mxu0 %v1927
        %1990 = vmatprep.subr.bf16.mxu0 0
        %1991 = vmatpush1.bf16.msra.mxu0 %v1928
        %1992 = vmatprep.subr.bf16.mxu0 0
        %1993 = vmatpush1.bf16.msra.mxu0 %v1929
        %1994 = vmatprep.mubr.bf16.mxu0 %v1764
        %1995 = vmatmul.mubr.bf16.gmra.mrb[0].mxu0 %v1763
        %v1996 = vpop.f32.mrb[0].mxu0
        %v1997 = vadd.f32 0.0, %v1996
        %v1998 = vpop.f32.mrb[0].mxu0
        %v1999 = vpop.f32.mrb[0].mxu0
        %v2000 = vadd.f32 0.0, %v1999
        %v2001 = vpop.f32.mrb[0].mxu0
        %2002 = vmatprep.mubr.bf16.mxu0 %v1767
        %2003 = vmatmul.mubr.bf16.gmra.mrb[0].mxu0 %v1766
        %v2004 = vpop.f32.mrb[0].mxu0
        %v2005 = vadd.f32 0.0, %v2004
        %v2006 = vpop.f32.mrb[0].mxu0
        %v2007 = vpop.f32.mrb[0].mxu0
        %v2008 = vadd.f32 0.0, %v2007
        %v2009 = vpop.f32.mrb[0].mxu0
        %2010 = vdwg.mxu0
        %2011 = vmatprep.subr.bf16.mxu0 0
        %2012 = vmatpush1.bf16.msra.mxu0 %v1930
        %2013 = vmatprep.subr.bf16.mxu0 0
        %2014 = vmatpush1.bf16.msra.mxu0 %v1931
        %2015 = vmatprep.subr.bf16.mxu0 0
        %2016 = vmatpush1.bf16.msra.mxu0 %v1932
        %2017 = vmatprep.subr.bf16.mxu0 0
        %2018 = vmatpush1.bf16.msra.mxu0 %v1933
        %2019 = vmatprep.subr.bf16.mxu0 0
        %2020 = vmatpush1.bf16.msra.mxu0 %v1934
        %2021 = vmatprep.subr.bf16.mxu0 0
        %2022 = vmatpush1.bf16.msra.mxu0 %v1935
        %2023 = vmatprep.subr.bf16.mxu0 0
        %2024 = vmatpush1.bf16.msra.mxu0 %v1936
        %2025 = vmatprep.subr.bf16.mxu0 0
        %2026 = vmatpush1.bf16.msra.mxu0 %v1937
        %2027 = vmatprep.subr.bf16.mxu0 0
        %2028 = vmatpush1.bf16.msra.mxu0 0
        %2029 = vmatprep.subr.bf16.mxu0 0
        %2030 = vmatpush1.bf16.msra.mxu0 0
        %2031 = vmatprep.subr.bf16.mxu0 0
        %2032 = vmatpush1.bf16.msra.mxu0 0
        %2033 = vmatprep.subr.bf16.mxu0 0
        %2034 = vmatpush1.bf16.msra.mxu0 0
        %2035 = vmatprep.subr.bf16.mxu0 0
        %2036 = vmatpush1.bf16.msra.mxu0 0
        %2037 = vmatprep.subr.bf16.mxu0 0
        %2038 = vmatpush1.bf16.msra.mxu0 0
        %2039 = vmatprep.subr.bf16.mxu0 0
        %2040 = vmatpush1.bf16.msra.mxu0 0
        %2041 = vmatprep.subr.bf16.mxu0 0
        %2042 = vmatpush1.bf16.msra.mxu0 0
        %2043 = vmatprep.mubr.bf16.mxu0 0
        %2044 = vmatmul.mubr.bf16.gmra.mrb[0].mxu0 %v1765
        %v2045 = vpop.f32.mrb[0].mxu0
        %v2046 = vadd.f32 %v1997, %v2045
        %v2047 = vpop.f32.mrb[0].mxu0
        %v2048 = vpop.f32.mrb[0].mxu0
        %v2049 = vadd.f32 %v2000, %v2048
        %v2050 = vpop.f32.mrb[0].mxu0
        %2051 = vmatprep.mubr.bf16.mxu0 0
        %2052 = vmatmul.mubr.bf16.gmra.mrb[0].mxu0 %v1768
        %v2053 = vpop.f32.mrb[0].mxu0
        %v2054 = vadd.f32 %v2005, %v2053
        %v2055 = vpop.f32.mrb[0].mxu0
        %v2056 = vpop.f32.mrb[0].mxu0
        %v2057 = vadd.f32 %v2008, %v2056
        %v2058 = vpop.f32.mrb[0].mxu0
        %2059 = vdwg.mxu0
        %v2060 = vadd.f32 %v1617, %v2046
        %v2061 = vadd.f32 %v1618, %v2049
        %v2062 = vadd.f32 %v1619, %v2054
        %v2063 = vadd.f32 %v1620, %v2057
        %2064 = vrot.lane.b32.xlu0 %v2046, 16
        %v2065 = vpop.permute.xlu0 %2064
        %2066 = vrot.lane.b32.xlu0 %v2049, 16
        %v2067 = vpop.permute.xlu0 %2066
        %2068 = vrot.lane.b32.xlu0 %v2054, 16
        %v2069 = vpop.permute.xlu0 %2068
        %2070 = vrot.lane.b32.xlu0 %v2057, 16
        %v2071 = vpop.permute.xlu0 %2070
        %v2072 = vsel %vm231, %v2065, -inf
        %v2073 = vsel %vm231, %v2067, -inf
        %v2074 = vsel %vm231, %v2069, -inf
        %v2075 = vsel %vm231, %v2071, -inf
        %v2076 = vmax.f32 %v2046, %v2072
        %v2077 = vmax.f32 %v2049, %v2073
        %v2078 = vmax.f32 %v2054, %v2074
        %v2079 = vmax.f32 %v2057, %v2075
        %2080 = vrot.lane.b32.xlu0 %v2046, 8
        %v2081 = vpop.permute.xlu0 %2080
        %2082 = vrot.lane.b32.xlu0 %v2049, 8
        %v2083 = vpop.permute.xlu0 %2082
        %2084 = vrot.lane.b32.xlu0 %v2054, 8
        %v2085 = vpop.permute.xlu0 %2084
        %2086 = vrot.lane.b32.xlu0 %v2057, 8
        %v2087 = vpop.permute.xlu0 %2086
        %v2088 = vsel %vm232, %v2081, -inf
        %v2089 = vsel %vm232, %v2083, -inf
        %v2090 = vsel %vm232, %v2085, -inf
        %v2091 = vsel %vm232, %v2087, -inf
        %v2092 = vmax.f32 %v2076, %v2088
        %v2093 = vmax.f32 %v2077, %v2089
        %v2094 = vmax.f32 %v2078, %v2090
        %v2095 = vmax.f32 %v2079, %v2091
        %2096 = vrot.lane.b32.xlu0 %v2046, 120
        %v2097 = vpop.permute.xlu0 %2096
        %2098 = vrot.lane.b32.xlu0 %v2049, 120
        %v2099 = vpop.permute.xlu0 %2098
        %2100 = vrot.lane.b32.xlu0 %v2054, 120
        %v2101 = vpop.permute.xlu0 %2100
        %2102 = vrot.lane.b32.xlu0 %v2057, 120
        %v2103 = vpop.permute.xlu0 %2102
        %v2104 = vsel %vm233, %v2097, -inf
        %v2105 = vsel %vm233, %v2099, -inf
        %v2106 = vsel %vm233, %v2101, -inf
        %v2107 = vsel %vm233, %v2103, -inf
        %v2108 = vmax.f32 %v2092, %v2104
        %v2109 = vmax.f32 %v2093, %v2105
        %v2110 = vmax.f32 %v2094, %v2106
        %v2111 = vmax.f32 %v2095, %v2107
        %2112 = vrot.lane.b32.xlu0 %v2046, 112
        %v2113 = vpop.permute.xlu0 %2112
        %2114 = vrot.lane.b32.xlu0 %v2049, 112
        %v2115 = vpop.permute.xlu0 %2114
        %2116 = vrot.lane.b32.xlu0 %v2054, 112
        %v2117 = vpop.permute.xlu0 %2116
        %2118 = vrot.lane.b32.xlu0 %v2057, 112
        %v2119 = vpop.permute.xlu0 %2118
        %v2120 = vsel %vm234, %v2113, -inf
        %v2121 = vsel %vm234, %v2115, -inf
        %v2122 = vsel %vm234, %v2117, -inf
        %v2123 = vsel %vm234, %v2119, -inf
        %v2124 = vmax.f32 %v2108, %v2120
        %v2125 = vmax.f32 %v2109, %v2121
        %v2126 = vmax.f32 %v2110, %v2122
        %v2127 = vmax.f32 %v2111, %v2123
        %2128 = vst [vmem:[#allocation3 + $0x2] sm:$0xff] %v2124
        %2129 = vst [vmem:[#allocation3 + $0xa] sm:$0xff] %v2125
        %2130 = vst [vmem:[#allocation3 + $0x16] sm:$0xff] %v2126
        %2131 = vst [vmem:[#allocation3 + $0x1e] sm:$0xff] %v2127
        %v2132 = vld [vmem:[#allocation3] sm:$0xff]
        %v2133 = vld [vmem:[#allocation3 + $0x8] sm:$0xff]
        %v2134 = vld [vmem:[#allocation3 + $0x1] sm:$0xff]
        %v2135 = vld [vmem:[#allocation3 + $0x9] sm:$0xff]
        %v2136 = vmax.f32 %v2132, %v2134
        %v2137 = vmax.f32 %v2133, %v2135
        %v2138 = vld [vmem:[#allocation3 + $0x2] sm:$0xff]
        %v2139 = vld [vmem:[#allocation3 + $0xa] sm:$0xff]
        %v2140 = vmax.f32 %v2136, %v2138
        %v2141 = vmax.f32 %v2137, %v2139
        %v2142 = vld [vmem:[#allocation3 + $0x3] sm:$0xff]
        %v2143 = vld [vmem:[#allocation3 + $0xb] sm:$0xff]
        %v2144 = vmax.f32 %v2140, %v2142
        %v2145 = vmax.f32 %v2141, %v2143
        %v2146 = vld [vmem:[#allocation3 + $0x4] sm:$0xff]
        %v2147 = vld [vmem:[#allocation3 + $0xc] sm:$0xff]
        %v2148 = vmax.f32 %v2144, %v2146
        %v2149 = vmax.f32 %v2145, %v2147
        %v2150 = vld [vmem:[#allocation3 + $0x14] sm:$0xff]
        %v2151 = vld [vmem:[#allocation3 + $0x1c] sm:$0xff]
        %v2152 = vld [vmem:[#allocation3 + $0x15] sm:$0xff]
        %v2153 = vld [vmem:[#allocation3 + $0x1d] sm:$0xff]
        %v2154 = vmax.f32 %v2150, %v2152
        %v2155 = vmax.f32 %v2151, %v2153
        %v2156 = vld [vmem:[#allocation3 + $0x16] sm:$0xff]
        %v2157 = vld [vmem:[#allocation3 + $0x1e] sm:$0xff]
        %v2158 = vmax.f32 %v2154, %v2156
        %v2159 = vmax.f32 %v2155, %v2157
        %v2160 = vld [vmem:[#allocation3 + $0x17] sm:$0xff]
        %v2161 = vld [vmem:[#allocation3 + $0x1f] sm:$0xff]
        %v2162 = vmax.f32 %v2158, %v2160
        %v2163 = vmax.f32 %v2159, %v2161
        %v2164 = vld [vmem:[#allocation3 + $0x18] sm:$0xff]
        %v2165 = vld [vmem:[#allocation3 + $0x20] sm:$0xff]
        %v2166 = vmax.f32 %v2162, %v2164
        %v2167 = vmax.f32 %v2163, %v2165
        %v2168 = vpack.c.bf16 %v2149, %v2148
        %v2169 = vpack.c.bf16 %v2167, %v2166
        %2170 = vst [vmem:[#allocation2 + $0x8] sm:$0xff] %v2168
        %2171 = vst [vmem:[#allocation2 + $0x20] sm:$0xff] %v2169
        %v2173 = vshrl.u32 %v2168, 16
        %v2175 = vrot.slane %v2173, 7
        %v2176 = vshll.u32 %v2168, 16
        %v2178 = vor.u32 %v2175, %v2176
        %v2180 = vld [vmem:[#allocation2] sm:$0xff]
        %v2181 = vsel %vm257, %v2178, %v2180
        %2182 = vst [vmem:[#allocation2] sm:$0xff] %v2181
        %v2183 = vrot.slane %v2176, 1
        %v2184 = vor.u32 %v2173, %v2183
        %v2186 = vld [vmem:[#allocation2 + $0x10] sm:$0xff]
        %v2187 = vsel %vm265, %v2184, %v2186
        %2188 = vst [vmem:[#allocation2 + $0x10] sm:$0xff] %v2187
        %v2190 = vshrl.u32 %v2169, 16
        %v2192 = vrot.slane %v2190, 7
        %v2193 = vshll.u32 %v2169, 16
        %v2195 = vor.u32 %v2192, %v2193
        %v2197 = vld [vmem:[#allocation2 + $0x18] sm:$0xff]
        %v2198 = vsel %vm257, %v2195, %v2197
        %2199 = vst [vmem:[#allocation2 + $0x18] sm:$0xff] %v2198
        %v2200 = vrot.slane %v2193, 1
        %v2201 = vor.u32 %v2190, %v2200
        %v2203 = vld [vmem:[#allocation2 + $0x28] sm:$0xff]
        %v2204 = vsel %vm265, %v2201, %v2203
        %2205 = vst [vmem:[#allocation2 + $0x28] sm:$0xff] %v2204
        %v2206 = vld [vmem:[#allocation2] sm:$0xff]
        %v2207 = vld [vmem:[#allocation2 + $0x8] sm:$0xff]
        %v2208 = vld [vmem:[#allocation2 + $0x10] sm:$0xff]
        %v2209 = vld [vmem:[#allocation2 + $0x18] sm:$0xff]
        %v2210 = vld [vmem:[#allocation2 + $0x20] sm:$0xff]
        %v2211 = vld [vmem:[#allocation2 + $0x28] sm:$0xff]
        %s2212 = scalar_lea.vmem [#allocation7], 960
        %v2213 = vld [vmem:[%s2212] sm:$0xf]
        %v2214 = vld [vmem:[%s2212 + $0x4] sm:$0xf]
        %v2215 = vld [vmem:[%s2212 + $0x8] sm:$0xf]
        %v2216 = vld [vmem:[%s2212 + $0xc] sm:$0xf]
        %v2217 = vld [vmem:[%s2212 + $0x10] sm:$0xf]
        %v2218 = vld [vmem:[%s2212 + $0x14] sm:$0xf]
        %v2219 = vld [vmem:[%s2212 + $0x18] sm:$0xf]
        %v2220 = vld [vmem:[%s2212 + $0x1c] sm:$0xf]
        %v2221 = vld [vmem:[%s2212 + $0x20] sm:$0xf]
        %v2222 = vld [vmem:[%s2212 + $0x24] sm:$0xf]
        %v2223 = vld [vmem:[%s2212 + $0x28] sm:$0xf]
        %v2224 = vld [vmem:[%s2212 + $0x2c] sm:$0xf]
        %v2225 = vld [vmem:[%s2212 + $0x30] sm:$0xf]
        %v2226 = vld [vmem:[%s2212 + $0x34] sm:$0xf]
        %v2227 = vld [vmem:[%s2212 + $0x38] sm:$0xf]
        %v2228 = vld [vmem:[%s2212 + $0x3c] sm:$0xf]
        %v2229 = vld [vmem:[%s2212 + $0x40] sm:$0xf]
        %v2230 = vld [vmem:[%s2212 + $0x44] sm:$0xf]
        %v2231 = vld [vmem:[%s2212 + $0x48] sm:$0xf]
        %v2232 = vld [vmem:[%s2212 + $0x4c] sm:$0xf]
        %v2233 = vld [vmem:[%s2212 + $0x50] sm:$0xf]
        %v2234 = vld [vmem:[%s2212 + $0x54] sm:$0xf]
        %v2235 = vld [vmem:[%s2212 + $0x58] sm:$0xf]
        %v2236 = vld [vmem:[%s2212 + $0x5c] sm:$0xf]
        %v2237 = vld [vmem:[%s2212 + $0x60] sm:$0xf]
        %v2238 = vld [vmem:[%s2212 + $0x64] sm:$0xf]
        %v2239 = vld [vmem:[%s2212 + $0x68] sm:$0xf]
        %v2240 = vld [vmem:[%s2212 + $0x6c] sm:$0xf]
        %v2241 = vld [vmem:[%s2212 + $0x70] sm:$0xf]
        %v2242 = vld [vmem:[%s2212 + $0x74] sm:$0xf]
        %v2243 = vld [vmem:[%s2212 + $0x78] sm:$0xf]
        %v2244 = vld [vmem:[%s2212 + $0x7c] sm:$0xf]
        %v2245 = vld [vmem:[%s2212 + $0x80] sm:$0xf]
        %v2246 = vld [vmem:[%s2212 + $0x84] sm:$0xf]
        %v2247 = vld [vmem:[%s2212 + $0x88] sm:$0xf]
        %v2248 = vld [vmem:[%s2212 + $0x8c] sm:$0xf]
        %v2249 = vld [vmem:[%s2212 + $0x90] sm:$0xf]
        %v2250 = vld [vmem:[%s2212 + $0x94] sm:$0xf]
        %v2251 = vld [vmem:[%s2212 + $0x98] sm:$0xf]
        %v2252 = vld [vmem:[%s2212 + $0x9c] sm:$0xf]
        %v2253 = vld [vmem:[%s2212 + $0xa0] sm:$0xf]
        %v2254 = vld [vmem:[%s2212 + $0xa4] sm:$0xf]
        %v2255 = vld [vmem:[%s2212 + $0xa8] sm:$0xf]
        %v2256 = vld [vmem:[%s2212 + $0xac] sm:$0xf]
        %v2257 = vld [vmem:[%s2212 + $0xb0] sm:$0xf]
        %v2258 = vld [vmem:[%s2212 + $0xb4] sm:$0xf]
        %v2259 = vld [vmem:[%s2212 + $0xb8] sm:$0xf]
        %v2260 = vld [vmem:[%s2212 + $0xbc] sm:$0xf]
        %v2309 = vunpack.c.l.b16 %v2213
        %v2310 = vunpack.c.l.b16 %v2214
        %v2311 = vunpack.c.l.b16 %v2215
        %v2312 = vunpack.c.l.b16 %v2216
        %v2313 = vunpack.c.l.b16 %v2217
        %v2314 = vunpack.c.l.b16 %v2218
        %v2315 = vunpack.c.l.b16 %v2219
        %v2316 = vunpack.c.l.b16 %v2220
        %v2317 = vunpack.c.l.b16 %v2221
        %v2318 = vunpack.c.l.b16 %v2222
        %v2319 = vunpack.c.l.b16 %v2223
        %v2320 = vunpack.c.l.b16 %v2224
        %v2321 = vunpack.c.l.b16 %v2225
        %v2322 = vunpack.c.l.b16 %v2226
        %v2323 = vunpack.c.l.b16 %v2227
        %v2324 = vunpack.c.l.b16 %v2228
        %v2325 = vunpack.c.l.b16 %v2229
        %v2326 = vunpack.c.l.b16 %v2230
        %v2327 = vunpack.c.l.b16 %v2231
        %v2328 = vunpack.c.l.b16 %v2232
        %v2329 = vunpack.c.l.b16 %v2233
        %v2330 = vunpack.c.l.b16 %v2234
        %v2331 = vunpack.c.l.b16 %v2235
        %v2332 = vunpack.c.l.b16 %v2236
        %v2333 = vunpack.c.l.b16 %v2237
        %v2334 = vunpack.c.l.b16 %v2238
        %v2335 = vunpack.c.l.b16 %v2239
        %v2336 = vunpack.c.l.b16 %v2240
        %v2337 = vunpack.c.l.b16 %v2241
        %v2338 = vunpack.c.l.b16 %v2242
        %v2339 = vunpack.c.l.b16 %v2243
        %v2340 = vunpack.c.l.b16 %v2244
        %v2341 = vunpack.c.l.b16 %v2245
        %v2342 = vunpack.c.l.b16 %v2246
        %v2343 = vunpack.c.l.b16 %v2247
        %v2344 = vunpack.c.l.b16 %v2248
        %v2345 = vunpack.c.l.b16 %v2249
        %v2346 = vunpack.c.l.b16 %v2250
        %v2347 = vunpack.c.l.b16 %v2251
        %v2348 = vunpack.c.l.b16 %v2252
        %v2349 = vunpack.c.l.b16 %v2253
        %v2350 = vunpack.c.l.b16 %v2254
        %v2351 = vunpack.c.l.b16 %v2255
        %v2352 = vunpack.c.l.b16 %v2256
        %v2353 = vunpack.c.l.b16 %v2257
        %v2354 = vunpack.c.l.b16 %v2258
        %v2355 = vunpack.c.l.b16 %v2259
        %v2356 = vunpack.c.l.b16 %v2260
        %v2357 = vpack.c.b16 %v2310, %v2309
        %v2358 = vpack.c.b16 %v2312, %v2311
        %v2359 = vpack.c.b16 %v2314, %v2313
        %v2360 = vpack.c.b16 %v2316, %v2315
        %v2361 = vpack.c.b16 %v2318, %v2317
        %v2362 = vpack.c.b16 %v2320, %v2319
        %v2363 = vpack.c.b16 %v2322, %v2321
        %v2364 = vpack.c.b16 %v2324, %v2323
        %v2365 = vpack.c.b16 %v2326, %v2325
        %v2366 = vpack.c.b16 %v2328, %v2327
        %v2367 = vpack.c.b16 %v2330, %v2329
        %v2368 = vpack.c.b16 %v2332, %v2331
        %v2369 = vpack.c.b16 %v2334, %v2333
        %v2370 = vpack.c.b16 %v2336, %v2335
        %v2371 = vpack.c.b16 %v2338, %v2337
        %v2372 = vpack.c.b16 %v2340, %v2339
        %v2373 = vpack.c.b16 %v2342, %v2341
        %v2374 = vpack.c.b16 %v2344, %v2343
        %v2375 = vpack.c.b16 %v2346, %v2345
        %v2376 = vpack.c.b16 %v2348, %v2347
        %v2377 = vpack.c.b16 %v2350, %v2349
        %v2378 = vpack.c.b16 %v2352, %v2351
        %v2379 = vpack.c.b16 %v2354, %v2353
        %v2380 = vpack.c.b16 %v2356, %v2355
        %2405 = vmatprep.subr.bf16.mxu0 0
        %2406 = vmatpush1.bf16.msra.mxu0 %v2357
        %2407 = vmatprep.subr.bf16.mxu0 0
        %2408 = vmatpush1.bf16.msra.mxu0 %v2358
        %2409 = vmatprep.subr.bf16.mxu0 0
        %2410 = vmatpush1.bf16.msra.mxu0 %v2359
        %2411 = vmatprep.subr.bf16.mxu0 0
        %2412 = vmatpush1.bf16.msra.mxu0 %v2360
        %2413 = vmatprep.subr.bf16.mxu0 0
        %2414 = vmatpush1.bf16.msra.mxu0 %v2361
        %2415 = vmatprep.subr.bf16.mxu0 0
        %2416 = vmatpush1.bf16.msra.mxu0 %v2362
        %2417 = vmatprep.subr.bf16.mxu0 0
        %2418 = vmatpush1.bf16.msra.mxu0 %v2363
        %2419 = vmatprep.subr.bf16.mxu0 0
        %2420 = vmatpush1.bf16.msra.mxu0 %v2364
        %2421 = vmatprep.subr.bf16.mxu0 0
        %2422 = vmatpush1.bf16.msra.mxu0 %v2365
        %2423 = vmatprep.subr.bf16.mxu0 0
        %2424 = vmatpush1.bf16.msra.mxu0 %v2366
        %2425 = vmatprep.subr.bf16.mxu0 0
        %2426 = vmatpush1.bf16.msra.mxu0 %v2367
        %2427 = vmatprep.subr.bf16.mxu0 0
        %2428 = vmatpush1.bf16.msra.mxu0 %v2368
        %2429 = vmatprep.subr.bf16.mxu0 0
        %2430 = vmatpush1.bf16.msra.mxu0 %v2369
        %2431 = vmatprep.subr.bf16.mxu0 0
        %2432 = vmatpush1.bf16.msra.mxu0 %v2370
        %2433 = vmatprep.subr.bf16.mxu0 0
        %2434 = vmatpush1.bf16.msra.mxu0 %v2371
        %2435 = vmatprep.subr.bf16.mxu0 0
        %2436 = vmatpush1.bf16.msra.mxu0 %v2372
        %2437 = vmatprep.mubr.bf16.mxu0 %v2207
        %2438 = vmatmul.mubr.bf16.gmra.mrb[0].mxu0 %v2206
        %v2439 = vpop.f32.mrb[0].mxu0
        %v2440 = vadd.f32 0.0, %v2439
        %v2441 = vpop.f32.mrb[0].mxu0
        %v2442 = vpop.f32.mrb[0].mxu0
        %v2443 = vadd.f32 0.0, %v2442
        %v2444 = vpop.f32.mrb[0].mxu0
        %2445 = vmatprep.mubr.bf16.mxu0 %v2210
        %2446 = vmatmul.mubr.bf16.gmra.mrb[0].mxu0 %v2209
        %v2447 = vpop.f32.mrb[0].mxu0
        %v2448 = vadd.f32 0.0, %v2447
        %v2449 = vpop.f32.mrb[0].mxu0
        %v2450 = vpop.f32.mrb[0].mxu0
        %v2451 = vadd.f32 0.0, %v2450
        %v2452 = vpop.f32.mrb[0].mxu0
        %2453 = vdwg.mxu0
        %2454 = vmatprep.subr.bf16.mxu0 0
        %2455 = vmatpush1.bf16.msra.mxu0 %v2373
        %2456 = vmatprep.subr.bf16.mxu0 0
        %2457 = vmatpush1.bf16.msra.mxu0 %v2374
        %2458 = vmatprep.subr.bf16.mxu0 0
        %2459 = vmatpush1.bf16.msra.mxu0 %v2375
        %2460 = vmatprep.subr.bf16.mxu0 0
        %2461 = vmatpush1.bf16.msra.mxu0 %v2376
        %2462 = vmatprep.subr.bf16.mxu0 0
        %2463 = vmatpush1.bf16.msra.mxu0 %v2377
        %2464 = vmatprep.subr.bf16.mxu0 0
        %2465 = vmatpush1.bf16.msra.mxu0 %v2378
        %2466 = vmatprep.subr.bf16.mxu0 0
        %2467 = vmatpush1.bf16.msra.mxu0 %v2379
        %2468 = vmatprep.subr.bf16.mxu0 0
        %2469 = vmatpush1.bf16.msra.mxu0 %v2380
        %2470 = vmatprep.subr.bf16.mxu0 0
        %2471 = vmatpush1.bf16.msra.mxu0 0
        %2472 = vmatprep.subr.bf16.mxu0 0
        %2473 = vmatpush1.bf16.msra.mxu0 0
        %2474 = vmatprep.subr.bf16.mxu0 0
        %2475 = vmatpush1.bf16.msra.mxu0 0
        %2476 = vmatprep.subr.bf16.mxu0 0
        %2477 = vmatpush1.bf16.msra.mxu0 0
        %2478 = vmatprep.subr.bf16.mxu0 0
        %2479 = vmatpush1.bf16.msra.mxu0 0
        %2480 = vmatprep.subr.bf16.mxu0 0
        %2481 = vmatpush1.bf16.msra.mxu0 0
        %2482 = vmatprep.subr.bf16.mxu0 0
        %2483 = vmatpush1.bf16.msra.mxu0 0
        %2484 = vmatprep.subr.bf16.mxu0 0
        %2485 = vmatpush1.bf16.msra.mxu0 0
        %2486 = vmatprep.mubr.bf16.mxu0 0
        %2487 = vmatmul.mubr.bf16.gmra.mrb[0].mxu0 %v2208
        %v2488 = vpop.f32.mrb[0].mxu0
        %v2489 = vadd.f32 %v2440, %v2488
        %v2490 = vpop.f32.mrb[0].mxu0
        %v2491 = vpop.f32.mrb[0].mxu0
        %v2492 = vadd.f32 %v2443, %v2491
        %v2493 = vpop.f32.mrb[0].mxu0
        %2494 = vmatprep.mubr.bf16.mxu0 0
        %2495 = vmatmul.mubr.bf16.gmra.mrb[0].mxu0 %v2211
        %v2496 = vpop.f32.mrb[0].mxu0
        %v2497 = vadd.f32 %v2448, %v2496
        %v2498 = vpop.f32.mrb[0].mxu0
        %v2499 = vpop.f32.mrb[0].mxu0
        %v2500 = vadd.f32 %v2451, %v2499
        %v2501 = vpop.f32.mrb[0].mxu0
        %2502 = vdwg.mxu0
        %v2503 = vadd.f32 %v2060, %v2489
        %v2504 = vadd.f32 %v2061, %v2492
        %v2505 = vadd.f32 %v2062, %v2497
        %v2506 = vadd.f32 %v2063, %v2500
        %2507 = vrot.lane.b32.xlu0 %v2489, 16
        %v2508 = vpop.permute.xlu0 %2507
        %2509 = vrot.lane.b32.xlu0 %v2492, 16
        %v2510 = vpop.permute.xlu0 %2509
        %2511 = vrot.lane.b32.xlu0 %v2497, 16
        %v2512 = vpop.permute.xlu0 %2511
        %2513 = vrot.lane.b32.xlu0 %v2500, 16
        %v2514 = vpop.permute.xlu0 %2513
        %v2515 = vsel %vm231, %v2508, -inf
        %v2516 = vsel %vm231, %v2510, -inf
        %v2517 = vsel %vm231, %v2512, -inf
        %v2518 = vsel %vm231, %v2514, -inf
        %v2519 = vmax.f32 %v2489, %v2515
        %v2520 = vmax.f32 %v2492, %v2516
        %v2521 = vmax.f32 %v2497, %v2517
        %v2522 = vmax.f32 %v2500, %v2518
        %2523 = vrot.lane.b32.xlu0 %v2489, 8
        %v2524 = vpop.permute.xlu0 %2523
        %2525 = vrot.lane.b32.xlu0 %v2492, 8
        %v2526 = vpop.permute.xlu0 %2525
        %2527 = vrot.lane.b32.xlu0 %v2497, 8
        %v2528 = vpop.permute.xlu0 %2527
        %2529 = vrot.lane.b32.xlu0 %v2500, 8
        %v2530 = vpop.permute.xlu0 %2529
        %v2531 = vsel %vm232, %v2524, -inf
        %v2532 = vsel %vm232, %v2526, -inf
        %v2533 = vsel %vm232, %v2528, -inf
        %v2534 = vsel %vm232, %v2530, -inf
        %v2535 = vmax.f32 %v2519, %v2531
        %v2536 = vmax.f32 %v2520, %v2532
        %v2537 = vmax.f32 %v2521, %v2533
        %v2538 = vmax.f32 %v2522, %v2534
        %2539 = vrot.lane.b32.xlu0 %v2489, 120
        %v2540 = vpop.permute.xlu0 %2539
        %2541 = vrot.lane.b32.xlu0 %v2492, 120
        %v2542 = vpop.permute.xlu0 %2541
        %2543 = vrot.lane.b32.xlu0 %v2497, 120
        %v2544 = vpop.permute.xlu0 %2543
        %2545 = vrot.lane.b32.xlu0 %v2500, 120
        %v2546 = vpop.permute.xlu0 %2545
        %v2547 = vsel %vm233, %v2540, -inf
        %v2548 = vsel %vm233, %v2542, -inf
        %v2549 = vsel %vm233, %v2544, -inf
        %v2550 = vsel %vm233, %v2546, -inf
        %v2551 = vmax.f32 %v2535, %v2547
        %v2552 = vmax.f32 %v2536, %v2548
        %v2553 = vmax.f32 %v2537, %v2549
        %v2554 = vmax.f32 %v2538, %v2550
        %2555 = vrot.lane.b32.xlu0 %v2489, 112
        %v2556 = vpop.permute.xlu0 %2555
        %2557 = vrot.lane.b32.xlu0 %v2492, 112
        %v2558 = vpop.permute.xlu0 %2557
        %2559 = vrot.lane.b32.xlu0 %v2497, 112
        %v2560 = vpop.permute.xlu0 %2559
        %2561 = vrot.lane.b32.xlu0 %v2500, 112
        %v2562 = vpop.permute.xlu0 %2561
        %v2563 = vsel %vm234, %v2556, -inf
        %v2564 = vsel %vm234, %v2558, -inf
        %v2565 = vsel %vm234, %v2560, -inf
        %v2566 = vsel %vm234, %v2562, -inf
        %v2567 = vmax.f32 %v2551, %v2563
        %v2568 = vmax.f32 %v2552, %v2564
        %v2569 = vmax.f32 %v2553, %v2565
        %v2570 = vmax.f32 %v2554, %v2566
        %2571 = vst [vmem:[#allocation3 + $0x2] sm:$0xff] %v2567
        %2572 = vst [vmem:[#allocation3 + $0xa] sm:$0xff] %v2568
        %2573 = vst [vmem:[#allocation3 + $0x16] sm:$0xff] %v2569
        %2574 = vst [vmem:[#allocation3 + $0x1e] sm:$0xff] %v2570
        %v2575 = vld [vmem:[#allocation3] sm:$0xff]
        %v2576 = vld [vmem:[#allocation3 + $0x8] sm:$0xff]
        %v2577 = vld [vmem:[#allocation3 + $0x1] sm:$0xff]
        %v2578 = vld [vmem:[#allocation3 + $0x9] sm:$0xff]
        %v2579 = vmax.f32 %v2575, %v2577
        %v2580 = vmax.f32 %v2576, %v2578
        %v2581 = vld [vmem:[#allocation3 + $0x2] sm:$0xff]
        %v2582 = vld [vmem:[#allocation3 + $0xa] sm:$0xff]
        %v2583 = vmax.f32 %v2579, %v2581
        %v2584 = vmax.f32 %v2580, %v2582
        %v2585 = vld [vmem:[#allocation3 + $0x3] sm:$0xff]
        %v2586 = vld [vmem:[#allocation3 + $0xb] sm:$0xff]
        %v2587 = vmax.f32 %v2583, %v2585
        %v2588 = vmax.f32 %v2584, %v2586
        %v2589 = vld [vmem:[#allocation3 + $0x4] sm:$0xff]
        %v2590 = vld [vmem:[#allocation3 + $0xc] sm:$0xff]
        %v2591 = vmax.f32 %v2587, %v2589
        %v2592 = vmax.f32 %v2588, %v2590
        %v2593 = vld [vmem:[#allocation3 + $0x14] sm:$0xff]
        %v2594 = vld [vmem:[#allocation3 + $0x1c] sm:$0xff]
        %v2595 = vld [vmem:[#allocation3 + $0x15] sm:$0xff]
        %v2596 = vld [vmem:[#allocation3 + $0x1d] sm:$0xff]
        %v2597 = vmax.f32 %v2593, %v2595
        %v2598 = vmax.f32 %v2594, %v2596
        %v2599 = vld [vmem:[#allocation3 + $0x16] sm:$0xff]
        %v2600 = vld [vmem:[#allocation3 + $0x1e] sm:$0xff]
        %v2601 = vmax.f32 %v2597, %v2599
        %v2602 = vmax.f32 %v2598, %v2600
        %v2603 = vld [vmem:[#allocation3 + $0x17] sm:$0xff]
        %v2604 = vld [vmem:[#allocation3 + $0x1f] sm:$0xff]
        %v2605 = vmax.f32 %v2601, %v2603
        %v2606 = vmax.f32 %v2602, %v2604
        %v2607 = vld [vmem:[#allocation3 + $0x18] sm:$0xff]
        %v2608 = vld [vmem:[#allocation3 + $0x20] sm:$0xff]
        %v2609 = vmax.f32 %v2605, %v2607
        %v2610 = vmax.f32 %v2606, %v2608
        %v2611 = vpack.c.bf16 %v2592, %v2591
        %v2612 = vpack.c.bf16 %v2610, %v2609
        %2613 = vst [vmem:[#allocation2 + $0x8] sm:$0xff] %v2611
        %2614 = vst [vmem:[#allocation2 + $0x20] sm:$0xff] %v2612
        %v2616 = vshrl.u32 %v2611, 16
        %v2618 = vrot.slane %v2616, 7
        %v2619 = vshll.u32 %v2611, 16
        %v2621 = vor.u32 %v2618, %v2619
        %v2623 = vld [vmem:[#allocation2] sm:$0xff]
        %v2624 = vsel %vm257, %v2621, %v2623
        %2625 = vst [vmem:[#allocation2] sm:$0xff] %v2624
        %v2626 = vrot.slane %v2619, 1
        %v2627 = vor.u32 %v2616, %v2626
        %v2629 = vld [vmem:[#allocation2 + $0x10] sm:$0xff]
        %v2630 = vsel %vm265, %v2627, %v2629
        %2631 = vst [vmem:[#allocation2 + $0x10] sm:$0xff] %v2630
        %v2633 = vshrl.u32 %v2612, 16
        %v2635 = vrot.slane %v2633, 7
        %v2636 = vshll.u32 %v2612, 16
        %v2638 = vor.u32 %v2635, %v2636
        %v2640 = vld [vmem:[#allocation2 + $0x18] sm:$0xff]
        %v2641 = vsel %vm257, %v2638, %v2640
        %2642 = vst [vmem:[#allocation2 + $0x18] sm:$0xff] %v2641
        %v2643 = vrot.slane %v2636, 1
        %v2644 = vor.u32 %v2633, %v2643
        %v2646 = vld [vmem:[#allocation2 + $0x28] sm:$0xff]
        %v2647 = vsel %vm265, %v2644, %v2646
        %2648 = vst [vmem:[#allocation2 + $0x28] sm:$0xff] %v2647
        %v2649 = vld [vmem:[#allocation2] sm:$0xff]
        %v2650 = vld [vmem:[#allocation2 + $0x8] sm:$0xff]
        %v2651 = vld [vmem:[#allocation2 + $0x10] sm:$0xff]
        %v2652 = vld [vmem:[#allocation2 + $0x18] sm:$0xff]
        %v2653 = vld [vmem:[#allocation2 + $0x20] sm:$0xff]
        %v2654 = vld [vmem:[#allocation2 + $0x28] sm:$0xff]
        %s2655 = scalar_lea.vmem [#allocation7], 1152
        %v2656 = vld [vmem:[%s2655] sm:$0xf]
        %v2657 = vld [vmem:[%s2655 + $0x4] sm:$0xf]
        %v2658 = vld [vmem:[%s2655 + $0x8] sm:$0xf]
        %v2659 = vld [vmem:[%s2655 + $0xc] sm:$0xf]
        %v2660 = vld [vmem:[%s2655 + $0x10] sm:$0xf]
        %v2661 = vld [vmem:[%s2655 + $0x14] sm:$0xf]
        %v2662 = vld [vmem:[%s2655 + $0x18] sm:$0xf]
        %v2663 = vld [vmem:[%s2655 + $0x1c] sm:$0xf]
        %v2664 = vld [vmem:[%s2655 + $0x20] sm:$0xf]
        %v2665 = vld [vmem:[%s2655 + $0x24] sm:$0xf]
        %v2666 = vld [vmem:[%s2655 + $0x28] sm:$0xf]
        %v2667 = vld [vmem:[%s2655 + $0x2c] sm:$0xf]
        %v2668 = vld [vmem:[%s2655 + $0x30] sm:$0xf]
        %v2669 = vld [vmem:[%s2655 + $0x34] sm:$0xf]
        %v2670 = vld [vmem:[%s2655 + $0x38] sm:$0xf]
        %v2671 = vld [vmem:[%s2655 + $0x3c] sm:$0xf]
        %v2672 = vld [vmem:[%s2655 + $0x40] sm:$0xf]
        %v2673 = vld [vmem:[%s2655 + $0x44] sm:$0xf]
        %v2674 = vld [vmem:[%s2655 + $0x48] sm:$0xf]
        %v2675 = vld [vmem:[%s2655 + $0x4c] sm:$0xf]
        %v2676 = vld [vmem:[%s2655 + $0x50] sm:$0xf]
        %v2677 = vld [vmem:[%s2655 + $0x54] sm:$0xf]
        %v2678 = vld [vmem:[%s2655 + $0x58] sm:$0xf]
        %v2679 = vld [vmem:[%s2655 + $0x5c] sm:$0xf]
        %v2680 = vld [vmem:[%s2655 + $0x60] sm:$0xf]
        %v2681 = vld [vmem:[%s2655 + $0x64] sm:$0xf]
        %v2682 = vld [vmem:[%s2655 + $0x68] sm:$0xf]
        %v2683 = vld [vmem:[%s2655 + $0x6c] sm:$0xf]
        %v2684 = vld [vmem:[%s2655 + $0x70] sm:$0xf]
        %v2685 = vld [vmem:[%s2655 + $0x74] sm:$0xf]
        %v2686 = vld [vmem:[%s2655 + $0x78] sm:$0xf]
        %v2687 = vld [vmem:[%s2655 + $0x7c] sm:$0xf]
        %v2688 = vld [vmem:[%s2655 + $0x80] sm:$0xf]
        %v2689 = vld [vmem:[%s2655 + $0x84] sm:$0xf]
        %v2690 = vld [vmem:[%s2655 + $0x88] sm:$0xf]
        %v2691 = vld [vmem:[%s2655 + $0x8c] sm:$0xf]
        %v2692 = vld [vmem:[%s2655 + $0x90] sm:$0xf]
        %v2693 = vld [vmem:[%s2655 + $0x94] sm:$0xf]
        %v2694 = vld [vmem:[%s2655 + $0x98] sm:$0xf]
        %v2695 = vld [vmem:[%s2655 + $0x9c] sm:$0xf]
        %v2696 = vld [vmem:[%s2655 + $0xa0] sm:$0xf]
        %v2697 = vld [vmem:[%s2655 + $0xa4] sm:$0xf]
        %v2698 = vld [vmem:[%s2655 + $0xa8] sm:$0xf]
        %v2699 = vld [vmem:[%s2655 + $0xac] sm:$0xf]
        %v2700 = vld [vmem:[%s2655 + $0xb0] sm:$0xf]
        %v2701 = vld [vmem:[%s2655 + $0xb4] sm:$0xf]
        %v2702 = vld [vmem:[%s2655 + $0xb8] sm:$0xf]
        %v2703 = vld [vmem:[%s2655 + $0xbc] sm:$0xf]
        %v2752 = vunpack.c.l.b16 %v2656
        %v2753 = vunpack.c.l.b16 %v2657
        %v2754 = vunpack.c.l.b16 %v2658
        %v2755 = vunpack.c.l.b16 %v2659
        %v2756 = vunpack.c.l.b16 %v2660
        %v2757 = vunpack.c.l.b16 %v2661
        %v2758 = vunpack.c.l.b16 %v2662
        %v2759 = vunpack.c.l.b16 %v2663
        %v2760 = vunpack.c.l.b16 %v2664
        %v2761 = vunpack.c.l.b16 %v2665
        %v2762 = vunpack.c.l.b16 %v2666
        %v2763 = vunpack.c.l.b16 %v2667
        %v2764 = vunpack.c.l.b16 %v2668
        %v2765 = vunpack.c.l.b16 %v2669
        %v2766 = vunpack.c.l.b16 %v2670
        %v2767 = vunpack.c.l.b16 %v2671
        %v2768 = vunpack.c.l.b16 %v2672
        %v2769 = vunpack.c.l.b16 %v2673
        %v2770 = vunpack.c.l.b16 %v2674
        %v2771 = vunpack.c.l.b16 %v2675
        %v2772 = vunpack.c.l.b16 %v2676
        %v2773 = vunpack.c.l.b16 %v2677
        %v2774 = vunpack.c.l.b16 %v2678
        %v2775 = vunpack.c.l.b16 %v2679
        %v2776 = vunpack.c.l.b16 %v2680
        %v2777 = vunpack.c.l.b16 %v2681
        %v2778 = vunpack.c.l.b16 %v2682
        %v2779 = vunpack.c.l.b16 %v2683
        %v2780 = vunpack.c.l.b16 %v2684
        %v2781 = vunpack.c.l.b16 %v2685
        %v2782 = vunpack.c.l.b16 %v2686
        %v2783 = vunpack.c.l.b16 %v2687
        %v2784 = vunpack.c.l.b16 %v2688
        %v2785 = vunpack.c.l.b16 %v2689
        %v2786 = vunpack.c.l.b16 %v2690
        %v2787 = vunpack.c.l.b16 %v2691
        %v2788 = vunpack.c.l.b16 %v2692
        %v2789 = vunpack.c.l.b16 %v2693
        %v2790 = vunpack.c.l.b16 %v2694
        %v2791 = vunpack.c.l.b16 %v2695
        %v2792 = vunpack.c.l.b16 %v2696
        %v2793 = vunpack.c.l.b16 %v2697
        %v2794 = vunpack.c.l.b16 %v2698
        %v2795 = vunpack.c.l.b16 %v2699
        %v2796 = vunpack.c.l.b16 %v2700
        %v2797 = vunpack.c.l.b16 %v2701
        %v2798 = vunpack.c.l.b16 %v2702
        %v2799 = vunpack.c.l.b16 %v2703
        %v2800 = vpack.c.b16 %v2753, %v2752
        %v2801 = vpack.c.b16 %v2755, %v2754
        %v2802 = vpack.c.b16 %v2757, %v2756
        %v2803 = vpack.c.b16 %v2759, %v2758
        %v2804 = vpack.c.b16 %v2761, %v2760
        %v2805 = vpack.c.b16 %v2763, %v2762
        %v2806 = vpack.c.b16 %v2765, %v2764
        %v2807 = vpack.c.b16 %v2767, %v2766
        %v2808 = vpack.c.b16 %v2769, %v2768
        %v2809 = vpack.c.b16 %v2771, %v2770
        %v2810 = vpack.c.b16 %v2773, %v2772
        %v2811 = vpack.c.b16 %v2775, %v2774
        %v2812 = vpack.c.b16 %v2777, %v2776
        %v2813 = vpack.c.b16 %v2779, %v2778
        %v2814 = vpack.c.b16 %v2781, %v2780
        %v2815 = vpack.c.b16 %v2783, %v2782
        %v2816 = vpack.c.b16 %v2785, %v2784
        %v2817 = vpack.c.b16 %v2787, %v2786
        %v2818 = vpack.c.b16 %v2789, %v2788
        %v2819 = vpack.c.b16 %v2791, %v2790
        %v2820 = vpack.c.b16 %v2793, %v2792
        %v2821 = vpack.c.b16 %v2795, %v2794
        %v2822 = vpack.c.b16 %v2797, %v2796
        %v2823 = vpack.c.b16 %v2799, %v2798
        %2848 = vmatprep.subr.bf16.mxu0 0
        %2849 = vmatpush1.bf16.msra.mxu0 %v2800
        %2850 = vmatprep.subr.bf16.mxu0 0
        %2851 = vmatpush1.bf16.msra.mxu0 %v2801
        %2852 = vmatprep.subr.bf16.mxu0 0
        %2853 = vmatpush1.bf16.msra.mxu0 %v2802
        %2854 = vmatprep.subr.bf16.mxu0 0
        %2855 = vmatpush1.bf16.msra.mxu0 %v2803
        %2856 = vmatprep.subr.bf16.mxu0 0
        %2857 = vmatpush1.bf16.msra.mxu0 %v2804
        %2858 = vmatprep.subr.bf16.mxu0 0
        %2859 = vmatpush1.bf16.msra.mxu0 %v2805
        %2860 = vmatprep.subr.bf16.mxu0 0
        %2861 = vmatpush1.bf16.msra.mxu0 %v2806
        %2862 = vmatprep.subr.bf16.mxu0 0
        %2863 = vmatpush1.bf16.msra.mxu0 %v2807
        %2864 = vmatprep.subr.bf16.mxu0 0
        %2865 = vmatpush1.bf16.msra.mxu0 %v2808
        %2866 = vmatprep.subr.bf16.mxu0 0
        %2867 = vmatpush1.bf16.msra.mxu0 %v2809
        %2868 = vmatprep.subr.bf16.mxu0 0
        %2869 = vmatpush1.bf16.msra.mxu0 %v2810
        %2870 = vmatprep.subr.bf16.mxu0 0
        %2871 = vmatpush1.bf16.msra.mxu0 %v2811
        %2872 = vmatprep.subr.bf16.mxu0 0
        %2873 = vmatpush1.bf16.msra.mxu0 %v2812
        %2874 = vmatprep.subr.bf16.mxu0 0
        %2875 = vmatpush1.bf16.msra.mxu0 %v2813
        %2876 = vmatprep.subr.bf16.mxu0 0
        %2877 = vmatpush1.bf16.msra.mxu0 %v2814
        %2878 = vmatprep.subr.bf16.mxu0 0
        %2879 = vmatpush1.bf16.msra.mxu0 %v2815
        %2880 = vmatprep.mubr.bf16.mxu0 %v2650
        %2881 = vmatmul.mubr.bf16.gmra.mrb[0].mxu0 %v2649
        %v2882 = vpop.f32.mrb[0].mxu0
        %v2883 = vadd.f32 0.0, %v2882
        %v2884 = vpop.f32.mrb[0].mxu0
        %v2885 = vpop.f32.mrb[0].mxu0
        %v2886 = vadd.f32 0.0, %v2885
        %v2887 = vpop.f32.mrb[0].mxu0
        %2888 = vmatprep.mubr.bf16.mxu0 %v2653
        %2889 = vmatmul.mubr.bf16.gmra.mrb[0].mxu0 %v2652
        %v2890 = vpop.f32.mrb[0].mxu0
        %v2891 = vadd.f32 0.0, %v2890
        %v2892 = vpop.f32.mrb[0].mxu0
        %v2893 = vpop.f32.mrb[0].mxu0
        %v2894 = vadd.f32 0.0, %v2893
        %v2895 = vpop.f32.mrb[0].mxu0
        %2896 = vdwg.mxu0
        %2897 = vmatprep.subr.bf16.mxu0 0
        %2898 = vmatpush1.bf16.msra.mxu0 %v2816
        %2899 = vmatprep.subr.bf16.mxu0 0
        %2900 = vmatpush1.bf16.msra.mxu0 %v2817
        %2901 = vmatprep.subr.bf16.mxu0 0
        %2902 = vmatpush1.bf16.msra.mxu0 %v2818
        %2903 = vmatprep.subr.bf16.mxu0 0
        %2904 = vmatpush1.bf16.msra.mxu0 %v2819
        %2905 = vmatprep.subr.bf16.mxu0 0
        %2906 = vmatpush1.bf16.msra.mxu0 %v2820
        %2907 = vmatprep.subr.bf16.mxu0 0
        %2908 = vmatpush1.bf16.msra.mxu0 %v2821
        %2909 = vmatprep.subr.bf16.mxu0 0
        %2910 = vmatpush1.bf16.msra.mxu0 %v2822
        %2911 = vmatprep.subr.bf16.mxu0 0
        %2912 = vmatpush1.bf16.msra.mxu0 %v2823
        %2913 = vmatprep.subr.bf16.mxu0 0
        %2914 = vmatpush1.bf16.msra.mxu0 0
        %2915 = vmatprep.subr.bf16.mxu0 0
        %2916 = vmatpush1.bf16.msra.mxu0 0
        %2917 = vmatprep.subr.bf16.mxu0 0
        %2918 = vmatpush1.bf16.msra.mxu0 0
        %2919 = vmatprep.subr.bf16.mxu0 0
        %2920 = vmatpush1.bf16.msra.mxu0 0
        %2921 = vmatprep.subr.bf16.mxu0 0
        %2922 = vmatpush1.bf16.msra.mxu0 0
        %2923 = vmatprep.subr.bf16.mxu0 0
        %2924 = vmatpush1.bf16.msra.mxu0 0
        %2925 = vmatprep.subr.bf16.mxu0 0
        %2926 = vmatpush1.bf16.msra.mxu0 0
        %2927 = vmatprep.subr.bf16.mxu0 0
        %2928 = vmatpush1.bf16.msra.mxu0 0
        %2929 = vmatprep.mubr.bf16.mxu0 0
        %2930 = vmatmul.mubr.bf16.gmra.mrb[0].mxu0 %v2651
        %v2931 = vpop.f32.mrb[0].mxu0
        %v2932 = vadd.f32 %v2883, %v2931
        %v2933 = vpop.f32.mrb[0].mxu0
        %v2934 = vpop.f32.mrb[0].mxu0
        %v2935 = vadd.f32 %v2886, %v2934
        %v2936 = vpop.f32.mrb[0].mxu0
        %2937 = vmatprep.mubr.bf16.mxu0 0
        %2938 = vmatmul.mubr.bf16.gmra.mrb[0].mxu0 %v2654
        %v2939 = vpop.f32.mrb[0].mxu0
        %v2940 = vadd.f32 %v2891, %v2939
        %v2941 = vpop.f32.mrb[0].mxu0
        %v2942 = vpop.f32.mrb[0].mxu0
        %v2943 = vadd.f32 %v2894, %v2942
        %v2944 = vpop.f32.mrb[0].mxu0
        %2945 = vdwg.mxu0
        %v2946 = vadd.f32 %v2503, %v2932
        %v2947 = vadd.f32 %v2504, %v2935
        %v2948 = vadd.f32 %v2505, %v2940
        %v2949 = vadd.f32 %v2506, %v2943
        %v2950 = vmax.f32 %v2946, 0.0
        %v2951 = vmax.f32 %v2947, 0.0
        %v2952 = vmax.f32 %v2948, 0.0
        %v2953 = vmax.f32 %v2949, 0.0
        %v2954 = vpack.c.bf16 %v2951, %v2950
        %v2955 = vpack.c.bf16 %v2953, %v2952
        %2956 = vst [vmem:[#allocation2 + $0x8] sm:$0xff] %v2954
        %2957 = vst [vmem:[#allocation2 + $0x20] sm:$0xff] %v2955
        %v2959 = vshrl.u32 %v2954, 16
        %v2961 = vrot.slane %v2959, 7
        %v2962 = vshll.u32 %v2954, 16
        %v2964 = vor.u32 %v2961, %v2962
        %v2966 = vld [vmem:[#allocation2] sm:$0xff]
        %v2967 = vsel %vm257, %v2964, %v2966
        %2968 = vst [vmem:[#allocation2] sm:$0xff] %v2967
        %v2969 = vrot.slane %v2962, 1
        %v2970 = vor.u32 %v2959, %v2969
        %v2972 = vld [vmem:[#allocation2 + $0x10] sm:$0xff]
        %v2973 = vsel %vm265, %v2970, %v2972
        %2974 = vst [vmem:[#allocation2 + $0x10] sm:$0xff] %v2973
        %v2976 = vshrl.u32 %v2955, 16
        %v2978 = vrot.slane %v2976, 7
        %v2979 = vshll.u32 %v2955, 16
        %v2981 = vor.u32 %v2978, %v2979
        %v2983 = vld [vmem:[#allocation2 + $0x18] sm:$0xff]
        %v2984 = vsel %vm257, %v2981, %v2983
        %2985 = vst [vmem:[#allocation2 + $0x18] sm:$0xff] %v2984
        %v2986 = vrot.slane %v2979, 1
        %v2987 = vor.u32 %v2976, %v2986
        %v2989 = vld [vmem:[#allocation2 + $0x28] sm:$0xff]
        %v2990 = vsel %vm265, %v2987, %v2989
        %2991 = vst [vmem:[#allocation2 + $0x28] sm:$0xff] %v2990
        %v2992 = vld [vmem:[#allocation2] sm:$0xff]
        %v2993 = vld [vmem:[#allocation2 + $0x8] sm:$0xff]
        %v2994 = vld [vmem:[#allocation2 + $0x10] sm:$0xff]
        %v2995 = vld [vmem:[#allocation2 + $0x18] sm:$0xff]
        %v2996 = vld [vmem:[#allocation2 + $0x20] sm:$0xff]
        %v2997 = vld [vmem:[#allocation2 + $0x28] sm:$0xff]
        %s2998 = scalar_lea.vmem [#allocation7], 1344
        %v2999 = vld [vmem:[%s2998] sm:$0xf]
        %v3000 = vld [vmem:[%s2998 + $0x4] sm:$0xf]
        %v3001 = vld [vmem:[%s2998 + $0x8] sm:$0xf]
        %v3002 = vld [vmem:[%s2998 + $0xc] sm:$0xf]
        %v3003 = vld [vmem:[%s2998 + $0x10] sm:$0xf]
        %v3004 = vld [vmem:[%s2998 + $0x14] sm:$0xf]
        %v3005 = vld [vmem:[%s2998 + $0x18] sm:$0xf]
        %v3006 = vld [vmem:[%s2998 + $0x1c] sm:$0xf]
        %v3007 = vld [vmem:[%s2998 + $0x20] sm:$0xf]
        %v3008 = vld [vmem:[%s2998 + $0x24] sm:$0xf]
        %v3009 = vld [vmem:[%s2998 + $0x28] sm:$0xf]
        %v3010 = vld [vmem:[%s2998 + $0x2c] sm:$0xf]
        %v3011 = vld [vmem:[%s2998 + $0x30] sm:$0xf]
        %v3012 = vld [vmem:[%s2998 + $0x34] sm:$0xf]
        %v3013 = vld [vmem:[%s2998 + $0x38] sm:$0xf]
        %v3014 = vld [vmem:[%s2998 + $0x3c] sm:$0xf]
        %v3015 = vld [vmem:[%s2998 + $0x40] sm:$0xf]
        %v3016 = vld [vmem:[%s2998 + $0x44] sm:$0xf]
        %v3017 = vld [vmem:[%s2998 + $0x48] sm:$0xf]
        %v3018 = vld [vmem:[%s2998 + $0x4c] sm:$0xf]
        %v3019 = vld [vmem:[%s2998 + $0x50] sm:$0xf]
        %v3020 = vld [vmem:[%s2998 + $0x54] sm:$0xf]
        %v3021 = vld [vmem:[%s2998 + $0x58] sm:$0xf]
        %v3022 = vld [vmem:[%s2998 + $0x5c] sm:$0xf]
        %v3023 = vld [vmem:[%s2998 + $0x60] sm:$0xf]
        %v3024 = vld [vmem:[%s2998 + $0x64] sm:$0xf]
        %v3025 = vld [vmem:[%s2998 + $0x68] sm:$0xf]
        %v3026 = vld [vmem:[%s2998 + $0x6c] sm:$0xf]
        %v3027 = vld [vmem:[%s2998 + $0x70] sm:$0xf]
        %v3028 = vld [vmem:[%s2998 + $0x74] sm:$0xf]
        %v3029 = vld [vmem:[%s2998 + $0x78] sm:$0xf]
        %v3030 = vld [vmem:[%s2998 + $0x7c] sm:$0xf]
        %v3031 = vld [vmem:[%s2998 + $0x80] sm:$0xf]
        %v3032 = vld [vmem:[%s2998 + $0x84] sm:$0xf]
        %v3033 = vld [vmem:[%s2998 + $0x88] sm:$0xf]
        %v3034 = vld [vmem:[%s2998 + $0x8c] sm:$0xf]
        %v3035 = vld [vmem:[%s2998 + $0x90] sm:$0xf]
        %v3036 = vld [vmem:[%s2998 + $0x94] sm:$0xf]
        %v3037 = vld [vmem:[%s2998 + $0x98] sm:$0xf]
        %v3038 = vld [vmem:[%s2998 + $0x9c] sm:$0xf]
        %v3039 = vld [vmem:[%s2998 + $0xa0] sm:$0xf]
        %v3040 = vld [vmem:[%s2998 + $0xa4] sm:$0xf]
        %v3041 = vld [vmem:[%s2998 + $0xa8] sm:$0xf]
        %v3042 = vld [vmem:[%s2998 + $0xac] sm:$0xf]
        %v3043 = vld [vmem:[%s2998 + $0xb0] sm:$0xf]
        %v3044 = vld [vmem:[%s2998 + $0xb4] sm:$0xf]
        %v3045 = vld [vmem:[%s2998 + $0xb8] sm:$0xf]
        %v3046 = vld [vmem:[%s2998 + $0xbc] sm:$0xf]
        %v3047 = vld [vmem:[%s2 + $0x2] sm:$0x1]
        %v3048 = vlaneseq
        %v3049 = vshrl.u32 %v3048, 7
        %v3050 = vsub.s32 0, %v3049
        %v3051 = vrot.slane %v3047, %v3050
        %v3100 = vunpack.c.l.b16 %v2999
        %v3101 = vunpack.c.l.b16 %v3000
        %v3102 = vunpack.c.l.b16 %v3001
        %v3103 = vunpack.c.l.b16 %v3002
        %v3104 = vunpack.c.l.b16 %v3003
        %v3105 = vunpack.c.l.b16 %v3004
        %v3106 = vunpack.c.l.b16 %v3005
        %v3107 = vunpack.c.l.b16 %v3006
        %v3108 = vunpack.c.l.b16 %v3007
        %v3109 = vunpack.c.l.b16 %v3008
        %v3110 = vunpack.c.l.b16 %v3009
        %v3111 = vunpack.c.l.b16 %v3010
        %v3112 = vunpack.c.l.b16 %v3011
        %v3113 = vunpack.c.l.b16 %v3012
        %v3114 = vunpack.c.l.b16 %v3013
        %v3115 = vunpack.c.l.b16 %v3014
        %v3116 = vunpack.c.l.b16 %v3015
        %v3117 = vunpack.c.l.b16 %v3016
        %v3118 = vunpack.c.l.b16 %v3017
        %v3119 = vunpack.c.l.b16 %v3018
        %v3120 = vunpack.c.l.b16 %v3019
        %v3121 = vunpack.c.l.b16 %v3020
        %v3122 = vunpack.c.l.b16 %v3021
        %v3123 = vunpack.c.l.b16 %v3022
        %v3124 = vunpack.c.l.b16 %v3023
        %v3125 = vunpack.c.l.b16 %v3024
        %v3126 = vunpack.c.l.b16 %v3025
        %v3127 = vunpack.c.l.b16 %v3026
        %v3128 = vunpack.c.l.b16 %v3027
        %v3129 = vunpack.c.l.b16 %v3028
        %v3130 = vunpack.c.l.b16 %v3029
        %v3131 = vunpack.c.l.b16 %v3030
        %v3132 = vunpack.c.l.b16 %v3031
        %v3133 = vunpack.c.l.b16 %v3032
        %v3134 = vunpack.c.l.b16 %v3033
        %v3135 = vunpack.c.l.b16 %v3034
        %v3136 = vunpack.c.l.b16 %v3035
        %v3137 = vunpack.c.l.b16 %v3036
        %v3138 = vunpack.c.l.b16 %v3037
        %v3139 = vunpack.c.l.b16 %v3038
        %v3140 = vunpack.c.l.b16 %v3039
        %v3141 = vunpack.c.l.b16 %v3040
        %v3142 = vunpack.c.l.b16 %v3041
        %v3143 = vunpack.c.l.b16 %v3042
        %v3144 = vunpack.c.l.b16 %v3043
        %v3145 = vunpack.c.l.b16 %v3044
        %v3146 = vunpack.c.l.b16 %v3045
        %v3147 = vunpack.c.l.b16 %v3046
        %v3148 = vpack.c.b16 %v3101, %v3100
        %v3149 = vpack.c.b16 %v3103, %v3102
        %v3150 = vpack.c.b16 %v3105, %v3104
        %v3151 = vpack.c.b16 %v3107, %v3106
        %v3152 = vpack.c.b16 %v3109, %v3108
        %v3153 = vpack.c.b16 %v3111, %v3110
        %v3154 = vpack.c.b16 %v3113, %v3112
        %v3155 = vpack.c.b16 %v3115, %v3114
        %v3156 = vpack.c.b16 %v3117, %v3116
        %v3157 = vpack.c.b16 %v3119, %v3118
        %v3158 = vpack.c.b16 %v3121, %v3120
        %v3159 = vpack.c.b16 %v3123, %v3122
        %v3160 = vpack.c.b16 %v3125, %v3124
        %v3161 = vpack.c.b16 %v3127, %v3126
        %v3162 = vpack.c.b16 %v3129, %v3128
        %v3163 = vpack.c.b16 %v3131, %v3130
        %v3164 = vpack.c.b16 %v3133, %v3132
        %v3165 = vpack.c.b16 %v3135, %v3134
        %v3166 = vpack.c.b16 %v3137, %v3136
        %v3167 = vpack.c.b16 %v3139, %v3138
        %v3168 = vpack.c.b16 %v3141, %v3140
        %v3169 = vpack.c.b16 %v3143, %v3142
        %v3170 = vpack.c.b16 %v3145, %v3144
        %v3171 = vpack.c.b16 %v3147, %v3146
        %3196 = vmatprep.subr.bf16.mxu0 0
        %3197 = vmatpush1.bf16.msra.mxu0 %v3148
        %3198 = vmatprep.subr.bf16.mxu0 0
        %3199 = vmatpush1.bf16.msra.mxu0 %v3149
        %3200 = vmatprep.subr.bf16.mxu0 0
        %3201 = vmatpush1.bf16.msra.mxu0 %v3150
        %3202 = vmatprep.subr.bf16.mxu0 0
        %3203 = vmatpush1.bf16.msra.mxu0 %v3151
        %3204 = vmatprep.subr.bf16.mxu0 0
        %3205 = vmatpush1.bf16.msra.mxu0 %v3152
        %3206 = vmatprep.subr.bf16.mxu0 0
        %3207 = vmatpush1.bf16.msra.mxu0 %v3153
        %3208 = vmatprep.subr.bf16.mxu0 0
        %3209 = vmatpush1.bf16.msra.mxu0 %v3154
        %3210 = vmatprep.subr.bf16.mxu0 0
        %3211 = vmatpush1.bf16.msra.mxu0 %v3155
        %3212 = vmatprep.subr.bf16.mxu0 0
        %3213 = vmatpush1.bf16.msra.mxu0 %v3156
        %3214 = vmatprep.subr.bf16.mxu0 0
        %3215 = vmatpush1.bf16.msra.mxu0 %v3157
        %3216 = vmatprep.subr.bf16.mxu0 0
        %3217 = vmatpush1.bf16.msra.mxu0 %v3158
        %3218 = vmatprep.subr.bf16.mxu0 0
        %3219 = vmatpush1.bf16.msra.mxu0 %v3159
        %3220 = vmatprep.subr.bf16.mxu0 0
        %3221 = vmatpush1.bf16.msra.mxu0 %v3160
        %3222 = vmatprep.subr.bf16.mxu0 0
        %3223 = vmatpush1.bf16.msra.mxu0 %v3161
        %3224 = vmatprep.subr.bf16.mxu0 0
        %3225 = vmatpush1.bf16.msra.mxu0 %v3162
        %3226 = vmatprep.subr.bf16.mxu0 0
        %3227 = vmatpush1.bf16.msra.mxu0 %v3163
        %3228 = vmatprep.mubr.bf16.mxu0 %v2993
        %3229 = vmatmul.mubr.bf16.gmra.mrb[0].mxu0 %v2992
        %v3230 = vpop.f32.mrb[0].mxu0
        %v3231 = vadd.f32 %v3051, %v3230
        %v3232 = vpop.f32.mrb[0].mxu0
        %v3233 = vpop.f32.mrb[0].mxu0
        %v3234 = vadd.f32 %v3051, %v3233
        %v3235 = vpop.f32.mrb[0].mxu0
        %3236 = vmatprep.mubr.bf16.mxu0 %v2996
        %3237 = vmatmul.mubr.bf16.gmra.mrb[0].mxu0 %v2995
        %v3238 = vpop.f32.mrb[0].mxu0
        %v3239 = vadd.f32 %v3051, %v3238
        %v3240 = vpop.f32.mrb[0].mxu0
        %v3241 = vpop.f32.mrb[0].mxu0
        %v3242 = vadd.f32 %v3051, %v3241
        %v3243 = vpop.f32.mrb[0].mxu0
        %3244 = vdwg.mxu0
        %3245 = vmatprep.subr.bf16.mxu0 0
        %3246 = vmatpush1.bf16.msra.mxu0 %v3164
        %3247 = vmatprep.subr.bf16.mxu0 0
        %3248 = vmatpush1.bf16.msra.mxu0 %v3165
        %3249 = vmatprep.subr.bf16.mxu0 0
        %3250 = vmatpush1.bf16.msra.mxu0 %v3166
        %3251 = vmatprep.subr.bf16.mxu0 0
        %3252 = vmatpush1.bf16.msra.mxu0 %v3167
        %3253 = vmatprep.subr.bf16.mxu0 0
        %3254 = vmatpush1.bf16.msra.mxu0 %v3168
        %3255 = vmatprep.subr.bf16.mxu0 0
        %3256 = vmatpush1.bf16.msra.mxu0 %v3169
        %3257 = vmatprep.subr.bf16.mxu0 0
        %3258 = vmatpush1.bf16.msra.mxu0 %v3170
        %3259 = vmatprep.subr.bf16.mxu0 0
        %3260 = vmatpush1.bf16.msra.mxu0 %v3171
        %3261 = vmatprep.subr.bf16.mxu0 0
        %3262 = vmatpush1.bf16.msra.mxu0 0
        %3263 = vmatprep.subr.bf16.mxu0 0
        %3264 = vmatpush1.bf16.msra.mxu0 0
        %3265 = vmatprep.subr.bf16.mxu0 0
        %3266 = vmatpush1.bf16.msra.mxu0 0
        %3267 = vmatprep.subr.bf16.mxu0 0
        %3268 = vmatpush1.bf16.msra.mxu0 0
        %3269 = vmatprep.subr.bf16.mxu0 0
        %3270 = vmatpush1.bf16.msra.mxu0 0
        %3271 = vmatprep.subr.bf16.mxu0 0
        %3272 = vmatpush1.bf16.msra.mxu0 0
        %3273 = vmatprep.subr.bf16.mxu0 0
        %3274 = vmatpush1.bf16.msra.mxu0 0
        %3275 = vmatprep.subr.bf16.mxu0 0
        %3276 = vmatpush1.bf16.msra.mxu0 0
        %3277 = vmatprep.mubr.bf16.mxu0 0
        %3278 = vmatmul.mubr.bf16.gmra.mrb[0].mxu0 %v2994
        %v3279 = vpop.f32.mrb[0].mxu0
        %v3280 = vadd.f32 %v3231, %v3279
        %v3281 = vpop.f32.mrb[0].mxu0
        %v3282 = vpop.f32.mrb[0].mxu0
        %v3283 = vadd.f32 %v3234, %v3282
        %v3284 = vpop.f32.mrb[0].mxu0
        %3285 = vmatprep.mubr.bf16.mxu0 0
        %3286 = vmatmul.mubr.bf16.gmra.mrb[0].mxu0 %v2997
        %v3287 = vpop.f32.mrb[0].mxu0
        %v3288 = vadd.f32 %v3239, %v3287
        %v3289 = vpop.f32.mrb[0].mxu0
        %v3290 = vpop.f32.mrb[0].mxu0
        %v3291 = vadd.f32 %v3242, %v3290
        %v3292 = vpop.f32.mrb[0].mxu0
        %3293 = vdwg.mxu0
        %v3294 = vmax.f32 %v3280, 0.0
        %v3295 = vmax.f32 %v3283, 0.0
        %v3296 = vmax.f32 %v3288, 0.0
        %v3297 = vmax.f32 %v3291, 0.0
        %v3298 = vpack.c.bf16 %v3295, %v3294
        %v3299 = vpack.c.bf16 %v3297, %v3296
        %3300 = vst [vmem:[#allocation2 + $0x8] sm:$0xff] %v3298
        %3301 = vst [vmem:[#allocation2 + $0x20] sm:$0xff] %v3299
        %v3303 = vshrl.u32 %v3298, 16
        %v3305 = vrot.slane %v3303, 7
        %v3306 = vshll.u32 %v3298, 16
        %v3308 = vor.u32 %v3305, %v3306
        %v3310 = vld [vmem:[#allocation2] sm:$0xff]
        %v3311 = vsel %vm257, %v3308, %v3310
        %3312 = vst [vmem:[#allocation2] sm:$0xff] %v3311
        %v3313 = vrot.slane %v3306, 1
        %v3314 = vor.u32 %v3303, %v3313
        %v3316 = vld [vmem:[#allocation2 + $0x10] sm:$0xff]
        %v3317 = vsel %vm265, %v3314, %v3316
        %3318 = vst [vmem:[#allocation2 + $0x10] sm:$0xff] %v3317
        %v3320 = vshrl.u32 %v3299, 16
        %v3322 = vrot.slane %v3320, 7
        %v3323 = vshll.u32 %v3299, 16
        %v3325 = vor.u32 %v3322, %v3323
        %v3327 = vld [vmem:[#allocation2 + $0x18] sm:$0xff]
        %v3328 = vsel %vm257, %v3325, %v3327
        %3329 = vst [vmem:[#allocation2 + $0x18] sm:$0xff] %v3328
        %v3330 = vrot.slane %v3323, 1
        %v3331 = vor.u32 %v3320, %v3330
        %v3333 = vld [vmem:[#allocation2 + $0x28] sm:$0xff]
        %v3334 = vsel %vm265, %v3331, %v3333
        %3335 = vst [vmem:[#allocation2 + $0x28] sm:$0xff] %v3334
        %v3336 = vld [vmem:[#allocation2] sm:$0xff]
        %v3337 = vld [vmem:[#allocation2 + $0x8] sm:$0xff]
        %v3338 = vld [vmem:[#allocation2 + $0x10] sm:$0xff]
        %v3339 = vld [vmem:[#allocation2 + $0x18] sm:$0xff]
        %v3340 = vld [vmem:[#allocation2 + $0x20] sm:$0xff]
        %v3341 = vld [vmem:[#allocation2 + $0x28] sm:$0xff]
        %s3342 = scalar_lea.vmem [#allocation7], 1536
        %v3343 = vld [vmem:[%s3342] sm:$0xf]
        %v3344 = vld [vmem:[%s3342 + $0x4] sm:$0xf]
        %v3345 = vld [vmem:[%s3342 + $0x8] sm:$0xf]
        %v3346 = vld [vmem:[%s3342 + $0xc] sm:$0xf]
        %v3347 = vld [vmem:[%s3342 + $0x10] sm:$0xf]
        %v3348 = vld [vmem:[%s3342 + $0x14] sm:$0xf]
        %v3349 = vld [vmem:[%s3342 + $0x18] sm:$0xf]
        %v3350 = vld [vmem:[%s3342 + $0x1c] sm:$0xf]
        %v3351 = vld [vmem:[%s3342 + $0x20] sm:$0xf]
        %v3352 = vld [vmem:[%s3342 + $0x24] sm:$0xf]
        %v3353 = vld [vmem:[%s3342 + $0x28] sm:$0xf]
        %v3354 = vld [vmem:[%s3342 + $0x2c] sm:$0xf]
        %v3355 = vld [vmem:[%s3342 + $0x30] sm:$0xf]
        %v3356 = vld [vmem:[%s3342 + $0x34] sm:$0xf]
        %v3357 = vld [vmem:[%s3342 + $0x38] sm:$0xf]
        %v3358 = vld [vmem:[%s3342 + $0x3c] sm:$0xf]
        %v3359 = vld [vmem:[%s3342 + $0x40] sm:$0xf]
        %v3360 = vld [vmem:[%s3342 + $0x44] sm:$0xf]
        %v3361 = vld [vmem:[%s3342 + $0x48] sm:$0xf]
        %v3362 = vld [vmem:[%s3342 + $0x4c] sm:$0xf]
        %v3363 = vld [vmem:[%s3342 + $0x50] sm:$0xf]
        %v3364 = vld [vmem:[%s3342 + $0x54] sm:$0xf]
        %v3365 = vld [vmem:[%s3342 + $0x58] sm:$0xf]
        %v3366 = vld [vmem:[%s3342 + $0x5c] sm:$0xf]
        %v3367 = vld [vmem:[%s3342 + $0x60] sm:$0xf]
        %v3368 = vld [vmem:[%s3342 + $0x64] sm:$0xf]
        %v3369 = vld [vmem:[%s3342 + $0x68] sm:$0xf]
        %v3370 = vld [vmem:[%s3342 + $0x6c] sm:$0xf]
        %v3371 = vld [vmem:[%s3342 + $0x70] sm:$0xf]
        %v3372 = vld [vmem:[%s3342 + $0x74] sm:$0xf]
        %v3373 = vld [vmem:[%s3342 + $0x78] sm:$0xf]
        %v3374 = vld [vmem:[%s3342 + $0x7c] sm:$0xf]
        %v3375 = vld [vmem:[%s3342 + $0x80] sm:$0xf]
        %v3376 = vld [vmem:[%s3342 + $0x84] sm:$0xf]
        %v3377 = vld [vmem:[%s3342 + $0x88] sm:$0xf]
        %v3378 = vld [vmem:[%s3342 + $0x8c] sm:$0xf]
        %v3379 = vld [vmem:[%s3342 + $0x90] sm:$0xf]
        %v3380 = vld [vmem:[%s3342 + $0x94] sm:$0xf]
        %v3381 = vld [vmem:[%s3342 + $0x98] sm:$0xf]
        %v3382 = vld [vmem:[%s3342 + $0x9c] sm:$0xf]
        %v3383 = vld [vmem:[%s3342 + $0xa0] sm:$0xf]
        %v3384 = vld [vmem:[%s3342 + $0xa4] sm:$0xf]
        %v3385 = vld [vmem:[%s3342 + $0xa8] sm:$0xf]
        %v3386 = vld [vmem:[%s3342 + $0xac] sm:$0xf]
        %v3387 = vld [vmem:[%s3342 + $0xb0] sm:$0xf]
        %v3388 = vld [vmem:[%s3342 + $0xb4] sm:$0xf]
        %v3389 = vld [vmem:[%s3342 + $0xb8] sm:$0xf]
        %v3390 = vld [vmem:[%s3342 + $0xbc] sm:$0xf]
        %v3439 = vunpack.c.l.b16 %v3343
        %v3440 = vunpack.c.l.b16 %v3344
        %v3441 = vunpack.c.l.b16 %v3345
        %v3442 = vunpack.c.l.b16 %v3346
        %v3443 = vunpack.c.l.b16 %v3347
        %v3444 = vunpack.c.l.b16 %v3348
        %v3445 = vunpack.c.l.b16 %v3349
        %v3446 = vunpack.c.l.b16 %v3350
        %v3447 = vunpack.c.l.b16 %v3351
        %v3448 = vunpack.c.l.b16 %v3352
        %v3449 = vunpack.c.l.b16 %v3353
        %v3450 = vunpack.c.l.b16 %v3354
        %v3451 = vunpack.c.l.b16 %v3355
        %v3452 = vunpack.c.l.b16 %v3356
        %v3453 = vunpack.c.l.b16 %v3357
        %v3454 = vunpack.c.l.b16 %v3358
        %v3455 = vunpack.c.l.b16 %v3359
        %v3456 = vunpack.c.l.b16 %v3360
        %v3457 = vunpack.c.l.b16 %v3361
        %v3458 = vunpack.c.l.b16 %v3362
        %v3459 = vunpack.c.l.b16 %v3363
        %v3460 = vunpack.c.l.b16 %v3364
        %v3461 = vunpack.c.l.b16 %v3365
        %v3462 = vunpack.c.l.b16 %v3366
        %v3463 = vunpack.c.l.b16 %v3367
        %v3464 = vunpack.c.l.b16 %v3368
        %v3465 = vunpack.c.l.b16 %v3369
        %v3466 = vunpack.c.l.b16 %v3370
        %v3467 = vunpack.c.l.b16 %v3371
        %v3468 = vunpack.c.l.b16 %v3372
        %v3469 = vunpack.c.l.b16 %v3373
        %v3470 = vunpack.c.l.b16 %v3374
        %v3471 = vunpack.c.l.b16 %v3375
        %v3472 = vunpack.c.l.b16 %v3376
        %v3473 = vunpack.c.l.b16 %v3377
        %v3474 = vunpack.c.l.b16 %v3378
        %v3475 = vunpack.c.l.b16 %v3379
        %v3476 = vunpack.c.l.b16 %v3380
        %v3477 = vunpack.c.l.b16 %v3381
        %v3478 = vunpack.c.l.b16 %v3382
        %v3479 = vunpack.c.l.b16 %v3383
        %v3480 = vunpack.c.l.b16 %v3384
        %v3481 = vunpack.c.l.b16 %v3385
        %v3482 = vunpack.c.l.b16 %v3386
        %v3483 = vunpack.c.l.b16 %v3387
        %v3484 = vunpack.c.l.b16 %v3388
        %v3485 = vunpack.c.l.b16 %v3389
        %v3486 = vunpack.c.l.b16 %v3390
        %v3487 = vpack.c.b16 %v3440, %v3439
        %v3488 = vpack.c.b16 %v3442, %v3441
        %v3489 = vpack.c.b16 %v3444, %v3443
        %v3490 = vpack.c.b16 %v3446, %v3445
        %v3491 = vpack.c.b16 %v3448, %v3447
        %v3492 = vpack.c.b16 %v3450, %v3449
        %v3493 = vpack.c.b16 %v3452, %v3451
        %v3494 = vpack.c.b16 %v3454, %v3453
        %v3495 = vpack.c.b16 %v3456, %v3455
        %v3496 = vpack.c.b16 %v3458, %v3457
        %v3497 = vpack.c.b16 %v3460, %v3459
        %v3498 = vpack.c.b16 %v3462, %v3461
        %v3499 = vpack.c.b16 %v3464, %v3463
        %v3500 = vpack.c.b16 %v3466, %v3465
        %v3501 = vpack.c.b16 %v3468, %v3467
        %v3502 = vpack.c.b16 %v3470, %v3469
        %v3503 = vpack.c.b16 %v3472, %v3471
        %v3504 = vpack.c.b16 %v3474, %v3473
        %v3505 = vpack.c.b16 %v3476, %v3475
        %v3506 = vpack.c.b16 %v3478, %v3477
        %v3507 = vpack.c.b16 %v3480, %v3479
        %v3508 = vpack.c.b16 %v3482, %v3481
        %v3509 = vpack.c.b16 %v3484, %v3483
        %v3510 = vpack.c.b16 %v3486, %v3485
        %3535 = vmatprep.subr.bf16.mxu0 0
        %3536 = vmatpush1.bf16.msra.mxu0 %v3487
        %3537 = vmatprep.subr.bf16.mxu0 0
        %3538 = vmatpush1.bf16.msra.mxu0 %v3488
        %3539 = vmatprep.subr.bf16.mxu0 0
        %3540 = vmatpush1.bf16.msra.mxu0 %v3489
        %3541 = vmatprep.subr.bf16.mxu0 0
        %3542 = vmatpush1.bf16.msra.mxu0 %v3490
        %3543 = vmatprep.subr.bf16.mxu0 0
        %3544 = vmatpush1.bf16.msra.mxu0 %v3491
        %3545 = vmatprep.subr.bf16.mxu0 0
        %3546 = vmatpush1.bf16.msra.mxu0 %v3492
        %3547 = vmatprep.subr.bf16.mxu0 0
        %3548 = vmatpush1.bf16.msra.mxu0 %v3493
        %3549 = vmatprep.subr.bf16.mxu0 0
        %3550 = vmatpush1.bf16.msra.mxu0 %v3494
        %3551 = vmatprep.subr.bf16.mxu0 0
        %3552 = vmatpush1.bf16.msra.mxu0 %v3495
        %3553 = vmatprep.subr.bf16.mxu0 0
        %3554 = vmatpush1.bf16.msra.mxu0 %v3496
        %3555 = vmatprep.subr.bf16.mxu0 0
        %3556 = vmatpush1.bf16.msra.mxu0 %v3497
        %3557 = vmatprep.subr.bf16.mxu0 0
        %3558 = vmatpush1.bf16.msra.mxu0 %v3498
        %3559 = vmatprep.subr.bf16.mxu0 0
        %3560 = vmatpush1.bf16.msra.mxu0 %v3499
        %3561 = vmatprep.subr.bf16.mxu0 0
        %3562 = vmatpush1.bf16.msra.mxu0 %v3500
        %3563 = vmatprep.subr.bf16.mxu0 0
        %3564 = vmatpush1.bf16.msra.mxu0 %v3501
        %3565 = vmatprep.subr.bf16.mxu0 0
        %3566 = vmatpush1.bf16.msra.mxu0 %v3502
        %3567 = vmatprep.mubr.bf16.mxu0 %v3337
        %3568 = vmatmul.mubr.bf16.gmra.mrb[0].mxu0 %v3336
        %v3569 = vpop.f32.mrb[0].mxu0
        %v3570 = vadd.f32 0.0, %v3569
        %v3571 = vpop.f32.mrb[0].mxu0
        %v3572 = vpop.f32.mrb[0].mxu0
        %v3573 = vadd.f32 0.0, %v3572
        %v3574 = vpop.f32.mrb[0].mxu0
        %3575 = vmatprep.mubr.bf16.mxu0 %v3340
        %3576 = vmatmul.mubr.bf16.gmra.mrb[0].mxu0 %v3339
        %v3577 = vpop.f32.mrb[0].mxu0
        %v3578 = vadd.f32 0.0, %v3577
        %v3579 = vpop.f32.mrb[0].mxu0
        %v3580 = vpop.f32.mrb[0].mxu0
        %v3581 = vadd.f32 0.0, %v3580
        %v3582 = vpop.f32.mrb[0].mxu0
        %3583 = vdwg.mxu0
        %3584 = vmatprep.subr.bf16.mxu0 0
        %3585 = vmatpush1.bf16.msra.mxu0 %v3503
        %3586 = vmatprep.subr.bf16.mxu0 0
        %3587 = vmatpush1.bf16.msra.mxu0 %v3504
        %3588 = vmatprep.subr.bf16.mxu0 0
        %3589 = vmatpush1.bf16.msra.mxu0 %v3505
        %3590 = vmatprep.subr.bf16.mxu0 0
        %3591 = vmatpush1.bf16.msra.mxu0 %v3506
        %3592 = vmatprep.subr.bf16.mxu0 0
        %3593 = vmatpush1.bf16.msra.mxu0 %v3507
        %3594 = vmatprep.subr.bf16.mxu0 0
        %3595 = vmatpush1.bf16.msra.mxu0 %v3508
        %3596 = vmatprep.subr.bf16.mxu0 0
        %3597 = vmatpush1.bf16.msra.mxu0 %v3509
        %3598 = vmatprep.subr.bf16.mxu0 0
        %3599 = vmatpush1.bf16.msra.mxu0 %v3510
        %3600 = vmatprep.subr.bf16.mxu0 0
        %3601 = vmatpush1.bf16.msra.mxu0 0
        %3602 = vmatprep.subr.bf16.mxu0 0
        %3603 = vmatpush1.bf16.msra.mxu0 0
        %3604 = vmatprep.subr.bf16.mxu0 0
        %3605 = vmatpush1.bf16.msra.mxu0 0
        %3606 = vmatprep.subr.bf16.mxu0 0
        %3607 = vmatpush1.bf16.msra.mxu0 0
        %3608 = vmatprep.subr.bf16.mxu0 0
        %3609 = vmatpush1.bf16.msra.mxu0 0
        %3610 = vmatprep.subr.bf16.mxu0 0
        %3611 = vmatpush1.bf16.msra.mxu0 0
        %3612 = vmatprep.subr.bf16.mxu0 0
        %3613 = vmatpush1.bf16.msra.mxu0 0
        %3614 = vmatprep.subr.bf16.mxu0 0
        %3615 = vmatpush1.bf16.msra.mxu0 0
        %3616 = vmatprep.mubr.bf16.mxu0 0
        %3617 = vmatmul.mubr.bf16.gmra.mrb[0].mxu0 %v3338
        %v3618 = vpop.f32.mrb[0].mxu0
        %v3619 = vadd.f32 %v3570, %v3618
        %v3620 = vpop.f32.mrb[0].mxu0
        %v3621 = vpop.f32.mrb[0].mxu0
        %v3622 = vadd.f32 %v3573, %v3621
        %v3623 = vpop.f32.mrb[0].mxu0
        %3624 = vmatprep.mubr.bf16.mxu0 0
        %3625 = vmatmul.mubr.bf16.gmra.mrb[0].mxu0 %v3341
        %v3626 = vpop.f32.mrb[0].mxu0
        %v3627 = vadd.f32 %v3578, %v3626
        %v3628 = vpop.f32.mrb[0].mxu0
        %v3629 = vpop.f32.mrb[0].mxu0
        %v3630 = vadd.f32 %v3581, %v3629
        %v3631 = vpop.f32.mrb[0].mxu0
        %3632 = vdwg.mxu0
        %v3633 = vadd.f32 %v2950, %v3619
        %v3634 = vadd.f32 %v2951, %v3622
        %v3635 = vadd.f32 %v2952, %v3627
        %v3636 = vadd.f32 %v2953, %v3630
        %3637 = vst [vmem:[%s203] sm:$0xff] %v3633
        %3638 = vst [vmem:[%s203 + $0x8] sm:$0xff] %v3634
        %3639 = vst [vmem:[%s203 + $0x10] sm:$0xff] %v3635
        %3640 = vst [vmem:[%s203 + $0x18] sm:$0xff] %v3636
        %s3641 = sand.u32 %s97, 1
        %s3642 = scalar_lea.sflag [#allocation6], %s3641
        %s3643 = sand.u32 %s97, 1
        %s3644 = smul.addr %s3643, 32
        %s3645 = scalar_lea.vmem [#allocation9], %s3644
        // Predicated region
        $region41: #{tpu_custom_call.1} parent=31 // pred_check
          %p3646 = pneg %p107
        $region42: #{tpu_custom_call.1} parent=31 // pred_check_branch
          %3648 = sbr.rel (%p3646) target = $region44
        $region43: #{tpu_custom_call.1} parent=31 // pred_region
          %s3649 = smul.u32 4, %s21
          %s3651 = ssub.s32 512, 512
          %3652 = vsyncadd %s3642, %s3651
          %s3653 = smul.addr %s3649, 128
          %s3654 = scalar_lea.hbm %s3, %s3653
          %s3655 = sshll.u32 %s3645, 4
          %s3656 = int_to_ptr.vmem [resolvable:$true] %s3655
          %3661 = dma.vmem_to_hbm [thread:$0]  %s3656, 512, %s3654, %s3642, 128, 128, 8
        $region44: #{tpu_custom_call.1} parent=31 // pred_fallthru
          _
      $region32: #{tpu_custom_call.1} parent=5 // pred_fallthru
        _
      %p3662 = scmp.le.s32.totalorder 2, %s16
      // Predicated region
      $region45: #{tpu_custom_call.1} parent=5 // pred_check
        %p3663 = pneg %p3662
      $region46: #{tpu_custom_call.1} parent=5 // pred_check_branch
        %3665 = sbr.rel (%p3663) target = $region48
      $region47: #{tpu_custom_call.1} parent=5 // pred_region
        %s3666 = ssub.s32 %s16, 2
        // Predicated region
        $region49: #{tpu_custom_call.1} parent=47 // pred_check
          %p3667 = pneg %p113
        $region50: #{tpu_custom_call.1} parent=47 // pred_check_branch
          %3669 = sbr.rel (%p3667) target = $region52
        $region51: #{tpu_custom_call.1} parent=47 // pred_region
          %s3670 = sand.u32 %s98, 1
          %s3671 = scalar_lea.sflag [#allocation6], %s3670
          %s3672 = sand.u32 %s98, 1
          %s3673 = smul.addr %s3672, 32
          %s3674 = scalar_lea.vmem [#allocation9], %s3673
          %3675 = dma.done %s3671, 512
        $region52: #{tpu_custom_call.1} parent=47 // pred_fallthru
          _
      $region48: #{tpu_custom_call.1} parent=5 // pred_fallthru
        _
    $region6: #{tpu_custom_call.1} parent=1 // loop_footer
      %s20 = sadd.s32 1, %s16
    $region7: #{tpu_custom_call.1} parent=1 // loop_footer_branch
      %15 = sbr.rel target = $region3
    $region8: #{tpu_custom_call.1} parent=1 // loop_exit
      _
    %3676 = vsyncpa [#allocation5], 1
    %s3677 = scalar_lea.sflag [#allocation5], 1
    %3678 = vsyncpa %s3677, 1
    %3679 = vsyncpa [#allocation8], 1
    %3680 = vsyncpa [#allocation6], 1
    %s3681 = scalar_lea.sflag [#allocation6], 1
    %3682 = vsyncpa %s3681, 1

</llo_original>
